<compile_context>
chip_gen: v6e
topology: v6e:2x2x1
jax: 0.10.0
libtpu: 0.0.40
codegen_flags: <defaults>
</compile_context>

<pallas_src>
import functools

import numpy as np
import jax
import jax.numpy as jnp
from jax.experimental import pallas as pl
from jax.experimental.pallas import tpu as pltpu


def _criss_cross_kernel(fl_ref, fv_ref, wq_ref, bq_ref, wvk_ref, bvk_ref,
                        diag_ref, gamma_ref, out_ref, k_scr, v_scr,
                        *, lane_dense):
    j = pl.program_id(1)                       # W-tile index
    _, H, W, C = fl_ref.shape
    TW = fv_ref.shape[2]
    Cq = wq_ref.shape[1]

    # ---- K / V projection for the whole image, once per batch element. ----
    # Fused [Wv | Wk] 1x1 conv as a single bf16 MXU pass (f32 accumulation);
    # results cached in bf16 VMEM scratch (h-major layout only).
    # TODO(synk): chunk this projection over H rows on VMEM-tight parts (v7x)
    # to bound the (H*W, C+Cq) f32 temporary.
    @pl.when(j == 0)
    def _():
        fl2 = fl_ref[0].reshape(H * W, C).astype(jnp.bfloat16)
        kv = jnp.dot(fl2, wvk_ref[...],
                     preferred_element_type=jnp.float32) + bvk_ref[...]
        v_scr[...] = kv[:, :C].reshape(H, W, C).astype(v_scr.dtype)
        k_scr[...] = kv[:, C:].reshape(H, W, Cq).astype(k_scr.dtype)

    # ---- Q projection for this W-tile (from Fv), bf16-fed MXU. ----
    fv2 = fv_ref[0].reshape(H * TW, C).astype(jnp.bfloat16)
    q = (jnp.dot(fv2, wq_ref[...], preferred_element_type=jnp.float32)
         + bq_ref[...]).reshape(H, TW, Cq)                         # f32
    q_b = q.astype(jnp.bfloat16)                                   # (H, TW, Cq)
    q_t = jnp.transpose(q, (1, 0, 2)).astype(jnp.bfloat16)         # (TW, H, Cq)

    w0 = pl.multiple_of(j * TW, TW)
    # Per-tile w-major views of K / V.  Transposes are done in f32 (small XLU
    # work riding next to the MXU) and cast back to bf16 for the matmuls.
    k_cols_t = jnp.transpose(
        k_scr[:, pl.ds(w0, TW), :].astype(jnp.float32), (1, 0, 2)
    ).astype(jnp.bfloat16)                                         # (TW, H, Cq)
    v_cols_t = jnp.transpose(
        v_scr[:, pl.ds(w0, TW), :].astype(jnp.float32), (1, 0, 2)
    ).astype(jnp.bfloat16)                                         # (TW, H, C)
    k_full = k_scr[...]                                            # (H, W, Cq)
    v_full = v_scr[...]                                            # (H, W, C)

    # ---- criss-cross energies (bf16 MXU operands, f32 logits). ----
    e_h = jnp.einsum('whc,wgc->whg', q_t, k_cols_t,
                     preferred_element_type=jnp.float32)           # (TW, H, H)
    e_h = e_h + diag_ref[...][None, :, :]                          # -1e30 diag
    e_w = jnp.einsum('hwc,hvc->hwv', q_b, k_full,
                     preferred_element_type=jnp.float32)           # (H, TW, W)

    # ---- joint softmax over the H + W positions (f32, no concatenation). ----
    m = jnp.maximum(jnp.transpose(jnp.max(e_h, axis=-1)),
                    jnp.max(e_w, axis=-1))                         # (H, TW)
    p_h = jnp.exp(e_h - jnp.transpose(m)[:, :, None])              # (TW, H, H)
    p_w = jnp.exp(e_w - m[:, :, None])                             # (H, TW, W)
    denom = jnp.transpose(jnp.sum(p_h, axis=-1)) + jnp.sum(p_w, axis=-1)
    inv = pl.reciprocal(denom, approx=True)                        # (H, TW)

    # ---- attention-weighted aggregation: bf16 MXU operands, f32 accum. ----
    out_h_t = jnp.einsum('whg,wgc->whc', p_h.astype(jnp.bfloat16), v_cols_t,
                         preferred_element_type=jnp.float32)       # (TW, H, C)
    out_w = jnp.einsum('hwv,hvc->hwc', p_w.astype(jnp.bfloat16), v_full,
                       preferred_element_type=jnp.float32)         # (H, TW, C)
    out_sum = (jnp.transpose(out_h_t, (1, 0, 2)) + out_w) * inv[:, :, None]

    fl_tile = fl_ref[0, :, pl.ds(w0, TW), :]                       # (H, TW, C)
    final = (gamma_ref[0] * out_sum + fl_tile).astype(out_ref.dtype)
    if lane_dense:
        out_ref[0] = final.reshape(H, TW * C)    # unmasked 128-lane stores
    else:
        out_ref[0] = final


def _vmem_budget_bytes():
    """Generation-aware VMEM budget (~80% of per-core capacity)."""
    cap = None
    try:
        cap = pltpu.get_tpu_info().vmem_capacity_bytes
    except Exception:
        cap = None
    if not cap:
        cap = 64 * 1024 * 1024            # conservative (v7x per-TC capacity)
    return int(cap * 0.8)


def _vmem_estimate_bytes(H, W, TW, C, Cq):
    """Rough per-step working-set estimate (includes BlockSpec double-buffering)."""
    f32, bf16 = 4, 2
    est = 0
    est += 2 * H * W * C * f32                      # Fl full-image block (x2 bufs)
    est += 4 * H * TW * C * f32                     # Fv tile + out tile (x2 bufs)
    est += H * W * (C + Cq) * bf16                  # K / V bf16 scratch
    est += H * W * (C + Cq) * (f32 + bf16)          # j==0 projection temporaries
    est += 3 * TW * H * (H + W) * f32               # energies / probabilities
    est += TW * H * (H + W) * bf16                  # bf16 probability casts
    est += 6 * H * TW * C * f32                     # aggregation / transpose temps
    est += 2 * H * TW * Cq * (f32 + bf16)           # q / q_t
    est += C * (C + 2 * Cq) * bf16                  # weights (bf16)
    est += (C + 2 * Cq + H * H + 16) * f32          # biases + diag mask
    return int(est * 1.5)                           # relayout / spill headroom


def _pick_tile_w(H, W, C, Cq, budget, lane_dense):
    """Largest sublane-multiple W-tile fitting the VMEM budget (lane-dense when asked)."""
    cands = [t for t in range(8, W, 8) if W % t == 0]
    cands.append(W)
    if lane_dense:
        cands = [t for t in cands if t == W or (t * C) % 128 == 0]
    fits = [t for t in cands if _vmem_estimate_bytes(H, W, t, C, Cq) <= budget]
    pool = fits if fits else cands
    if fits:
        dense = [t for t in fits if (t * C) % 128 == 0]
        return max(dense) if dense else max(fits)
    return min(pool)


def criss_cross_rtb(fl_nchw, fv_nchw, params, *, tile_w=None):
    """Fl, Fv: (B, C, H, W) float32.  Returns (B, C, H, W) float32."""
    wq, bq, wk, bk, wv, bv, gamma = params
    B, C, H, W = fl_nchw.shape
    Cq = wq.shape[1]

    fl = jnp.transpose(fl_nchw, (0, 2, 3, 1)).astype(jnp.float32)   # NHWC
    fv = jnp.transpose(fv_nchw, (0, 2, 3, 1)).astype(jnp.float32)   # NHWC

    # Fused [Wv | Wk] projection weights; weights pre-cast to bf16 so every
    # GEMM feeds the MXU bf16 operands (f32 accumulation); biases stay f32.
    wvk = jnp.concatenate([wv, wk], axis=1).astype(jnp.bfloat16)     # (C, C+Cq)
    bvk = jnp.concatenate([bv, bk], axis=0).reshape(1, C + Cq).astype(jnp.float32)
    wq_b = wq.astype(jnp.bfloat16)
    bq2 = bq.reshape(1, Cq).astype(jnp.float32)
    gamma1 = gamma.reshape(1).astype(jnp.float32)

    # Additive -1e30 diagonal mask, built once (constant input, not per-step).
    diag = jnp.where(jnp.eye(H, dtype=bool), jnp.float32(-1e30), jnp.float32(0.0))

    budget = _vmem_budget_bytes()
    want_lane_dense = C < 128     # C >= 128 already stores full 128-lane vregs

    def run(ld):
        tw = tile_w if tile_w is not None else _pick_tile_w(H, W, C, Cq, budget, ld)
        assert W % tw == 0 and (tw % 8 == 0 or tw == W)
        n_wt = W // tw
        est = _vmem_estimate_bytes(H, W, tw, C, Cq)
        vmem_limit = min(budget, max(est, 32 * 1024 * 1024))

        if ld:
            out_shape = jax.ShapeDtypeStruct((B, H, W * C), jnp.float32)
            out_spec = pl.BlockSpec((1, H, tw * C), lambda b, j: (b, 0, j))
        else:
            out_shape = jax.ShapeDtypeStruct((B, H, W, C), jnp.float32)
            out_spec = pl.BlockSpec((1, H, tw, C), lambda b, j: (b, 0, j, 0))

        kern = functools.partial(_criss_cross_kernel, lane_dense=ld)
        out = pl.pallas_call(
            kern,
            out_shape=out_shape,
            grid=(B, n_wt),
            in_specs=[
                pl.BlockSpec((1, H, W, C), lambda b, j: (b, 0, 0, 0)),   # Fl (full)
                pl.BlockSpec((1, H, tw, C), lambda b, j: (b, 0, j, 0)),  # Fv tile
                pl.BlockSpec((C, Cq), lambda b, j: (0, 0)),              # Wq (bf16)
                pl.BlockSpec((1, Cq), lambda b, j: (0, 0)),              # bq
                pl.BlockSpec((C, C + Cq), lambda b, j: (0, 0)),          # [Wv|Wk] bf16
                pl.BlockSpec((1, C + Cq), lambda b, j: (0, 0)),          # [bv|bk]
                pl.BlockSpec((H, H), lambda b, j: (0, 0)),               # diag mask
                pl.BlockSpec(memory_space=pltpu.MemorySpace.SMEM),       # gamma
            ],
            out_specs=out_spec,
            scratch_shapes=[
                pltpu.VMEM((H, W, Cq), jnp.bfloat16),    # K, h-major
                pltpu.VMEM((H, W, C), jnp.bfloat16),     # V, h-major
            ],
            compiler_params=pltpu.CompilerParams(
                dimension_semantics=("parallel", "arbitrary"),
                vmem_limit_bytes=vmem_limit),
        )(fl, fv, wq_b, bq2, wvk, bvk, diag, gamma1)

        if ld:
            out = out.reshape(B, H, W, C)
        return jnp.transpose(out, (0, 3, 1, 2))          # back to NCHW

    if want_lane_dense:
        try:
            return run(True)
        except Exception:
            # Mosaic rejected the in-kernel lane-flattening reshape on this
            # backend; fall back to the channel-minor output layout.
            return run(False)
    return run(False)


def criss_cross_reference(fl_nchw, fv_nchw, params):
    """Plain-JAX f32 reference mirroring the PyTorch forward exactly."""
    wq, bq, wk, bk, wv, bv, gamma = params
    B, C, H, W = fl_nchw.shape
    fl = jnp.transpose(fl_nchw, (0, 2, 3, 1)).astype(jnp.float32)
    fv = jnp.transpose(fv_nchw, (0, 2, 3, 1)).astype(jnp.float32)
    q = jnp.einsum('bhwc,cd->bhwd', fv, wq) + bq
    k = jnp.einsum('bhwc,cd->bhwd', fl, wk) + bk
    v = jnp.einsum('bhwc,cd->bhwd', fl, wv) + bv
    e_h = jnp.einsum('bhwd,bgwd->bhwg', q, k)
    diag = jnp.eye(H, dtype=bool)[:, None, :]                    # (H, 1, H)
    e_h = jnp.where(diag[None], -jnp.inf, e_h)
    e_w = jnp.einsum('bhwd,bhvd->bhwv', q, k)
    att = jax.nn.softmax(jnp.concatenate([e_h, e_w], axis=-1), axis=-1)
    att_h, att_w = att[..., :H], att[..., H:]
    out_h = jnp.einsum('bhwg,bgwc->bhwc', att_h, v)
    out_w = jnp.einsum('bhwv,bhvc->bhwc', att_w, v)
    out = gamma * (out_h + out_w) + fl
    return jnp.transpose(out, (0, 3, 1, 2))


if __name__ == "__main__":
    B, C, H, W = 2, 16, 8, 16
    Cq = C // 8

    key = jax.random.PRNGKey(0)
    k1, k2, k3, k4, k5, k6, k7, k8 = jax.random.split(key, 8)
    Fl = jax.random.normal(k1, (B, C, H, W), jnp.float32)
    Fv = jax.random.normal(k2, (B, C, H, W), jnp.float32)

    # Conv weights stored as (in, out) so y = x @ W + b == PyTorch 1x1 conv.
    wq = 0.3 * jax.random.normal(k3, (C, Cq), jnp.float32)
    bq = 0.1 * jax.random.normal(k4, (Cq,), jnp.float32)
    wk = 0.3 * jax.random.normal(k5, (C, Cq), jnp.float32)
    bk = 0.1 * jax.random.normal(k6, (Cq,), jnp.float32)
    wv = 0.3 * jax.random.normal(k7, (C, C), jnp.float32)
    bv = 0.1 * jax.random.normal(k8, (C,), jnp.float32)
    # PyTorch initializes gamma to 0 (output would trivially equal Fl);
    # use a deterministic nonzero value so the attention path is exercised.
    gamma = jnp.array([0.7], jnp.float32)
    params = (wq, bq, wk, bk, wv, bv, gamma)

    ref = criss_cross_reference(Fl, Fv, params)

    # Auto-sized W-tile (whole width fits the VMEM budget at this size).
    out = jax.block_until_ready(criss_cross_rtb(Fl, Fv, params))
    assert out.shape == (B, C, H, W)
    np.testing.assert_allclose(np.asarray(out), np.asarray(ref),
                               rtol=3e-2, atol=5e-2)

    # Forced multi-tile path (TW=8, TW*C=128): exercises j==0 K/V caching
    # across W-tiles and the lane-dense tiled output blocks.
    out_t = jax.block_until_ready(criss_cross_rtb(Fl, Fv, params, tile_w=8))
    np.testing.assert_allclose(np.asarray(out_t), np.asarray(ref),
                               rtol=3e-2, atol=5e-2)

    print("KERNEL_OK")
</pallas_src>

<mosaic_0001>
module attributes {stable_mosaic.version = 11 : i64} {
  func.func @_criss_cross_kernel(%arg0: i32, %arg1: i32, %arg2: memref<1x8x16x16xf32, #tpu.memory_space<vmem>>, %arg3: memref<1x8x16x16xf32, #tpu.memory_space<vmem>>, %arg4: memref<16x2xbf16, #tpu.memory_space<vmem>>, %arg5: memref<1x2xf32, #tpu.memory_space<vmem>>, %arg6: memref<16x18xbf16, #tpu.memory_space<vmem>>, %arg7: memref<1x18xf32, #tpu.memory_space<vmem>>, %arg8: memref<8x8xf32, #tpu.memory_space<vmem>>, %arg9: memref<1xf32, #tpu.memory_space<smem>>, %arg10: memref<1x8x256xf32, #tpu.memory_space<vmem>>, %arg11: memref<8x16x2xbf16, #tpu.memory_space<vmem>>, %arg12: memref<8x16x16xbf16, #tpu.memory_space<vmem>>) attributes {dimension_semantics = [#tpu.dimension_semantics<parallel>, #tpu.dimension_semantics<arbitrary>], iteration_bounds = array<i64: 2, 1>, scalar_prefetch = 0 : i64, scratch_operands = 2 : i64, tpu.core_type = #tpu.core_type<tc>, window_params = [{transform_indices = @transform_0, window_bounds = array<i64: 1, 8, 16, 16>}, {transform_indices = @transform_1, window_bounds = array<i64: 1, 8, 16, 16>}, {pipeline_mode = #tpu.pipeline_mode<synchronous>, transform_indices = @transform_2, window_bounds = array<i64: 16, 2>}, {pipeline_mode = #tpu.pipeline_mode<synchronous>, transform_indices = @transform_3, window_bounds = array<i64: 1, 2>}, {pipeline_mode = #tpu.pipeline_mode<synchronous>, transform_indices = @transform_4, window_bounds = array<i64: 16, 18>}, {pipeline_mode = #tpu.pipeline_mode<synchronous>, transform_indices = @transform_5, window_bounds = array<i64: 1, 18>}, {pipeline_mode = #tpu.pipeline_mode<synchronous>, transform_indices = @transform_6, window_bounds = array<i64: 8, 8>}, {transform_indices = @transform_7, window_bounds = array<i64: 1>}, {transform_indices = @transform_8, window_bounds = array<i64: 1, 8, 256>}]} {
    %c0_i32 = arith.constant 0 : i32
    %0 = arith.cmpi eq, %arg1, %c0_i32 : i32
    %1 = arith.extui %0 : i1 to i32
    %c0_i32_0 = arith.constant 0 : i32
    %2 = arith.cmpi ne, %1, %c0_i32_0 : i32
    scf.if %2 {
      %c0_35 = arith.constant 0 : index
      %c0_36 = arith.constant 0 : index
      %c0_37 = arith.constant 0 : index
      %c0_38 = arith.constant 0 : index
      %74 = vector.load %arg2[%c0_35, %c0_36, %c0_37, %c0_38] : memref<1x8x16x16xf32, #tpu.memory_space<vmem>>, vector<1x8x16x16xf32>
      %75 = vector.shape_cast %74 : vector<1x8x16x16xf32> to vector<8x16x16xf32>
      %76 = vector.shape_cast %75 : vector<8x16x16xf32> to vector<128x16xf32>
      %77 = arith.truncf %76 : vector<128x16xf32> to vector<128x16xbf16>
      %c0_39 = arith.constant 0 : index
      %c0_40 = arith.constant 0 : index
      %78 = vector.load %arg6[%c0_39, %c0_40] : memref<16x18xbf16, #tpu.memory_space<vmem>>, vector<16x18xbf16>
      %cst_41 = arith.constant dense<0.000000e+00> : vector<128x18xf32>
      %79 = tpu.matmul %77, %78, %cst_41 {dimension_numbers = #tpu.dot_dimension_numbers<[1], [0], [0], [1], [0, 0, 1, 1], [], []>} : vector<128x16xbf16>, vector<16x18xbf16>, vector<128x18xf32> -> vector<128x18xf32>
      %c0_42 = arith.constant 0 : index
      %c0_43 = arith.constant 0 : index
      %80 = vector.load %arg7[%c0_42, %c0_43] : memref<1x18xf32, #tpu.memory_space<vmem>>, vector<1x18xf32>
      %81 = vector.broadcast %80 : vector<1x18xf32> to vector<128x18xf32>
      %82 = arith.addf %79, %81 : vector<128x18xf32>
      %83 = vector.extract_strided_slice %82 {offsets = [0, 0], sizes = [128, 16], strides = [1, 1]} : vector<128x18xf32> to vector<128x16xf32>
      %84 = vector.shape_cast %83 : vector<128x16xf32> to vector<8x16x16xf32>
      %85 = arith.truncf %84 : vector<8x16x16xf32> to vector<8x16x16xbf16>
      %c0_44 = arith.constant 0 : index
      %c0_45 = arith.constant 0 : index
      %c0_46 = arith.constant 0 : index
      %86 = vector.load %arg12[%c0_44, %c0_45, %c0_46] : memref<8x16x16xbf16, #tpu.memory_space<vmem>>, vector<8x16x16xbf16>
      tpu.vector_store %arg12[%c0_44, %c0_45, %c0_46], %85 {strides = array<i32>} : memref<8x16x16xbf16, #tpu.memory_space<vmem>>, vector<8x16x16xbf16>,
      %87 = vector.extract_strided_slice %82 {offsets = [0, 16], sizes = [128, 2], strides = [1, 1]} : vector<128x18xf32> to vector<128x2xf32>
      %88 = vector.shape_cast %87 : vector<128x2xf32> to vector<8x16x2xf32>
      %89 = arith.truncf %88 : vector<8x16x2xf32> to vector<8x16x2xbf16>
      %c0_47 = arith.constant 0 : index
      %c0_48 = arith.constant 0 : index
      %c0_49 = arith.constant 0 : index
      %90 = vector.load %arg11[%c0_47, %c0_48, %c0_49] : memref<8x16x2xbf16, #tpu.memory_space<vmem>>, vector<8x16x2xbf16>
      tpu.vector_store %arg11[%c0_47, %c0_48, %c0_49], %89 {strides = array<i32>} : memref<8x16x2xbf16, #tpu.memory_space<vmem>>, vector<8x16x2xbf16>,
    } else {
    }
    %c0 = arith.constant 0 : index
    %c0_1 = arith.constant 0 : index
    %c0_2 = arith.constant 0 : index
    %c0_3 = arith.constant 0 : index
    %3 = vector.load %arg3[%c0, %c0_1, %c0_2, %c0_3] : memref<1x8x16x16xf32, #tpu.memory_space<vmem>>, vector<1x8x16x16xf32>
    %4 = vector.shape_cast %3 : vector<1x8x16x16xf32> to vector<8x16x16xf32>
    %5 = vector.shape_cast %4 : vector<8x16x16xf32> to vector<128x16xf32>
    %6 = arith.truncf %5 : vector<128x16xf32> to vector<128x16xbf16>
    %c0_4 = arith.constant 0 : index
    %c0_5 = arith.constant 0 : index
    %7 = vector.load %arg4[%c0_4, %c0_5] : memref<16x2xbf16, #tpu.memory_space<vmem>>, vector<16x2xbf16>
    %cst = arith.constant dense<0.000000e+00> : vector<128x2xf32>
    %8 = tpu.matmul %6, %7, %cst {dimension_numbers = #tpu.dot_dimension_numbers<[1], [0], [0], [1], [0, 0, 1, 1], [], []>} : vector<128x16xbf16>, vector<16x2xbf16>, vector<128x2xf32> -> vector<128x2xf32>
    %c0_6 = arith.constant 0 : index
    %c0_7 = arith.constant 0 : index
    %9 = vector.load %arg5[%c0_6, %c0_7] : memref<1x2xf32, #tpu.memory_space<vmem>>, vector<1x2xf32>
    %10 = vector.broadcast %9 : vector<1x2xf32> to vector<128x2xf32>
    %11 = arith.addf %8, %10 : vector<128x2xf32>
    %12 = vector.shape_cast %11 : vector<128x2xf32> to vector<8x16x2xf32>
    %13 = arith.truncf %12 : vector<8x16x2xf32> to vector<8x16x2xbf16>
    %14 = tpu.transpose %12, [1, 0, 2] : vector<8x16x2xf32> -> vector<16x8x2xf32>
    %15 = arith.truncf %14 : vector<16x8x2xf32> to vector<16x8x2xbf16>
    %c16_i32 = arith.constant 16 : i32
    %16 = arith.muli %arg1, %c16_i32 : i32
    %17 = tpu.assume_multiple %16, 16 : i32
    %c0_8 = arith.constant 0 : index
    %18 = arith.index_cast %17 : i32 to index
    %c0_9 = arith.constant 0 : index
    %19 = vector.load %arg11[%c0_8, %18, %c0_9] : memref<8x16x2xbf16, #tpu.memory_space<vmem>>, vector<8x16x2xbf16>
    %20 = arith.extf %19 : vector<8x16x2xbf16> to vector<8x16x2xf32>
    %21 = tpu.transpose %20, [1, 0, 2] : vector<8x16x2xf32> -> vector<16x8x2xf32>
    %22 = arith.truncf %21 : vector<16x8x2xf32> to vector<16x8x2xbf16>
    %c0_10 = arith.constant 0 : index
    %23 = arith.index_cast %17 : i32 to index
    %c0_11 = arith.constant 0 : index
    %24 = vector.load %arg12[%c0_10, %23, %c0_11] : memref<8x16x16xbf16, #tpu.memory_space<vmem>>, vector<8x16x16xbf16>
    %25 = arith.extf %24 : vector<8x16x16xbf16> to vector<8x16x16xf32>
    %26 = tpu.transpose %25, [1, 0, 2] : vector<8x16x16xf32> -> vector<16x8x16xf32>
    %27 = arith.truncf %26 : vector<16x8x16xf32> to vector<16x8x16xbf16>
    %c0_12 = arith.constant 0 : index
    %c0_13 = arith.constant 0 : index
    %c0_14 = arith.constant 0 : index
    %28 = vector.load %arg11[%c0_12, %c0_13, %c0_14] : memref<8x16x2xbf16, #tpu.memory_space<vmem>>, vector<8x16x2xbf16>
    %c0_15 = arith.constant 0 : index
    %c0_16 = arith.constant 0 : index
    %c0_17 = arith.constant 0 : index
    %29 = vector.load %arg12[%c0_15, %c0_16, %c0_17] : memref<8x16x16xbf16, #tpu.memory_space<vmem>>, vector<8x16x16xbf16>
    "tpu.trace_start"() <{level = 10 : i32, message = "whc,wgc->whg"}> : () -> ()
    %cst_18 = arith.constant dense<0.000000e+00> : vector<16x8x8xf32>
    %30 = tpu.matmul %15, %22, %cst_18 {dimension_numbers = #tpu.dot_dimension_numbers<[2], [2], [1], [1], [0, 0, 0, 1, 1, 1], [0], [0]>} : vector<16x8x2xbf16>, vector<16x8x2xbf16>, vector<16x8x8xf32> -> vector<16x8x8xf32>
    "tpu.trace_stop"() : () -> ()
    %c0_19 = arith.constant 0 : index
    %c0_20 = arith.constant 0 : index
    %31 = vector.load %arg8[%c0_19, %c0_20] : memref<8x8xf32, #tpu.memory_space<vmem>>, vector<8x8xf32>
    %32 = vector.shape_cast %31 : vector<8x8xf32> to vector<1x8x8xf32>
    %33 = vector.broadcast %32 : vector<1x8x8xf32> to vector<16x8x8xf32>
    %34 = arith.addf %30, %33 : vector<16x8x8xf32>
    "tpu.trace_start"() <{level = 10 : i32, message = "hwc,hvc->hwv"}> : () -> ()
    %cst_21 = arith.constant dense<0.000000e+00> : vector<8x16x16xf32>
    %35 = tpu.matmul %13, %28, %cst_21 {dimension_numbers = #tpu.dot_dimension_numbers<[2], [2], [1], [1], [0, 0, 0, 1, 1, 1], [0], [0]>} : vector<8x16x2xbf16>, vector<8x16x2xbf16>, vector<8x16x16xf32> -> vector<8x16x16xf32>
    "tpu.trace_stop"() : () -> ()
    %cst_22 = arith.constant dense<0xFF800000> : vector<16x8xf32>
    %36 = vector.multi_reduction <maximumf>, %34, %cst_22 [2] : vector<16x8x8xf32> to vector<16x8xf32>
    %37 = tpu.transpose %36, [1, 0] : vector<16x8xf32> -> vector<8x16xf32>
    %cst_23 = arith.constant dense<0xFF800000> : vector<8x16xf32>
    %38 = vector.multi_reduction <maximumf>, %35, %cst_23 [2] : vector<8x16x16xf32> to vector<8x16xf32>
    %39 = arith.maximumf %37, %38 : vector<8x16xf32>
    %40 = tpu.transpose %39, [1, 0] : vector<8x16xf32> -> vector<16x8xf32>
    %41 = vector.shape_cast %40 : vector<16x8xf32> to vector<16x8x1xf32>
    %42 = vector.broadcast %41 : vector<16x8x1xf32> to vector<16x8x8xf32>
    %43 = arith.subf %34, %42 : vector<16x8x8xf32>
    %44 = math.exp %43 : vector<16x8x8xf32>
    %45 = vector.shape_cast %39 : vector<8x16xf32> to vector<8x16x1xf32>
    %46 = vector.broadcast %45 : vector<8x16x1xf32> to vector<8x16x16xf32>
    %47 = arith.subf %35, %46 : vector<8x16x16xf32>
    %48 = math.exp %47 : vector<8x16x16xf32>
    %cst_24 = arith.constant dense<0.000000e+00> : vector<16x8xf32>
    %49 = vector.multi_reduction <add>, %44, %cst_24 [2] : vector<16x8x8xf32> to vector<16x8xf32>
    %50 = tpu.transpose %49, [1, 0] : vector<16x8xf32> -> vector<8x16xf32>
    %cst_25 = arith.constant dense<0.000000e+00> : vector<8x16xf32>
    %51 = vector.multi_reduction <add>, %48, %cst_25 [2] : vector<8x16x16xf32> to vector<8x16xf32>
    %52 = arith.addf %50, %51 : vector<8x16xf32>
    %53 = tpu.reciprocal %52 {approx = true} : vector<8x16xf32> -> vector<8x16xf32>
    %54 = arith.truncf %44 : vector<16x8x8xf32> to vector<16x8x8xbf16>
    "tpu.trace_start"() <{level = 10 : i32, message = "whg,wgc->whc"}> : () -> ()
    %cst_26 = arith.constant dense<0.000000e+00> : vector<16x8x16xf32>
    %55 = tpu.matmul %54, %27, %cst_26 {dimension_numbers = #tpu.dot_dimension_numbers<[2], [1], [1], [2], [0, 0, 0, 1, 1, 2], [0], [0]>} : vector<16x8x8xbf16>, vector<16x8x16xbf16>, vector<16x8x16xf32> -> vector<16x8x16xf32>
    "tpu.trace_stop"() : () -> ()
    %56 = arith.truncf %48 : vector<8x16x16xf32> to vector<8x16x16xbf16>
    "tpu.trace_start"() <{level = 10 : i32, message = "hwv,hvc->hwc"}> : () -> ()
    %cst_27 = arith.constant dense<0.000000e+00> : vector<8x16x16xf32>
    %57 = tpu.matmul %56, %29, %cst_27 {dimension_numbers = #tpu.dot_dimension_numbers<[2], [1], [1], [2], [0, 0, 0, 1, 1, 2], [0], [0]>} : vector<8x16x16xbf16>, vector<8x16x16xbf16>, vector<8x16x16xf32> -> vector<8x16x16xf32>
    "tpu.trace_stop"() : () -> ()
    %58 = tpu.transpose %55, [1, 0, 2] : vector<16x8x16xf32> -> vector<8x16x16xf32>
    %59 = arith.addf %58, %57 : vector<8x16x16xf32>
    %60 = vector.shape_cast %53 : vector<8x16xf32> to vector<8x16x1xf32>
    %61 = vector.broadcast %60 : vector<8x16x1xf32> to vector<8x16x16xf32>
    %62 = arith.mulf %59, %61 : vector<8x16x16xf32>
    %c0_28 = arith.constant 0 : index
    %c0_29 = arith.constant 0 : index
    %63 = arith.index_cast %17 : i32 to index
    %c0_30 = arith.constant 0 : index
    %64 = vector.load %arg2[%c0_28, %c0_29, %63, %c0_30] : memref<1x8x16x16xf32, #tpu.memory_space<vmem>>, vector<1x8x16x16xf32>
    %65 = vector.shape_cast %64 : vector<1x8x16x16xf32> to vector<8x16x16xf32>
    %c0_31 = arith.constant 0 : index
    %66 = memref.load %arg9[%c0_31] : memref<1xf32, #tpu.memory_space<smem>>
    %67 = vector.broadcast %66 : f32 to vector<8x16x16xf32>
    %68 = arith.mulf %67, %62 : vector<8x16x16xf32>
    %69 = arith.addf %68, %65 : vector<8x16x16xf32>
    %70 = vector.shape_cast %69 : vector<8x16x16xf32> to vector<8x256xf32>
    %c0_32 = arith.constant 0 : index
    %c0_33 = arith.constant 0 : index
    %c0_34 = arith.constant 0 : index
    %71 = vector.load %arg10[%c0_32, %c0_33, %c0_34] : memref<1x8x256xf32, #tpu.memory_space<vmem>>, vector<1x8x256xf32>
    %72 = vector.shape_cast %71 : vector<1x8x256xf32> to vector<8x256xf32>
    %73 = vector.shape_cast %70 : vector<8x256xf32> to vector<1x8x256xf32>
    tpu.vector_store %arg10[%c0_32, %c0_33, %c0_34], %73 {strides = array<i32>} : memref<1x8x256xf32, #tpu.memory_space<vmem>>, vector<1x8x256xf32>,
    return
  }
  func.func @transform_0(%arg0: i32, %arg1: i32) -> (i32, i32, i32, i32) {
    %c0_i32 = arith.constant 0 : i32
    %c0_i32_0 = arith.constant 0 : i32
    %c0_i32_1 = arith.constant 0 : i32
    %c0_i32_2 = arith.constant 0 : i32
    return %arg0, %c0_i32, %c0_i32_0, %c0_i32_1 : i32, i32, i32, i32
  }
  func.func @transform_1(%arg0: i32, %arg1: i32) -> (i32, i32, i32, i32) {
    %c0_i32 = arith.constant 0 : i32
    %c0_i32_0 = arith.constant 0 : i32
    %c0_i32_1 = arith.constant 0 : i32
    return %arg0, %c0_i32, %arg1, %c0_i32_0 : i32, i32, i32, i32
  }
  func.func @transform_2(%arg0: i32, %arg1: i32) -> (i32, i32) {
    %c0_i32 = arith.constant 0 : i32
    %c0_i32_0 = arith.constant 0 : i32
    %c0_i32_1 = arith.constant 0 : i32
    return %c0_i32, %c0_i32_0 : i32, i32
  }
  func.func @transform_3(%arg0: i32, %arg1: i32) -> (i32, i32) {
    %c0_i32 = arith.constant 0 : i32
    %c0_i32_0 = arith.constant 0 : i32
    %c0_i32_1 = arith.constant 0 : i32
    return %c0_i32, %c0_i32_0 : i32, i32
  }
  func.func @transform_4(%arg0: i32, %arg1: i32) -> (i32, i32) {
    %c0_i32 = arith.constant 0 : i32
    %c0_i32_0 = arith.constant 0 : i32
    %c0_i32_1 = arith.constant 0 : i32
    return %c0_i32, %c0_i32_0 : i32, i32
  }
  func.func @transform_5(%arg0: i32, %arg1: i32) -> (i32, i32) {
    %c0_i32 = arith.constant 0 : i32
    %c0_i32_0 = arith.constant 0 : i32
    %c0_i32_1 = arith.constant 0 : i32
    return %c0_i32, %c0_i32_0 : i32, i32
  }
  func.func @transform_6(%arg0: i32, %arg1: i32) -> (i32, i32) {
    %c0_i32 = arith.constant 0 : i32
    %c0_i32_0 = arith.constant 0 : i32
    %c0_i32_1 = arith.constant 0 : i32
    return %c0_i32, %c0_i32_0 : i32, i32
  }
  func.func @transform_7(%arg0: i32, %arg1: i32) -> i32 {
    %c0_i32 = arith.constant 0 : i32
    %c0_i32_0 = arith.constant 0 : i32
    return %c0_i32 : i32
  }
  func.func @transform_8(%arg0: i32, %arg1: i32) -> (i32, i32, i32) {
    %c0_i32 = arith.constant 0 : i32
    %c0_i32_0 = arith.constant 0 : i32
    return %arg0, %c0_i32, %arg1 : i32, i32, i32
  }
}

module attributes {stable_mosaic.version = 11 : i64} {
  func.func @_criss_cross_kernel(%arg0: i32, %arg1: i32, %arg2: memref<1x8x16x16xf32, #tpu.memory_space<vmem>>, %arg3: memref<1x8x16x16xf32, #tpu.memory_space<vmem>>, %arg4: memref<16x2xbf16, #tpu.memory_space<vmem>>, %arg5: memref<1x2xf32, #tpu.memory_space<vmem>>, %arg6: memref<16x18xbf16, #tpu.memory_space<vmem>>, %arg7: memref<1x18xf32, #tpu.memory_space<vmem>>, %arg8: memref<8x8xf32, #tpu.memory_space<vmem>>, %arg9: memref<1xf32, #tpu.memory_space<smem>>, %arg10: memref<1x8x16x16xf32, #tpu.memory_space<vmem>>, %arg11: memref<8x16x2xbf16, #tpu.memory_space<vmem>>, %arg12: memref<8x16x16xbf16, #tpu.memory_space<vmem>>) attributes {dimension_semantics = [#tpu.dimension_semantics<parallel>, #tpu.dimension_semantics<arbitrary>], iteration_bounds = array<i64: 2, 1>, scalar_prefetch = 0 : i64, scratch_operands = 2 : i64, tpu.core_type = #tpu.core_type<tc>, window_params = [{transform_indices = @transform_0, window_bounds = array<i64: 1, 8, 16, 16>}, {transform_indices = @transform_1, window_bounds = array<i64: 1, 8, 16, 16>}, {pipeline_mode = #tpu.pipeline_mode<synchronous>, transform_indices = @transform_2, window_bounds = array<i64: 16, 2>}, {pipeline_mode = #tpu.pipeline_mode<synchronous>, transform_indices = @transform_3, window_bounds = array<i64: 1, 2>}, {pipeline_mode = #tpu.pipeline_mode<synchronous>, transform_indices = @transform_4, window_bounds = array<i64: 16, 18>}, {pipeline_mode = #tpu.pipeline_mode<synchronous>, transform_indices = @transform_5, window_bounds = array<i64: 1, 18>}, {pipeline_mode = #tpu.pipeline_mode<synchronous>, transform_indices = @transform_6, window_bounds = array<i64: 8, 8>}, {transform_indices = @transform_7, window_bounds = array<i64: 1>}, {transform_indices = @transform_8, window_bounds = array<i64: 1, 8, 16, 16>}]} {
    %c0_i32 = arith.constant 0 : i32
    %0 = arith.cmpi eq, %arg1, %c0_i32 : i32
    %1 = arith.extui %0 : i1 to i32
    %c0_i32_0 = arith.constant 0 : i32
    %2 = arith.cmpi ne, %1, %c0_i32_0 : i32
    scf.if %2 {
      %c0_36 = arith.constant 0 : index
      %c0_37 = arith.constant 0 : index
      %c0_38 = arith.constant 0 : index
      %c0_39 = arith.constant 0 : index
      %73 = vector.load %arg2[%c0_36, %c0_37, %c0_38, %c0_39] : memref<1x8x16x16xf32, #tpu.memory_space<vmem>>, vector<1x8x16x16xf32>
      %74 = vector.shape_cast %73 : vector<1x8x16x16xf32> to vector<8x16x16xf32>
      %75 = vector.shape_cast %74 : vector<8x16x16xf32> to vector<128x16xf32>
      %76 = arith.truncf %75 : vector<128x16xf32> to vector<128x16xbf16>
      %c0_40 = arith.constant 0 : index
      %c0_41 = arith.constant 0 : index
      %77 = vector.load %arg6[%c0_40, %c0_41] : memref<16x18xbf16, #tpu.memory_space<vmem>>, vector<16x18xbf16>
      %cst_42 = arith.constant dense<0.000000e+00> : vector<128x18xf32>
      %78 = tpu.matmul %76, %77, %cst_42 {dimension_numbers = #tpu.dot_dimension_numbers<[1], [0], [0], [1], [0, 0, 1, 1], [], []>} : vector<128x16xbf16>, vector<16x18xbf16>, vector<128x18xf32> -> vector<128x18xf32>
      %c0_43 = arith.constant 0 : index
      %c0_44 = arith.constant 0 : index
      %79 = vector.load %arg7[%c0_43, %c0_44] : memref<1x18xf32, #tpu.memory_space<vmem>>, vector<1x18xf32>
      %80 = vector.broadcast %79 : vector<1x18xf32> to vector<128x18xf32>
      %81 = arith.addf %78, %80 : vector<128x18xf32>
      %82 = vector.extract_strided_slice %81 {offsets = [0, 0], sizes = [128, 16], strides = [1, 1]} : vector<128x18xf32> to vector<128x16xf32>
      %83 = vector.shape_cast %82 : vector<128x16xf32> to vector<8x16x16xf32>
      %84 = arith.truncf %83 : vector<8x16x16xf32> to vector<8x16x16xbf16>
      %c0_45 = arith.constant 0 : index
      %c0_46 = arith.constant 0 : index
      %c0_47 = arith.constant 0 : index
      %85 = vector.load %arg12[%c0_45, %c0_46, %c0_47] : memref<8x16x16xbf16, #tpu.memory_space<vmem>>, vector<8x16x16xbf16>
      tpu.vector_store %arg12[%c0_45, %c0_46, %c0_47], %84 {strides = array<i32>} : memref<8x16x16xbf16, #tpu.memory_space<vmem>>, vector<8x16x16xbf16>,
      %86 = vector.extract_strided_slice %81 {offsets = [0, 16], sizes = [128, 2], strides = [1, 1]} : vector<128x18xf32> to vector<128x2xf32>
      %87 = vector.shape_cast %86 : vector<128x2xf32> to vector<8x16x2xf32>
      %88 = arith.truncf %87 : vector<8x16x2xf32> to vector<8x16x2xbf16>
      %c0_48 = arith.constant 0 : index
      %c0_49 = arith.constant 0 : index
      %c0_50 = arith.constant 0 : index
      %89 = vector.load %arg11[%c0_48, %c0_49, %c0_50] : memref<8x16x2xbf16, #tpu.memory_space<vmem>>, vector<8x16x2xbf16>
      tpu.vector_store %arg11[%c0_48, %c0_49, %c0_50], %88 {strides = array<i32>} : memref<8x16x2xbf16, #tpu.memory_space<vmem>>, vector<8x16x2xbf16>,
    } else {
    }
    %c0 = arith.constant 0 : index
    %c0_1 = arith.constant 0 : index
    %c0_2 = arith.constant 0 : index
    %c0_3 = arith.constant 0 : index
    %3 = vector.load %arg3[%c0, %c0_1, %c0_2, %c0_3] : memref<1x8x16x16xf32, #tpu.memory_space<vmem>>, vector<1x8x16x16xf32>
    %4 = vector.shape_cast %3 : vector<1x8x16x16xf32> to vector<8x16x16xf32>
    %5 = vector.shape_cast %4 : vector<8x16x16xf32> to vector<128x16xf32>
    %6 = arith.truncf %5 : vector<128x16xf32> to vector<128x16xbf16>
    %c0_4 = arith.constant 0 : index
    %c0_5 = arith.constant 0 : index
    %7 = vector.load %arg4[%c0_4, %c0_5] : memref<16x2xbf16, #tpu.memory_space<vmem>>, vector<16x2xbf16>
    %cst = arith.constant dense<0.000000e+00> : vector<128x2xf32>
    %8 = tpu.matmul %6, %7, %cst {dimension_numbers = #tpu.dot_dimension_numbers<[1], [0], [0], [1], [0, 0, 1, 1], [], []>} : vector<128x16xbf16>, vector<16x2xbf16>, vector<128x2xf32> -> vector<128x2xf32>
    %c0_6 = arith.constant 0 : index
    %c0_7 = arith.constant 0 : index
    %9 = vector.load %arg5[%c0_6, %c0_7] : memref<1x2xf32, #tpu.memory_space<vmem>>, vector<1x2xf32>
    %10 = vector.broadcast %9 : vector<1x2xf32> to vector<128x2xf32>
    %11 = arith.addf %8, %10 : vector<128x2xf32>
    %12 = vector.shape_cast %11 : vector<128x2xf32> to vector<8x16x2xf32>
    %13 = arith.truncf %12 : vector<8x16x2xf32> to vector<8x16x2xbf16>
    %14 = tpu.transpose %12, [1, 0, 2] : vector<8x16x2xf32> -> vector<16x8x2xf32>
    %15 = arith.truncf %14 : vector<16x8x2xf32> to vector<16x8x2xbf16>
    %c16_i32 = arith.constant 16 : i32
    %16 = arith.muli %arg1, %c16_i32 : i32
    %17 = tpu.assume_multiple %16, 16 : i32
    %c0_8 = arith.constant 0 : index
    %18 = arith.index_cast %17 : i32 to index
    %c0_9 = arith.constant 0 : index
    %19 = vector.load %arg11[%c0_8, %18, %c0_9] : memref<8x16x2xbf16, #tpu.memory_space<vmem>>, vector<8x16x2xbf16>
    %20 = arith.extf %19 : vector<8x16x2xbf16> to vector<8x16x2xf32>
    %21 = tpu.transpose %20, [1, 0, 2] : vector<8x16x2xf32> -> vector<16x8x2xf32>
    %22 = arith.truncf %21 : vector<16x8x2xf32> to vector<16x8x2xbf16>
    %c0_10 = arith.constant 0 : index
    %23 = arith.index_cast %17 : i32 to index
    %c0_11 = arith.constant 0 : index
    %24 = vector.load %arg12[%c0_10, %23, %c0_11] : memref<8x16x16xbf16, #tpu.memory_space<vmem>>, vector<8x16x16xbf16>
    %25 = arith.extf %24 : vector<8x16x16xbf16> to vector<8x16x16xf32>
    %26 = tpu.transpose %25, [1, 0, 2] : vector<8x16x16xf32> -> vector<16x8x16xf32>
    %27 = arith.truncf %26 : vector<16x8x16xf32> to vector<16x8x16xbf16>
    %c0_12 = arith.constant 0 : index
    %c0_13 = arith.constant 0 : index
    %c0_14 = arith.constant 0 : index
    %28 = vector.load %arg11[%c0_12, %c0_13, %c0_14] : memref<8x16x2xbf16, #tpu.memory_space<vmem>>, vector<8x16x2xbf16>
    %c0_15 = arith.constant 0 : index
    %c0_16 = arith.constant 0 : index
    %c0_17 = arith.constant 0 : index
    %29 = vector.load %arg12[%c0_15, %c0_16, %c0_17] : memref<8x16x16xbf16, #tpu.memory_space<vmem>>, vector<8x16x16xbf16>
    "tpu.trace_start"() <{level = 10 : i32, message = "whc,wgc->whg"}> : () -> ()
    %cst_18 = arith.constant dense<0.000000e+00> : vector<16x8x8xf32>
    %30 = tpu.matmul %15, %22, %cst_18 {dimension_numbers = #tpu.dot_dimension_numbers<[2], [2], [1], [1], [0, 0, 0, 1, 1, 1], [0], [0]>} : vector<16x8x2xbf16>, vector<16x8x2xbf16>, vector<16x8x8xf32> -> vector<16x8x8xf32>
    "tpu.trace_stop"() : () -> ()
    %c0_19 = arith.constant 0 : index
    %c0_20 = arith.constant 0 : index
    %31 = vector.load %arg8[%c0_19, %c0_20] : memref<8x8xf32, #tpu.memory_space<vmem>>, vector<8x8xf32>
    %32 = vector.shape_cast %31 : vector<8x8xf32> to vector<1x8x8xf32>
    %33 = vector.broadcast %32 : vector<1x8x8xf32> to vector<16x8x8xf32>
    %34 = arith.addf %30, %33 : vector<16x8x8xf32>
    "tpu.trace_start"() <{level = 10 : i32, message = "hwc,hvc->hwv"}> : () -> ()
    %cst_21 = arith.constant dense<0.000000e+00> : vector<8x16x16xf32>
    %35 = tpu.matmul %13, %28, %cst_21 {dimension_numbers = #tpu.dot_dimension_numbers<[2], [2], [1], [1], [0, 0, 0, 1, 1, 1], [0], [0]>} : vector<8x16x2xbf16>, vector<8x16x2xbf16>, vector<8x16x16xf32> -> vector<8x16x16xf32>
    "tpu.trace_stop"() : () -> ()
    %cst_22 = arith.constant dense<0xFF800000> : vector<16x8xf32>
    %36 = vector.multi_reduction <maximumf>, %34, %cst_22 [2] : vector<16x8x8xf32> to vector<16x8xf32>
    %37 = tpu.transpose %36, [1, 0] : vector<16x8xf32> -> vector<8x16xf32>
    %cst_23 = arith.constant dense<0xFF800000> : vector<8x16xf32>
    %38 = vector.multi_reduction <maximumf>, %35, %cst_23 [2] : vector<8x16x16xf32> to vector<8x16xf32>
    %39 = arith.maximumf %37, %38 : vector<8x16xf32>
    %40 = tpu.transpose %39, [1, 0] : vector<8x16xf32> -> vector<16x8xf32>
    %41 = vector.shape_cast %40 : vector<16x8xf32> to vector<16x8x1xf32>
    %42 = vector.broadcast %41 : vector<16x8x1xf32> to vector<16x8x8xf32>
    %43 = arith.subf %34, %42 : vector<16x8x8xf32>
    %44 = math.exp %43 : vector<16x8x8xf32>
    %45 = vector.shape_cast %39 : vector<8x16xf32> to vector<8x16x1xf32>
    %46 = vector.broadcast %45 : vector<8x16x1xf32> to vector<8x16x16xf32>
    %47 = arith.subf %35, %46 : vector<8x16x16xf32>
    %48 = math.exp %47 : vector<8x16x16xf32>
    %cst_24 = arith.constant dense<0.000000e+00> : vector<16x8xf32>
    %49 = vector.multi_reduction <add>, %44, %cst_24 [2] : vector<16x8x8xf32> to vector<16x8xf32>
    %50 = tpu.transpose %49, [1, 0] : vector<16x8xf32> -> vector<8x16xf32>
    %cst_25 = arith.constant dense<0.000000e+00> : vector<8x16xf32>
    %51 = vector.multi_reduction <add>, %48, %cst_25 [2] : vector<8x16x16xf32> to vector<8x16xf32>
    %52 = arith.addf %50, %51 : vector<8x16xf32>
    %53 = tpu.reciprocal %52 {approx = true} : vector<8x16xf32> -> vector<8x16xf32>
    %54 = arith.truncf %44 : vector<16x8x8xf32> to vector<16x8x8xbf16>
    "tpu.trace_start"() <{level = 10 : i32, message = "whg,wgc->whc"}> : () -> ()
    %cst_26 = arith.constant dense<0.000000e+00> : vector<16x8x16xf32>
    %55 = tpu.matmul %54, %27, %cst_26 {dimension_numbers = #tpu.dot_dimension_numbers<[2], [1], [1], [2], [0, 0, 0, 1, 1, 2], [0], [0]>} : vector<16x8x8xbf16>, vector<16x8x16xbf16>, vector<16x8x16xf32> -> vector<16x8x16xf32>
    "tpu.trace_stop"() : () -> ()
    %56 = arith.truncf %48 : vector<8x16x16xf32> to vector<8x16x16xbf16>
    "tpu.trace_start"() <{level = 10 : i32, message = "hwv,hvc->hwc"}> : () -> ()
    %cst_27 = arith.constant dense<0.000000e+00> : vector<8x16x16xf32>
    %57 = tpu.matmul %56, %29, %cst_27 {dimension_numbers = #tpu.dot_dimension_numbers<[2], [1], [1], [2], [0, 0, 0, 1, 1, 2], [0], [0]>} : vector<8x16x16xbf16>, vector<8x16x16xbf16>, vector<8x16x16xf32> -> vector<8x16x16xf32>
    "tpu.trace_stop"() : () -> ()
    %58 = tpu.transpose %55, [1, 0, 2] : vector<16x8x16xf32> -> vector<8x16x16xf32>
    %59 = arith.addf %58, %57 : vector<8x16x16xf32>
    %60 = vector.shape_cast %53 : vector<8x16xf32> to vector<8x16x1xf32>
    %61 = vector.broadcast %60 : vector<8x16x1xf32> to vector<8x16x16xf32>
    %62 = arith.mulf %59, %61 : vector<8x16x16xf32>
    %c0_28 = arith.constant 0 : index
    %c0_29 = arith.constant 0 : index
    %63 = arith.index_cast %17 : i32 to index
    %c0_30 = arith.constant 0 : index
    %64 = vector.load %arg2[%c0_28, %c0_29, %63, %c0_30] : memref<1x8x16x16xf32, #tpu.memory_space<vmem>>, vector<1x8x16x16xf32>
    %65 = vector.shape_cast %64 : vector<1x8x16x16xf32> to vector<8x16x16xf32>
    %c0_31 = arith.constant 0 : index
    %66 = memref.load %arg9[%c0_31] : memref<1xf32, #tpu.memory_space<smem>>
    %67 = vector.broadcast %66 : f32 to vector<8x16x16xf32>
    %68 = arith.mulf %67, %62 : vector<8x16x16xf32>
    %69 = arith.addf %68, %65 : vector<8x16x16xf32>
    %c0_32 = arith.constant 0 : index
    %c0_33 = arith.constant 0 : index
    %c0_34 = arith.constant 0 : index
    %c0_35 = arith.constant 0 : index
    %70 = vector.load %arg10[%c0_32, %c0_33, %c0_34, %c0_35] : memref<1x8x16x16xf32, #tpu.memory_space<vmem>>, vector<1x8x16x16xf32>
    %71 = vector.shape_cast %70 : vector<1x8x16x16xf32> to vector<8x16x16xf32>
    %72 = vector.shape_cast %69 : vector<8x16x16xf32> to vector<1x8x16x16xf32>
    tpu.vector_store %arg10[%c0_32, %c0_33, %c0_34, %c0_35], %72 {strides = array<i32>} : memref<1x8x16x16xf32, #tpu.memory_space<vmem>>, vector<1x8x16x16xf32>,
    return
  }
  func.func @transform_0(%arg0: i32, %arg1: i32) -> (i32, i32, i32, i32) {
    %c0_i32 = arith.constant 0 : i32
    %c0_i32_0 = arith.constant 0 : i32
    %c0_i32_1 = arith.constant 0 : i32
    %c0_i32_2 = arith.constant 0 : i32
    return %arg0, %c0_i32, %c0_i32_0, %c0_i32_1 : i32, i32, i32, i32
  }
  func.func @transform_1(%arg0: i32, %arg1: i32) -> (i32, i32, i32, i32) {
    %c0_i32 = arith.constant 0 : i32
    %c0_i32_0 = arith.constant 0 : i32
    %c0_i32_1 = arith.constant 0 : i32
    return %arg0, %c0_i32, %arg1, %c0_i32_0 : i32, i32, i32, i32
  }
  func.func @transform_2(%arg0: i32, %arg1: i32) -> (i32, i32) {
    %c0_i32 = arith.constant 0 : i32
    %c0_i32_0 = arith.constant 0 : i32
    %c0_i32_1 = arith.constant 0 : i32
    return %c0_i32, %c0_i32_0 : i32, i32
  }
  func.func @transform_3(%arg0: i32, %arg1: i32) -> (i32, i32) {
    %c0_i32 = arith.constant 0 : i32
    %c0_i32_0 = arith.constant 0 : i32
    %c0_i32_1 = arith.constant 0 : i32
    return %c0_i32, %c0_i32_0 : i32, i32
  }
  func.func @transform_4(%arg0: i32, %arg1: i32) -> (i32, i32) {
    %c0_i32 = arith.constant 0 : i32
    %c0_i32_0 = arith.constant 0 : i32
    %c0_i32_1 = arith.constant 0 : i32
    return %c0_i32, %c0_i32_0 : i32, i32
  }
  func.func @transform_5(%arg0: i32, %arg1: i32) -> (i32, i32) {
    %c0_i32 = arith.constant 0 : i32
    %c0_i32_0 = arith.constant 0 : i32
    %c0_i32_1 = arith.constant 0 : i32
    return %c0_i32, %c0_i32_0 : i32, i32
  }
  func.func @transform_6(%arg0: i32, %arg1: i32) -> (i32, i32) {
    %c0_i32 = arith.constant 0 : i32
    %c0_i32_0 = arith.constant 0 : i32
    %c0_i32_1 = arith.constant 0 : i32
    return %c0_i32, %c0_i32_0 : i32, i32
  }
  func.func @transform_7(%arg0: i32, %arg1: i32) -> i32 {
    %c0_i32 = arith.constant 0 : i32
    %c0_i32_0 = arith.constant 0 : i32
    return %c0_i32 : i32
  }
  func.func @transform_8(%arg0: i32, %arg1: i32) -> (i32, i32, i32, i32) {
    %c0_i32 = arith.constant 0 : i32
    %c0_i32_0 = arith.constant 0 : i32
    %c0_i32_1 = arith.constant 0 : i32
    return %arg0, %c0_i32, %arg1, %c0_i32_0 : i32, i32, i32, i32
  }
}

</mosaic_0001>

<llo_original>
// kernel: tpu_custom_call.1
$region0: #{tpu_custom_call.1}
  #allocation0 [shape = 'u32[]', space=smem, size = 0x4, offset = 0x4, fixed_abs, tag = 'smem constant byte address 0x4 - core index']
  #allocation1 [shape = 'u32[144,128]{1,0:T(1,128)}', space=vmem, size = 0x12000, scoped, tag = 'internal scratch']
  #allocation2 [shape = 'bf16[8,16,2]{2,1,0:T(8,128)(2,1)}', space=vmem, size = 0x8000, scoped, tag = 'scratch operand']
  #allocation3 [shape = 'bf16[8,16,16]{2,1,0:T(8,128)(2,1)}', space=vmem, size = 0x8000, scoped, tag = 'scratch operand']
  #allocation4 [shape = 'f32[1]{0:T(128)S(6)}', space=smem, size = 0x200, scoped, tag = 'scoped memory for tpu_custom_call.1']
  %s0 = inlined_call_operand.hbm [shape: f32[2,8,16,16], index: 0, kind: input, shape index: {}]
  %s1 = inlined_call_operand.hbm [shape: f32[2,8,16,16], index: 1, kind: input, shape index: {}]
  %s2 = inlined_call_operand.vmem [shape: bf16[16,2], index: 2, kind: input, shape index: {}]
  %s3 = inlined_call_operand.hbm [shape: f32[1,2], index: 3, kind: input, shape index: {}]
  %s4 = inlined_call_operand.vmem [shape: bf16[16,18], index: 4, kind: input, shape index: {}]
  %s5 = inlined_call_operand.vmem [shape: f32[1,18], index: 5, kind: input, shape index: {}]
  %s6 = inlined_call_operand.vmem [shape: f32[8,8], index: 6, kind: input, shape index: {}]
  %s7 = inlined_call_operand.<no memory space> [shape: f32[1], index: 7, kind: input, shape index: {}]
  %s8 = inlined_call_operand.hbm [shape: f32[2,8,256], index: 8, kind: output, shape index: {}]
  %s9 = sld [smem:[#allocation0]]
  $region81: #{tpu_custom_call.1} parent=0
    _
  %s11 = ssub.s32 1, %s9
  %s12 = scalar_select 0, %s11, %s9
  %13 = sst [smem:[#allocation4]] %s7
  $region1: #{tpu_custom_call.1} parent=0
    #allocation5 [shape = 'u8[131072]{0}', space=vmem, size = 0x20000, scoped, tag = 'input window, operand 0']
    #allocation6 [shape = 's32[2]{0}', space=sflag, size = 0x8, scoped, tag = 'scoped memory for tpu_custom_call.1']
    #allocation7 [shape = 's32[2]{0}', space=sflag, size = 0x8, scoped, tag = 'scoped memory for tpu_custom_call.1']
    #allocation8 [shape = 'u8[131072]{0}', space=vmem, size = 0x20000, scoped, tag = 'input window, operand 1']
    #allocation9 [shape = 's32[2]{0}', space=sflag, size = 0x8, scoped, tag = 'scoped memory for tpu_custom_call.1']
    #allocation10 [shape = 'u8[512]{0}', space=vmem, size = 0x400, scoped, tag = 'input window, operand 3, single buffered']
    #allocation11 [shape = 'u8[16384]{0}', space=vmem, size = 0x4000, scoped, tag = 'output window, operand 0']
    %14 = vsyncpa [#allocation6], 0
    %s15 = scalar_lea.sflag [#allocation6], 1
    %16 = vsyncpa %s15, 0
    %17 = vsyncpa [#allocation9], 0
    %s18 = scalar_lea.sflag [#allocation9], 1
    %19 = vsyncpa %s18, 0
    %20 = vsyncpa [#allocation7], 0
    %s21 = scalar_lea.sflag [#allocation7], 1
    %22 = vsyncpa %s21, 0
    loop: start=0, step=1, limit=4
    $region2: #{tpu_custom_call.1} parent=1 // loop_pre_header
      _
    $region3: #{tpu_custom_call.1} parent=1 // loop_header
      %s24 = sphi 0, %s28
      %p25 = scmp.ge.s32.totalorder %s24, 4
      %s31 = sphi 0, %s43
      %s32 = sphi 0, %s39
      %s33 = sphi 0, %s31
      %s34 = sphi 0, %s32
      %s35 = sphi 0, %s33
      %s36 = sphi 0, %s34
      %s46 = sphi 0, %s48
      %s49 = sphi 0, %s46
      %s50 = sphi 0, %s49
      %s66 = sphi 0, %s50
      %s74 = sphi 0, %s76
      %s77 = sphi 0, %s74
      %s78 = sphi 0, %s77
      %s94 = sphi 0, %s78
      %s98 = sphi 0, %s98
      %s100 = sphi 0, %s98
      %s101 = sphi 0, %s100
      %s115 = sphi 0, %s101
      %s119 = sphi 0, %s119
      %s121 = sphi 0, %s119
      %s122 = sphi 0, %s121
      %s136 = sphi 0, %s122
      %s140 = sphi 0, %s140
      %s142 = sphi 0, %s140
      %s143 = sphi 0, %s142
      %s157 = sphi 0, %s143
      %s161 = sphi 0, %s161
      %s163 = sphi 0, %s161
      %s164 = sphi 0, %s163
      %s178 = sphi 0, %s164
      %s182 = sphi 0, %s182
      %s184 = sphi 0, %s182
      %s185 = sphi 0, %s184
      %s199 = sphi 0, %s185
      %s203 = sphi 0, %s203
      %s205 = sphi 0, %s203
      %s206 = sphi 0, %s205
      %s220 = sphi 0, %s206
      %s228 = sphi 0, %s230
      %s231 = sphi 0, %s228
      %s232 = sphi 0, %s231
      %s248 = sphi 0, %s232
    $region4: #{tpu_custom_call.1} parent=1 // loop_header_branch
      %27 = sbr.rel (%p25) target = $region8
    $region5: #{tpu_custom_call.1} parent=1 // loop_body
      %s29 = ssub.s32 %s24, 1
      %s30 = ssub.s32 %s24, 2
      %s37 = sadd.s32 1, %s32
      %p38 = scmp.ge.s32.totalorder %s37, 1
      %s39 = scalar_select %p38, 0, %s37
      %s40 = sadd.s32 1, %s31
      %s41 = scalar_select %p38, %s40, %s31
      %p42 = scmp.ge.s32.totalorder %s41, 2
      %s43 = scalar_select %p42, 0, %s41
      %s44 = ssub.s32 %s31, %s43
      %p45 = scmp.eq.s32.totalorder %s44, 0
      %s47 = sadd.s32 %s46, 1
      %s48 = scalar_select %p45, %s46, %s47
      %p51 = pneg %p45
      %p52 = scmp.eq.s32.totalorder %s24, 1
      %p53 = por %p51, %p52
      %p54 = scmp.ne.s32.totalorder %s46, %s49
      %p55 = scmp.eq.s32.totalorder %s24, 0
      %p56 = por %p54, %p55
      %p57 = scmp.ne.s32.totalorder %s46, %s49
      %p58 = scmp.eq.s32.totalorder %s29, 1
      %p59 = por %p57, %p58
      %p60 = scmp.ne.s32.totalorder %s49, %s50
      %p61 = scmp.eq.s32.totalorder %s29, 0
      %p62 = por %p60, %p61
      %p63 = scmp.ne.s32.totalorder %s49, %s50
      %p64 = scmp.eq.s32.totalorder %s30, 1
      %p65 = por %p63, %p64
      %p67 = scmp.ne.s32.totalorder %s50, %s66
      %p68 = scmp.eq.s32.totalorder %s30, 0
      %p69 = por %p67, %p68
      %s70 = ssub.s32 %s31, %s43
      %s71 = ssub.s32 %s32, %s39
      %s72 = sor.u32 %s70, %s71
      %p73 = scmp.eq.s32.totalorder %s72, 0
      %s75 = sadd.s32 %s74, 1
      %s76 = scalar_select %p73, %s74, %s75
      %p79 = pneg %p73
      %p80 = scmp.eq.s32.totalorder %s24, 1
      %p81 = por %p79, %p80
      %p82 = scmp.ne.s32.totalorder %s74, %s77
      %p83 = scmp.eq.s32.totalorder %s24, 0
      %p84 = por %p82, %p83
      %p85 = scmp.ne.s32.totalorder %s74, %s77
      %p86 = scmp.eq.s32.totalorder %s29, 1
      %p87 = por %p85, %p86
      %p88 = scmp.ne.s32.totalorder %s77, %s78
      %p89 = scmp.eq.s32.totalorder %s29, 0
      %p90 = por %p88, %p89
      %p91 = scmp.ne.s32.totalorder %s77, %s78
      %p92 = scmp.eq.s32.totalorder %s30, 1
      %p93 = por %p91, %p92
      %p95 = scmp.ne.s32.totalorder %s78, %s94
      %p96 = scmp.eq.s32.totalorder %s30, 0
      %p97 = por %p95, %p96
      %s99 = sadd.s32 %s98, 1
      %p102 = scmp.eq.s32.totalorder %s24, 1
      %p103 = scmp.ne.s32.totalorder %s98, %s100
      %p104 = scmp.eq.s32.totalorder %s24, 0
      %p105 = por %p103, %p104
      %p106 = scmp.ne.s32.totalorder %s98, %s100
      %p107 = scmp.eq.s32.totalorder %s29, 1
      %p108 = por %p106, %p107
      %p109 = scmp.ne.s32.totalorder %s100, %s101
      %p110 = scmp.eq.s32.totalorder %s29, 0
      %p111 = por %p109, %p110
      %p112 = scmp.ne.s32.totalorder %s100, %s101
      %p113 = scmp.eq.s32.totalorder %s30, 1
      %p114 = por %p112, %p113
      %p116 = scmp.ne.s32.totalorder %s101, %s115
      %p117 = scmp.eq.s32.totalorder %s30, 0
      %p118 = por %p116, %p117
      %s120 = sadd.s32 %s119, 1
      %p123 = scmp.eq.s32.totalorder %s24, 1
      %p124 = scmp.ne.s32.totalorder %s119, %s121
      %p125 = scmp.eq.s32.totalorder %s24, 0
      %p126 = por %p124, %p125
      %p127 = scmp.ne.s32.totalorder %s119, %s121
      %p128 = scmp.eq.s32.totalorder %s29, 1
      %p129 = por %p127, %p128
      %p130 = scmp.ne.s32.totalorder %s121, %s122
      %p131 = scmp.eq.s32.totalorder %s29, 0
      %p132 = por %p130, %p131
      %p133 = scmp.ne.s32.totalorder %s121, %s122
      %p134 = scmp.eq.s32.totalorder %s30, 1
      %p135 = por %p133, %p134
      %p137 = scmp.ne.s32.totalorder %s122, %s136
      %p138 = scmp.eq.s32.totalorder %s30, 0
      %p139 = por %p137, %p138
      %s141 = sadd.s32 %s140, 1
      %p144 = scmp.eq.s32.totalorder %s24, 1
      %p145 = scmp.ne.s32.totalorder %s140, %s142
      %p146 = scmp.eq.s32.totalorder %s24, 0
      %p147 = por %p145, %p146
      %p148 = scmp.ne.s32.totalorder %s140, %s142
      %p149 = scmp.eq.s32.totalorder %s29, 1
      %p150 = por %p148, %p149
      %p151 = scmp.ne.s32.totalorder %s142, %s143
      %p152 = scmp.eq.s32.totalorder %s29, 0
      %p153 = por %p151, %p152
      %p154 = scmp.ne.s32.totalorder %s142, %s143
      %p155 = scmp.eq.s32.totalorder %s30, 1
      %p156 = por %p154, %p155
      %p158 = scmp.ne.s32.totalorder %s143, %s157
      %p159 = scmp.eq.s32.totalorder %s30, 0
      %p160 = por %p158, %p159
      %s162 = sadd.s32 %s161, 1
      %p165 = scmp.eq.s32.totalorder %s24, 1
      %p166 = scmp.ne.s32.totalorder %s161, %s163
      %p167 = scmp.eq.s32.totalorder %s24, 0
      %p168 = por %p166, %p167
      %p169 = scmp.ne.s32.totalorder %s161, %s163
      %p170 = scmp.eq.s32.totalorder %s29, 1
      %p171 = por %p169, %p170
      %p172 = scmp.ne.s32.totalorder %s163, %s164
      %p173 = scmp.eq.s32.totalorder %s29, 0
      %p174 = por %p172, %p173
      %p175 = scmp.ne.s32.totalorder %s163, %s164
      %p176 = scmp.eq.s32.totalorder %s30, 1
      %p177 = por %p175, %p176
      %p179 = scmp.ne.s32.totalorder %s164, %s178
      %p180 = scmp.eq.s32.totalorder %s30, 0
      %p181 = por %p179, %p180
      %s183 = sadd.s32 %s182, 1
      %p186 = scmp.eq.s32.totalorder %s24, 1
      %p187 = scmp.ne.s32.totalorder %s182, %s184
      %p188 = scmp.eq.s32.totalorder %s24, 0
      %p189 = por %p187, %p188
      %p190 = scmp.ne.s32.totalorder %s182, %s184
      %p191 = scmp.eq.s32.totalorder %s29, 1
      %p192 = por %p190, %p191
      %p193 = scmp.ne.s32.totalorder %s184, %s185
      %p194 = scmp.eq.s32.totalorder %s29, 0
      %p195 = por %p193, %p194
      %p196 = scmp.ne.s32.totalorder %s184, %s185
      %p197 = scmp.eq.s32.totalorder %s30, 1
      %p198 = por %p196, %p197
      %p200 = scmp.ne.s32.totalorder %s185, %s199
      %p201 = scmp.eq.s32.totalorder %s30, 0
      %p202 = por %p200, %p201
      %s204 = sadd.s32 %s203, 1
      %p207 = scmp.eq.s32.totalorder %s24, 1
      %p208 = scmp.ne.s32.totalorder %s203, %s205
      %p209 = scmp.eq.s32.totalorder %s24, 0
      %p210 = por %p208, %p209
      %p211 = scmp.ne.s32.totalorder %s203, %s205
      %p212 = scmp.eq.s32.totalorder %s29, 1
      %p213 = por %p211, %p212
      %p214 = scmp.ne.s32.totalorder %s205, %s206
      %p215 = scmp.eq.s32.totalorder %s29, 0
      %p216 = por %p214, %p215
      %p217 = scmp.ne.s32.totalorder %s205, %s206
      %p218 = scmp.eq.s32.totalorder %s30, 1
      %p219 = por %p217, %p218
      %p221 = scmp.ne.s32.totalorder %s206, %s220
      %p222 = scmp.eq.s32.totalorder %s30, 0
      %p223 = por %p221, %p222
      %s224 = ssub.s32 %s31, %s43
      %s225 = ssub.s32 %s32, %s39
      %s226 = sor.u32 %s224, %s225
      %p227 = scmp.eq.s32.totalorder %s226, 0
      %s229 = sadd.s32 %s228, 1
      %s230 = scalar_select %p227, %s228, %s229
      %p233 = pneg %p227
      %p234 = scmp.eq.s32.totalorder %s24, 1
      %p235 = por %p233, %p234
      %p236 = scmp.ne.s32.totalorder %s228, %s231
      %p237 = scmp.eq.s32.totalorder %s24, 0
      %p238 = por %p236, %p237
      %p239 = scmp.ne.s32.totalorder %s228, %s231
      %p240 = scmp.eq.s32.totalorder %s29, 1
      %p241 = por %p239, %p240
      %p242 = scmp.ne.s32.totalorder %s231, %s232
      %p243 = scmp.eq.s32.totalorder %s29, 0
      %p244 = por %p242, %p243
      %p245 = scmp.ne.s32.totalorder %s231, %s232
      %p246 = scmp.eq.s32.totalorder %s30, 1
      %p247 = por %p245, %p246
      %p249 = scmp.ne.s32.totalorder %s232, %s248
      %p250 = scmp.eq.s32.totalorder %s30, 0
      %p251 = por %p249, %p250
      %p252 = scmp.le.s32.totalorder 1, %s24
      %p253 = scmp.lt.s32.totalorder %s24, 3
      %p254 = pnand %p252, %p253
      %p255 = pneg %p254
      // Predicated region
      $region9: #{tpu_custom_call.1} parent=5 // pred_check
        _
      $region10: #{tpu_custom_call.1} parent=5 // pred_check_branch
        %257 = sbr.rel (%p254) target = $region12
      $region11: #{tpu_custom_call.1} parent=5 // pred_region
        %s258 = ssub.s32 %s24, 1
        // Predicated region
        $region13: #{tpu_custom_call.1} parent=11 // pred_check
          %p259 = pneg %p111
        $region14: #{tpu_custom_call.1} parent=11 // pred_check_branch
          %261 = sbr.rel (%p259) target = $region16
        $region15: #{tpu_custom_call.1} parent=11 // pred_region
          _
        $region16: #{tpu_custom_call.1} parent=11 // pred_fallthru
          _
        // Predicated region
        $region17: #{tpu_custom_call.1} parent=11 // pred_check
          %p262 = pneg %p132
        $region18: #{tpu_custom_call.1} parent=11 // pred_check_branch
          %264 = sbr.rel (%p262) target = $region20
        $region19: #{tpu_custom_call.1} parent=11 // pred_region
          %s266 = ssub.s32 16, 16
          %267 = vsyncadd [#allocation9], %s266
          %s269 = sshll.u32 [#allocation10], 4
          %s270 = int_to_ptr.vmem [resolvable:$true] %s269
          %272 = dma.hbm_to_vmem [thread:$0]  %s3, 16, %s270, [#allocation9]
        $region20: #{tpu_custom_call.1} parent=11 // pred_fallthru
          _
        // Predicated region
        $region21: #{tpu_custom_call.1} parent=11 // pred_check
          %p273 = pneg %p153
        $region22: #{tpu_custom_call.1} parent=11 // pred_check_branch
          %275 = sbr.rel (%p273) target = $region24
        $region23: #{tpu_custom_call.1} parent=11 // pred_region
          _
        $region24: #{tpu_custom_call.1} parent=11 // pred_fallthru
          _
        // Predicated region
        $region25: #{tpu_custom_call.1} parent=11 // pred_check
          %p276 = pneg %p174
        $region26: #{tpu_custom_call.1} parent=11 // pred_check_branch
          %278 = sbr.rel (%p276) target = $region28
        $region27: #{tpu_custom_call.1} parent=11 // pred_region
          _
        $region28: #{tpu_custom_call.1} parent=11 // pred_fallthru
          _
        // Predicated region
        $region29: #{tpu_custom_call.1} parent=11 // pred_check
          %p279 = pneg %p195
        $region30: #{tpu_custom_call.1} parent=11 // pred_check_branch
          %281 = sbr.rel (%p279) target = $region32
        $region31: #{tpu_custom_call.1} parent=11 // pred_region
          _
        $region32: #{tpu_custom_call.1} parent=11 // pred_fallthru
          _
        // Predicated region
        $region33: #{tpu_custom_call.1} parent=11 // pred_check
          %p282 = pneg %p216
        $region34: #{tpu_custom_call.1} parent=11 // pred_check_branch
          %284 = sbr.rel (%p282) target = $region36
        $region35: #{tpu_custom_call.1} parent=11 // pred_region
          _
        $region36: #{tpu_custom_call.1} parent=11 // pred_fallthru
          _
      $region12: #{tpu_custom_call.1} parent=5 // pred_fallthru
        _
      %p285 = scmp.lt.s32.totalorder %s24, 2
      // Predicated region
      $region37: #{tpu_custom_call.1} parent=5 // pred_check
        %p286 = pneg %p285
      $region38: #{tpu_custom_call.1} parent=5 // pred_check_branch
        %288 = sbr.rel (%p286) target = $region40
      $region39: #{tpu_custom_call.1} parent=5 // pred_region
        // Predicated region
        $region41: #{tpu_custom_call.1} parent=39 // pred_check
          %p289 = pneg %p56
        $region42: #{tpu_custom_call.1} parent=39 // pred_check_branch
          %291 = sbr.rel (%p289) target = $region44
        $region43: #{tpu_custom_call.1} parent=39 // pred_region
          %s292 = sand.u32 %s46, 1
          %s293 = scalar_lea.sflag [#allocation6], %s292
          %s294 = sand.u32 %s46, 1
          %s295 = smul.addr %s294, 128
          %s296 = scalar_lea.vmem [#allocation5], %s295
          %s298 = ssub.s32 2048, 2048
          %299 = vsyncadd %s293, %s298
          %s300 = smul.addr %s31, 16
          %s301 = smul.addr %s300, 128
          %s302 = scalar_lea.hbm %s0, %s301
          %s303 = sshll.u32 %s296, 4
          %s304 = int_to_ptr.vmem [resolvable:$true] %s303
          %309 = dma.hbm_to_vmem [thread:$0]  %s302, 2048, %s304, %s293, 128, 128, 8
        $region44: #{tpu_custom_call.1} parent=39 // pred_fallthru
          _
        // Predicated region
        $region45: #{tpu_custom_call.1} parent=39 // pred_check
          %p310 = pneg %p84
        $region46: #{tpu_custom_call.1} parent=39 // pred_check_branch
          %312 = sbr.rel (%p310) target = $region48
        $region47: #{tpu_custom_call.1} parent=39 // pred_region
          %s313 = sand.u32 %s24, 1
          %s314 = scalar_lea.sflag [#allocation9], %s313
          %s315 = sand.u32 %s74, 1
          %s316 = smul.addr %s315, 128
          %s317 = scalar_lea.vmem [#allocation8], %s316
          %s318 = smul.u32 2, %s32
          %s320 = ssub.s32 2048, 2048
          %321 = vsyncadd %s314, %s320
          %s322 = smul.addr %s31, 16
          %s323 = sadd.s32 %s318, %s322
          %s324 = smul.addr %s323, 128
          %s325 = scalar_lea.hbm %s1, %s324
          %s326 = sshll.u32 %s317, 4
          %s327 = int_to_ptr.vmem [resolvable:$true] %s326
          %332 = dma.hbm_to_vmem [thread:$0]  %s325, 2048, %s327, %s314, 128, 128, 8
        $region48: #{tpu_custom_call.1} parent=39 // pred_fallthru
          _
      $region40: #{tpu_custom_call.1} parent=5 // pred_fallthru
        _
      %p333 = scmp.le.s32.totalorder 1, %s24
      %p334 = scmp.lt.s32.totalorder %s24, 3
      %p335 = pnand %p333, %p334
      %p336 = pneg %p335
      // Predicated region
      $region49: #{tpu_custom_call.1} parent=5 // pred_check
        _
      $region50: #{tpu_custom_call.1} parent=5 // pred_check_branch
        %338 = sbr.rel (%p335) target = $region52
      $region51: #{tpu_custom_call.1} parent=5 // pred_region
        %s339 = ssub.s32 %s24, 1
        %s340 = sand.u32 %s49, 1
        %s341 = scalar_lea.sflag [#allocation6], %s340
        %s342 = sand.u32 %s49, 1
        %s343 = smul.addr %s342, 128
        %s344 = scalar_lea.vmem [#allocation5], %s343
        // Predicated region
        $region53: #{tpu_custom_call.1} parent=51 // pred_check
          %p345 = pneg %p62
        $region54: #{tpu_custom_call.1} parent=51 // pred_check_branch
          %347 = sbr.rel (%p345) target = $region56
        $region55: #{tpu_custom_call.1} parent=51 // pred_region
          %348 = dma.done %s341, 2048
        $region56: #{tpu_custom_call.1} parent=51 // pred_fallthru
          _
        %s349 = sand.u32 %s29, 1
        %s350 = scalar_lea.sflag [#allocation9], %s349
        %s351 = sand.u32 %s77, 1
        %s352 = smul.addr %s351, 128
        %s353 = scalar_lea.vmem [#allocation8], %s352
        // Predicated region
        $region57: #{tpu_custom_call.1} parent=51 // pred_check
          %p354 = pneg %p90
        $region58: #{tpu_custom_call.1} parent=51 // pred_check_branch
          %356 = sbr.rel (%p354) target = $region60
        $region59: #{tpu_custom_call.1} parent=51 // pred_region
          %357 = dma.done %s350, 2048
        $region60: #{tpu_custom_call.1} parent=51 // pred_fallthru
          _
        // Predicated region
        $region61: #{tpu_custom_call.1} parent=51 // pred_check
          %p358 = pneg %p132
        $region62: #{tpu_custom_call.1} parent=51 // pred_check_branch
          %360 = sbr.rel (%p358) target = $region64
        $region63: #{tpu_custom_call.1} parent=51 // pred_region
          %361 = dma.done [#allocation9], 16
        $region64: #{tpu_custom_call.1} parent=51 // pred_fallthru
          _
        %s362 = sand.u32 %s49, 1
        %s363 = scalar_lea.sflag [#allocation6], %s362
        %s364 = sand.u32 %s49, 1
        %s365 = smul.addr %s364, 128
        %s366 = scalar_lea.vmem [#allocation5], %s365
        %p367 = pneg %p62
        %p368 = pneg %p59
        %s369 = sand.u32 %s29, 1
        %s370 = scalar_lea.sflag [#allocation9], %s369
        %s371 = sand.u32 %s77, 1
        %s372 = smul.addr %s371, 128
        %s373 = scalar_lea.vmem [#allocation8], %s372
        %p374 = pneg %p90
        %p375 = pneg %p87
        %p376 = pneg %p111
        %p377 = pneg %p108
        %p378 = pneg %p132
        %p379 = pneg %p129
        %p380 = pneg %p153
        %p381 = pneg %p150
        %p382 = pneg %p174
        %p383 = pneg %p171
        %p384 = pneg %p195
        %p385 = pneg %p192
        %p386 = pneg %p216
        %p387 = pneg %p213
        %p388 = pneg %p244
        %p389 = pneg %p241
        %s390 = sand.u32 %s231, 1
        %s391 = scalar_lea.sflag [#allocation7], %s390
        %s392 = sand.u32 %s231, 1
        %s393 = smul.addr %s392, 16
        %s394 = scalar_lea.vmem [#allocation11], %s393
        %s395 = smul.u32 2, %s34
        %s396 = smul.u32 2, %s34
        %p398 = scmp.eq.s32.totalorder %s34, 0
        // Predicated region
        $region65: #{tpu_custom_call.1} parent=51 // pred_check
          %p399 = pneg %p398
        $region66: #{tpu_custom_call.1} parent=51 // pred_check_branch
          %401 = sbr.rel (%p399) target = $region68
        $region67: #{tpu_custom_call.1} parent=51 // pred_region
          %v402 = vld [vmem:[%s344] sm:$0xff]
          %v403 = vld [vmem:[%s344 + $0x8] sm:$0xff]
          %v404 = vld [vmem:[%s344 + $0x10] sm:$0xff]
          %v405 = vld [vmem:[%s344 + $0x18] sm:$0xff]
          %v406 = vld [vmem:[%s344 + $0x20] sm:$0xff]
          %v407 = vld [vmem:[%s344 + $0x28] sm:$0xff]
          %v408 = vld [vmem:[%s344 + $0x30] sm:$0xff]
          %v409 = vld [vmem:[%s344 + $0x38] sm:$0xff]
          %v410 = vld [vmem:[%s344 + $0x40] sm:$0xff]
          %v411 = vld [vmem:[%s344 + $0x48] sm:$0xff]
          %v412 = vld [vmem:[%s344 + $0x50] sm:$0xff]
          %v413 = vld [vmem:[%s344 + $0x58] sm:$0xff]
          %v414 = vld [vmem:[%s344 + $0x60] sm:$0xff]
          %v415 = vld [vmem:[%s344 + $0x68] sm:$0xff]
          %v416 = vld [vmem:[%s344 + $0x70] sm:$0xff]
          %v417 = vld [vmem:[%s344 + $0x78] sm:$0xff]
          %v418 = vpack.c.bf16 %v403, %v402
          %v419 = vpack.c.bf16 %v405, %v404
          %v420 = vpack.c.bf16 %v407, %v406
          %v421 = vpack.c.bf16 %v409, %v408
          %v422 = vpack.c.bf16 %v411, %v410
          %v423 = vpack.c.bf16 %v413, %v412
          %v424 = vpack.c.bf16 %v415, %v414
          %v425 = vpack.c.bf16 %v417, %v416
          %v426 = vld [vmem:[%s4] sm:$0xf]
          %v427 = vld [vmem:[%s4 + $0x4] sm:$0xf]
          %v428 = vld [vmem:[%s5] sm:$0x1]
          %v430 = vlaneseq
          %v431 = vshrl.u32 %v430, 7
          %v432 = vsub.s32 0, %v431
          %v433 = vrot.slane %v428, %v432
          %v437 = vunpack.c.l.b16 %v426
          %v438 = vunpack.c.l.b16 %v427
          %v439 = vpack.c.b16 %v438, %v437
          %vm441 = vcmask 130048
          %v443 = vsel %vm441, %v418, 0
          %v446 = vsel %vm441, %v419, 0
          %v449 = vsel %vm441, %v420, 0
          %v452 = vsel %vm441, %v421, 0
          %v455 = vsel %vm441, %v422, 0
          %v458 = vsel %vm441, %v423, 0
          %v461 = vsel %vm441, %v424, 0
          %v464 = vsel %vm441, %v425, 0
          %466 = vmatprep.subr.bf16.mxu0 0
          %467 = vmatpush1.bf16.msra.mxu0 0
          %468 = vmatprep.subr.bf16.mxu0 0
          %469 = vmatpush1.bf16.msra.mxu0 0
          %470 = vmatprep.subr.bf16.mxu0 0
          %471 = vmatpush1.bf16.msra.mxu0 0
          %472 = vmatprep.subr.bf16.mxu0 0
          %473 = vmatpush1.bf16.msra.mxu0 0
          %474 = vmatprep.subr.bf16.mxu0 0
          %475 = vmatpush1.bf16.msra.mxu0 0
          %476 = vmatprep.subr.bf16.mxu0 0
          %477 = vmatpush1.bf16.msra.mxu0 0
          %478 = vmatprep.subr.bf16.mxu0 0
          %479 = vmatpush1.bf16.msra.mxu0 0
          %480 = vmatprep.subr.bf16.mxu0 0
          %481 = vmatpush1.bf16.msra.mxu0 %v439
          %482 = vmatprep.subr.bf16.mxu0 0
          %483 = vmatpush2.bf16.msra.mxu0 0
          %484 = vmatprep.subr.bf16.mxu0 0
          %485 = vmatpush2.bf16.msra.mxu0 0
          %486 = vmatprep.subr.bf16.mxu0 0
          %487 = vmatpush2.bf16.msra.mxu0 0
          %488 = vmatprep.subr.bf16.mxu0 0
          %489 = vmatpush2.bf16.msra.mxu0 0
          %490 = vmatprep.subr.bf16.mxu0 0
          %491 = vmatpush2.bf16.msra.mxu0 0
          %492 = vmatprep.subr.bf16.mxu0 0
          %493 = vmatpush2.bf16.msra.mxu0 0
          %494 = vmatprep.subr.bf16.mxu0 0
          %495 = vmatpush2.bf16.msra.mxu0 0
          %496 = vmatprep.subr.bf16.mxu0 0
          %497 = vmatpush2.bf16.msra.mxu0 0
          %498 = vmatprep.mubr.bf16.mxu0 0
          %499 = vmatmul.mubr.bf16.gmra.mxu0 %v443
          %v500 = vpop.f32.mrf.mxu0
          %v501 = vadd.f32 %v433, %v500
          %v502 = vpop.f32.mrf.mxu0
          %v503 = vpop.f32.mrf.mxu0
          %v504 = vadd.f32 %v433, %v503
          %v505 = vpop.f32.mrf.mxu0
          %506 = vmatprep.mubr.bf16.mxu0 0
          %507 = vmatmul.mubr.bf16.gmra.mxu0 %v446
          %v508 = vpop.f32.mrf.mxu0
          %v509 = vadd.f32 %v433, %v508
          %v510 = vpop.f32.mrf.mxu0
          %v511 = vpop.f32.mrf.mxu0
          %v512 = vadd.f32 %v433, %v511
          %v513 = vpop.f32.mrf.mxu0
          %514 = vmatprep.mubr.bf16.mxu0 0
          %515 = vmatmul.mubr.bf16.gmra.mxu0 %v449
          %v516 = vpop.f32.mrf.mxu0
          %v517 = vadd.f32 %v433, %v516
          %v518 = vpop.f32.mrf.mxu0
          %v519 = vpop.f32.mrf.mxu0
          %v520 = vadd.f32 %v433, %v519
          %v521 = vpop.f32.mrf.mxu0
          %522 = vmatprep.mubr.bf16.mxu0 0
          %523 = vmatmul.mubr.bf16.gmra.mxu0 %v452
          %v524 = vpop.f32.mrf.mxu0
          %v525 = vadd.f32 %v433, %v524
          %v526 = vpop.f32.mrf.mxu0
          %v527 = vpop.f32.mrf.mxu0
          %v528 = vadd.f32 %v433, %v527
          %v529 = vpop.f32.mrf.mxu0
          %530 = vmatprep.mubr.bf16.mxu0 0
          %531 = vmatmul.mubr.bf16.gmra.mxu0 %v455
          %v532 = vpop.f32.mrf.mxu0
          %v533 = vadd.f32 %v433, %v532
          %v534 = vpop.f32.mrf.mxu0
          %v535 = vpop.f32.mrf.mxu0
          %v536 = vadd.f32 %v433, %v535
          %v537 = vpop.f32.mrf.mxu0
          %538 = vmatprep.mubr.bf16.mxu0 0
          %539 = vmatmul.mubr.bf16.gmra.mxu0 %v458
          %v540 = vpop.f32.mrf.mxu0
          %v541 = vadd.f32 %v433, %v540
          %v542 = vpop.f32.mrf.mxu0
          %v543 = vpop.f32.mrf.mxu0
          %v544 = vadd.f32 %v433, %v543
          %v545 = vpop.f32.mrf.mxu0
          %546 = vmatprep.mubr.bf16.mxu0 0
          %547 = vmatmul.mubr.bf16.gmra.mxu0 %v461
          %v548 = vpop.f32.mrf.mxu0
          %v549 = vadd.f32 %v433, %v548
          %v550 = vpop.f32.mrf.mxu0
          %v551 = vpop.f32.mrf.mxu0
          %v552 = vadd.f32 %v433, %v551
          %v553 = vpop.f32.mrf.mxu0
          %554 = vmatprep.mubr.bf16.mxu0 0
          %555 = vmatmul.mubr.bf16.gmra.mxu0 %v464
          %v556 = vpop.f32.mrf.mxu0
          %v557 = vadd.f32 %v433, %v556
          %v558 = vpop.f32.mrf.mxu0
          %v559 = vpop.f32.mrf.mxu0
          %v560 = vadd.f32 %v433, %v559
          %v561 = vpop.f32.mrf.mxu0
          %562 = vdwg.mxu0
          %v563 = vpack.c.bf16 %v504, %v501
          %v564 = vpack.c.bf16 %v512, %v509
          %v565 = vpack.c.bf16 %v520, %v517
          %v566 = vpack.c.bf16 %v528, %v525
          %v567 = vpack.c.bf16 %v536, %v533
          %v568 = vpack.c.bf16 %v544, %v541
          %v569 = vpack.c.bf16 %v552, %v549
          %v570 = vpack.c.bf16 %v560, %v557
          %v579 = vunpack.c.l.b16 %v563
          %v580 = vunpack.c.h.b16 %v563
          %v581 = vunpack.c.l.b16 %v564
          %v582 = vunpack.c.h.b16 %v564
          %v583 = vunpack.c.l.b16 %v565
          %v584 = vunpack.c.h.b16 %v565
          %v585 = vunpack.c.l.b16 %v566
          %v586 = vunpack.c.h.b16 %v566
          %v587 = vunpack.c.l.b16 %v567
          %v588 = vunpack.c.h.b16 %v567
          %v589 = vunpack.c.l.b16 %v568
          %v590 = vunpack.c.h.b16 %v568
          %v591 = vunpack.c.l.b16 %v569
          %v592 = vunpack.c.h.b16 %v569
          %v593 = vunpack.c.l.b16 %v570
          %v594 = vunpack.c.h.b16 %v570
          %v595 = vpack.c.b16 %v579, %v579
          %v596 = vpack.c.b16 %v580, %v580
          %v597 = vpack.c.b16 %v581, %v581
          %v598 = vpack.c.b16 %v582, %v582
          %v599 = vpack.c.b16 %v583, %v583
          %v600 = vpack.c.b16 %v584, %v584
          %v601 = vpack.c.b16 %v585, %v585
          %v602 = vpack.c.b16 %v586, %v586
          %v603 = vpack.c.b16 %v587, %v587
          %v604 = vpack.c.b16 %v588, %v588
          %v605 = vpack.c.b16 %v589, %v589
          %v606 = vpack.c.b16 %v590, %v590
          %v607 = vpack.c.b16 %v591, %v591
          %v608 = vpack.c.b16 %v592, %v592
          %v609 = vpack.c.b16 %v593, %v593
          %v610 = vpack.c.b16 %v594, %v594
          %vm627 = vcmask 125952
          %628 = vst.msk [vmem:[#allocation3] sm:$0xf] %vm627, %v595
          %629 = vst.msk [vmem:[#allocation3 + $0x4] sm:$0xf] %vm627, %v596
          %630 = vst.msk [vmem:[#allocation3 + $0x8] sm:$0xf] %vm627, %v597
          %631 = vst.msk [vmem:[#allocation3 + $0xc] sm:$0xf] %vm627, %v598
          %632 = vst.msk [vmem:[#allocation3 + $0x10] sm:$0xf] %vm627, %v599
          %633 = vst.msk [vmem:[#allocation3 + $0x14] sm:$0xf] %vm627, %v600
          %634 = vst.msk [vmem:[#allocation3 + $0x18] sm:$0xf] %vm627, %v601
          %635 = vst.msk [vmem:[#allocation3 + $0x1c] sm:$0xf] %vm627, %v602
          %636 = vst.msk [vmem:[#allocation3 + $0x20] sm:$0xf] %vm627, %v603
          %637 = vst.msk [vmem:[#allocation3 + $0x24] sm:$0xf] %vm627, %v604
          %638 = vst.msk [vmem:[#allocation3 + $0x28] sm:$0xf] %vm627, %v605
          %639 = vst.msk [vmem:[#allocation3 + $0x2c] sm:$0xf] %vm627, %v606
          %640 = vst.msk [vmem:[#allocation3 + $0x30] sm:$0xf] %vm627, %v607
          %641 = vst.msk [vmem:[#allocation3 + $0x34] sm:$0xf] %vm627, %v608
          %642 = vst.msk [vmem:[#allocation3 + $0x38] sm:$0xf] %vm627, %v609
          %643 = vst.msk [vmem:[#allocation3 + $0x3c] sm:$0xf] %vm627, %v610
          %644 = vrot.lane.b32.xlu0 %v595, 112
          %v645 = vpop.permute.xlu0 %644
          %646 = vrot.lane.b32.xlu0 %v596, 112
          %v647 = vpop.permute.xlu0 %646
          %648 = vrot.lane.b32.xlu0 %v597, 112
          %v649 = vpop.permute.xlu0 %648
          %650 = vrot.lane.b32.xlu0 %v598, 112
          %v651 = vpop.permute.xlu0 %650
          %652 = vrot.lane.b32.xlu0 %v599, 112
          %v653 = vpop.permute.xlu0 %652
          %654 = vrot.lane.b32.xlu0 %v600, 112
          %v655 = vpop.permute.xlu0 %654
          %656 = vrot.lane.b32.xlu0 %v601, 112
          %v657 = vpop.permute.xlu0 %656
          %658 = vrot.lane.b32.xlu0 %v602, 112
          %v659 = vpop.permute.xlu0 %658
          %660 = vrot.lane.b32.xlu0 %v603, 112
          %v661 = vpop.permute.xlu0 %660
          %662 = vrot.lane.b32.xlu0 %v604, 112
          %v663 = vpop.permute.xlu0 %662
          %664 = vrot.lane.b32.xlu0 %v605, 112
          %v665 = vpop.permute.xlu0 %664
          %666 = vrot.lane.b32.xlu0 %v606, 112
          %v667 = vpop.permute.xlu0 %666
          %668 = vrot.lane.b32.xlu0 %v607, 112
          %v669 = vpop.permute.xlu0 %668
          %670 = vrot.lane.b32.xlu0 %v608, 112
          %v671 = vpop.permute.xlu0 %670
          %672 = vrot.lane.b32.xlu0 %v609, 112
          %v673 = vpop.permute.xlu0 %672
          %674 = vrot.lane.b32.xlu0 %v610, 112
          %v675 = vpop.permute.xlu0 %674
          %vm692 = vcmask 11264
          %693 = vst.msk [vmem:[#allocation2] sm:$0xf] %vm692, %v645
          %694 = vst.msk [vmem:[#allocation2 + $0x4] sm:$0xf] %vm692, %v647
          %695 = vst.msk [vmem:[#allocation2 + $0x8] sm:$0xf] %vm692, %v649
          %696 = vst.msk [vmem:[#allocation2 + $0xc] sm:$0xf] %vm692, %v651
          %697 = vst.msk [vmem:[#allocation2 + $0x10] sm:$0xf] %vm692, %v653
          %698 = vst.msk [vmem:[#allocation2 + $0x14] sm:$0xf] %vm692, %v655
          %699 = vst.msk [vmem:[#allocation2 + $0x18] sm:$0xf] %vm692, %v657
          %700 = vst.msk [vmem:[#allocation2 + $0x1c] sm:$0xf] %vm692, %v659
          %701 = vst.msk [vmem:[#allocation2 + $0x20] sm:$0xf] %vm692, %v661
          %702 = vst.msk [vmem:[#allocation2 + $0x24] sm:$0xf] %vm692, %v663
          %703 = vst.msk [vmem:[#allocation2 + $0x28] sm:$0xf] %vm692, %v665
          %704 = vst.msk [vmem:[#allocation2 + $0x2c] sm:$0xf] %vm692, %v667
          %705 = vst.msk [vmem:[#allocation2 + $0x30] sm:$0xf] %vm692, %v669
          %706 = vst.msk [vmem:[#allocation2 + $0x34] sm:$0xf] %vm692, %v671
          %707 = vst.msk [vmem:[#allocation2 + $0x38] sm:$0xf] %vm692, %v673
          %708 = vst.msk [vmem:[#allocation2 + $0x3c] sm:$0xf] %vm692, %v675
        $region68: #{tpu_custom_call.1} parent=51 // pred_fallthru
          _
        %v709 = vld [vmem:[%s353] sm:$0xff]
        %v710 = vld [vmem:[%s353 + $0x8] sm:$0xff]
        %v711 = vld [vmem:[%s353 + $0x10] sm:$0xff]
        %v712 = vld [vmem:[%s353 + $0x18] sm:$0xff]
        %v713 = vld [vmem:[%s353 + $0x20] sm:$0xff]
        %v714 = vld [vmem:[%s353 + $0x28] sm:$0xff]
        %v715 = vld [vmem:[%s353 + $0x30] sm:$0xff]
        %v716 = vld [vmem:[%s353 + $0x38] sm:$0xff]
        %v717 = vld [vmem:[%s353 + $0x40] sm:$0xff]
        %v718 = vld [vmem:[%s353 + $0x48] sm:$0xff]
        %v719 = vld [vmem:[%s353 + $0x50] sm:$0xff]
        %v720 = vld [vmem:[%s353 + $0x58] sm:$0xff]
        %v721 = vld [vmem:[%s353 + $0x60] sm:$0xff]
        %v722 = vld [vmem:[%s353 + $0x68] sm:$0xff]
        %v723 = vld [vmem:[%s353 + $0x70] sm:$0xff]
        %v724 = vld [vmem:[%s353 + $0x78] sm:$0xff]
        %v725 = vpack.c.bf16 %v710, %v709
        %v726 = vpack.c.bf16 %v712, %v711
        %v727 = vpack.c.bf16 %v714, %v713
        %v728 = vpack.c.bf16 %v716, %v715
        %v729 = vpack.c.bf16 %v718, %v717
        %v730 = vpack.c.bf16 %v720, %v719
        %v731 = vpack.c.bf16 %v722, %v721
        %v732 = vpack.c.bf16 %v724, %v723
        %v733 = vld [vmem:[%s2] sm:$0xf]
        %v734 = vld [vmem:[%s2 + $0x4] sm:$0xf]
        %v735 = vld [vmem:[#allocation10] sm:$0x1]
        %v737 = vlaneseq
        %v738 = vshrl.u32 %v737, 7
        %v739 = vsub.s32 0, %v738
        %v740 = vrot.slane %v735, %v739
        %v744 = vunpack.c.l.b16 %v733
        %v745 = vunpack.c.l.b16 %v734
        %v746 = vpack.c.b16 %v745, %v744
        %vm748 = vcmask 130048
        %v750 = vsel %vm748, %v725, 0
        %v753 = vsel %vm748, %v726, 0
        %v756 = vsel %vm748, %v727, 0
        %v759 = vsel %vm748, %v728, 0
        %v762 = vsel %vm748, %v729, 0
        %v765 = vsel %vm748, %v730, 0
        %v768 = vsel %vm748, %v731, 0
        %v771 = vsel %vm748, %v732, 0
        %773 = vmatprep.subr.bf16.mxu0 0
        %774 = vmatpush1.bf16.msra.mxu0 0
        %775 = vmatprep.subr.bf16.mxu0 0
        %776 = vmatpush1.bf16.msra.mxu0 0
        %777 = vmatprep.subr.bf16.mxu0 0
        %778 = vmatpush1.bf16.msra.mxu0 0
        %779 = vmatprep.subr.bf16.mxu0 0
        %780 = vmatpush1.bf16.msra.mxu0 0
        %781 = vmatprep.subr.bf16.mxu0 0
        %782 = vmatpush1.bf16.msra.mxu0 0
        %783 = vmatprep.subr.bf16.mxu0 0
        %784 = vmatpush1.bf16.msra.mxu0 0
        %785 = vmatprep.subr.bf16.mxu0 0
        %786 = vmatpush1.bf16.msra.mxu0 0
        %787 = vmatprep.subr.bf16.mxu0 0
        %788 = vmatpush1.bf16.msra.mxu0 %v746
        %789 = vmatprep.subr.bf16.mxu0 0
        %790 = vmatpush2.bf16.msra.mxu0 0
        %791 = vmatprep.subr.bf16.mxu0 0
        %792 = vmatpush2.bf16.msra.mxu0 0
        %793 = vmatprep.subr.bf16.mxu0 0
        %794 = vmatpush2.bf16.msra.mxu0 0
        %795 = vmatprep.subr.bf16.mxu0 0
        %796 = vmatpush2.bf16.msra.mxu0 0
        %797 = vmatprep.subr.bf16.mxu0 0
        %798 = vmatpush2.bf16.msra.mxu0 0
        %799 = vmatprep.subr.bf16.mxu0 0
        %800 = vmatpush2.bf16.msra.mxu0 0
        %801 = vmatprep.subr.bf16.mxu0 0
        %802 = vmatpush2.bf16.msra.mxu0 0
        %803 = vmatprep.subr.bf16.mxu0 0
        %804 = vmatpush2.bf16.msra.mxu0 0
        %805 = vmatprep.mubr.bf16.mxu0 0
        %806 = vmatmul.mubr.bf16.gmra.mxu0 %v750
        %v807 = vpop.f32.mrf.mxu0
        %v808 = vadd.f32 %v740, %v807
        %v809 = vpop.f32.mrf.mxu0
        %v810 = vpop.f32.mrf.mxu0
        %v811 = vadd.f32 %v740, %v810
        %v812 = vpop.f32.mrf.mxu0
        %813 = vmatprep.mubr.bf16.mxu0 0
        %814 = vmatmul.mubr.bf16.gmra.mxu0 %v753
        %v815 = vpop.f32.mrf.mxu0
        %v816 = vadd.f32 %v740, %v815
        %v817 = vpop.f32.mrf.mxu0
        %v818 = vpop.f32.mrf.mxu0
        %v819 = vadd.f32 %v740, %v818
        %v820 = vpop.f32.mrf.mxu0
        %821 = vmatprep.mubr.bf16.mxu0 0
        %822 = vmatmul.mubr.bf16.gmra.mxu0 %v756
        %v823 = vpop.f32.mrf.mxu0
        %v824 = vadd.f32 %v740, %v823
        %v825 = vpop.f32.mrf.mxu0
        %v826 = vpop.f32.mrf.mxu0
        %v827 = vadd.f32 %v740, %v826
        %v828 = vpop.f32.mrf.mxu0
        %829 = vmatprep.mubr.bf16.mxu0 0
        %830 = vmatmul.mubr.bf16.gmra.mxu0 %v759
        %v831 = vpop.f32.mrf.mxu0
        %v832 = vadd.f32 %v740, %v831
        %v833 = vpop.f32.mrf.mxu0
        %v834 = vpop.f32.mrf.mxu0
        %v835 = vadd.f32 %v740, %v834
        %v836 = vpop.f32.mrf.mxu0
        %837 = vmatprep.mubr.bf16.mxu0 0
        %838 = vmatmul.mubr.bf16.gmra.mxu0 %v762
        %v839 = vpop.f32.mrf.mxu0
        %v840 = vadd.f32 %v740, %v839
        %v841 = vpop.f32.mrf.mxu0
        %v842 = vpop.f32.mrf.mxu0
        %v843 = vadd.f32 %v740, %v842
        %v844 = vpop.f32.mrf.mxu0
        %845 = vmatprep.mubr.bf16.mxu0 0
        %846 = vmatmul.mubr.bf16.gmra.mxu0 %v765
        %v847 = vpop.f32.mrf.mxu0
        %v848 = vadd.f32 %v740, %v847
        %v849 = vpop.f32.mrf.mxu0
        %v850 = vpop.f32.mrf.mxu0
        %v851 = vadd.f32 %v740, %v850
        %v852 = vpop.f32.mrf.mxu0
        %853 = vmatprep.mubr.bf16.mxu0 0
        %854 = vmatmul.mubr.bf16.gmra.mxu0 %v768
        %v855 = vpop.f32.mrf.mxu0
        %v856 = vadd.f32 %v740, %v855
        %v857 = vpop.f32.mrf.mxu0
        %v858 = vpop.f32.mrf.mxu0
        %v859 = vadd.f32 %v740, %v858
        %v860 = vpop.f32.mrf.mxu0
        %861 = vmatprep.mubr.bf16.mxu0 0
        %862 = vmatmul.mubr.bf16.gmra.mxu0 %v771
        %v863 = vpop.f32.mrf.mxu0
        %v864 = vadd.f32 %v740, %v863
        %v865 = vpop.f32.mrf.mxu0
        %v866 = vpop.f32.mrf.mxu0
        %v867 = vadd.f32 %v740, %v866
        %v868 = vpop.f32.mrf.mxu0
        %869 = vdwg.mxu0
        %v870 = vpack.c.bf16 %v811, %v808
        %v871 = vpack.c.bf16 %v819, %v816
        %v872 = vpack.c.bf16 %v827, %v824
        %v873 = vpack.c.bf16 %v835, %v832
        %v874 = vpack.c.bf16 %v843, %v840
        %v875 = vpack.c.bf16 %v851, %v848
        %v876 = vpack.c.bf16 %v859, %v856
        %v877 = vpack.c.bf16 %v867, %v864
        %v878 = vcombine.low %v808, %v824
        %v879 = vcombine.high %v808, %v824
        %v881 = vunpack.c.l.s4 1983009808
        %v882 = vunpack.c.0.s8 %v881
        %v883 = vlaneseq
        %v884 = vshrl.u32 %v883, 7
        %v885 = vsub.s32 %v882, %v884
        %v886 = vrot.slane %v878, %v885
        %v888 = vunpack.c.l.s4 1983009808
        %v889 = vunpack.c.0.s8 %v888
        %v890 = vlaneseq
        %v891 = vshrl.u32 %v890, 7
        %v892 = vsub.s32 %v889, %v891
        %v893 = vrot.slane %v879, %v892
        %v894 = vcombine.low %v816, %v832
        %v895 = vcombine.high %v816, %v832
        %v897 = vunpack.c.l.s4 1983009808
        %v898 = vunpack.c.0.s8 %v897
        %v899 = vlaneseq
        %v900 = vshrl.u32 %v899, 7
        %v901 = vsub.s32 %v898, %v900
        %v902 = vrot.slane %v894, %v901
        %v904 = vunpack.c.l.s4 1983009808
        %v905 = vunpack.c.0.s8 %v904
        %v906 = vlaneseq
        %v907 = vshrl.u32 %v906, 7
        %v908 = vsub.s32 %v905, %v907
        %v909 = vrot.slane %v895, %v908
        %v910 = vcombine.low %v840, %v856
        %v911 = vcombine.high %v840, %v856
        %v913 = vunpack.c.l.s4 1983009808
        %v914 = vunpack.c.0.s8 %v913
        %v915 = vlaneseq
        %v916 = vshrl.u32 %v915, 7
        %v917 = vsub.s32 %v914, %v916
        %v918 = vrot.slane %v910, %v917
        %v920 = vunpack.c.l.s4 1983009808
        %v921 = vunpack.c.0.s8 %v920
        %v922 = vlaneseq
        %v923 = vshrl.u32 %v922, 7
        %v924 = vsub.s32 %v921, %v923
        %v925 = vrot.slane %v911, %v924
        %v926 = vcombine.low %v848, %v864
        %v927 = vcombine.high %v848, %v864
        %v929 = vunpack.c.l.s4 1983009808
        %v930 = vunpack.c.0.s8 %v929
        %v931 = vlaneseq
        %v932 = vshrl.u32 %v931, 7
        %v933 = vsub.s32 %v930, %v932
        %v934 = vrot.slane %v926, %v933
        %v936 = vunpack.c.l.s4 1983009808
        %v937 = vunpack.c.0.s8 %v936
        %v938 = vlaneseq
        %v939 = vshrl.u32 %v938, 7
        %v940 = vsub.s32 %v937, %v939
        %v941 = vrot.slane %v927, %v940
        %v942 = vcombine.low %v886, %v902
        %v943 = vcombine.high %v886, %v902
        %v945 = vunpack.c.l.s4 1934713408
        %v946 = vunpack.c.0.s8 %v945
        %v947 = vlaneseq
        %v948 = vshrl.u32 %v947, 7
        %v949 = vsub.s32 %v946, %v948
        %v950 = vrot.slane %v942, %v949
        %v952 = vunpack.c.l.s4 1934713408
        %v953 = vunpack.c.0.s8 %v952
        %v954 = vlaneseq
        %v955 = vshrl.u32 %v954, 7
        %v956 = vsub.s32 %v953, %v955
        %v957 = vrot.slane %v943, %v956
        %v958 = vcombine.low %v893, %v909
        %v959 = vcombine.high %v893, %v909
        %v961 = vunpack.c.l.s4 1934713408
        %v962 = vunpack.c.0.s8 %v961
        %v963 = vlaneseq
        %v964 = vshrl.u32 %v963, 7
        %v965 = vsub.s32 %v962, %v964
        %v966 = vrot.slane %v958, %v965
        %v968 = vunpack.c.l.s4 1934713408
        %v969 = vunpack.c.0.s8 %v968
        %v970 = vlaneseq
        %v971 = vshrl.u32 %v970, 7
        %v972 = vsub.s32 %v969, %v971
        %v973 = vrot.slane %v959, %v972
        %v974 = vcombine.low %v918, %v934
        %v975 = vcombine.high %v918, %v934
        %v977 = vunpack.c.l.s4 1934713408
        %v978 = vunpack.c.0.s8 %v977
        %v979 = vlaneseq
        %v980 = vshrl.u32 %v979, 7
        %v981 = vsub.s32 %v978, %v980
        %v982 = vrot.slane %v974, %v981
        %v984 = vunpack.c.l.s4 1934713408
        %v985 = vunpack.c.0.s8 %v984
        %v986 = vlaneseq
        %v987 = vshrl.u32 %v986, 7
        %v988 = vsub.s32 %v985, %v987
        %v989 = vrot.slane %v975, %v988
        %v990 = vcombine.low %v925, %v941
        %v991 = vcombine.high %v925, %v941
        %v993 = vunpack.c.l.s4 1934713408
        %v994 = vunpack.c.0.s8 %v993
        %v995 = vlaneseq
        %v996 = vshrl.u32 %v995, 7
        %v997 = vsub.s32 %v994, %v996
        %v998 = vrot.slane %v990, %v997
        %v1000 = vunpack.c.l.s4 1934713408
        %v1001 = vunpack.c.0.s8 %v1000
        %v1002 = vlaneseq
        %v1003 = vshrl.u32 %v1002, 7
        %v1004 = vsub.s32 %v1001, %v1003
        %v1005 = vrot.slane %v991, %v1004
        %v1006 = vcombine.low %v950, %v982
        %v1007 = vcombine.high %v950, %v982
        %v1008 = vcombine.low %v957, %v989
        %v1009 = vcombine.high %v957, %v989
        %v1010 = vcombine.low %v966, %v998
        %v1011 = vcombine.high %v966, %v998
        %v1012 = vcombine.low %v973, %v1005
        %v1013 = vcombine.high %v973, %v1005
        %v1014 = vcombine.low %v811, %v827
        %v1015 = vcombine.high %v811, %v827
        %v1017 = vunpack.c.l.s4 1983009808
        %v1018 = vunpack.c.0.s8 %v1017
        %v1019 = vlaneseq
        %v1020 = vshrl.u32 %v1019, 7
        %v1021 = vsub.s32 %v1018, %v1020
        %v1022 = vrot.slane %v1014, %v1021
        %v1024 = vunpack.c.l.s4 1983009808
        %v1025 = vunpack.c.0.s8 %v1024
        %v1026 = vlaneseq
        %v1027 = vshrl.u32 %v1026, 7
        %v1028 = vsub.s32 %v1025, %v1027
        %v1029 = vrot.slane %v1015, %v1028
        %v1030 = vcombine.low %v819, %v835
        %v1031 = vcombine.high %v819, %v835
        %v1033 = vunpack.c.l.s4 1983009808
        %v1034 = vunpack.c.0.s8 %v1033
        %v1035 = vlaneseq
        %v1036 = vshrl.u32 %v1035, 7
        %v1037 = vsub.s32 %v1034, %v1036
        %v1038 = vrot.slane %v1030, %v1037
        %v1040 = vunpack.c.l.s4 1983009808
        %v1041 = vunpack.c.0.s8 %v1040
        %v1042 = vlaneseq
        %v1043 = vshrl.u32 %v1042, 7
        %v1044 = vsub.s32 %v1041, %v1043
        %v1045 = vrot.slane %v1031, %v1044
        %v1046 = vcombine.low %v843, %v859
        %v1047 = vcombine.high %v843, %v859
        %v1049 = vunpack.c.l.s4 1983009808
        %v1050 = vunpack.c.0.s8 %v1049
        %v1051 = vlaneseq
        %v1052 = vshrl.u32 %v1051, 7
        %v1053 = vsub.s32 %v1050, %v1052
        %v1054 = vrot.slane %v1046, %v1053
        %v1056 = vunpack.c.l.s4 1983009808
        %v1057 = vunpack.c.0.s8 %v1056
        %v1058 = vlaneseq
        %v1059 = vshrl.u32 %v1058, 7
        %v1060 = vsub.s32 %v1057, %v1059
        %v1061 = vrot.slane %v1047, %v1060
        %v1062 = vcombine.low %v851, %v867
        %v1063 = vcombine.high %v851, %v867
        %v1065 = vunpack.c.l.s4 1983009808
        %v1066 = vunpack.c.0.s8 %v1065
        %v1067 = vlaneseq
        %v1068 = vshrl.u32 %v1067, 7
        %v1069 = vsub.s32 %v1066, %v1068
        %v1070 = vrot.slane %v1062, %v1069
        %v1072 = vunpack.c.l.s4 1983009808
        %v1073 = vunpack.c.0.s8 %v1072
        %v1074 = vlaneseq
        %v1075 = vshrl.u32 %v1074, 7
        %v1076 = vsub.s32 %v1073, %v1075
        %v1077 = vrot.slane %v1063, %v1076
        %v1078 = vcombine.low %v1022, %v1038
        %v1079 = vcombine.high %v1022, %v1038
        %v1081 = vunpack.c.l.s4 1934713408
        %v1082 = vunpack.c.0.s8 %v1081
        %v1083 = vlaneseq
        %v1084 = vshrl.u32 %v1083, 7
        %v1085 = vsub.s32 %v1082, %v1084
        %v1086 = vrot.slane %v1078, %v1085
        %v1088 = vunpack.c.l.s4 1934713408
        %v1089 = vunpack.c.0.s8 %v1088
        %v1090 = vlaneseq
        %v1091 = vshrl.u32 %v1090, 7
        %v1092 = vsub.s32 %v1089, %v1091
        %v1093 = vrot.slane %v1079, %v1092
        %v1094 = vcombine.low %v1029, %v1045
        %v1095 = vcombine.high %v1029, %v1045
        %v1097 = vunpack.c.l.s4 1934713408
        %v1098 = vunpack.c.0.s8 %v1097
        %v1099 = vlaneseq
        %v1100 = vshrl.u32 %v1099, 7
        %v1101 = vsub.s32 %v1098, %v1100
        %v1102 = vrot.slane %v1094, %v1101
        %v1104 = vunpack.c.l.s4 1934713408
        %v1105 = vunpack.c.0.s8 %v1104
        %v1106 = vlaneseq
        %v1107 = vshrl.u32 %v1106, 7
        %v1108 = vsub.s32 %v1105, %v1107
        %v1109 = vrot.slane %v1095, %v1108
        %v1110 = vcombine.low %v1054, %v1070
        %v1111 = vcombine.high %v1054, %v1070
        %v1113 = vunpack.c.l.s4 1934713408
        %v1114 = vunpack.c.0.s8 %v1113
        %v1115 = vlaneseq
        %v1116 = vshrl.u32 %v1115, 7
        %v1117 = vsub.s32 %v1114, %v1116
        %v1118 = vrot.slane %v1110, %v1117
        %v1120 = vunpack.c.l.s4 1934713408
        %v1121 = vunpack.c.0.s8 %v1120
        %v1122 = vlaneseq
        %v1123 = vshrl.u32 %v1122, 7
        %v1124 = vsub.s32 %v1121, %v1123
        %v1125 = vrot.slane %v1111, %v1124
        %v1126 = vcombine.low %v1061, %v1077
        %v1127 = vcombine.high %v1061, %v1077
        %v1129 = vunpack.c.l.s4 1934713408
        %v1130 = vunpack.c.0.s8 %v1129
        %v1131 = vlaneseq
        %v1132 = vshrl.u32 %v1131, 7
        %v1133 = vsub.s32 %v1130, %v1132
        %v1134 = vrot.slane %v1126, %v1133
        %v1136 = vunpack.c.l.s4 1934713408
        %v1137 = vunpack.c.0.s8 %v1136
        %v1138 = vlaneseq
        %v1139 = vshrl.u32 %v1138, 7
        %v1140 = vsub.s32 %v1137, %v1139
        %v1141 = vrot.slane %v1127, %v1140
        %v1142 = vcombine.low %v1086, %v1118
        %v1143 = vcombine.high %v1086, %v1118
        %v1144 = vcombine.low %v1093, %v1125
        %v1145 = vcombine.high %v1093, %v1125
        %v1146 = vcombine.low %v1102, %v1134
        %v1147 = vcombine.high %v1102, %v1134
        %v1148 = vcombine.low %v1109, %v1141
        %v1149 = vcombine.high %v1109, %v1141
        %v1150 = vpack.c.bf16 %v1006, %v1006
        %v1151 = vpack.c.bf16 %v1007, %v1007
        %v1152 = vpack.c.bf16 %v1008, %v1008
        %v1153 = vpack.c.bf16 %v1009, %v1009
        %v1154 = vpack.c.bf16 %v1010, %v1010
        %v1155 = vpack.c.bf16 %v1011, %v1011
        %v1156 = vpack.c.bf16 %v1012, %v1012
        %v1157 = vpack.c.bf16 %v1013, %v1013
        %v1158 = vpack.c.bf16 %v1142, %v1142
        %v1159 = vpack.c.bf16 %v1143, %v1143
        %v1160 = vpack.c.bf16 %v1144, %v1144
        %v1161 = vpack.c.bf16 %v1145, %v1145
        %v1162 = vpack.c.bf16 %v1146, %v1146
        %v1163 = vpack.c.bf16 %v1147, %v1147
        %v1164 = vpack.c.bf16 %v1148, %v1148
        %v1165 = vpack.c.bf16 %v1149, %v1149
        %s1166 = smul.u32 %s34, 16
        %s1167 = sshra.s32 %s1166, 3
        %s1168 = sand.u32 %s1166, 7
        %s1169 = smul.addr %s1167, 4
        %s1170 = scalar_lea.vmem [#allocation2], %s1169
        %v1171 = vld [vmem:[%s1170] sm:$0xf]
        %v1172 = vld [vmem:[%s1170 + $0x4] sm:$0xf]
        %v1173 = vld [vmem:[%s1170 + $0x8] sm:$0xf]
        %v1174 = vld [vmem:[%s1170 + $0xc] sm:$0xf]
        %v1175 = vld [vmem:[%s1170 + $0x10] sm:$0xf]
        %v1176 = vld [vmem:[%s1170 + $0x14] sm:$0xf]
        %v1177 = vld [vmem:[%s1170 + $0x18] sm:$0xf]
        %v1178 = vld [vmem:[%s1170 + $0x1c] sm:$0xf]
        %v1179 = vld [vmem:[%s1170 + $0x20] sm:$0xf]
        %v1180 = vld [vmem:[%s1170 + $0x24] sm:$0xf]
        %v1181 = vld [vmem:[%s1170 + $0x28] sm:$0xf]
        %v1182 = vld [vmem:[%s1170 + $0x2c] sm:$0xf]
        %v1183 = vld [vmem:[%s1170 + $0x30] sm:$0xf]
        %v1184 = vld [vmem:[%s1170 + $0x34] sm:$0xf]
        %v1185 = vld [vmem:[%s1170 + $0x38] sm:$0xf]
        %v1186 = vld [vmem:[%s1170 + $0x3c] sm:$0xf]
        %v1187 = vunpack.c.l.bf16 %v1171
        %v1188 = vunpack.c.l.bf16 %v1172
        %v1189 = vunpack.c.l.bf16 %v1173
        %v1190 = vunpack.c.l.bf16 %v1174
        %v1191 = vunpack.c.l.bf16 %v1175
        %v1192 = vunpack.c.l.bf16 %v1176
        %v1193 = vunpack.c.l.bf16 %v1177
        %v1194 = vunpack.c.l.bf16 %v1178
        %v1195 = vunpack.c.l.bf16 %v1179
        %v1196 = vunpack.c.l.bf16 %v1180
        %v1197 = vunpack.c.l.bf16 %v1181
        %v1198 = vunpack.c.l.bf16 %v1182
        %v1199 = vunpack.c.l.bf16 %v1183
        %v1200 = vunpack.c.l.bf16 %v1184
        %v1201 = vunpack.c.l.bf16 %v1185
        %v1202 = vunpack.c.l.bf16 %v1186
        %v1203 = vcombine.low %v1187, %v1191
        %v1204 = vcombine.high %v1187, %v1191
        %v1206 = vunpack.c.l.s4 1983009808
        %v1207 = vunpack.c.0.s8 %v1206
        %v1208 = vlaneseq
        %v1209 = vshrl.u32 %v1208, 7
        %v1210 = vsub.s32 %v1207, %v1209
        %v1211 = vrot.slane %v1203, %v1210
        %v1213 = vunpack.c.l.s4 1983009808
        %v1214 = vunpack.c.0.s8 %v1213
        %v1215 = vlaneseq
        %v1216 = vshrl.u32 %v1215, 7
        %v1217 = vsub.s32 %v1214, %v1216
        %v1218 = vrot.slane %v1204, %v1217
        %v1219 = vcombine.low %v1189, %v1193
        %v1220 = vcombine.high %v1189, %v1193
        %v1222 = vunpack.c.l.s4 1983009808
        %v1223 = vunpack.c.0.s8 %v1222
        %v1224 = vlaneseq
        %v1225 = vshrl.u32 %v1224, 7
        %v1226 = vsub.s32 %v1223, %v1225
        %v1227 = vrot.slane %v1219, %v1226
        %v1229 = vunpack.c.l.s4 1983009808
        %v1230 = vunpack.c.0.s8 %v1229
        %v1231 = vlaneseq
        %v1232 = vshrl.u32 %v1231, 7
        %v1233 = vsub.s32 %v1230, %v1232
        %v1234 = vrot.slane %v1220, %v1233
        %v1235 = vcombine.low %v1195, %v1199
        %v1236 = vcombine.high %v1195, %v1199
        %v1238 = vunpack.c.l.s4 1983009808
        %v1239 = vunpack.c.0.s8 %v1238
        %v1240 = vlaneseq
        %v1241 = vshrl.u32 %v1240, 7
        %v1242 = vsub.s32 %v1239, %v1241
        %v1243 = vrot.slane %v1235, %v1242
        %v1245 = vunpack.c.l.s4 1983009808
        %v1246 = vunpack.c.0.s8 %v1245
        %v1247 = vlaneseq
        %v1248 = vshrl.u32 %v1247, 7
        %v1249 = vsub.s32 %v1246, %v1248
        %v1250 = vrot.slane %v1236, %v1249
        %v1251 = vcombine.low %v1197, %v1201
        %v1252 = vcombine.high %v1197, %v1201
        %v1254 = vunpack.c.l.s4 1983009808
        %v1255 = vunpack.c.0.s8 %v1254
        %v1256 = vlaneseq
        %v1257 = vshrl.u32 %v1256, 7
        %v1258 = vsub.s32 %v1255, %v1257
        %v1259 = vrot.slane %v1251, %v1258
        %v1261 = vunpack.c.l.s4 1983009808
        %v1262 = vunpack.c.0.s8 %v1261
        %v1263 = vlaneseq
        %v1264 = vshrl.u32 %v1263, 7
        %v1265 = vsub.s32 %v1262, %v1264
        %v1266 = vrot.slane %v1252, %v1265
        %v1267 = vcombine.low %v1211, %v1227
        %v1268 = vcombine.high %v1211, %v1227
        %v1270 = vunpack.c.l.s4 1934713408
        %v1271 = vunpack.c.0.s8 %v1270
        %v1272 = vlaneseq
        %v1273 = vshrl.u32 %v1272, 7
        %v1274 = vsub.s32 %v1271, %v1273
        %v1275 = vrot.slane %v1267, %v1274
        %v1277 = vunpack.c.l.s4 1934713408
        %v1278 = vunpack.c.0.s8 %v1277
        %v1279 = vlaneseq
        %v1280 = vshrl.u32 %v1279, 7
        %v1281 = vsub.s32 %v1278, %v1280
        %v1282 = vrot.slane %v1268, %v1281
        %v1283 = vcombine.low %v1218, %v1234
        %v1284 = vcombine.high %v1218, %v1234
        %v1286 = vunpack.c.l.s4 1934713408
        %v1287 = vunpack.c.0.s8 %v1286
        %v1288 = vlaneseq
        %v1289 = vshrl.u32 %v1288, 7
        %v1290 = vsub.s32 %v1287, %v1289
        %v1291 = vrot.slane %v1283, %v1290
        %v1293 = vunpack.c.l.s4 1934713408
        %v1294 = vunpack.c.0.s8 %v1293
        %v1295 = vlaneseq
        %v1296 = vshrl.u32 %v1295, 7
        %v1297 = vsub.s32 %v1294, %v1296
        %v1298 = vrot.slane %v1284, %v1297
        %v1299 = vcombine.low %v1243, %v1259
        %v1300 = vcombine.high %v1243, %v1259
        %v1302 = vunpack.c.l.s4 1934713408
        %v1303 = vunpack.c.0.s8 %v1302
        %v1304 = vlaneseq
        %v1305 = vshrl.u32 %v1304, 7
        %v1306 = vsub.s32 %v1303, %v1305
        %v1307 = vrot.slane %v1299, %v1306
        %v1309 = vunpack.c.l.s4 1934713408
        %v1310 = vunpack.c.0.s8 %v1309
        %v1311 = vlaneseq
        %v1312 = vshrl.u32 %v1311, 7
        %v1313 = vsub.s32 %v1310, %v1312
        %v1314 = vrot.slane %v1300, %v1313
        %v1315 = vcombine.low %v1250, %v1266
        %v1316 = vcombine.high %v1250, %v1266
        %v1318 = vunpack.c.l.s4 1934713408
        %v1319 = vunpack.c.0.s8 %v1318
        %v1320 = vlaneseq
        %v1321 = vshrl.u32 %v1320, 7
        %v1322 = vsub.s32 %v1319, %v1321
        %v1323 = vrot.slane %v1315, %v1322
        %v1325 = vunpack.c.l.s4 1934713408
        %v1326 = vunpack.c.0.s8 %v1325
        %v1327 = vlaneseq
        %v1328 = vshrl.u32 %v1327, 7
        %v1329 = vsub.s32 %v1326, %v1328
        %v1330 = vrot.slane %v1316, %v1329
        %v1331 = vcombine.low %v1275, %v1307
        %v1332 = vcombine.high %v1275, %v1307
        %v1333 = vcombine.low %v1282, %v1314
        %v1334 = vcombine.high %v1282, %v1314
        %v1335 = vcombine.low %v1291, %v1323
        %v1336 = vcombine.high %v1291, %v1323
        %v1337 = vcombine.low %v1298, %v1330
        %v1338 = vcombine.high %v1298, %v1330
        %v1339 = vcombine.low %v1188, %v1192
        %v1340 = vcombine.high %v1188, %v1192
        %v1342 = vunpack.c.l.s4 1983009808
        %v1343 = vunpack.c.0.s8 %v1342
        %v1344 = vlaneseq
        %v1345 = vshrl.u32 %v1344, 7
        %v1346 = vsub.s32 %v1343, %v1345
        %v1347 = vrot.slane %v1339, %v1346
        %v1349 = vunpack.c.l.s4 1983009808
        %v1350 = vunpack.c.0.s8 %v1349
        %v1351 = vlaneseq
        %v1352 = vshrl.u32 %v1351, 7
        %v1353 = vsub.s32 %v1350, %v1352
        %v1354 = vrot.slane %v1340, %v1353
        %v1355 = vcombine.low %v1190, %v1194
        %v1356 = vcombine.high %v1190, %v1194
        %v1358 = vunpack.c.l.s4 1983009808
        %v1359 = vunpack.c.0.s8 %v1358
        %v1360 = vlaneseq
        %v1361 = vshrl.u32 %v1360, 7
        %v1362 = vsub.s32 %v1359, %v1361
        %v1363 = vrot.slane %v1355, %v1362
        %v1365 = vunpack.c.l.s4 1983009808
        %v1366 = vunpack.c.0.s8 %v1365
        %v1367 = vlaneseq
        %v1368 = vshrl.u32 %v1367, 7
        %v1369 = vsub.s32 %v1366, %v1368
        %v1370 = vrot.slane %v1356, %v1369
        %v1371 = vcombine.low %v1196, %v1200
        %v1372 = vcombine.high %v1196, %v1200
        %v1374 = vunpack.c.l.s4 1983009808
        %v1375 = vunpack.c.0.s8 %v1374
        %v1376 = vlaneseq
        %v1377 = vshrl.u32 %v1376, 7
        %v1378 = vsub.s32 %v1375, %v1377
        %v1379 = vrot.slane %v1371, %v1378
        %v1381 = vunpack.c.l.s4 1983009808
        %v1382 = vunpack.c.0.s8 %v1381
        %v1383 = vlaneseq
        %v1384 = vshrl.u32 %v1383, 7
        %v1385 = vsub.s32 %v1382, %v1384
        %v1386 = vrot.slane %v1372, %v1385
        %v1387 = vcombine.low %v1198, %v1202
        %v1388 = vcombine.high %v1198, %v1202
        %v1390 = vunpack.c.l.s4 1983009808
        %v1391 = vunpack.c.0.s8 %v1390
        %v1392 = vlaneseq
        %v1393 = vshrl.u32 %v1392, 7
        %v1394 = vsub.s32 %v1391, %v1393
        %v1395 = vrot.slane %v1387, %v1394
        %v1397 = vunpack.c.l.s4 1983009808
        %v1398 = vunpack.c.0.s8 %v1397
        %v1399 = vlaneseq
        %v1400 = vshrl.u32 %v1399, 7
        %v1401 = vsub.s32 %v1398, %v1400
        %v1402 = vrot.slane %v1388, %v1401
        %v1403 = vcombine.low %v1347, %v1363
        %v1404 = vcombine.high %v1347, %v1363
        %v1406 = vunpack.c.l.s4 1934713408
        %v1407 = vunpack.c.0.s8 %v1406
        %v1408 = vlaneseq
        %v1409 = vshrl.u32 %v1408, 7
        %v1410 = vsub.s32 %v1407, %v1409
        %v1411 = vrot.slane %v1403, %v1410
        %v1413 = vunpack.c.l.s4 1934713408
        %v1414 = vunpack.c.0.s8 %v1413
        %v1415 = vlaneseq
        %v1416 = vshrl.u32 %v1415, 7
        %v1417 = vsub.s32 %v1414, %v1416
        %v1418 = vrot.slane %v1404, %v1417
        %v1419 = vcombine.low %v1354, %v1370
        %v1420 = vcombine.high %v1354, %v1370
        %v1422 = vunpack.c.l.s4 1934713408
        %v1423 = vunpack.c.0.s8 %v1422
        %v1424 = vlaneseq
        %v1425 = vshrl.u32 %v1424, 7
        %v1426 = vsub.s32 %v1423, %v1425
        %v1427 = vrot.slane %v1419, %v1426
        %v1429 = vunpack.c.l.s4 1934713408
        %v1430 = vunpack.c.0.s8 %v1429
        %v1431 = vlaneseq
        %v1432 = vshrl.u32 %v1431, 7
        %v1433 = vsub.s32 %v1430, %v1432
        %v1434 = vrot.slane %v1420, %v1433
        %v1435 = vcombine.low %v1379, %v1395
        %v1436 = vcombine.high %v1379, %v1395
        %v1438 = vunpack.c.l.s4 1934713408
        %v1439 = vunpack.c.0.s8 %v1438
        %v1440 = vlaneseq
        %v1441 = vshrl.u32 %v1440, 7
        %v1442 = vsub.s32 %v1439, %v1441
        %v1443 = vrot.slane %v1435, %v1442
        %v1445 = vunpack.c.l.s4 1934713408
        %v1446 = vunpack.c.0.s8 %v1445
        %v1447 = vlaneseq
        %v1448 = vshrl.u32 %v1447, 7
        %v1449 = vsub.s32 %v1446, %v1448
        %v1450 = vrot.slane %v1436, %v1449
        %v1451 = vcombine.low %v1386, %v1402
        %v1452 = vcombine.high %v1386, %v1402
        %v1454 = vunpack.c.l.s4 1934713408
        %v1455 = vunpack.c.0.s8 %v1454
        %v1456 = vlaneseq
        %v1457 = vshrl.u32 %v1456, 7
        %v1458 = vsub.s32 %v1455, %v1457
        %v1459 = vrot.slane %v1451, %v1458
        %v1461 = vunpack.c.l.s4 1934713408
        %v1462 = vunpack.c.0.s8 %v1461
        %v1463 = vlaneseq
        %v1464 = vshrl.u32 %v1463, 7
        %v1465 = vsub.s32 %v1462, %v1464
        %v1466 = vrot.slane %v1452, %v1465
        %v1467 = vcombine.low %v1411, %v1443
        %v1468 = vcombine.high %v1411, %v1443
        %v1469 = vcombine.low %v1418, %v1450
        %v1470 = vcombine.high %v1418, %v1450
        %v1471 = vcombine.low %v1427, %v1459
        %v1472 = vcombine.high %v1427, %v1459
        %v1473 = vcombine.low %v1434, %v1466
        %v1474 = vcombine.high %v1434, %v1466
        %v1475 = vpack.c.bf16 %v1331, %v1331
        %v1476 = vpack.c.bf16 %v1332, %v1332
        %v1477 = vpack.c.bf16 %v1333, %v1333
        %v1478 = vpack.c.bf16 %v1334, %v1334
        %v1479 = vpack.c.bf16 %v1335, %v1335
        %v1480 = vpack.c.bf16 %v1336, %v1336
        %v1481 = vpack.c.bf16 %v1337, %v1337
        %v1482 = vpack.c.bf16 %v1338, %v1338
        %v1483 = vpack.c.bf16 %v1467, %v1467
        %v1484 = vpack.c.bf16 %v1468, %v1468
        %v1485 = vpack.c.bf16 %v1469, %v1469
        %v1486 = vpack.c.bf16 %v1470, %v1470
        %v1487 = vpack.c.bf16 %v1471, %v1471
        %v1488 = vpack.c.bf16 %v1472, %v1472
        %v1489 = vpack.c.bf16 %v1473, %v1473
        %v1490 = vpack.c.bf16 %v1474, %v1474
        %s1491 = smul.addr %s1167, 4
        %s1492 = scalar_lea.vmem [#allocation3], %s1491
        %v1493 = vld [vmem:[%s1492] sm:$0xf]
        %v1494 = vld [vmem:[%s1492 + $0x4] sm:$0xf]
        %v1495 = vld [vmem:[%s1492 + $0x8] sm:$0xf]
        %v1496 = vld [vmem:[%s1492 + $0xc] sm:$0xf]
        %v1497 = vld [vmem:[%s1492 + $0x10] sm:$0xf]
        %v1498 = vld [vmem:[%s1492 + $0x14] sm:$0xf]
        %v1499 = vld [vmem:[%s1492 + $0x18] sm:$0xf]
        %v1500 = vld [vmem:[%s1492 + $0x1c] sm:$0xf]
        %v1501 = vld [vmem:[%s1492 + $0x20] sm:$0xf]
        %v1502 = vld [vmem:[%s1492 + $0x24] sm:$0xf]
        %v1503 = vld [vmem:[%s1492 + $0x28] sm:$0xf]
        %v1504 = vld [vmem:[%s1492 + $0x2c] sm:$0xf]
        %v1505 = vld [vmem:[%s1492 + $0x30] sm:$0xf]
        %v1506 = vld [vmem:[%s1492 + $0x34] sm:$0xf]
        %v1507 = vld [vmem:[%s1492 + $0x38] sm:$0xf]
        %v1508 = vld [vmem:[%s1492 + $0x3c] sm:$0xf]
        %v1509 = vunpack.c.l.bf16 %v1493
        %v1510 = vunpack.c.l.bf16 %v1494
        %v1511 = vunpack.c.l.bf16 %v1495
        %v1512 = vunpack.c.l.bf16 %v1496
        %v1513 = vunpack.c.l.bf16 %v1497
        %v1514 = vunpack.c.l.bf16 %v1498
        %v1515 = vunpack.c.l.bf16 %v1499
        %v1516 = vunpack.c.l.bf16 %v1500
        %v1517 = vunpack.c.l.bf16 %v1501
        %v1518 = vunpack.c.l.bf16 %v1502
        %v1519 = vunpack.c.l.bf16 %v1503
        %v1520 = vunpack.c.l.bf16 %v1504
        %v1521 = vunpack.c.l.bf16 %v1505
        %v1522 = vunpack.c.l.bf16 %v1506
        %v1523 = vunpack.c.l.bf16 %v1507
        %v1524 = vunpack.c.l.bf16 %v1508
        %v1525 = vcombine.low %v1509, %v1513
        %v1526 = vcombine.high %v1509, %v1513
        %v1528 = vunpack.c.l.s4 1983009808
        %v1529 = vunpack.c.0.s8 %v1528
        %v1530 = vlaneseq
        %v1531 = vshrl.u32 %v1530, 7
        %v1532 = vsub.s32 %v1529, %v1531
        %v1533 = vrot.slane %v1525, %v1532
        %v1535 = vunpack.c.l.s4 1983009808
        %v1536 = vunpack.c.0.s8 %v1535
        %v1537 = vlaneseq
        %v1538 = vshrl.u32 %v1537, 7
        %v1539 = vsub.s32 %v1536, %v1538
        %v1540 = vrot.slane %v1526, %v1539
        %v1541 = vcombine.low %v1511, %v1515
        %v1542 = vcombine.high %v1511, %v1515
        %v1544 = vunpack.c.l.s4 1983009808
        %v1545 = vunpack.c.0.s8 %v1544
        %v1546 = vlaneseq
        %v1547 = vshrl.u32 %v1546, 7
        %v1548 = vsub.s32 %v1545, %v1547
        %v1549 = vrot.slane %v1541, %v1548
        %v1551 = vunpack.c.l.s4 1983009808
        %v1552 = vunpack.c.0.s8 %v1551
        %v1553 = vlaneseq
        %v1554 = vshrl.u32 %v1553, 7
        %v1555 = vsub.s32 %v1552, %v1554
        %v1556 = vrot.slane %v1542, %v1555
        %v1557 = vcombine.low %v1517, %v1521
        %v1558 = vcombine.high %v1517, %v1521
        %v1560 = vunpack.c.l.s4 1983009808
        %v1561 = vunpack.c.0.s8 %v1560
        %v1562 = vlaneseq
        %v1563 = vshrl.u32 %v1562, 7
        %v1564 = vsub.s32 %v1561, %v1563
        %v1565 = vrot.slane %v1557, %v1564
        %v1567 = vunpack.c.l.s4 1983009808
        %v1568 = vunpack.c.0.s8 %v1567
        %v1569 = vlaneseq
        %v1570 = vshrl.u32 %v1569, 7
        %v1571 = vsub.s32 %v1568, %v1570
        %v1572 = vrot.slane %v1558, %v1571
        %v1573 = vcombine.low %v1519, %v1523
        %v1574 = vcombine.high %v1519, %v1523
        %v1576 = vunpack.c.l.s4 1983009808
        %v1577 = vunpack.c.0.s8 %v1576
        %v1578 = vlaneseq
        %v1579 = vshrl.u32 %v1578, 7
        %v1580 = vsub.s32 %v1577, %v1579
        %v1581 = vrot.slane %v1573, %v1580
        %v1583 = vunpack.c.l.s4 1983009808
        %v1584 = vunpack.c.0.s8 %v1583
        %v1585 = vlaneseq
        %v1586 = vshrl.u32 %v1585, 7
        %v1587 = vsub.s32 %v1584, %v1586
        %v1588 = vrot.slane %v1574, %v1587
        %v1589 = vcombine.low %v1533, %v1549
        %v1590 = vcombine.high %v1533, %v1549
        %v1592 = vunpack.c.l.s4 1934713408
        %v1593 = vunpack.c.0.s8 %v1592
        %v1594 = vlaneseq
        %v1595 = vshrl.u32 %v1594, 7
        %v1596 = vsub.s32 %v1593, %v1595
        %v1597 = vrot.slane %v1589, %v1596
        %v1599 = vunpack.c.l.s4 1934713408
        %v1600 = vunpack.c.0.s8 %v1599
        %v1601 = vlaneseq
        %v1602 = vshrl.u32 %v1601, 7
        %v1603 = vsub.s32 %v1600, %v1602
        %v1604 = vrot.slane %v1590, %v1603
        %v1605 = vcombine.low %v1540, %v1556
        %v1606 = vcombine.high %v1540, %v1556
        %v1608 = vunpack.c.l.s4 1934713408
        %v1609 = vunpack.c.0.s8 %v1608
        %v1610 = vlaneseq
        %v1611 = vshrl.u32 %v1610, 7
        %v1612 = vsub.s32 %v1609, %v1611
        %v1613 = vrot.slane %v1605, %v1612
        %v1615 = vunpack.c.l.s4 1934713408
        %v1616 = vunpack.c.0.s8 %v1615
        %v1617 = vlaneseq
        %v1618 = vshrl.u32 %v1617, 7
        %v1619 = vsub.s32 %v1616, %v1618
        %v1620 = vrot.slane %v1606, %v1619
        %v1621 = vcombine.low %v1565, %v1581
        %v1622 = vcombine.high %v1565, %v1581
        %v1624 = vunpack.c.l.s4 1934713408
        %v1625 = vunpack.c.0.s8 %v1624
        %v1626 = vlaneseq
        %v1627 = vshrl.u32 %v1626, 7
        %v1628 = vsub.s32 %v1625, %v1627
        %v1629 = vrot.slane %v1621, %v1628
        %v1631 = vunpack.c.l.s4 1934713408
        %v1632 = vunpack.c.0.s8 %v1631
        %v1633 = vlaneseq
        %v1634 = vshrl.u32 %v1633, 7
        %v1635 = vsub.s32 %v1632, %v1634
        %v1636 = vrot.slane %v1622, %v1635
        %v1637 = vcombine.low %v1572, %v1588
        %v1638 = vcombine.high %v1572, %v1588
        %v1640 = vunpack.c.l.s4 1934713408
        %v1641 = vunpack.c.0.s8 %v1640
        %v1642 = vlaneseq
        %v1643 = vshrl.u32 %v1642, 7
        %v1644 = vsub.s32 %v1641, %v1643
        %v1645 = vrot.slane %v1637, %v1644
        %v1647 = vunpack.c.l.s4 1934713408
        %v1648 = vunpack.c.0.s8 %v1647
        %v1649 = vlaneseq
        %v1650 = vshrl.u32 %v1649, 7
        %v1651 = vsub.s32 %v1648, %v1650
        %v1652 = vrot.slane %v1638, %v1651
        %v1653 = vcombine.low %v1597, %v1629
        %v1654 = vcombine.high %v1597, %v1629
        %v1655 = vcombine.low %v1604, %v1636
        %v1656 = vcombine.high %v1604, %v1636
        %v1657 = vcombine.low %v1613, %v1645
        %v1658 = vcombine.high %v1613, %v1645
        %v1659 = vcombine.low %v1620, %v1652
        %v1660 = vcombine.high %v1620, %v1652
        %v1661 = vcombine.low %v1510, %v1514
        %v1662 = vcombine.high %v1510, %v1514
        %v1664 = vunpack.c.l.s4 1983009808
        %v1665 = vunpack.c.0.s8 %v1664
        %v1666 = vlaneseq
        %v1667 = vshrl.u32 %v1666, 7
        %v1668 = vsub.s32 %v1665, %v1667
        %v1669 = vrot.slane %v1661, %v1668
        %v1671 = vunpack.c.l.s4 1983009808
        %v1672 = vunpack.c.0.s8 %v1671
        %v1673 = vlaneseq
        %v1674 = vshrl.u32 %v1673, 7
        %v1675 = vsub.s32 %v1672, %v1674
        %v1676 = vrot.slane %v1662, %v1675
        %v1677 = vcombine.low %v1512, %v1516
        %v1678 = vcombine.high %v1512, %v1516
        %v1680 = vunpack.c.l.s4 1983009808
        %v1681 = vunpack.c.0.s8 %v1680
        %v1682 = vlaneseq
        %v1683 = vshrl.u32 %v1682, 7
        %v1684 = vsub.s32 %v1681, %v1683
        %v1685 = vrot.slane %v1677, %v1684
        %v1687 = vunpack.c.l.s4 1983009808
        %v1688 = vunpack.c.0.s8 %v1687
        %v1689 = vlaneseq
        %v1690 = vshrl.u32 %v1689, 7
        %v1691 = vsub.s32 %v1688, %v1690
        %v1692 = vrot.slane %v1678, %v1691
        %v1693 = vcombine.low %v1518, %v1522
        %v1694 = vcombine.high %v1518, %v1522
        %v1696 = vunpack.c.l.s4 1983009808
        %v1697 = vunpack.c.0.s8 %v1696
        %v1698 = vlaneseq
        %v1699 = vshrl.u32 %v1698, 7
        %v1700 = vsub.s32 %v1697, %v1699
        %v1701 = vrot.slane %v1693, %v1700
        %v1703 = vunpack.c.l.s4 1983009808
        %v1704 = vunpack.c.0.s8 %v1703
        %v1705 = vlaneseq
        %v1706 = vshrl.u32 %v1705, 7
        %v1707 = vsub.s32 %v1704, %v1706
        %v1708 = vrot.slane %v1694, %v1707
        %v1709 = vcombine.low %v1520, %v1524
        %v1710 = vcombine.high %v1520, %v1524
        %v1712 = vunpack.c.l.s4 1983009808
        %v1713 = vunpack.c.0.s8 %v1712
        %v1714 = vlaneseq
        %v1715 = vshrl.u32 %v1714, 7
        %v1716 = vsub.s32 %v1713, %v1715
        %v1717 = vrot.slane %v1709, %v1716
        %v1719 = vunpack.c.l.s4 1983009808
        %v1720 = vunpack.c.0.s8 %v1719
        %v1721 = vlaneseq
        %v1722 = vshrl.u32 %v1721, 7
        %v1723 = vsub.s32 %v1720, %v1722
        %v1724 = vrot.slane %v1710, %v1723
        %v1725 = vcombine.low %v1669, %v1685
        %v1726 = vcombine.high %v1669, %v1685
        %v1728 = vunpack.c.l.s4 1934713408
        %v1729 = vunpack.c.0.s8 %v1728
        %v1730 = vlaneseq
        %v1731 = vshrl.u32 %v1730, 7
        %v1732 = vsub.s32 %v1729, %v1731
        %v1733 = vrot.slane %v1725, %v1732
        %v1735 = vunpack.c.l.s4 1934713408
        %v1736 = vunpack.c.0.s8 %v1735
        %v1737 = vlaneseq
        %v1738 = vshrl.u32 %v1737, 7
        %v1739 = vsub.s32 %v1736, %v1738
        %v1740 = vrot.slane %v1726, %v1739
        %v1741 = vcombine.low %v1676, %v1692
        %v1742 = vcombine.high %v1676, %v1692
        %v1744 = vunpack.c.l.s4 1934713408
        %v1745 = vunpack.c.0.s8 %v1744
        %v1746 = vlaneseq
        %v1747 = vshrl.u32 %v1746, 7
        %v1748 = vsub.s32 %v1745, %v1747
        %v1749 = vrot.slane %v1741, %v1748
        %v1751 = vunpack.c.l.s4 1934713408
        %v1752 = vunpack.c.0.s8 %v1751
        %v1753 = vlaneseq
        %v1754 = vshrl.u32 %v1753, 7
        %v1755 = vsub.s32 %v1752, %v1754
        %v1756 = vrot.slane %v1742, %v1755
        %v1757 = vcombine.low %v1701, %v1717
        %v1758 = vcombine.high %v1701, %v1717
        %v1760 = vunpack.c.l.s4 1934713408
        %v1761 = vunpack.c.0.s8 %v1760
        %v1762 = vlaneseq
        %v1763 = vshrl.u32 %v1762, 7
        %v1764 = vsub.s32 %v1761, %v1763
        %v1765 = vrot.slane %v1757, %v1764
        %v1767 = vunpack.c.l.s4 1934713408
        %v1768 = vunpack.c.0.s8 %v1767
        %v1769 = vlaneseq
        %v1770 = vshrl.u32 %v1769, 7
        %v1771 = vsub.s32 %v1768, %v1770
        %v1772 = vrot.slane %v1758, %v1771
        %v1773 = vcombine.low %v1708, %v1724
        %v1774 = vcombine.high %v1708, %v1724
        %v1776 = vunpack.c.l.s4 1934713408
        %v1777 = vunpack.c.0.s8 %v1776
        %v1778 = vlaneseq
        %v1779 = vshrl.u32 %v1778, 7
        %v1780 = vsub.s32 %v1777, %v1779
        %v1781 = vrot.slane %v1773, %v1780
        %v1783 = vunpack.c.l.s4 1934713408
        %v1784 = vunpack.c.0.s8 %v1783
        %v1785 = vlaneseq
        %v1786 = vshrl.u32 %v1785, 7
        %v1787 = vsub.s32 %v1784, %v1786
        %v1788 = vrot.slane %v1774, %v1787
        %v1789 = vcombine.low %v1733, %v1765
        %v1790 = vcombine.high %v1733, %v1765
        %v1791 = vcombine.low %v1740, %v1772
        %v1792 = vcombine.high %v1740, %v1772
        %v1793 = vcombine.low %v1749, %v1781
        %v1794 = vcombine.high %v1749, %v1781
        %v1795 = vcombine.low %v1756, %v1788
        %v1796 = vcombine.high %v1756, %v1788
        %v1797 = vpack.c.bf16 %v1653, %v1653
        %v1798 = vpack.c.bf16 %v1654, %v1654
        %v1799 = vpack.c.bf16 %v1655, %v1655
        %v1800 = vpack.c.bf16 %v1656, %v1656
        %v1801 = vpack.c.bf16 %v1657, %v1657
        %v1802 = vpack.c.bf16 %v1658, %v1658
        %v1803 = vpack.c.bf16 %v1659, %v1659
        %v1804 = vpack.c.bf16 %v1660, %v1660
        %v1805 = vpack.c.bf16 %v1789, %v1789
        %v1806 = vpack.c.bf16 %v1790, %v1790
        %v1807 = vpack.c.bf16 %v1791, %v1791
        %v1808 = vpack.c.bf16 %v1792, %v1792
        %v1809 = vpack.c.bf16 %v1793, %v1793
        %v1810 = vpack.c.bf16 %v1794, %v1794
        %v1811 = vpack.c.bf16 %v1795, %v1795
        %v1812 = vpack.c.bf16 %v1796, %v1796
        %v1813 = vld [vmem:[#allocation2] sm:$0xf]
        %v1814 = vld [vmem:[#allocation2 + $0x4] sm:$0xf]
        %v1815 = vld [vmem:[#allocation2 + $0x8] sm:$0xf]
        %v1816 = vld [vmem:[#allocation2 + $0xc] sm:$0xf]
        %v1817 = vld [vmem:[#allocation2 + $0x10] sm:$0xf]
        %v1818 = vld [vmem:[#allocation2 + $0x14] sm:$0xf]
        %v1819 = vld [vmem:[#allocation2 + $0x18] sm:$0xf]
        %v1820 = vld [vmem:[#allocation2 + $0x1c] sm:$0xf]
        %v1821 = vld [vmem:[#allocation2 + $0x20] sm:$0xf]
        %v1822 = vld [vmem:[#allocation2 + $0x24] sm:$0xf]
        %v1823 = vld [vmem:[#allocation2 + $0x28] sm:$0xf]
        %v1824 = vld [vmem:[#allocation2 + $0x2c] sm:$0xf]
        %v1825 = vld [vmem:[#allocation2 + $0x30] sm:$0xf]
        %v1826 = vld [vmem:[#allocation2 + $0x34] sm:$0xf]
        %v1827 = vld [vmem:[#allocation2 + $0x38] sm:$0xf]
        %v1828 = vld [vmem:[#allocation2 + $0x3c] sm:$0xf]
        %v1829 = vld [vmem:[#allocation3] sm:$0xf]
        %v1830 = vld [vmem:[#allocation3 + $0x4] sm:$0xf]
        %v1831 = vld [vmem:[#allocation3 + $0x8] sm:$0xf]
        %v1832 = vld [vmem:[#allocation3 + $0xc] sm:$0xf]
        %v1833 = vld [vmem:[#allocation3 + $0x10] sm:$0xf]
        %v1834 = vld [vmem:[#allocation3 + $0x14] sm:$0xf]
        %v1835 = vld [vmem:[#allocation3 + $0x18] sm:$0xf]
        %v1836 = vld [vmem:[#allocation3 + $0x1c] sm:$0xf]
        %v1837 = vld [vmem:[#allocation3 + $0x20] sm:$0xf]
        %v1838 = vld [vmem:[#allocation3 + $0x24] sm:$0xf]
        %v1839 = vld [vmem:[#allocation3 + $0x28] sm:$0xf]
        %v1840 = vld [vmem:[#allocation3 + $0x2c] sm:$0xf]
        %v1841 = vld [vmem:[#allocation3 + $0x30] sm:$0xf]
        %v1842 = vld [vmem:[#allocation3 + $0x34] sm:$0xf]
        %v1843 = vld [vmem:[#allocation3 + $0x38] sm:$0xf]
        %v1844 = vld [vmem:[#allocation3 + $0x3c] sm:$0xf]
        %v1845 = vld [vmem:[%s6] sm:$0xff]
        %vm1846 = vcmask 15360
        %v1848 = vsel %vm1846, %v1150, 0
        %v1851 = vsel %vm1846, %v1475, 0
        %1853 = vmatprep.subr.bf16.mxu0 0
        %1854 = vmatpush1.bf16.xpose.msra.mxu0 0
        %1855 = vmatprep.subr.bf16.mxu0 0
        %1856 = vmatpush1.bf16.xpose.msra.mxu0 0
        %1857 = vmatprep.subr.bf16.mxu0 0
        %1858 = vmatpush1.bf16.xpose.msra.mxu0 0
        %1859 = vmatprep.subr.bf16.mxu0 0
        %1860 = vmatpush1.bf16.xpose.msra.mxu0 0
        %1861 = vmatprep.subr.bf16.mxu0 0
        %1862 = vmatpush1.bf16.xpose.msra.mxu0 0
        %1863 = vmatprep.subr.bf16.mxu0 0
        %1864 = vmatpush1.bf16.xpose.msra.mxu0 0
        %1865 = vmatprep.subr.bf16.mxu0 0
        %1866 = vmatpush1.bf16.xpose.msra.mxu0 0
        %1867 = vmatprep.subr.bf16.mxu0 0
        %1868 = vmatpush1.bf16.xpose.msra.mxu0 %v1851
        %1869 = vmatprep.subr.bf16.mxu0 0
        %1870 = vmatpush2.bf16.xpose.msra.mxu0 0
        %1871 = vmatprep.subr.bf16.mxu0 0
        %1872 = vmatpush2.bf16.xpose.msra.mxu0 0
        %1873 = vmatprep.subr.bf16.mxu0 0
        %1874 = vmatpush2.bf16.xpose.msra.mxu0 0
        %1875 = vmatprep.subr.bf16.mxu0 0
        %1876 = vmatpush2.bf16.xpose.msra.mxu0 0
        %1877 = vmatprep.subr.bf16.mxu0 0
        %1878 = vmatpush2.bf16.xpose.msra.mxu0 0
        %1879 = vmatprep.subr.bf16.mxu0 0
        %1880 = vmatpush2.bf16.xpose.msra.mxu0 0
        %1881 = vmatprep.subr.bf16.mxu0 0
        %1882 = vmatpush2.bf16.xpose.msra.mxu0 0
        %1883 = vmatprep.subr.bf16.mxu0 0
        %1884 = vmatpush2.bf16.xpose.msra.mxu0 0
        %1885 = vmatprep.mubr.bf16.mxu0 0
        %1886 = vmatmul.mubr.bf16.gmra.mxu0 %v1848
        %v1887 = vpop.f32.mrf.mxu0
        %v1888 = vadd.f32 %v1845, %v1887
        %v1889 = vpop.f32.mrf.mxu0
        %v1890 = vpop.f32.mrf.mxu0
        %v1891 = vpop.f32.mrf.mxu0
        %1892 = vdwg.mxu0
        %v1894 = vsel %vm1846, %v1151, 0
        %v1897 = vsel %vm1846, %v1476, 0
        %1899 = vmatprep.subr.bf16.mxu0 0
        %1900 = vmatpush1.bf16.xpose.msra.mxu0 0
        %1901 = vmatprep.subr.bf16.mxu0 0
        %1902 = vmatpush1.bf16.xpose.msra.mxu0 0
        %1903 = vmatprep.subr.bf16.mxu0 0
        %1904 = vmatpush1.bf16.xpose.msra.mxu0 0
        %1905 = vmatprep.subr.bf16.mxu0 0
        %1906 = vmatpush1.bf16.xpose.msra.mxu0 0
        %1907 = vmatprep.subr.bf16.mxu0 0
        %1908 = vmatpush1.bf16.xpose.msra.mxu0 0
        %1909 = vmatprep.subr.bf16.mxu0 0
        %1910 = vmatpush1.bf16.xpose.msra.mxu0 0
        %1911 = vmatprep.subr.bf16.mxu0 0
        %1912 = vmatpush1.bf16.xpose.msra.mxu0 0
        %1913 = vmatprep.subr.bf16.mxu0 0
        %1914 = vmatpush1.bf16.xpose.msra.mxu0 %v1897
        %1915 = vmatprep.subr.bf16.mxu0 0
        %1916 = vmatpush2.bf16.xpose.msra.mxu0 0
        %1917 = vmatprep.subr.bf16.mxu0 0
        %1918 = vmatpush2.bf16.xpose.msra.mxu0 0
        %1919 = vmatprep.subr.bf16.mxu0 0
        %1920 = vmatpush2.bf16.xpose.msra.mxu0 0
        %1921 = vmatprep.subr.bf16.mxu0 0
        %1922 = vmatpush2.bf16.xpose.msra.mxu0 0
        %1923 = vmatprep.subr.bf16.mxu0 0
        %1924 = vmatpush2.bf16.xpose.msra.mxu0 0
        %1925 = vmatprep.subr.bf16.mxu0 0
        %1926 = vmatpush2.bf16.xpose.msra.mxu0 0
        %1927 = vmatprep.subr.bf16.mxu0 0
        %1928 = vmatpush2.bf16.xpose.msra.mxu0 0
        %1929 = vmatprep.subr.bf16.mxu0 0
        %1930 = vmatpush2.bf16.xpose.msra.mxu0 0
        %1931 = vmatprep.mubr.bf16.mxu0 0
        %1932 = vmatmul.mubr.bf16.gmra.mxu0 %v1894
        %v1933 = vpop.f32.mrf.mxu0
        %v1934 = vadd.f32 %v1845, %v1933
        %v1935 = vpop.f32.mrf.mxu0
        %v1936 = vpop.f32.mrf.mxu0
        %v1937 = vpop.f32.mrf.mxu0
        %1938 = vdwg.mxu0
        %v1940 = vsel %vm1846, %v1152, 0
        %v1943 = vsel %vm1846, %v1477, 0
        %1945 = vmatprep.subr.bf16.mxu0 0
        %1946 = vmatpush1.bf16.xpose.msra.mxu0 0
        %1947 = vmatprep.subr.bf16.mxu0 0
        %1948 = vmatpush1.bf16.xpose.msra.mxu0 0
        %1949 = vmatprep.subr.bf16.mxu0 0
        %1950 = vmatpush1.bf16.xpose.msra.mxu0 0
        %1951 = vmatprep.subr.bf16.mxu0 0
        %1952 = vmatpush1.bf16.xpose.msra.mxu0 0
        %1953 = vmatprep.subr.bf16.mxu0 0
        %1954 = vmatpush1.bf16.xpose.msra.mxu0 0
        %1955 = vmatprep.subr.bf16.mxu0 0
        %1956 = vmatpush1.bf16.xpose.msra.mxu0 0
        %1957 = vmatprep.subr.bf16.mxu0 0
        %1958 = vmatpush1.bf16.xpose.msra.mxu0 0
        %1959 = vmatprep.subr.bf16.mxu0 0
        %1960 = vmatpush1.bf16.xpose.msra.mxu0 %v1943
        %1961 = vmatprep.subr.bf16.mxu0 0
        %1962 = vmatpush2.bf16.xpose.msra.mxu0 0
        %1963 = vmatprep.subr.bf16.mxu0 0
        %1964 = vmatpush2.bf16.xpose.msra.mxu0 0
        %1965 = vmatprep.subr.bf16.mxu0 0
        %1966 = vmatpush2.bf16.xpose.msra.mxu0 0
        %1967 = vmatprep.subr.bf16.mxu0 0
        %1968 = vmatpush2.bf16.xpose.msra.mxu0 0
        %1969 = vmatprep.subr.bf16.mxu0 0
        %1970 = vmatpush2.bf16.xpose.msra.mxu0 0
        %1971 = vmatprep.subr.bf16.mxu0 0
        %1972 = vmatpush2.bf16.xpose.msra.mxu0 0
        %1973 = vmatprep.subr.bf16.mxu0 0
        %1974 = vmatpush2.bf16.xpose.msra.mxu0 0
        %1975 = vmatprep.subr.bf16.mxu0 0
        %1976 = vmatpush2.bf16.xpose.msra.mxu0 0
        %1977 = vmatprep.mubr.bf16.mxu0 0
        %1978 = vmatmul.mubr.bf16.gmra.mxu0 %v1940
        %v1979 = vpop.f32.mrf.mxu0
        %v1980 = vadd.f32 %v1845, %v1979
        %v1981 = vpop.f32.mrf.mxu0
        %v1982 = vpop.f32.mrf.mxu0
        %v1983 = vpop.f32.mrf.mxu0
        %1984 = vdwg.mxu0
        %v1986 = vsel %vm1846, %v1153, 0
        %v1989 = vsel %vm1846, %v1478, 0
        %1991 = vmatprep.subr.bf16.mxu0 0
        %1992 = vmatpush1.bf16.xpose.msra.mxu0 0
        %1993 = vmatprep.subr.bf16.mxu0 0
        %1994 = vmatpush1.bf16.xpose.msra.mxu0 0
        %1995 = vmatprep.subr.bf16.mxu0 0
        %1996 = vmatpush1.bf16.xpose.msra.mxu0 0
        %1997 = vmatprep.subr.bf16.mxu0 0
        %1998 = vmatpush1.bf16.xpose.msra.mxu0 0
        %1999 = vmatprep.subr.bf16.mxu0 0
        %2000 = vmatpush1.bf16.xpose.msra.mxu0 0
        %2001 = vmatprep.subr.bf16.mxu0 0
        %2002 = vmatpush1.bf16.xpose.msra.mxu0 0
        %2003 = vmatprep.subr.bf16.mxu0 0
        %2004 = vmatpush1.bf16.xpose.msra.mxu0 0
        %2005 = vmatprep.subr.bf16.mxu0 0
        %2006 = vmatpush1.bf16.xpose.msra.mxu0 %v1989
        %2007 = vmatprep.subr.bf16.mxu0 0
        %2008 = vmatpush2.bf16.xpose.msra.mxu0 0
        %2009 = vmatprep.subr.bf16.mxu0 0
        %2010 = vmatpush2.bf16.xpose.msra.mxu0 0
        %2011 = vmatprep.subr.bf16.mxu0 0
        %2012 = vmatpush2.bf16.xpose.msra.mxu0 0
        %2013 = vmatprep.subr.bf16.mxu0 0
        %2014 = vmatpush2.bf16.xpose.msra.mxu0 0
        %2015 = vmatprep.subr.bf16.mxu0 0
        %2016 = vmatpush2.bf16.xpose.msra.mxu0 0
        %2017 = vmatprep.subr.bf16.mxu0 0
        %2018 = vmatpush2.bf16.xpose.msra.mxu0 0
        %2019 = vmatprep.subr.bf16.mxu0 0
        %2020 = vmatpush2.bf16.xpose.msra.mxu0 0
        %2021 = vmatprep.subr.bf16.mxu0 0
        %2022 = vmatpush2.bf16.xpose.msra.mxu0 0
        %2023 = vmatprep.mubr.bf16.mxu0 0
        %2024 = vmatmul.mubr.bf16.gmra.mxu0 %v1986
        %v2025 = vpop.f32.mrf.mxu0
        %v2026 = vadd.f32 %v1845, %v2025
        %v2027 = vpop.f32.mrf.mxu0
        %v2028 = vpop.f32.mrf.mxu0
        %v2029 = vpop.f32.mrf.mxu0
        %2030 = vdwg.mxu0
        %v2032 = vsel %vm1846, %v1154, 0
        %v2035 = vsel %vm1846, %v1479, 0
        %2037 = vmatprep.subr.bf16.mxu0 0
        %2038 = vmatpush1.bf16.xpose.msra.mxu0 0
        %2039 = vmatprep.subr.bf16.mxu0 0
        %2040 = vmatpush1.bf16.xpose.msra.mxu0 0
        %2041 = vmatprep.subr.bf16.mxu0 0
        %2042 = vmatpush1.bf16.xpose.msra.mxu0 0
        %2043 = vmatprep.subr.bf16.mxu0 0
        %2044 = vmatpush1.bf16.xpose.msra.mxu0 0
        %2045 = vmatprep.subr.bf16.mxu0 0
        %2046 = vmatpush1.bf16.xpose.msra.mxu0 0
        %2047 = vmatprep.subr.bf16.mxu0 0
        %2048 = vmatpush1.bf16.xpose.msra.mxu0 0
        %2049 = vmatprep.subr.bf16.mxu0 0
        %2050 = vmatpush1.bf16.xpose.msra.mxu0 0
        %2051 = vmatprep.subr.bf16.mxu0 0
        %2052 = vmatpush1.bf16.xpose.msra.mxu0 %v2035
        %2053 = vmatprep.subr.bf16.mxu0 0
        %2054 = vmatpush2.bf16.xpose.msra.mxu0 0
        %2055 = vmatprep.subr.bf16.mxu0 0
        %2056 = vmatpush2.bf16.xpose.msra.mxu0 0
        %2057 = vmatprep.subr.bf16.mxu0 0
        %2058 = vmatpush2.bf16.xpose.msra.mxu0 0
        %2059 = vmatprep.subr.bf16.mxu0 0
        %2060 = vmatpush2.bf16.xpose.msra.mxu0 0
        %2061 = vmatprep.subr.bf16.mxu0 0
        %2062 = vmatpush2.bf16.xpose.msra.mxu0 0
        %2063 = vmatprep.subr.bf16.mxu0 0
        %2064 = vmatpush2.bf16.xpose.msra.mxu0 0
        %2065 = vmatprep.subr.bf16.mxu0 0
        %2066 = vmatpush2.bf16.xpose.msra.mxu0 0
        %2067 = vmatprep.subr.bf16.mxu0 0
        %2068 = vmatpush2.bf16.xpose.msra.mxu0 0
        %2069 = vmatprep.mubr.bf16.mxu0 0
        %2070 = vmatmul.mubr.bf16.gmra.mxu0 %v2032
        %v2071 = vpop.f32.mrf.mxu0
        %v2072 = vadd.f32 %v1845, %v2071
        %v2073 = vpop.f32.mrf.mxu0
        %v2074 = vpop.f32.mrf.mxu0
        %v2075 = vpop.f32.mrf.mxu0
        %2076 = vdwg.mxu0
        %v2078 = vsel %vm1846, %v1155, 0
        %v2081 = vsel %vm1846, %v1480, 0
        %2083 = vmatprep.subr.bf16.mxu0 0
        %2084 = vmatpush1.bf16.xpose.msra.mxu0 0
        %2085 = vmatprep.subr.bf16.mxu0 0
        %2086 = vmatpush1.bf16.xpose.msra.mxu0 0
        %2087 = vmatprep.subr.bf16.mxu0 0
        %2088 = vmatpush1.bf16.xpose.msra.mxu0 0
        %2089 = vmatprep.subr.bf16.mxu0 0
        %2090 = vmatpush1.bf16.xpose.msra.mxu0 0
        %2091 = vmatprep.subr.bf16.mxu0 0
        %2092 = vmatpush1.bf16.xpose.msra.mxu0 0
        %2093 = vmatprep.subr.bf16.mxu0 0
        %2094 = vmatpush1.bf16.xpose.msra.mxu0 0
        %2095 = vmatprep.subr.bf16.mxu0 0
        %2096 = vmatpush1.bf16.xpose.msra.mxu0 0
        %2097 = vmatprep.subr.bf16.mxu0 0
        %2098 = vmatpush1.bf16.xpose.msra.mxu0 %v2081
        %2099 = vmatprep.subr.bf16.mxu0 0
        %2100 = vmatpush2.bf16.xpose.msra.mxu0 0
        %2101 = vmatprep.subr.bf16.mxu0 0
        %2102 = vmatpush2.bf16.xpose.msra.mxu0 0
        %2103 = vmatprep.subr.bf16.mxu0 0
        %2104 = vmatpush2.bf16.xpose.msra.mxu0 0
        %2105 = vmatprep.subr.bf16.mxu0 0
        %2106 = vmatpush2.bf16.xpose.msra.mxu0 0
        %2107 = vmatprep.subr.bf16.mxu0 0
        %2108 = vmatpush2.bf16.xpose.msra.mxu0 0
        %2109 = vmatprep.subr.bf16.mxu0 0
        %2110 = vmatpush2.bf16.xpose.msra.mxu0 0
        %2111 = vmatprep.subr.bf16.mxu0 0
        %2112 = vmatpush2.bf16.xpose.msra.mxu0 0
        %2113 = vmatprep.subr.bf16.mxu0 0
        %2114 = vmatpush2.bf16.xpose.msra.mxu0 0
        %2115 = vmatprep.mubr.bf16.mxu0 0
        %2116 = vmatmul.mubr.bf16.gmra.mxu0 %v2078
        %v2117 = vpop.f32.mrf.mxu0
        %v2118 = vadd.f32 %v1845, %v2117
        %v2119 = vpop.f32.mrf.mxu0
        %v2120 = vpop.f32.mrf.mxu0
        %v2121 = vpop.f32.mrf.mxu0
        %2122 = vdwg.mxu0
        %v2124 = vsel %vm1846, %v1156, 0
        %v2127 = vsel %vm1846, %v1481, 0
        %2129 = vmatprep.subr.bf16.mxu0 0
        %2130 = vmatpush1.bf16.xpose.msra.mxu0 0
        %2131 = vmatprep.subr.bf16.mxu0 0
        %2132 = vmatpush1.bf16.xpose.msra.mxu0 0
        %2133 = vmatprep.subr.bf16.mxu0 0
        %2134 = vmatpush1.bf16.xpose.msra.mxu0 0
        %2135 = vmatprep.subr.bf16.mxu0 0
        %2136 = vmatpush1.bf16.xpose.msra.mxu0 0
        %2137 = vmatprep.subr.bf16.mxu0 0
        %2138 = vmatpush1.bf16.xpose.msra.mxu0 0
        %2139 = vmatprep.subr.bf16.mxu0 0
        %2140 = vmatpush1.bf16.xpose.msra.mxu0 0
        %2141 = vmatprep.subr.bf16.mxu0 0
        %2142 = vmatpush1.bf16.xpose.msra.mxu0 0
        %2143 = vmatprep.subr.bf16.mxu0 0
        %2144 = vmatpush1.bf16.xpose.msra.mxu0 %v2127
        %2145 = vmatprep.subr.bf16.mxu0 0
        %2146 = vmatpush2.bf16.xpose.msra.mxu0 0
        %2147 = vmatprep.subr.bf16.mxu0 0
        %2148 = vmatpush2.bf16.xpose.msra.mxu0 0
        %2149 = vmatprep.subr.bf16.mxu0 0
        %2150 = vmatpush2.bf16.xpose.msra.mxu0 0
        %2151 = vmatprep.subr.bf16.mxu0 0
        %2152 = vmatpush2.bf16.xpose.msra.mxu0 0
        %2153 = vmatprep.subr.bf16.mxu0 0
        %2154 = vmatpush2.bf16.xpose.msra.mxu0 0
        %2155 = vmatprep.subr.bf16.mxu0 0
        %2156 = vmatpush2.bf16.xpose.msra.mxu0 0
        %2157 = vmatprep.subr.bf16.mxu0 0
        %2158 = vmatpush2.bf16.xpose.msra.mxu0 0
        %2159 = vmatprep.subr.bf16.mxu0 0
        %2160 = vmatpush2.bf16.xpose.msra.mxu0 0
        %2161 = vmatprep.mubr.bf16.mxu0 0
        %2162 = vmatmul.mubr.bf16.gmra.mxu0 %v2124
        %v2163 = vpop.f32.mrf.mxu0
        %v2164 = vadd.f32 %v1845, %v2163
        %v2165 = vpop.f32.mrf.mxu0
        %v2166 = vpop.f32.mrf.mxu0
        %v2167 = vpop.f32.mrf.mxu0
        %2168 = vdwg.mxu0
        %v2170 = vsel %vm1846, %v1157, 0
        %v2173 = vsel %vm1846, %v1482, 0
        %2175 = vmatprep.subr.bf16.mxu0 0
        %2176 = vmatpush1.bf16.xpose.msra.mxu0 0
        %2177 = vmatprep.subr.bf16.mxu0 0
        %2178 = vmatpush1.bf16.xpose.msra.mxu0 0
        %2179 = vmatprep.subr.bf16.mxu0 0
        %2180 = vmatpush1.bf16.xpose.msra.mxu0 0
        %2181 = vmatprep.subr.bf16.mxu0 0
        %2182 = vmatpush1.bf16.xpose.msra.mxu0 0
        %2183 = vmatprep.subr.bf16.mxu0 0
        %2184 = vmatpush1.bf16.xpose.msra.mxu0 0
        %2185 = vmatprep.subr.bf16.mxu0 0
        %2186 = vmatpush1.bf16.xpose.msra.mxu0 0
        %2187 = vmatprep.subr.bf16.mxu0 0
        %2188 = vmatpush1.bf16.xpose.msra.mxu0 0
        %2189 = vmatprep.subr.bf16.mxu0 0
        %2190 = vmatpush1.bf16.xpose.msra.mxu0 %v2173
        %2191 = vmatprep.subr.bf16.mxu0 0
        %2192 = vmatpush2.bf16.xpose.msra.mxu0 0
        %2193 = vmatprep.subr.bf16.mxu0 0
        %2194 = vmatpush2.bf16.xpose.msra.mxu0 0
        %2195 = vmatprep.subr.bf16.mxu0 0
        %2196 = vmatpush2.bf16.xpose.msra.mxu0 0
        %2197 = vmatprep.subr.bf16.mxu0 0
        %2198 = vmatpush2.bf16.xpose.msra.mxu0 0
        %2199 = vmatprep.subr.bf16.mxu0 0
        %2200 = vmatpush2.bf16.xpose.msra.mxu0 0
        %2201 = vmatprep.subr.bf16.mxu0 0
        %2202 = vmatpush2.bf16.xpose.msra.mxu0 0
        %2203 = vmatprep.subr.bf16.mxu0 0
        %2204 = vmatpush2.bf16.xpose.msra.mxu0 0
        %2205 = vmatprep.subr.bf16.mxu0 0
        %2206 = vmatpush2.bf16.xpose.msra.mxu0 0
        %2207 = vmatprep.mubr.bf16.mxu0 0
        %2208 = vmatmul.mubr.bf16.gmra.mxu0 %v2170
        %v2209 = vpop.f32.mrf.mxu0
        %v2210 = vadd.f32 %v1845, %v2209
        %v2211 = vpop.f32.mrf.mxu0
        %v2212 = vpop.f32.mrf.mxu0
        %v2213 = vpop.f32.mrf.mxu0
        %2214 = vdwg.mxu0
        %v2216 = vsel %vm1846, %v1158, 0
        %v2219 = vsel %vm1846, %v1483, 0
        %2221 = vmatprep.subr.bf16.mxu0 0
        %2222 = vmatpush1.bf16.xpose.msra.mxu0 0
        %2223 = vmatprep.subr.bf16.mxu0 0
        %2224 = vmatpush1.bf16.xpose.msra.mxu0 0
        %2225 = vmatprep.subr.bf16.mxu0 0
        %2226 = vmatpush1.bf16.xpose.msra.mxu0 0
        %2227 = vmatprep.subr.bf16.mxu0 0
        %2228 = vmatpush1.bf16.xpose.msra.mxu0 0
        %2229 = vmatprep.subr.bf16.mxu0 0
        %2230 = vmatpush1.bf16.xpose.msra.mxu0 0
        %2231 = vmatprep.subr.bf16.mxu0 0
        %2232 = vmatpush1.bf16.xpose.msra.mxu0 0
        %2233 = vmatprep.subr.bf16.mxu0 0
        %2234 = vmatpush1.bf16.xpose.msra.mxu0 0
        %2235 = vmatprep.subr.bf16.mxu0 0
        %2236 = vmatpush1.bf16.xpose.msra.mxu0 %v2219
        %2237 = vmatprep.subr.bf16.mxu0 0
        %2238 = vmatpush2.bf16.xpose.msra.mxu0 0
        %2239 = vmatprep.subr.bf16.mxu0 0
        %2240 = vmatpush2.bf16.xpose.msra.mxu0 0
        %2241 = vmatprep.subr.bf16.mxu0 0
        %2242 = vmatpush2.bf16.xpose.msra.mxu0 0
        %2243 = vmatprep.subr.bf16.mxu0 0
        %2244 = vmatpush2.bf16.xpose.msra.mxu0 0
        %2245 = vmatprep.subr.bf16.mxu0 0
        %2246 = vmatpush2.bf16.xpose.msra.mxu0 0
        %2247 = vmatprep.subr.bf16.mxu0 0
        %2248 = vmatpush2.bf16.xpose.msra.mxu0 0
        %2249 = vmatprep.subr.bf16.mxu0 0
        %2250 = vmatpush2.bf16.xpose.msra.mxu0 0
        %2251 = vmatprep.subr.bf16.mxu0 0
        %2252 = vmatpush2.bf16.xpose.msra.mxu0 0
        %2253 = vmatprep.mubr.bf16.mxu0 0
        %2254 = vmatmul.mubr.bf16.gmra.mxu0 %v2216
        %v2255 = vpop.f32.mrf.mxu0
        %v2256 = vadd.f32 %v1845, %v2255
        %v2257 = vpop.f32.mrf.mxu0
        %v2258 = vpop.f32.mrf.mxu0
        %v2259 = vpop.f32.mrf.mxu0
        %2260 = vdwg.mxu0
        %v2262 = vsel %vm1846, %v1159, 0
        %v2265 = vsel %vm1846, %v1484, 0
        %2267 = vmatprep.subr.bf16.mxu0 0
        %2268 = vmatpush1.bf16.xpose.msra.mxu0 0
        %2269 = vmatprep.subr.bf16.mxu0 0
        %2270 = vmatpush1.bf16.xpose.msra.mxu0 0
        %2271 = vmatprep.subr.bf16.mxu0 0
        %2272 = vmatpush1.bf16.xpose.msra.mxu0 0
        %2273 = vmatprep.subr.bf16.mxu0 0
        %2274 = vmatpush1.bf16.xpose.msra.mxu0 0
        %2275 = vmatprep.subr.bf16.mxu0 0
        %2276 = vmatpush1.bf16.xpose.msra.mxu0 0
        %2277 = vmatprep.subr.bf16.mxu0 0
        %2278 = vmatpush1.bf16.xpose.msra.mxu0 0
        %2279 = vmatprep.subr.bf16.mxu0 0
        %2280 = vmatpush1.bf16.xpose.msra.mxu0 0
        %2281 = vmatprep.subr.bf16.mxu0 0
        %2282 = vmatpush1.bf16.xpose.msra.mxu0 %v2265
        %2283 = vmatprep.subr.bf16.mxu0 0
        %2284 = vmatpush2.bf16.xpose.msra.mxu0 0
        %2285 = vmatprep.subr.bf16.mxu0 0
        %2286 = vmatpush2.bf16.xpose.msra.mxu0 0
        %2287 = vmatprep.subr.bf16.mxu0 0
        %2288 = vmatpush2.bf16.xpose.msra.mxu0 0
        %2289 = vmatprep.subr.bf16.mxu0 0
        %2290 = vmatpush2.bf16.xpose.msra.mxu0 0
        %2291 = vmatprep.subr.bf16.mxu0 0
        %2292 = vmatpush2.bf16.xpose.msra.mxu0 0
        %2293 = vmatprep.subr.bf16.mxu0 0
        %2294 = vmatpush2.bf16.xpose.msra.mxu0 0
        %2295 = vmatprep.subr.bf16.mxu0 0
        %2296 = vmatpush2.bf16.xpose.msra.mxu0 0
        %2297 = vmatprep.subr.bf16.mxu0 0
        %2298 = vmatpush2.bf16.xpose.msra.mxu0 0
        %2299 = vmatprep.mubr.bf16.mxu0 0
        %2300 = vmatmul.mubr.bf16.gmra.mxu0 %v2262
        %v2301 = vpop.f32.mrf.mxu0
        %v2302 = vadd.f32 %v1845, %v2301
        %v2303 = vpop.f32.mrf.mxu0
        %v2304 = vpop.f32.mrf.mxu0
        %v2305 = vpop.f32.mrf.mxu0
        %2306 = vdwg.mxu0
        %v2308 = vsel %vm1846, %v1160, 0
        %v2311 = vsel %vm1846, %v1485, 0
        %2313 = vmatprep.subr.bf16.mxu0 0
        %2314 = vmatpush1.bf16.xpose.msra.mxu0 0
        %2315 = vmatprep.subr.bf16.mxu0 0
        %2316 = vmatpush1.bf16.xpose.msra.mxu0 0
        %2317 = vmatprep.subr.bf16.mxu0 0
        %2318 = vmatpush1.bf16.xpose.msra.mxu0 0
        %2319 = vmatprep.subr.bf16.mxu0 0
        %2320 = vmatpush1.bf16.xpose.msra.mxu0 0
        %2321 = vmatprep.subr.bf16.mxu0 0
        %2322 = vmatpush1.bf16.xpose.msra.mxu0 0
        %2323 = vmatprep.subr.bf16.mxu0 0
        %2324 = vmatpush1.bf16.xpose.msra.mxu0 0
        %2325 = vmatprep.subr.bf16.mxu0 0
        %2326 = vmatpush1.bf16.xpose.msra.mxu0 0
        %2327 = vmatprep.subr.bf16.mxu0 0
        %2328 = vmatpush1.bf16.xpose.msra.mxu0 %v2311
        %2329 = vmatprep.subr.bf16.mxu0 0
        %2330 = vmatpush2.bf16.xpose.msra.mxu0 0
        %2331 = vmatprep.subr.bf16.mxu0 0
        %2332 = vmatpush2.bf16.xpose.msra.mxu0 0
        %2333 = vmatprep.subr.bf16.mxu0 0
        %2334 = vmatpush2.bf16.xpose.msra.mxu0 0
        %2335 = vmatprep.subr.bf16.mxu0 0
        %2336 = vmatpush2.bf16.xpose.msra.mxu0 0
        %2337 = vmatprep.subr.bf16.mxu0 0
        %2338 = vmatpush2.bf16.xpose.msra.mxu0 0
        %2339 = vmatprep.subr.bf16.mxu0 0
        %2340 = vmatpush2.bf16.xpose.msra.mxu0 0
        %2341 = vmatprep.subr.bf16.mxu0 0
        %2342 = vmatpush2.bf16.xpose.msra.mxu0 0
        %2343 = vmatprep.subr.bf16.mxu0 0
        %2344 = vmatpush2.bf16.xpose.msra.mxu0 0
        %2345 = vmatprep.mubr.bf16.mxu0 0
        %2346 = vmatmul.mubr.bf16.gmra.mxu0 %v2308
        %v2347 = vpop.f32.mrf.mxu0
        %v2348 = vadd.f32 %v1845, %v2347
        %v2349 = vpop.f32.mrf.mxu0
        %v2350 = vpop.f32.mrf.mxu0
        %v2351 = vpop.f32.mrf.mxu0
        %2352 = vdwg.mxu0
        %v2354 = vsel %vm1846, %v1161, 0
        %v2357 = vsel %vm1846, %v1486, 0
        %2359 = vmatprep.subr.bf16.mxu0 0
        %2360 = vmatpush1.bf16.xpose.msra.mxu0 0
        %2361 = vmatprep.subr.bf16.mxu0 0
        %2362 = vmatpush1.bf16.xpose.msra.mxu0 0
        %2363 = vmatprep.subr.bf16.mxu0 0
        %2364 = vmatpush1.bf16.xpose.msra.mxu0 0
        %2365 = vmatprep.subr.bf16.mxu0 0
        %2366 = vmatpush1.bf16.xpose.msra.mxu0 0
        %2367 = vmatprep.subr.bf16.mxu0 0
        %2368 = vmatpush1.bf16.xpose.msra.mxu0 0
        %2369 = vmatprep.subr.bf16.mxu0 0
        %2370 = vmatpush1.bf16.xpose.msra.mxu0 0
        %2371 = vmatprep.subr.bf16.mxu0 0
        %2372 = vmatpush1.bf16.xpose.msra.mxu0 0
        %2373 = vmatprep.subr.bf16.mxu0 0
        %2374 = vmatpush1.bf16.xpose.msra.mxu0 %v2357
        %2375 = vmatprep.subr.bf16.mxu0 0
        %2376 = vmatpush2.bf16.xpose.msra.mxu0 0
        %2377 = vmatprep.subr.bf16.mxu0 0
        %2378 = vmatpush2.bf16.xpose.msra.mxu0 0
        %2379 = vmatprep.subr.bf16.mxu0 0
        %2380 = vmatpush2.bf16.xpose.msra.mxu0 0
        %2381 = vmatprep.subr.bf16.mxu0 0
        %2382 = vmatpush2.bf16.xpose.msra.mxu0 0
        %2383 = vmatprep.subr.bf16.mxu0 0
        %2384 = vmatpush2.bf16.xpose.msra.mxu0 0
        %2385 = vmatprep.subr.bf16.mxu0 0
        %2386 = vmatpush2.bf16.xpose.msra.mxu0 0
        %2387 = vmatprep.subr.bf16.mxu0 0
        %2388 = vmatpush2.bf16.xpose.msra.mxu0 0
        %2389 = vmatprep.subr.bf16.mxu0 0
        %2390 = vmatpush2.bf16.xpose.msra.mxu0 0
        %2391 = vmatprep.mubr.bf16.mxu0 0
        %2392 = vmatmul.mubr.bf16.gmra.mxu0 %v2354
        %v2393 = vpop.f32.mrf.mxu0
        %v2394 = vadd.f32 %v1845, %v2393
        %v2395 = vpop.f32.mrf.mxu0
        %v2396 = vpop.f32.mrf.mxu0
        %v2397 = vpop.f32.mrf.mxu0
        %2398 = vdwg.mxu0
        %v2400 = vsel %vm1846, %v1162, 0
        %v2403 = vsel %vm1846, %v1487, 0
        %2405 = vmatprep.subr.bf16.mxu0 0
        %2406 = vmatpush1.bf16.xpose.msra.mxu0 0
        %2407 = vmatprep.subr.bf16.mxu0 0
        %2408 = vmatpush1.bf16.xpose.msra.mxu0 0
        %2409 = vmatprep.subr.bf16.mxu0 0
        %2410 = vmatpush1.bf16.xpose.msra.mxu0 0
        %2411 = vmatprep.subr.bf16.mxu0 0
        %2412 = vmatpush1.bf16.xpose.msra.mxu0 0
        %2413 = vmatprep.subr.bf16.mxu0 0
        %2414 = vmatpush1.bf16.xpose.msra.mxu0 0
        %2415 = vmatprep.subr.bf16.mxu0 0
        %2416 = vmatpush1.bf16.xpose.msra.mxu0 0
        %2417 = vmatprep.subr.bf16.mxu0 0
        %2418 = vmatpush1.bf16.xpose.msra.mxu0 0
        %2419 = vmatprep.subr.bf16.mxu0 0
        %2420 = vmatpush1.bf16.xpose.msra.mxu0 %v2403
        %2421 = vmatprep.subr.bf16.mxu0 0
        %2422 = vmatpush2.bf16.xpose.msra.mxu0 0
        %2423 = vmatprep.subr.bf16.mxu0 0
        %2424 = vmatpush2.bf16.xpose.msra.mxu0 0
        %2425 = vmatprep.subr.bf16.mxu0 0
        %2426 = vmatpush2.bf16.xpose.msra.mxu0 0
        %2427 = vmatprep.subr.bf16.mxu0 0
        %2428 = vmatpush2.bf16.xpose.msra.mxu0 0
        %2429 = vmatprep.subr.bf16.mxu0 0
        %2430 = vmatpush2.bf16.xpose.msra.mxu0 0
        %2431 = vmatprep.subr.bf16.mxu0 0
        %2432 = vmatpush2.bf16.xpose.msra.mxu0 0
        %2433 = vmatprep.subr.bf16.mxu0 0
        %2434 = vmatpush2.bf16.xpose.msra.mxu0 0
        %2435 = vmatprep.subr.bf16.mxu0 0
        %2436 = vmatpush2.bf16.xpose.msra.mxu0 0
        %2437 = vmatprep.mubr.bf16.mxu0 0
        %2438 = vmatmul.mubr.bf16.gmra.mxu0 %v2400
        %v2439 = vpop.f32.mrf.mxu0
        %v2440 = vadd.f32 %v1845, %v2439
        %v2441 = vpop.f32.mrf.mxu0
        %v2442 = vpop.f32.mrf.mxu0
        %v2443 = vpop.f32.mrf.mxu0
        %2444 = vdwg.mxu0
        %v2446 = vsel %vm1846, %v1163, 0
        %v2449 = vsel %vm1846, %v1488, 0
        %2451 = vmatprep.subr.bf16.mxu0 0
        %2452 = vmatpush1.bf16.xpose.msra.mxu0 0
        %2453 = vmatprep.subr.bf16.mxu0 0
        %2454 = vmatpush1.bf16.xpose.msra.mxu0 0
        %2455 = vmatprep.subr.bf16.mxu0 0
        %2456 = vmatpush1.bf16.xpose.msra.mxu0 0
        %2457 = vmatprep.subr.bf16.mxu0 0
        %2458 = vmatpush1.bf16.xpose.msra.mxu0 0
        %2459 = vmatprep.subr.bf16.mxu0 0
        %2460 = vmatpush1.bf16.xpose.msra.mxu0 0
        %2461 = vmatprep.subr.bf16.mxu0 0
        %2462 = vmatpush1.bf16.xpose.msra.mxu0 0
        %2463 = vmatprep.subr.bf16.mxu0 0
        %2464 = vmatpush1.bf16.xpose.msra.mxu0 0
        %2465 = vmatprep.subr.bf16.mxu0 0
        %2466 = vmatpush1.bf16.xpose.msra.mxu0 %v2449
        %2467 = vmatprep.subr.bf16.mxu0 0
        %2468 = vmatpush2.bf16.xpose.msra.mxu0 0
        %2469 = vmatprep.subr.bf16.mxu0 0
        %2470 = vmatpush2.bf16.xpose.msra.mxu0 0
        %2471 = vmatprep.subr.bf16.mxu0 0
        %2472 = vmatpush2.bf16.xpose.msra.mxu0 0
        %2473 = vmatprep.subr.bf16.mxu0 0
        %2474 = vmatpush2.bf16.xpose.msra.mxu0 0
        %2475 = vmatprep.subr.bf16.mxu0 0
        %2476 = vmatpush2.bf16.xpose.msra.mxu0 0
        %2477 = vmatprep.subr.bf16.mxu0 0
        %2478 = vmatpush2.bf16.xpose.msra.mxu0 0
        %2479 = vmatprep.subr.bf16.mxu0 0
        %2480 = vmatpush2.bf16.xpose.msra.mxu0 0
        %2481 = vmatprep.subr.bf16.mxu0 0
        %2482 = vmatpush2.bf16.xpose.msra.mxu0 0
        %2483 = vmatprep.mubr.bf16.mxu0 0
        %2484 = vmatmul.mubr.bf16.gmra.mxu0 %v2446
        %v2485 = vpop.f32.mrf.mxu0
        %v2486 = vadd.f32 %v1845, %v2485
        %v2487 = vpop.f32.mrf.mxu0
        %v2488 = vpop.f32.mrf.mxu0
        %v2489 = vpop.f32.mrf.mxu0
        %2490 = vdwg.mxu0
        %v2492 = vsel %vm1846, %v1164, 0
        %v2495 = vsel %vm1846, %v1489, 0
        %2497 = vmatprep.subr.bf16.mxu0 0
        %2498 = vmatpush1.bf16.xpose.msra.mxu0 0
        %2499 = vmatprep.subr.bf16.mxu0 0
        %2500 = vmatpush1.bf16.xpose.msra.mxu0 0
        %2501 = vmatprep.subr.bf16.mxu0 0
        %2502 = vmatpush1.bf16.xpose.msra.mxu0 0
        %2503 = vmatprep.subr.bf16.mxu0 0
        %2504 = vmatpush1.bf16.xpose.msra.mxu0 0
        %2505 = vmatprep.subr.bf16.mxu0 0
        %2506 = vmatpush1.bf16.xpose.msra.mxu0 0
        %2507 = vmatprep.subr.bf16.mxu0 0
        %2508 = vmatpush1.bf16.xpose.msra.mxu0 0
        %2509 = vmatprep.subr.bf16.mxu0 0
        %2510 = vmatpush1.bf16.xpose.msra.mxu0 0
        %2511 = vmatprep.subr.bf16.mxu0 0
        %2512 = vmatpush1.bf16.xpose.msra.mxu0 %v2495
        %2513 = vmatprep.subr.bf16.mxu0 0
        %2514 = vmatpush2.bf16.xpose.msra.mxu0 0
        %2515 = vmatprep.subr.bf16.mxu0 0
        %2516 = vmatpush2.bf16.xpose.msra.mxu0 0
        %2517 = vmatprep.subr.bf16.mxu0 0
        %2518 = vmatpush2.bf16.xpose.msra.mxu0 0
        %2519 = vmatprep.subr.bf16.mxu0 0
        %2520 = vmatpush2.bf16.xpose.msra.mxu0 0
        %2521 = vmatprep.subr.bf16.mxu0 0
        %2522 = vmatpush2.bf16.xpose.msra.mxu0 0
        %2523 = vmatprep.subr.bf16.mxu0 0
        %2524 = vmatpush2.bf16.xpose.msra.mxu0 0
        %2525 = vmatprep.subr.bf16.mxu0 0
        %2526 = vmatpush2.bf16.xpose.msra.mxu0 0
        %2527 = vmatprep.subr.bf16.mxu0 0
        %2528 = vmatpush2.bf16.xpose.msra.mxu0 0
        %2529 = vmatprep.mubr.bf16.mxu0 0
        %2530 = vmatmul.mubr.bf16.gmra.mxu0 %v2492
        %v2531 = vpop.f32.mrf.mxu0
        %v2532 = vadd.f32 %v1845, %v2531
        %v2533 = vpop.f32.mrf.mxu0
        %v2534 = vpop.f32.mrf.mxu0
        %v2535 = vpop.f32.mrf.mxu0
        %2536 = vdwg.mxu0
        %v2538 = vsel %vm1846, %v1165, 0
        %v2541 = vsel %vm1846, %v1490, 0
        %2543 = vmatprep.subr.bf16.mxu0 0
        %2544 = vmatpush1.bf16.xpose.msra.mxu0 0
        %2545 = vmatprep.subr.bf16.mxu0 0
        %2546 = vmatpush1.bf16.xpose.msra.mxu0 0
        %2547 = vmatprep.subr.bf16.mxu0 0
        %2548 = vmatpush1.bf16.xpose.msra.mxu0 0
        %2549 = vmatprep.subr.bf16.mxu0 0
        %2550 = vmatpush1.bf16.xpose.msra.mxu0 0
        %2551 = vmatprep.subr.bf16.mxu0 0
        %2552 = vmatpush1.bf16.xpose.msra.mxu0 0
        %2553 = vmatprep.subr.bf16.mxu0 0
        %2554 = vmatpush1.bf16.xpose.msra.mxu0 0
        %2555 = vmatprep.subr.bf16.mxu0 0
        %2556 = vmatpush1.bf16.xpose.msra.mxu0 0
        %2557 = vmatprep.subr.bf16.mxu0 0
        %2558 = vmatpush1.bf16.xpose.msra.mxu0 %v2541
        %2559 = vmatprep.subr.bf16.mxu0 0
        %2560 = vmatpush2.bf16.xpose.msra.mxu0 0
        %2561 = vmatprep.subr.bf16.mxu0 0
        %2562 = vmatpush2.bf16.xpose.msra.mxu0 0
        %2563 = vmatprep.subr.bf16.mxu0 0
        %2564 = vmatpush2.bf16.xpose.msra.mxu0 0
        %2565 = vmatprep.subr.bf16.mxu0 0
        %2566 = vmatpush2.bf16.xpose.msra.mxu0 0
        %2567 = vmatprep.subr.bf16.mxu0 0
        %2568 = vmatpush2.bf16.xpose.msra.mxu0 0
        %2569 = vmatprep.subr.bf16.mxu0 0
        %2570 = vmatpush2.bf16.xpose.msra.mxu0 0
        %2571 = vmatprep.subr.bf16.mxu0 0
        %2572 = vmatpush2.bf16.xpose.msra.mxu0 0
        %2573 = vmatprep.subr.bf16.mxu0 0
        %2574 = vmatpush2.bf16.xpose.msra.mxu0 0
        %2575 = vmatprep.mubr.bf16.mxu0 0
        %2576 = vmatmul.mubr.bf16.gmra.mxu0 %v2538
        %v2577 = vpop.f32.mrf.mxu0
        %v2578 = vadd.f32 %v1845, %v2577
        %v2579 = vpop.f32.mrf.mxu0
        %v2580 = vpop.f32.mrf.mxu0
        %v2581 = vpop.f32.mrf.mxu0
        %2582 = vdwg.mxu0
        %v2585 = vunpack.c.l.b16 %v1813
        %v2586 = vunpack.c.l.b16 %v1814
        %v2587 = vpack.c.b16 %v2586, %v2585
        %v2589 = vsel %vm1846, %v870, 0
        %v2592 = vsel %vm1846, %v2587, 0
        %2594 = vmatprep.subr.bf16.mxu0 0
        %2595 = vmatpush1.bf16.xpose.msra.mxu0 0
        %2596 = vmatprep.subr.bf16.mxu0 0
        %2597 = vmatpush1.bf16.xpose.msra.mxu0 0
        %2598 = vmatprep.subr.bf16.mxu0 0
        %2599 = vmatpush1.bf16.xpose.msra.mxu0 0
        %2600 = vmatprep.subr.bf16.mxu0 0
        %2601 = vmatpush1.bf16.xpose.msra.mxu0 0
        %2602 = vmatprep.subr.bf16.mxu0 0
        %2603 = vmatpush1.bf16.xpose.msra.mxu0 0
        %2604 = vmatprep.subr.bf16.mxu0 0
        %2605 = vmatpush1.bf16.xpose.msra.mxu0 0
        %2606 = vmatprep.subr.bf16.mxu0 0
        %2607 = vmatpush1.bf16.xpose.msra.mxu0 0
        %2608 = vmatprep.subr.bf16.mxu0 0
        %2609 = vmatpush1.bf16.xpose.msra.mxu0 %v2592
        %2610 = vmatprep.subr.bf16.mxu0 0
        %2611 = vmatpush2.bf16.xpose.msra.mxu0 0
        %2612 = vmatprep.subr.bf16.mxu0 0
        %2613 = vmatpush2.bf16.xpose.msra.mxu0 0
        %2614 = vmatprep.subr.bf16.mxu0 0
        %2615 = vmatpush2.bf16.xpose.msra.mxu0 0
        %2616 = vmatprep.subr.bf16.mxu0 0
        %2617 = vmatpush2.bf16.xpose.msra.mxu0 0
        %2618 = vmatprep.subr.bf16.mxu0 0
        %2619 = vmatpush2.bf16.xpose.msra.mxu0 0
        %2620 = vmatprep.subr.bf16.mxu0 0
        %2621 = vmatpush2.bf16.xpose.msra.mxu0 0
        %2622 = vmatprep.subr.bf16.mxu0 0
        %2623 = vmatpush2.bf16.xpose.msra.mxu0 0
        %2624 = vmatprep.subr.bf16.mxu0 0
        %2625 = vmatpush2.bf16.xpose.msra.mxu0 0
        %2626 = vmatprep.mubr.bf16.mxu0 0
        %2627 = vmatmul.mubr.bf16.gmra.mxu0 %v2589
        %v2628 = vpop.f32.mrf.mxu0
        %v2629 = vadd.f32 0.0, %v2628
        %v2630 = vpop.f32.mrf.mxu0
        %v2631 = vpop.f32.mrf.mxu0
        %v2632 = vadd.f32 0.0, %v2631
        %v2633 = vpop.f32.mrf.mxu0
        %2634 = vdwg.mxu0
        %v2637 = vunpack.c.l.b16 %v1815
        %v2638 = vunpack.c.l.b16 %v1816
        %v2639 = vpack.c.b16 %v2638, %v2637
        %v2641 = vsel %vm1846, %v871, 0
        %v2644 = vsel %vm1846, %v2639, 0
        %2646 = vmatprep.subr.bf16.mxu0 0
        %2647 = vmatpush1.bf16.xpose.msra.mxu0 0
        %2648 = vmatprep.subr.bf16.mxu0 0
        %2649 = vmatpush1.bf16.xpose.msra.mxu0 0
        %2650 = vmatprep.subr.bf16.mxu0 0
        %2651 = vmatpush1.bf16.xpose.msra.mxu0 0
        %2652 = vmatprep.subr.bf16.mxu0 0
        %2653 = vmatpush1.bf16.xpose.msra.mxu0 0
        %2654 = vmatprep.subr.bf16.mxu0 0
        %2655 = vmatpush1.bf16.xpose.msra.mxu0 0
        %2656 = vmatprep.subr.bf16.mxu0 0
        %2657 = vmatpush1.bf16.xpose.msra.mxu0 0
        %2658 = vmatprep.subr.bf16.mxu0 0
        %2659 = vmatpush1.bf16.xpose.msra.mxu0 0
        %2660 = vmatprep.subr.bf16.mxu0 0
        %2661 = vmatpush1.bf16.xpose.msra.mxu0 %v2644
        %2662 = vmatprep.subr.bf16.mxu0 0
        %2663 = vmatpush2.bf16.xpose.msra.mxu0 0
        %2664 = vmatprep.subr.bf16.mxu0 0
        %2665 = vmatpush2.bf16.xpose.msra.mxu0 0
        %2666 = vmatprep.subr.bf16.mxu0 0
        %2667 = vmatpush2.bf16.xpose.msra.mxu0 0
        %2668 = vmatprep.subr.bf16.mxu0 0
        %2669 = vmatpush2.bf16.xpose.msra.mxu0 0
        %2670 = vmatprep.subr.bf16.mxu0 0
        %2671 = vmatpush2.bf16.xpose.msra.mxu0 0
        %2672 = vmatprep.subr.bf16.mxu0 0
        %2673 = vmatpush2.bf16.xpose.msra.mxu0 0
        %2674 = vmatprep.subr.bf16.mxu0 0
        %2675 = vmatpush2.bf16.xpose.msra.mxu0 0
        %2676 = vmatprep.subr.bf16.mxu0 0
        %2677 = vmatpush2.bf16.xpose.msra.mxu0 0
        %2678 = vmatprep.mubr.bf16.mxu0 0
        %2679 = vmatmul.mubr.bf16.gmra.mxu0 %v2641
        %v2680 = vpop.f32.mrf.mxu0
        %v2681 = vadd.f32 0.0, %v2680
        %v2682 = vpop.f32.mrf.mxu0
        %v2683 = vpop.f32.mrf.mxu0
        %v2684 = vadd.f32 0.0, %v2683
        %v2685 = vpop.f32.mrf.mxu0
        %2686 = vdwg.mxu0
        %v2689 = vunpack.c.l.b16 %v1817
        %v2690 = vunpack.c.l.b16 %v1818
        %v2691 = vpack.c.b16 %v2690, %v2689
        %v2693 = vsel %vm1846, %v872, 0
        %v2696 = vsel %vm1846, %v2691, 0
        %2698 = vmatprep.subr.bf16.mxu0 0
        %2699 = vmatpush1.bf16.xpose.msra.mxu0 0
        %2700 = vmatprep.subr.bf16.mxu0 0
        %2701 = vmatpush1.bf16.xpose.msra.mxu0 0
        %2702 = vmatprep.subr.bf16.mxu0 0
        %2703 = vmatpush1.bf16.xpose.msra.mxu0 0
        %2704 = vmatprep.subr.bf16.mxu0 0
        %2705 = vmatpush1.bf16.xpose.msra.mxu0 0
        %2706 = vmatprep.subr.bf16.mxu0 0
        %2707 = vmatpush1.bf16.xpose.msra.mxu0 0
        %2708 = vmatprep.subr.bf16.mxu0 0
        %2709 = vmatpush1.bf16.xpose.msra.mxu0 0
        %2710 = vmatprep.subr.bf16.mxu0 0
        %2711 = vmatpush1.bf16.xpose.msra.mxu0 0
        %2712 = vmatprep.subr.bf16.mxu0 0
        %2713 = vmatpush1.bf16.xpose.msra.mxu0 %v2696
        %2714 = vmatprep.subr.bf16.mxu0 0
        %2715 = vmatpush2.bf16.xpose.msra.mxu0 0
        %2716 = vmatprep.subr.bf16.mxu0 0
        %2717 = vmatpush2.bf16.xpose.msra.mxu0 0
        %2718 = vmatprep.subr.bf16.mxu0 0
        %2719 = vmatpush2.bf16.xpose.msra.mxu0 0
        %2720 = vmatprep.subr.bf16.mxu0 0
        %2721 = vmatpush2.bf16.xpose.msra.mxu0 0
        %2722 = vmatprep.subr.bf16.mxu0 0
        %2723 = vmatpush2.bf16.xpose.msra.mxu0 0
        %2724 = vmatprep.subr.bf16.mxu0 0
        %2725 = vmatpush2.bf16.xpose.msra.mxu0 0
        %2726 = vmatprep.subr.bf16.mxu0 0
        %2727 = vmatpush2.bf16.xpose.msra.mxu0 0
        %2728 = vmatprep.subr.bf16.mxu0 0
        %2729 = vmatpush2.bf16.xpose.msra.mxu0 0
        %2730 = vmatprep.mubr.bf16.mxu0 0
        %2731 = vmatmul.mubr.bf16.gmra.mxu0 %v2693
        %v2732 = vpop.f32.mrf.mxu0
        %v2733 = vadd.f32 0.0, %v2732
        %v2734 = vpop.f32.mrf.mxu0
        %v2735 = vpop.f32.mrf.mxu0
        %v2736 = vadd.f32 0.0, %v2735
        %v2737 = vpop.f32.mrf.mxu0
        %2738 = vdwg.mxu0
        %v2741 = vunpack.c.l.b16 %v1819
        %v2742 = vunpack.c.l.b16 %v1820
        %v2743 = vpack.c.b16 %v2742, %v2741
        %v2745 = vsel %vm1846, %v873, 0
        %v2748 = vsel %vm1846, %v2743, 0
        %2750 = vmatprep.subr.bf16.mxu0 0
        %2751 = vmatpush1.bf16.xpose.msra.mxu0 0
        %2752 = vmatprep.subr.bf16.mxu0 0
        %2753 = vmatpush1.bf16.xpose.msra.mxu0 0
        %2754 = vmatprep.subr.bf16.mxu0 0
        %2755 = vmatpush1.bf16.xpose.msra.mxu0 0
        %2756 = vmatprep.subr.bf16.mxu0 0
        %2757 = vmatpush1.bf16.xpose.msra.mxu0 0
        %2758 = vmatprep.subr.bf16.mxu0 0
        %2759 = vmatpush1.bf16.xpose.msra.mxu0 0
        %2760 = vmatprep.subr.bf16.mxu0 0
        %2761 = vmatpush1.bf16.xpose.msra.mxu0 0
        %2762 = vmatprep.subr.bf16.mxu0 0
        %2763 = vmatpush1.bf16.xpose.msra.mxu0 0
        %2764 = vmatprep.subr.bf16.mxu0 0
        %2765 = vmatpush1.bf16.xpose.msra.mxu0 %v2748
        %2766 = vmatprep.subr.bf16.mxu0 0
        %2767 = vmatpush2.bf16.xpose.msra.mxu0 0
        %2768 = vmatprep.subr.bf16.mxu0 0
        %2769 = vmatpush2.bf16.xpose.msra.mxu0 0
        %2770 = vmatprep.subr.bf16.mxu0 0
        %2771 = vmatpush2.bf16.xpose.msra.mxu0 0
        %2772 = vmatprep.subr.bf16.mxu0 0
        %2773 = vmatpush2.bf16.xpose.msra.mxu0 0
        %2774 = vmatprep.subr.bf16.mxu0 0
        %2775 = vmatpush2.bf16.xpose.msra.mxu0 0
        %2776 = vmatprep.subr.bf16.mxu0 0
        %2777 = vmatpush2.bf16.xpose.msra.mxu0 0
        %2778 = vmatprep.subr.bf16.mxu0 0
        %2779 = vmatpush2.bf16.xpose.msra.mxu0 0
        %2780 = vmatprep.subr.bf16.mxu0 0
        %2781 = vmatpush2.bf16.xpose.msra.mxu0 0
        %2782 = vmatprep.mubr.bf16.mxu0 0
        %2783 = vmatmul.mubr.bf16.gmra.mxu0 %v2745
        %v2784 = vpop.f32.mrf.mxu0
        %v2785 = vadd.f32 0.0, %v2784
        %v2786 = vpop.f32.mrf.mxu0
        %v2787 = vpop.f32.mrf.mxu0
        %v2788 = vadd.f32 0.0, %v2787
        %v2789 = vpop.f32.mrf.mxu0
        %2790 = vdwg.mxu0
        %v2793 = vunpack.c.l.b16 %v1821
        %v2794 = vunpack.c.l.b16 %v1822
        %v2795 = vpack.c.b16 %v2794, %v2793
        %v2797 = vsel %vm1846, %v874, 0
        %v2800 = vsel %vm1846, %v2795, 0
        %2802 = vmatprep.subr.bf16.mxu0 0
        %2803 = vmatpush1.bf16.xpose.msra.mxu0 0
        %2804 = vmatprep.subr.bf16.mxu0 0
        %2805 = vmatpush1.bf16.xpose.msra.mxu0 0
        %2806 = vmatprep.subr.bf16.mxu0 0
        %2807 = vmatpush1.bf16.xpose.msra.mxu0 0
        %2808 = vmatprep.subr.bf16.mxu0 0
        %2809 = vmatpush1.bf16.xpose.msra.mxu0 0
        %2810 = vmatprep.subr.bf16.mxu0 0
        %2811 = vmatpush1.bf16.xpose.msra.mxu0 0
        %2812 = vmatprep.subr.bf16.mxu0 0
        %2813 = vmatpush1.bf16.xpose.msra.mxu0 0
        %2814 = vmatprep.subr.bf16.mxu0 0
        %2815 = vmatpush1.bf16.xpose.msra.mxu0 0
        %2816 = vmatprep.subr.bf16.mxu0 0
        %2817 = vmatpush1.bf16.xpose.msra.mxu0 %v2800
        %2818 = vmatprep.subr.bf16.mxu0 0
        %2819 = vmatpush2.bf16.xpose.msra.mxu0 0
        %2820 = vmatprep.subr.bf16.mxu0 0
        %2821 = vmatpush2.bf16.xpose.msra.mxu0 0
        %2822 = vmatprep.subr.bf16.mxu0 0
        %2823 = vmatpush2.bf16.xpose.msra.mxu0 0
        %2824 = vmatprep.subr.bf16.mxu0 0
        %2825 = vmatpush2.bf16.xpose.msra.mxu0 0
        %2826 = vmatprep.subr.bf16.mxu0 0
        %2827 = vmatpush2.bf16.xpose.msra.mxu0 0
        %2828 = vmatprep.subr.bf16.mxu0 0
        %2829 = vmatpush2.bf16.xpose.msra.mxu0 0
        %2830 = vmatprep.subr.bf16.mxu0 0
        %2831 = vmatpush2.bf16.xpose.msra.mxu0 0
        %2832 = vmatprep.subr.bf16.mxu0 0
        %2833 = vmatpush2.bf16.xpose.msra.mxu0 0
        %2834 = vmatprep.mubr.bf16.mxu0 0
        %2835 = vmatmul.mubr.bf16.gmra.mxu0 %v2797
        %v2836 = vpop.f32.mrf.mxu0
        %v2837 = vadd.f32 0.0, %v2836
        %v2838 = vpop.f32.mrf.mxu0
        %v2839 = vpop.f32.mrf.mxu0
        %v2840 = vadd.f32 0.0, %v2839
        %v2841 = vpop.f32.mrf.mxu0
        %2842 = vdwg.mxu0
        %v2845 = vunpack.c.l.b16 %v1823
        %v2846 = vunpack.c.l.b16 %v1824
        %v2847 = vpack.c.b16 %v2846, %v2845
        %v2849 = vsel %vm1846, %v875, 0
        %v2852 = vsel %vm1846, %v2847, 0
        %2854 = vmatprep.subr.bf16.mxu0 0
        %2855 = vmatpush1.bf16.xpose.msra.mxu0 0
        %2856 = vmatprep.subr.bf16.mxu0 0
        %2857 = vmatpush1.bf16.xpose.msra.mxu0 0
        %2858 = vmatprep.subr.bf16.mxu0 0
        %2859 = vmatpush1.bf16.xpose.msra.mxu0 0
        %2860 = vmatprep.subr.bf16.mxu0 0
        %2861 = vmatpush1.bf16.xpose.msra.mxu0 0
        %2862 = vmatprep.subr.bf16.mxu0 0
        %2863 = vmatpush1.bf16.xpose.msra.mxu0 0
        %2864 = vmatprep.subr.bf16.mxu0 0
        %2865 = vmatpush1.bf16.xpose.msra.mxu0 0
        %2866 = vmatprep.subr.bf16.mxu0 0
        %2867 = vmatpush1.bf16.xpose.msra.mxu0 0
        %2868 = vmatprep.subr.bf16.mxu0 0
        %2869 = vmatpush1.bf16.xpose.msra.mxu0 %v2852
        %2870 = vmatprep.subr.bf16.mxu0 0
        %2871 = vmatpush2.bf16.xpose.msra.mxu0 0
        %2872 = vmatprep.subr.bf16.mxu0 0
        %2873 = vmatpush2.bf16.xpose.msra.mxu0 0
        %2874 = vmatprep.subr.bf16.mxu0 0
        %2875 = vmatpush2.bf16.xpose.msra.mxu0 0
        %2876 = vmatprep.subr.bf16.mxu0 0
        %2877 = vmatpush2.bf16.xpose.msra.mxu0 0
        %2878 = vmatprep.subr.bf16.mxu0 0
        %2879 = vmatpush2.bf16.xpose.msra.mxu0 0
        %2880 = vmatprep.subr.bf16.mxu0 0
        %2881 = vmatpush2.bf16.xpose.msra.mxu0 0
        %2882 = vmatprep.subr.bf16.mxu0 0
        %2883 = vmatpush2.bf16.xpose.msra.mxu0 0
        %2884 = vmatprep.subr.bf16.mxu0 0
        %2885 = vmatpush2.bf16.xpose.msra.mxu0 0
        %2886 = vmatprep.mubr.bf16.mxu0 0
        %2887 = vmatmul.mubr.bf16.gmra.mxu0 %v2849
        %v2888 = vpop.f32.mrf.mxu0
        %v2889 = vadd.f32 0.0, %v2888
        %v2890 = vpop.f32.mrf.mxu0
        %v2891 = vpop.f32.mrf.mxu0
        %v2892 = vadd.f32 0.0, %v2891
        %v2893 = vpop.f32.mrf.mxu0
        %2894 = vdwg.mxu0
        %v2897 = vunpack.c.l.b16 %v1825
        %v2898 = vunpack.c.l.b16 %v1826
        %v2899 = vpack.c.b16 %v2898, %v2897
        %v2901 = vsel %vm1846, %v876, 0
        %v2904 = vsel %vm1846, %v2899, 0
        %2906 = vmatprep.subr.bf16.mxu0 0
        %2907 = vmatpush1.bf16.xpose.msra.mxu0 0
        %2908 = vmatprep.subr.bf16.mxu0 0
        %2909 = vmatpush1.bf16.xpose.msra.mxu0 0
        %2910 = vmatprep.subr.bf16.mxu0 0
        %2911 = vmatpush1.bf16.xpose.msra.mxu0 0
        %2912 = vmatprep.subr.bf16.mxu0 0
        %2913 = vmatpush1.bf16.xpose.msra.mxu0 0
        %2914 = vmatprep.subr.bf16.mxu0 0
        %2915 = vmatpush1.bf16.xpose.msra.mxu0 0
        %2916 = vmatprep.subr.bf16.mxu0 0
        %2917 = vmatpush1.bf16.xpose.msra.mxu0 0
        %2918 = vmatprep.subr.bf16.mxu0 0
        %2919 = vmatpush1.bf16.xpose.msra.mxu0 0
        %2920 = vmatprep.subr.bf16.mxu0 0
        %2921 = vmatpush1.bf16.xpose.msra.mxu0 %v2904
        %2922 = vmatprep.subr.bf16.mxu0 0
        %2923 = vmatpush2.bf16.xpose.msra.mxu0 0
        %2924 = vmatprep.subr.bf16.mxu0 0
        %2925 = vmatpush2.bf16.xpose.msra.mxu0 0
        %2926 = vmatprep.subr.bf16.mxu0 0
        %2927 = vmatpush2.bf16.xpose.msra.mxu0 0
        %2928 = vmatprep.subr.bf16.mxu0 0
        %2929 = vmatpush2.bf16.xpose.msra.mxu0 0
        %2930 = vmatprep.subr.bf16.mxu0 0
        %2931 = vmatpush2.bf16.xpose.msra.mxu0 0
        %2932 = vmatprep.subr.bf16.mxu0 0
        %2933 = vmatpush2.bf16.xpose.msra.mxu0 0
        %2934 = vmatprep.subr.bf16.mxu0 0
        %2935 = vmatpush2.bf16.xpose.msra.mxu0 0
        %2936 = vmatprep.subr.bf16.mxu0 0
        %2937 = vmatpush2.bf16.xpose.msra.mxu0 0
        %2938 = vmatprep.mubr.bf16.mxu0 0
        %2939 = vmatmul.mubr.bf16.gmra.mxu0 %v2901
        %v2940 = vpop.f32.mrf.mxu0
        %v2941 = vadd.f32 0.0, %v2940
        %v2942 = vpop.f32.mrf.mxu0
        %v2943 = vpop.f32.mrf.mxu0
        %v2944 = vadd.f32 0.0, %v2943
        %v2945 = vpop.f32.mrf.mxu0
        %2946 = vdwg.mxu0
        %v2949 = vunpack.c.l.b16 %v1827
        %v2950 = vunpack.c.l.b16 %v1828
        %v2951 = vpack.c.b16 %v2950, %v2949
        %v2953 = vsel %vm1846, %v877, 0
        %v2956 = vsel %vm1846, %v2951, 0
        %2958 = vmatprep.subr.bf16.mxu0 0
        %2959 = vmatpush1.bf16.xpose.msra.mxu0 0
        %2960 = vmatprep.subr.bf16.mxu0 0
        %2961 = vmatpush1.bf16.xpose.msra.mxu0 0
        %2962 = vmatprep.subr.bf16.mxu0 0
        %2963 = vmatpush1.bf16.xpose.msra.mxu0 0
        %2964 = vmatprep.subr.bf16.mxu0 0
        %2965 = vmatpush1.bf16.xpose.msra.mxu0 0
        %2966 = vmatprep.subr.bf16.mxu0 0
        %2967 = vmatpush1.bf16.xpose.msra.mxu0 0
        %2968 = vmatprep.subr.bf16.mxu0 0
        %2969 = vmatpush1.bf16.xpose.msra.mxu0 0
        %2970 = vmatprep.subr.bf16.mxu0 0
        %2971 = vmatpush1.bf16.xpose.msra.mxu0 0
        %2972 = vmatprep.subr.bf16.mxu0 0
        %2973 = vmatpush1.bf16.xpose.msra.mxu0 %v2956
        %2974 = vmatprep.subr.bf16.mxu0 0
        %2975 = vmatpush2.bf16.xpose.msra.mxu0 0
        %2976 = vmatprep.subr.bf16.mxu0 0
        %2977 = vmatpush2.bf16.xpose.msra.mxu0 0
        %2978 = vmatprep.subr.bf16.mxu0 0
        %2979 = vmatpush2.bf16.xpose.msra.mxu0 0
        %2980 = vmatprep.subr.bf16.mxu0 0
        %2981 = vmatpush2.bf16.xpose.msra.mxu0 0
        %2982 = vmatprep.subr.bf16.mxu0 0
        %2983 = vmatpush2.bf16.xpose.msra.mxu0 0
        %2984 = vmatprep.subr.bf16.mxu0 0
        %2985 = vmatpush2.bf16.xpose.msra.mxu0 0
        %2986 = vmatprep.subr.bf16.mxu0 0
        %2987 = vmatpush2.bf16.xpose.msra.mxu0 0
        %2988 = vmatprep.subr.bf16.mxu0 0
        %2989 = vmatpush2.bf16.xpose.msra.mxu0 0
        %2990 = vmatprep.mubr.bf16.mxu0 0
        %2991 = vmatmul.mubr.bf16.gmra.mxu0 %v2953
        %v2992 = vpop.f32.mrf.mxu0
        %v2993 = vadd.f32 0.0, %v2992
        %v2994 = vpop.f32.mrf.mxu0
        %v2995 = vpop.f32.mrf.mxu0
        %v2996 = vadd.f32 0.0, %v2995
        %v2997 = vpop.f32.mrf.mxu0
        %2998 = vdwg.mxu0
        %vm2999 = vcmask 64512
        %v3000 = vsel %vm2999, %v1888, -inf
        %3001 = vmax.xlane.f32.xlu0 %v3000
        %v3002 = vpop.xlane.xlu0 %3001
        %v3003 = vsel %vm2999, %v1934, -inf
        %3004 = vmax.xlane.f32.xlu0 %v3003
        %v3005 = vpop.xlane.xlu0 %3004
        %v3006 = vsel %vm2999, %v1980, -inf
        %3007 = vmax.xlane.f32.xlu0 %v3006
        %v3008 = vpop.xlane.xlu0 %3007
        %v3009 = vsel %vm2999, %v2026, -inf
        %3010 = vmax.xlane.f32.xlu0 %v3009
        %v3011 = vpop.xlane.xlu0 %3010
        %v3012 = vsel %vm2999, %v2072, -inf
        %3013 = vmax.xlane.f32.xlu0 %v3012
        %v3014 = vpop.xlane.xlu0 %3013
        %v3015 = vsel %vm2999, %v2118, -inf
        %3016 = vmax.xlane.f32.xlu0 %v3015
        %v3017 = vpop.xlane.xlu0 %3016
        %v3018 = vsel %vm2999, %v2164, -inf
        %3019 = vmax.xlane.f32.xlu0 %v3018
        %v3020 = vpop.xlane.xlu0 %3019
        %v3021 = vsel %vm2999, %v2210, -inf
        %3022 = vmax.xlane.f32.xlu0 %v3021
        %v3023 = vpop.xlane.xlu0 %3022
        %v3024 = vsel %vm2999, %v2256, -inf
        %3025 = vmax.xlane.f32.xlu0 %v3024
        %v3026 = vpop.xlane.xlu0 %3025
        %v3027 = vsel %vm2999, %v2302, -inf
        %3028 = vmax.xlane.f32.xlu0 %v3027
        %v3029 = vpop.xlane.xlu0 %3028
        %v3030 = vsel %vm2999, %v2348, -inf
        %3031 = vmax.xlane.f32.xlu0 %v3030
        %v3032 = vpop.xlane.xlu0 %3031
        %v3033 = vsel %vm2999, %v2394, -inf
        %3034 = vmax.xlane.f32.xlu0 %v3033
        %v3035 = vpop.xlane.xlu0 %3034
        %v3036 = vsel %vm2999, %v2440, -inf
        %3037 = vmax.xlane.f32.xlu0 %v3036
        %v3038 = vpop.xlane.xlu0 %3037
        %v3039 = vsel %vm2999, %v2486, -inf
        %3040 = vmax.xlane.f32.xlu0 %v3039
        %v3041 = vpop.xlane.xlu0 %3040
        %v3042 = vsel %vm2999, %v2532, -inf
        %3043 = vmax.xlane.f32.xlu0 %v3042
        %v3044 = vpop.xlane.xlu0 %3043
        %v3045 = vsel %vm2999, %v2578, -inf
        %3046 = vmax.xlane.f32.xlu0 %v3045
        %v3047 = vpop.xlane.xlu0 %3046
        %v3064 = vlaneseq
        %v3065 = vand.u32 %v3064, 127
        %v3066 = vlaneseq
        %v3067 = vshrl.u32 %v3066, 7
        %v3068 = vsub.s32 %v3065, %v3067
        %v3069 = vrot.slane %v3002, %v3068
        %v3070 = vlaneseq
        %v3071 = vshrl.u32 %v3070, 7
        %v3072 = vsub.s32 %v3065, %v3071
        %v3073 = vrot.slane %v3005, %v3072
        %v3074 = vlaneseq
        %v3075 = vshrl.u32 %v3074, 7
        %v3076 = vsub.s32 %v3065, %v3075
        %v3077 = vrot.slane %v3008, %v3076
        %v3078 = vlaneseq
        %v3079 = vshrl.u32 %v3078, 7
        %v3080 = vsub.s32 %v3065, %v3079
        %v3081 = vrot.slane %v3011, %v3080
        %v3082 = vlaneseq
        %v3083 = vshrl.u32 %v3082, 7
        %v3084 = vsub.s32 %v3065, %v3083
        %v3085 = vrot.slane %v3014, %v3084
        %v3086 = vlaneseq
        %v3087 = vshrl.u32 %v3086, 7
        %v3088 = vsub.s32 %v3065, %v3087
        %v3089 = vrot.slane %v3017, %v3088
        %v3090 = vlaneseq
        %v3091 = vshrl.u32 %v3090, 7
        %v3092 = vsub.s32 %v3065, %v3091
        %v3093 = vrot.slane %v3020, %v3092
        %v3094 = vlaneseq
        %v3095 = vshrl.u32 %v3094, 7
        %v3096 = vsub.s32 %v3065, %v3095
        %v3097 = vrot.slane %v3023, %v3096
        %v3098 = vlaneseq
        %v3099 = vshrl.u32 %v3098, 7
        %v3100 = vsub.s32 %v3065, %v3099
        %v3101 = vrot.slane %v3026, %v3100
        %v3102 = vlaneseq
        %v3103 = vshrl.u32 %v3102, 7
        %v3104 = vsub.s32 %v3065, %v3103
        %v3105 = vrot.slane %v3029, %v3104
        %v3106 = vlaneseq
        %v3107 = vshrl.u32 %v3106, 7
        %v3108 = vsub.s32 %v3065, %v3107
        %v3109 = vrot.slane %v3032, %v3108
        %v3110 = vlaneseq
        %v3111 = vshrl.u32 %v3110, 7
        %v3112 = vsub.s32 %v3065, %v3111
        %v3113 = vrot.slane %v3035, %v3112
        %v3114 = vlaneseq
        %v3115 = vshrl.u32 %v3114, 7
        %v3116 = vsub.s32 %v3065, %v3115
        %v3117 = vrot.slane %v3038, %v3116
        %v3118 = vlaneseq
        %v3119 = vshrl.u32 %v3118, 7
        %v3120 = vsub.s32 %v3065, %v3119
        %v3121 = vrot.slane %v3041, %v3120
        %v3122 = vlaneseq
        %v3123 = vshrl.u32 %v3122, 7
        %v3124 = vsub.s32 %v3065, %v3123
        %v3125 = vrot.slane %v3044, %v3124
        %v3126 = vlaneseq
        %v3127 = vshrl.u32 %v3126, 7
        %v3128 = vsub.s32 %v3065, %v3127
        %v3129 = vrot.slane %v3047, %v3128
        %vm3130 = vcmask 1041409
        %v3131 = vsel %vm3130, %v3073, %v3069
        %vm3132 = vcmask 1042434
        %v3133 = vsel %vm3132, %v3077, %v3131
        %vm3134 = vcmask 1043459
        %v3135 = vsel %vm3134, %v3081, %v3133
        %vm3136 = vcmask 1044484
        %v3137 = vsel %vm3136, %v3085, %v3135
        %vm3138 = vcmask 1045509
        %v3139 = vsel %vm3138, %v3089, %v3137
        %vm3140 = vcmask 1046534
        %v3141 = vsel %vm3140, %v3093, %v3139
        %vm3142 = vcmask 1047559
        %v3143 = vsel %vm3142, %v3097, %v3141
        %v3144 = vsel %vm3130, %v3105, %v3101
        %v3145 = vsel %vm3132, %v3109, %v3144
        %v3146 = vsel %vm3134, %v3113, %v3145
        %v3147 = vsel %vm3136, %v3117, %v3146
        %v3148 = vsel %vm3138, %v3121, %v3147
        %v3149 = vsel %vm3140, %v3125, %v3148
        %v3150 = vsel %vm3142, %v3129, %v3149
        %3153 = vxpose.xlu0.b32.start [1/16] %v3143, 128
        %3154 = vxpose.xlu0.b32.cont [2/16] %v3150, 128
        %3155 = vxpose.xlu0.b32.cont [3/16] 0.0, 128
        %3156 = vxpose.xlu0.b32.cont [4/16] 0.0, 128
        %3157 = vxpose.xlu0.b32.cont [5/16] 0.0, 128
        %3158 = vxpose.xlu0.b32.cont [6/16] 0.0, 128
        %3159 = vxpose.xlu0.b32.cont [7/16] 0.0, 128
        %3160 = vxpose.xlu0.b32.cont [8/16] 0.0, 128
        %3161 = vxpose.xlu0.b32.cont [9/16] 0.0, 128
        %3162 = vxpose.xlu0.b32.cont [10/16] 0.0, 128
        %3163 = vxpose.xlu0.b32.cont [11/16] 0.0, 128
        %3164 = vxpose.xlu0.b32.cont [12/16] 0.0, 128
        %3165 = vxpose.xlu0.b32.cont [13/16] 0.0, 128
        %3166 = vxpose.xlu0.b32.cont [14/16] 0.0, 128
        %3167 = vxpose.xlu0.b32.cont [15/16] 0.0, 128
        %3168 = vxpose.xlu0.b32.end [16/16] 0.0, 128
        %v3169 = vpop.trf.xlu0
        %v3170 = vpop.trf.xlu0
        %v3171 = vpop.trf.xlu0
        %v3172 = vpop.trf.xlu0
        %v3173 = vpop.trf.xlu0
        %v3174 = vpop.trf.xlu0
        %v3175 = vpop.trf.xlu0
        %v3176 = vpop.trf.xlu0
        %v3177 = vpop.trf.xlu0
        %v3178 = vpop.trf.xlu0
        %v3179 = vpop.trf.xlu0
        %v3180 = vpop.trf.xlu0
        %v3181 = vpop.trf.xlu0
        %v3182 = vpop.trf.xlu0
        %v3183 = vpop.trf.xlu0
        %v3184 = vpop.trf.xlu0
        %v3185 = vsel %vm748, %v2629, -inf
        %3186 = vmax.xlane.f32.xlu0 %v3185
        %v3187 = vpop.xlane.xlu0 %3186
        %v3188 = vsel %vm748, %v2632, -inf
        %3189 = vmax.xlane.f32.xlu0 %v3188
        %v3190 = vpop.xlane.xlu0 %3189
        %v3191 = vsel %vm748, %v2681, -inf
        %3192 = vmax.xlane.f32.xlu0 %v3191
        %v3193 = vpop.xlane.xlu0 %3192
        %v3194 = vsel %vm748, %v2684, -inf
        %3195 = vmax.xlane.f32.xlu0 %v3194
        %v3196 = vpop.xlane.xlu0 %3195
        %v3197 = vsel %vm748, %v2733, -inf
        %3198 = vmax.xlane.f32.xlu0 %v3197
        %v3199 = vpop.xlane.xlu0 %3198
        %v3200 = vsel %vm748, %v2736, -inf
        %3201 = vmax.xlane.f32.xlu0 %v3200
        %v3202 = vpop.xlane.xlu0 %3201
        %v3203 = vsel %vm748, %v2785, -inf
        %3204 = vmax.xlane.f32.xlu0 %v3203
        %v3205 = vpop.xlane.xlu0 %3204
        %v3206 = vsel %vm748, %v2788, -inf
        %3207 = vmax.xlane.f32.xlu0 %v3206
        %v3208 = vpop.xlane.xlu0 %3207
        %v3209 = vsel %vm748, %v2837, -inf
        %3210 = vmax.xlane.f32.xlu0 %v3209
        %v3211 = vpop.xlane.xlu0 %3210
        %v3212 = vsel %vm748, %v2840, -inf
        %3213 = vmax.xlane.f32.xlu0 %v3212
        %v3214 = vpop.xlane.xlu0 %3213
        %v3215 = vsel %vm748, %v2889, -inf
        %3216 = vmax.xlane.f32.xlu0 %v3215
        %v3217 = vpop.xlane.xlu0 %3216
        %v3218 = vsel %vm748, %v2892, -inf
        %3219 = vmax.xlane.f32.xlu0 %v3218
        %v3220 = vpop.xlane.xlu0 %3219
        %v3221 = vsel %vm748, %v2941, -inf
        %3222 = vmax.xlane.f32.xlu0 %v3221
        %v3223 = vpop.xlane.xlu0 %3222
        %v3224 = vsel %vm748, %v2944, -inf
        %3225 = vmax.xlane.f32.xlu0 %v3224
        %v3226 = vpop.xlane.xlu0 %3225
        %v3227 = vsel %vm748, %v2993, -inf
        %3228 = vmax.xlane.f32.xlu0 %v3227
        %v3229 = vpop.xlane.xlu0 %3228
        %v3230 = vsel %vm748, %v2996, -inf
        %3231 = vmax.xlane.f32.xlu0 %v3230
        %v3232 = vpop.xlane.xlu0 %3231
        %v3249 = vlaneseq
        %v3250 = vshrl.u32 %v3249, 7
        %v3251 = vsub.s32 %v3065, %v3250
        %v3252 = vrot.slane %v3187, %v3251
        %v3253 = vadd.s32 %v3065, 4294967288
        %v3254 = vlaneseq
        %v3255 = vshrl.u32 %v3254, 7
        %v3256 = vsub.s32 %v3253, %v3255
        %v3257 = vrot.slane %v3190, %v3256
        %vm3258 = vcmask 130112
        %v3259 = vsel %vm3258, %v3257, %v3252
        %v3260 = vlaneseq
        %v3261 = vshrl.u32 %v3260, 7
        %v3262 = vsub.s32 %v3065, %v3261
        %v3263 = vrot.slane %v3193, %v3262
        %v3264 = vlaneseq
        %v3265 = vshrl.u32 %v3264, 7
        %v3266 = vsub.s32 %v3253, %v3265
        %v3267 = vrot.slane %v3196, %v3266
        %v3268 = vsel %vm3258, %v3267, %v3263
        %v3269 = vlaneseq
        %v3270 = vshrl.u32 %v3269, 7
        %v3271 = vsub.s32 %v3065, %v3270
        %v3272 = vrot.slane %v3199, %v3271
        %v3273 = vlaneseq
        %v3274 = vshrl.u32 %v3273, 7
        %v3275 = vsub.s32 %v3253, %v3274
        %v3276 = vrot.slane %v3202, %v3275
        %v3277 = vsel %vm3258, %v3276, %v3272
        %v3278 = vlaneseq
        %v3279 = vshrl.u32 %v3278, 7
        %v3280 = vsub.s32 %v3065, %v3279
        %v3281 = vrot.slane %v3205, %v3280
        %v3282 = vlaneseq
        %v3283 = vshrl.u32 %v3282, 7
        %v3284 = vsub.s32 %v3253, %v3283
        %v3285 = vrot.slane %v3208, %v3284
        %v3286 = vsel %vm3258, %v3285, %v3281
        %v3287 = vlaneseq
        %v3288 = vshrl.u32 %v3287, 7
        %v3289 = vsub.s32 %v3065, %v3288
        %v3290 = vrot.slane %v3211, %v3289
        %v3291 = vlaneseq
        %v3292 = vshrl.u32 %v3291, 7
        %v3293 = vsub.s32 %v3253, %v3292
        %v3294 = vrot.slane %v3214, %v3293
        %v3295 = vsel %vm3258, %v3294, %v3290
        %v3296 = vlaneseq
        %v3297 = vshrl.u32 %v3296, 7
        %v3298 = vsub.s32 %v3065, %v3297
        %v3299 = vrot.slane %v3217, %v3298
        %v3300 = vlaneseq
        %v3301 = vshrl.u32 %v3300, 7
        %v3302 = vsub.s32 %v3253, %v3301
        %v3303 = vrot.slane %v3220, %v3302
        %v3304 = vsel %vm3258, %v3303, %v3299
        %v3305 = vlaneseq
        %v3306 = vshrl.u32 %v3305, 7
        %v3307 = vsub.s32 %v3065, %v3306
        %v3308 = vrot.slane %v3223, %v3307
        %v3309 = vlaneseq
        %v3310 = vshrl.u32 %v3309, 7
        %v3311 = vsub.s32 %v3253, %v3310
        %v3312 = vrot.slane %v3226, %v3311
        %v3313 = vsel %vm3258, %v3312, %v3308
        %v3314 = vlaneseq
        %v3315 = vshrl.u32 %v3314, 7
        %v3316 = vsub.s32 %v3065, %v3315
        %v3317 = vrot.slane %v3229, %v3316
        %v3318 = vlaneseq
        %v3319 = vshrl.u32 %v3318, 7
        %v3320 = vsub.s32 %v3253, %v3319
        %v3321 = vrot.slane %v3232, %v3320
        %v3322 = vsel %vm3258, %v3321, %v3317
        %v3323 = vsel %vm3130, %v3268, %v3259
        %v3324 = vsel %vm3132, %v3277, %v3323
        %v3325 = vsel %vm3134, %v3286, %v3324
        %v3326 = vsel %vm3136, %v3295, %v3325
        %v3327 = vsel %vm3138, %v3304, %v3326
        %v3328 = vsel %vm3140, %v3313, %v3327
        %v3329 = vsel %vm3142, %v3322, %v3328
        %v3331 = vmax.f32 %v3169, %v3329
        %3332 = vxpose.xlu0.b32.start [1/16] %v3331, 128
        %3333 = vxpose.xlu0.b32.cont [2/16] 0.0, 128
        %3334 = vxpose.xlu0.b32.cont [3/16] 0.0, 128
        %3335 = vxpose.xlu0.b32.cont [4/16] 0.0, 128
        %3336 = vxpose.xlu0.b32.cont [5/16] 0.0, 128
        %3337 = vxpose.xlu0.b32.cont [6/16] 0.0, 128
        %3338 = vxpose.xlu0.b32.cont [7/16] 0.0, 128
        %3339 = vxpose.xlu0.b32.cont [8/16] 0.0, 128
        %3340 = vxpose.xlu0.b32.cont [9/16] 0.0, 128
        %3341 = vxpose.xlu0.b32.cont [10/16] 0.0, 128
        %3342 = vxpose.xlu0.b32.cont [11/16] 0.0, 128
        %3343 = vxpose.xlu0.b32.cont [12/16] 0.0, 128
        %3344 = vxpose.xlu0.b32.cont [13/16] 0.0, 128
        %3345 = vxpose.xlu0.b32.cont [14/16] 0.0, 128
        %3346 = vxpose.xlu0.b32.cont [15/16] 0.0, 128
        %3347 = vxpose.xlu0.b32.end [16/16] 0.0, 128
        %v3348 = vpop.trf.xlu0
        %v3349 = vpop.trf.xlu0
        %v3350 = vpop.trf.xlu0
        %v3351 = vpop.trf.xlu0
        %v3352 = vpop.trf.xlu0
        %v3353 = vpop.trf.xlu0
        %v3354 = vpop.trf.xlu0
        %v3355 = vpop.trf.xlu0
        %v3356 = vpop.trf.xlu0
        %v3357 = vpop.trf.xlu0
        %v3358 = vpop.trf.xlu0
        %v3359 = vpop.trf.xlu0
        %v3360 = vpop.trf.xlu0
        %v3361 = vpop.trf.xlu0
        %v3362 = vpop.trf.xlu0
        %v3363 = vpop.trf.xlu0
        %v3364 = vlaneseq
        %v3365 = vshrl.u32 %v3364, 7
        %v3366 = vsub.s32 0, %v3365
        %v3367 = vrot.slane %v3348, %v3366
        %3369 = vbcast.lane.b32.xlu0 %v3367, 256
        %v3370 = vpop.permute.xlu0 %3369
        %v3371 = vlaneseq
        %v3372 = vshrl.u32 %v3371, 7
        %v3373 = vsub.s32 1, %v3372
        %v3374 = vrot.slane %v3348, %v3373
        %3376 = vbcast.lane.b32.xlu0 %v3374, 256
        %v3377 = vpop.permute.xlu0 %3376
        %v3378 = vlaneseq
        %v3379 = vshrl.u32 %v3378, 7
        %v3380 = vsub.s32 2, %v3379
        %v3381 = vrot.slane %v3348, %v3380
        %3383 = vbcast.lane.b32.xlu0 %v3381, 256
        %v3384 = vpop.permute.xlu0 %3383
        %v3385 = vlaneseq
        %v3386 = vshrl.u32 %v3385, 7
        %v3387 = vsub.s32 3, %v3386
        %v3388 = vrot.slane %v3348, %v3387
        %3390 = vbcast.lane.b32.xlu0 %v3388, 256
        %v3391 = vpop.permute.xlu0 %3390
        %v3392 = vlaneseq
        %v3393 = vshrl.u32 %v3392, 7
        %v3394 = vsub.s32 4, %v3393
        %v3395 = vrot.slane %v3348, %v3394
        %3397 = vbcast.lane.b32.xlu0 %v3395, 256
        %v3398 = vpop.permute.xlu0 %3397
        %v3399 = vlaneseq
        %v3400 = vshrl.u32 %v3399, 7
        %v3401 = vsub.s32 5, %v3400
        %v3402 = vrot.slane %v3348, %v3401
        %3404 = vbcast.lane.b32.xlu0 %v3402, 256
        %v3405 = vpop.permute.xlu0 %3404
        %v3406 = vlaneseq
        %v3407 = vshrl.u32 %v3406, 7
        %v3408 = vsub.s32 6, %v3407
        %v3409 = vrot.slane %v3348, %v3408
        %3411 = vbcast.lane.b32.xlu0 %v3409, 256
        %v3412 = vpop.permute.xlu0 %3411
        %v3413 = vlaneseq
        %v3414 = vshrl.u32 %v3413, 7
        %v3415 = vsub.s32 7, %v3414
        %v3416 = vrot.slane %v3348, %v3415
        %3418 = vbcast.lane.b32.xlu0 %v3416, 256
        %v3419 = vpop.permute.xlu0 %3418
        %v3420 = vlaneseq
        %v3421 = vshrl.u32 %v3420, 7
        %v3422 = vsub.s32 0, %v3421
        %v3423 = vrot.slane %v3349, %v3422
        %3425 = vbcast.lane.b32.xlu0 %v3423, 256
        %v3426 = vpop.permute.xlu0 %3425
        %v3427 = vlaneseq
        %v3428 = vshrl.u32 %v3427, 7
        %v3429 = vsub.s32 1, %v3428
        %v3430 = vrot.slane %v3349, %v3429
        %3432 = vbcast.lane.b32.xlu0 %v3430, 256
        %v3433 = vpop.permute.xlu0 %3432
        %v3434 = vlaneseq
        %v3435 = vshrl.u32 %v3434, 7
        %v3436 = vsub.s32 2, %v3435
        %v3437 = vrot.slane %v3349, %v3436
        %3439 = vbcast.lane.b32.xlu0 %v3437, 256
        %v3440 = vpop.permute.xlu0 %3439
        %v3441 = vlaneseq
        %v3442 = vshrl.u32 %v3441, 7
        %v3443 = vsub.s32 3, %v3442
        %v3444 = vrot.slane %v3349, %v3443
        %3446 = vbcast.lane.b32.xlu0 %v3444, 256
        %v3447 = vpop.permute.xlu0 %3446
        %v3448 = vlaneseq
        %v3449 = vshrl.u32 %v3448, 7
        %v3450 = vsub.s32 4, %v3449
        %v3451 = vrot.slane %v3349, %v3450
        %3453 = vbcast.lane.b32.xlu0 %v3451, 256
        %v3454 = vpop.permute.xlu0 %3453
        %v3455 = vlaneseq
        %v3456 = vshrl.u32 %v3455, 7
        %v3457 = vsub.s32 5, %v3456
        %v3458 = vrot.slane %v3349, %v3457
        %3460 = vbcast.lane.b32.xlu0 %v3458, 256
        %v3461 = vpop.permute.xlu0 %3460
        %v3462 = vlaneseq
        %v3463 = vshrl.u32 %v3462, 7
        %v3464 = vsub.s32 6, %v3463
        %v3465 = vrot.slane %v3349, %v3464
        %3467 = vbcast.lane.b32.xlu0 %v3465, 256
        %v3468 = vpop.permute.xlu0 %3467
        %v3469 = vlaneseq
        %v3470 = vshrl.u32 %v3469, 7
        %v3471 = vsub.s32 7, %v3470
        %v3472 = vrot.slane %v3349, %v3471
        %3474 = vbcast.lane.b32.xlu0 %v3472, 256
        %v3475 = vpop.permute.xlu0 %3474
        %v3476 = vsub.f32 %v1888, %v3370
        %v3477 = vsub.f32 %v1934, %v3377
        %v3478 = vsub.f32 %v1980, %v3384
        %v3479 = vsub.f32 %v2026, %v3391
        %v3480 = vsub.f32 %v2072, %v3398
        %v3481 = vsub.f32 %v2118, %v3405
        %v3482 = vsub.f32 %v2164, %v3412
        %v3483 = vsub.f32 %v2210, %v3419
        %v3484 = vsub.f32 %v2256, %v3426
        %v3485 = vsub.f32 %v2302, %v3433
        %v3486 = vsub.f32 %v2348, %v3440
        %v3487 = vsub.f32 %v2394, %v3447
        %v3488 = vsub.f32 %v2440, %v3454
        %v3489 = vsub.f32 %v2486, %v3461
        %v3490 = vsub.f32 %v2532, %v3468
        %v3491 = vsub.f32 %v2578, %v3475
        %v3492 = vmul.f32 %v3476, 1.442695
        %v3493 = vpow.pop %v3492
        %v3494 = vmul.f32 %v3477, 1.442695
        %v3495 = vpow.pop %v3494
        %v3496 = vmul.f32 %v3478, 1.442695
        %v3497 = vpow.pop %v3496
        %v3498 = vmul.f32 %v3479, 1.442695
        %v3499 = vpow.pop %v3498
        %v3500 = vmul.f32 %v3480, 1.442695
        %v3501 = vpow.pop %v3500
        %v3502 = vmul.f32 %v3481, 1.442695
        %v3503 = vpow.pop %v3502
        %v3504 = vmul.f32 %v3482, 1.442695
        %v3505 = vpow.pop %v3504
        %v3506 = vmul.f32 %v3483, 1.442695
        %v3507 = vpow.pop %v3506
        %v3508 = vmul.f32 %v3484, 1.442695
        %v3509 = vpow.pop %v3508
        %v3510 = vmul.f32 %v3485, 1.442695
        %v3511 = vpow.pop %v3510
        %v3512 = vmul.f32 %v3486, 1.442695
        %v3513 = vpow.pop %v3512
        %v3514 = vmul.f32 %v3487, 1.442695
        %v3515 = vpow.pop %v3514
        %v3516 = vmul.f32 %v3488, 1.442695
        %v3517 = vpow.pop %v3516
        %v3518 = vmul.f32 %v3489, 1.442695
        %v3519 = vpow.pop %v3518
        %v3520 = vmul.f32 %v3490, 1.442695
        %v3521 = vpow.pop %v3520
        %v3522 = vmul.f32 %v3491, 1.442695
        %v3523 = vpow.pop %v3522
        %v3524 = vlaneseq
        %v3525 = vshrl.u32 %v3524, 7
        %v3526 = vsub.s32 0, %v3525
        %v3527 = vrot.slane %v3331, %v3526
        %3529 = vbcast.lane.b32.xlu0 %v3527, 256
        %v3530 = vpop.permute.xlu0 %3529
        %s3532 = sor.u32 256, 8
        %3533 = vbcast.lane.b32.xlu0 %v3527, %s3532
        %v3534 = vpop.permute.xlu0 %3533
        %v3535 = vlaneseq
        %v3536 = vshrl.u32 %v3535, 7
        %v3537 = vsub.s32 1, %v3536
        %v3538 = vrot.slane %v3331, %v3537
        %3540 = vbcast.lane.b32.xlu0 %v3538, 256
        %v3541 = vpop.permute.xlu0 %3540
        %s3543 = sor.u32 256, 8
        %3544 = vbcast.lane.b32.xlu0 %v3538, %s3543
        %v3545 = vpop.permute.xlu0 %3544
        %v3546 = vlaneseq
        %v3547 = vshrl.u32 %v3546, 7
        %v3548 = vsub.s32 2, %v3547
        %v3549 = vrot.slane %v3331, %v3548
        %3551 = vbcast.lane.b32.xlu0 %v3549, 256
        %v3552 = vpop.permute.xlu0 %3551
        %s3554 = sor.u32 256, 8
        %3555 = vbcast.lane.b32.xlu0 %v3549, %s3554
        %v3556 = vpop.permute.xlu0 %3555
        %v3557 = vlaneseq
        %v3558 = vshrl.u32 %v3557, 7
        %v3559 = vsub.s32 3, %v3558
        %v3560 = vrot.slane %v3331, %v3559
        %3562 = vbcast.lane.b32.xlu0 %v3560, 256
        %v3563 = vpop.permute.xlu0 %3562
        %s3565 = sor.u32 256, 8
        %3566 = vbcast.lane.b32.xlu0 %v3560, %s3565
        %v3567 = vpop.permute.xlu0 %3566
        %v3568 = vlaneseq
        %v3569 = vshrl.u32 %v3568, 7
        %v3570 = vsub.s32 4, %v3569
        %v3571 = vrot.slane %v3331, %v3570
        %3573 = vbcast.lane.b32.xlu0 %v3571, 256
        %v3574 = vpop.permute.xlu0 %3573
        %s3576 = sor.u32 256, 8
        %3577 = vbcast.lane.b32.xlu0 %v3571, %s3576
        %v3578 = vpop.permute.xlu0 %3577
        %v3579 = vlaneseq
        %v3580 = vshrl.u32 %v3579, 7
        %v3581 = vsub.s32 5, %v3580
        %v3582 = vrot.slane %v3331, %v3581
        %3584 = vbcast.lane.b32.xlu0 %v3582, 256
        %v3585 = vpop.permute.xlu0 %3584
        %s3587 = sor.u32 256, 8
        %3588 = vbcast.lane.b32.xlu0 %v3582, %s3587
        %v3589 = vpop.permute.xlu0 %3588
        %v3590 = vlaneseq
        %v3591 = vshrl.u32 %v3590, 7
        %v3592 = vsub.s32 6, %v3591
        %v3593 = vrot.slane %v3331, %v3592
        %3595 = vbcast.lane.b32.xlu0 %v3593, 256
        %v3596 = vpop.permute.xlu0 %3595
        %s3598 = sor.u32 256, 8
        %3599 = vbcast.lane.b32.xlu0 %v3593, %s3598
        %v3600 = vpop.permute.xlu0 %3599
        %v3601 = vlaneseq
        %v3602 = vshrl.u32 %v3601, 7
        %v3603 = vsub.s32 7, %v3602
        %v3604 = vrot.slane %v3331, %v3603
        %3606 = vbcast.lane.b32.xlu0 %v3604, 256
        %v3607 = vpop.permute.xlu0 %3606
        %s3609 = sor.u32 256, 8
        %3610 = vbcast.lane.b32.xlu0 %v3604, %s3609
        %v3611 = vpop.permute.xlu0 %3610
        %v3612 = vsub.f32 %v2629, %v3530
        %v3613 = vsub.f32 %v2632, %v3534
        %v3614 = vsub.f32 %v2681, %v3541
        %v3615 = vsub.f32 %v2684, %v3545
        %v3616 = vsub.f32 %v2733, %v3552
        %v3617 = vsub.f32 %v2736, %v3556
        %v3618 = vsub.f32 %v2785, %v3563
        %v3619 = vsub.f32 %v2788, %v3567
        %v3620 = vsub.f32 %v2837, %v3574
        %v3621 = vsub.f32 %v2840, %v3578
        %v3622 = vsub.f32 %v2889, %v3585
        %v3623 = vsub.f32 %v2892, %v3589
        %v3624 = vsub.f32 %v2941, %v3596
        %v3625 = vsub.f32 %v2944, %v3600
        %v3626 = vsub.f32 %v2993, %v3607
        %v3627 = vsub.f32 %v2996, %v3611
        %v3628 = vmul.f32 %v3612, 1.442695
        %v3629 = vpow.pop %v3628
        %v3630 = vmul.f32 %v3613, 1.442695
        %v3631 = vpow.pop %v3630
        %v3632 = vmul.f32 %v3614, 1.442695
        %v3633 = vpow.pop %v3632
        %v3634 = vmul.f32 %v3615, 1.442695
        %v3635 = vpow.pop %v3634
        %v3636 = vmul.f32 %v3616, 1.442695
        %v3637 = vpow.pop %v3636
        %v3638 = vmul.f32 %v3617, 1.442695
        %v3639 = vpow.pop %v3638
        %v3640 = vmul.f32 %v3618, 1.442695
        %v3641 = vpow.pop %v3640
        %v3642 = vmul.f32 %v3619, 1.442695
        %v3643 = vpow.pop %v3642
        %v3644 = vmul.f32 %v3620, 1.442695
        %v3645 = vpow.pop %v3644
        %v3646 = vmul.f32 %v3621, 1.442695
        %v3647 = vpow.pop %v3646
        %v3648 = vmul.f32 %v3622, 1.442695
        %v3649 = vpow.pop %v3648
        %v3650 = vmul.f32 %v3623, 1.442695
        %v3651 = vpow.pop %v3650
        %v3652 = vmul.f32 %v3624, 1.442695
        %v3653 = vpow.pop %v3652
        %v3654 = vmul.f32 %v3625, 1.442695
        %v3655 = vpow.pop %v3654
        %v3656 = vmul.f32 %v3626, 1.442695
        %v3657 = vpow.pop %v3656
        %v3658 = vmul.f32 %v3627, 1.442695
        %v3659 = vpow.pop %v3658
        %v3660 = vsel %vm2999, %v3493, 0.0
        %3661 = vadd.xlane.f32.xlu0 %v3660
        %v3662 = vpop.xlane.xlu0 %3661
        %v3663 = vsel %vm2999, %v3495, 0.0
        %3664 = vadd.xlane.f32.xlu0 %v3663
        %v3665 = vpop.xlane.xlu0 %3664
        %v3666 = vsel %vm2999, %v3497, 0.0
        %3667 = vadd.xlane.f32.xlu0 %v3666
        %v3668 = vpop.xlane.xlu0 %3667
        %v3669 = vsel %vm2999, %v3499, 0.0
        %3670 = vadd.xlane.f32.xlu0 %v3669
        %v3671 = vpop.xlane.xlu0 %3670
        %v3672 = vsel %vm2999, %v3501, 0.0
        %3673 = vadd.xlane.f32.xlu0 %v3672
        %v3674 = vpop.xlane.xlu0 %3673
        %v3675 = vsel %vm2999, %v3503, 0.0
        %3676 = vadd.xlane.f32.xlu0 %v3675
        %v3677 = vpop.xlane.xlu0 %3676
        %v3678 = vsel %vm2999, %v3505, 0.0
        %3679 = vadd.xlane.f32.xlu0 %v3678
        %v3680 = vpop.xlane.xlu0 %3679
        %v3681 = vsel %vm2999, %v3507, 0.0
        %3682 = vadd.xlane.f32.xlu0 %v3681
        %v3683 = vpop.xlane.xlu0 %3682
        %v3684 = vsel %vm2999, %v3509, 0.0
        %3685 = vadd.xlane.f32.xlu0 %v3684
        %v3686 = vpop.xlane.xlu0 %3685
        %v3687 = vsel %vm2999, %v3511, 0.0
        %3688 = vadd.xlane.f32.xlu0 %v3687
        %v3689 = vpop.xlane.xlu0 %3688
        %v3690 = vsel %vm2999, %v3513, 0.0
        %3691 = vadd.xlane.f32.xlu0 %v3690
        %v3692 = vpop.xlane.xlu0 %3691
        %v3693 = vsel %vm2999, %v3515, 0.0
        %3694 = vadd.xlane.f32.xlu0 %v3693
        %v3695 = vpop.xlane.xlu0 %3694
        %v3696 = vsel %vm2999, %v3517, 0.0
        %3697 = vadd.xlane.f32.xlu0 %v3696
        %v3698 = vpop.xlane.xlu0 %3697
        %v3699 = vsel %vm2999, %v3519, 0.0
        %3700 = vadd.xlane.f32.xlu0 %v3699
        %v3701 = vpop.xlane.xlu0 %3700
        %v3702 = vsel %vm2999, %v3521, 0.0
        %3703 = vadd.xlane.f32.xlu0 %v3702
        %v3704 = vpop.xlane.xlu0 %3703
        %v3705 = vsel %vm2999, %v3523, 0.0
        %3706 = vadd.xlane.f32.xlu0 %v3705
        %v3707 = vpop.xlane.xlu0 %3706
        %v3724 = vlaneseq
        %v3725 = vshrl.u32 %v3724, 7
        %v3726 = vsub.s32 %v3065, %v3725
        %v3727 = vrot.slane %v3662, %v3726
        %v3728 = vlaneseq
        %v3729 = vshrl.u32 %v3728, 7
        %v3730 = vsub.s32 %v3065, %v3729
        %v3731 = vrot.slane %v3665, %v3730
        %v3732 = vlaneseq
        %v3733 = vshrl.u32 %v3732, 7
        %v3734 = vsub.s32 %v3065, %v3733
        %v3735 = vrot.slane %v3668, %v3734
        %v3736 = vlaneseq
        %v3737 = vshrl.u32 %v3736, 7
        %v3738 = vsub.s32 %v3065, %v3737
        %v3739 = vrot.slane %v3671, %v3738
        %v3740 = vlaneseq
        %v3741 = vshrl.u32 %v3740, 7
        %v3742 = vsub.s32 %v3065, %v3741
        %v3743 = vrot.slane %v3674, %v3742
        %v3744 = vlaneseq
        %v3745 = vshrl.u32 %v3744, 7
        %v3746 = vsub.s32 %v3065, %v3745
        %v3747 = vrot.slane %v3677, %v3746
        %v3748 = vlaneseq
        %v3749 = vshrl.u32 %v3748, 7
        %v3750 = vsub.s32 %v3065, %v3749
        %v3751 = vrot.slane %v3680, %v3750
        %v3752 = vlaneseq
        %v3753 = vshrl.u32 %v3752, 7
        %v3754 = vsub.s32 %v3065, %v3753
        %v3755 = vrot.slane %v3683, %v3754
        %v3756 = vlaneseq
        %v3757 = vshrl.u32 %v3756, 7
        %v3758 = vsub.s32 %v3065, %v3757
        %v3759 = vrot.slane %v3686, %v3758
        %v3760 = vlaneseq
        %v3761 = vshrl.u32 %v3760, 7
        %v3762 = vsub.s32 %v3065, %v3761
        %v3763 = vrot.slane %v3689, %v3762
        %v3764 = vlaneseq
        %v3765 = vshrl.u32 %v3764, 7
        %v3766 = vsub.s32 %v3065, %v3765
        %v3767 = vrot.slane %v3692, %v3766
        %v3768 = vlaneseq
        %v3769 = vshrl.u32 %v3768, 7
        %v3770 = vsub.s32 %v3065, %v3769
        %v3771 = vrot.slane %v3695, %v3770
        %v3772 = vlaneseq
        %v3773 = vshrl.u32 %v3772, 7
        %v3774 = vsub.s32 %v3065, %v3773
        %v3775 = vrot.slane %v3698, %v3774
        %v3776 = vlaneseq
        %v3777 = vshrl.u32 %v3776, 7
        %v3778 = vsub.s32 %v3065, %v3777
        %v3779 = vrot.slane %v3701, %v3778
        %v3780 = vlaneseq
        %v3781 = vshrl.u32 %v3780, 7
        %v3782 = vsub.s32 %v3065, %v3781
        %v3783 = vrot.slane %v3704, %v3782
        %v3784 = vlaneseq
        %v3785 = vshrl.u32 %v3784, 7
        %v3786 = vsub.s32 %v3065, %v3785
        %v3787 = vrot.slane %v3707, %v3786
        %v3788 = vsel %vm3130, %v3731, %v3727
        %v3789 = vsel %vm3132, %v3735, %v3788
        %v3790 = vsel %vm3134, %v3739, %v3789
        %v3791 = vsel %vm3136, %v3743, %v3790
        %v3792 = vsel %vm3138, %v3747, %v3791
        %v3793 = vsel %vm3140, %v3751, %v3792
        %v3794 = vsel %vm3142, %v3755, %v3793
        %v3795 = vsel %vm3130, %v3763, %v3759
        %v3796 = vsel %vm3132, %v3767, %v3795
        %v3797 = vsel %vm3134, %v3771, %v3796
        %v3798 = vsel %vm3136, %v3775, %v3797
        %v3799 = vsel %vm3138, %v3779, %v3798
        %v3800 = vsel %vm3140, %v3783, %v3799
        %v3801 = vsel %vm3142, %v3787, %v3800
        %3804 = vxpose.xlu0.b32.start [1/16] %v3794, 128
        %3805 = vxpose.xlu0.b32.cont [2/16] %v3801, 128
        %3806 = vxpose.xlu0.b32.cont [3/16] 0.0, 128
        %3807 = vxpose.xlu0.b32.cont [4/16] 0.0, 128
        %3808 = vxpose.xlu0.b32.cont [5/16] 0.0, 128
        %3809 = vxpose.xlu0.b32.cont [6/16] 0.0, 128
        %3810 = vxpose.xlu0.b32.cont [7/16] 0.0, 128
        %3811 = vxpose.xlu0.b32.cont [8/16] 0.0, 128
        %3812 = vxpose.xlu0.b32.cont [9/16] 0.0, 128
        %3813 = vxpose.xlu0.b32.cont [10/16] 0.0, 128
        %3814 = vxpose.xlu0.b32.cont [11/16] 0.0, 128
        %3815 = vxpose.xlu0.b32.cont [12/16] 0.0, 128
        %3816 = vxpose.xlu0.b32.cont [13/16] 0.0, 128
        %3817 = vxpose.xlu0.b32.cont [14/16] 0.0, 128
        %3818 = vxpose.xlu0.b32.cont [15/16] 0.0, 128
        %3819 = vxpose.xlu0.b32.end [16/16] 0.0, 128
        %v3820 = vpop.trf.xlu0
        %v3821 = vpop.trf.xlu0
        %v3822 = vpop.trf.xlu0
        %v3823 = vpop.trf.xlu0
        %v3824 = vpop.trf.xlu0
        %v3825 = vpop.trf.xlu0
        %v3826 = vpop.trf.xlu0
        %v3827 = vpop.trf.xlu0
        %v3828 = vpop.trf.xlu0
        %v3829 = vpop.trf.xlu0
        %v3830 = vpop.trf.xlu0
        %v3831 = vpop.trf.xlu0
        %v3832 = vpop.trf.xlu0
        %v3833 = vpop.trf.xlu0
        %v3834 = vpop.trf.xlu0
        %v3835 = vpop.trf.xlu0
        %v3836 = vsel %vm748, %v3629, 0.0
        %3837 = vadd.xlane.f32.xlu0 %v3836
        %v3838 = vpop.xlane.xlu0 %3837
        %v3839 = vsel %vm748, %v3631, 0.0
        %3840 = vadd.xlane.f32.xlu0 %v3839
        %v3841 = vpop.xlane.xlu0 %3840
        %v3842 = vsel %vm748, %v3633, 0.0
        %3843 = vadd.xlane.f32.xlu0 %v3842
        %v3844 = vpop.xlane.xlu0 %3843
        %v3845 = vsel %vm748, %v3635, 0.0
        %3846 = vadd.xlane.f32.xlu0 %v3845
        %v3847 = vpop.xlane.xlu0 %3846
        %v3848 = vsel %vm748, %v3637, 0.0
        %3849 = vadd.xlane.f32.xlu0 %v3848
        %v3850 = vpop.xlane.xlu0 %3849
        %v3851 = vsel %vm748, %v3639, 0.0
        %3852 = vadd.xlane.f32.xlu0 %v3851
        %v3853 = vpop.xlane.xlu0 %3852
        %v3854 = vsel %vm748, %v3641, 0.0
        %3855 = vadd.xlane.f32.xlu0 %v3854
        %v3856 = vpop.xlane.xlu0 %3855
        %v3857 = vsel %vm748, %v3643, 0.0
        %3858 = vadd.xlane.f32.xlu0 %v3857
        %v3859 = vpop.xlane.xlu0 %3858
        %v3860 = vsel %vm748, %v3645, 0.0
        %3861 = vadd.xlane.f32.xlu0 %v3860
        %v3862 = vpop.xlane.xlu0 %3861
        %v3863 = vsel %vm748, %v3647, 0.0
        %3864 = vadd.xlane.f32.xlu0 %v3863
        %v3865 = vpop.xlane.xlu0 %3864
        %v3866 = vsel %vm748, %v3649, 0.0
        %3867 = vadd.xlane.f32.xlu0 %v3866
        %v3868 = vpop.xlane.xlu0 %3867
        %v3869 = vsel %vm748, %v3651, 0.0
        %3870 = vadd.xlane.f32.xlu0 %v3869
        %v3871 = vpop.xlane.xlu0 %3870
        %v3872 = vsel %vm748, %v3653, 0.0
        %3873 = vadd.xlane.f32.xlu0 %v3872
        %v3874 = vpop.xlane.xlu0 %3873
        %v3875 = vsel %vm748, %v3655, 0.0
        %3876 = vadd.xlane.f32.xlu0 %v3875
        %v3877 = vpop.xlane.xlu0 %3876
        %v3878 = vsel %vm748, %v3657, 0.0
        %3879 = vadd.xlane.f32.xlu0 %v3878
        %v3880 = vpop.xlane.xlu0 %3879
        %v3881 = vsel %vm748, %v3659, 0.0
        %3882 = vadd.xlane.f32.xlu0 %v3881
        %v3883 = vpop.xlane.xlu0 %3882
        %v3900 = vlaneseq
        %v3901 = vshrl.u32 %v3900, 7
        %v3902 = vsub.s32 %v3065, %v3901
        %v3903 = vrot.slane %v3838, %v3902
        %v3904 = vlaneseq
        %v3905 = vshrl.u32 %v3904, 7
        %v3906 = vsub.s32 %v3253, %v3905
        %v3907 = vrot.slane %v3841, %v3906
        %v3908 = vsel %vm3258, %v3907, %v3903
        %v3909 = vlaneseq
        %v3910 = vshrl.u32 %v3909, 7
        %v3911 = vsub.s32 %v3065, %v3910
        %v3912 = vrot.slane %v3844, %v3911
        %v3913 = vlaneseq
        %v3914 = vshrl.u32 %v3913, 7
        %v3915 = vsub.s32 %v3253, %v3914
        %v3916 = vrot.slane %v3847, %v3915
        %v3917 = vsel %vm3258, %v3916, %v3912
        %v3918 = vlaneseq
        %v3919 = vshrl.u32 %v3918, 7
        %v3920 = vsub.s32 %v3065, %v3919
        %v3921 = vrot.slane %v3850, %v3920
        %v3922 = vlaneseq
        %v3923 = vshrl.u32 %v3922, 7
        %v3924 = vsub.s32 %v3253, %v3923
        %v3925 = vrot.slane %v3853, %v3924
        %v3926 = vsel %vm3258, %v3925, %v3921
        %v3927 = vlaneseq
        %v3928 = vshrl.u32 %v3927, 7
        %v3929 = vsub.s32 %v3065, %v3928
        %v3930 = vrot.slane %v3856, %v3929
        %v3931 = vlaneseq
        %v3932 = vshrl.u32 %v3931, 7
        %v3933 = vsub.s32 %v3253, %v3932
        %v3934 = vrot.slane %v3859, %v3933
        %v3935 = vsel %vm3258, %v3934, %v3930
        %v3936 = vlaneseq
        %v3937 = vshrl.u32 %v3936, 7
        %v3938 = vsub.s32 %v3065, %v3937
        %v3939 = vrot.slane %v3862, %v3938
        %v3940 = vlaneseq
        %v3941 = vshrl.u32 %v3940, 7
        %v3942 = vsub.s32 %v3253, %v3941
        %v3943 = vrot.slane %v3865, %v3942
        %v3944 = vsel %vm3258, %v3943, %v3939
        %v3945 = vlaneseq
        %v3946 = vshrl.u32 %v3945, 7
        %v3947 = vsub.s32 %v3065, %v3946
        %v3948 = vrot.slane %v3868, %v3947
        %v3949 = vlaneseq
        %v3950 = vshrl.u32 %v3949, 7
        %v3951 = vsub.s32 %v3253, %v3950
        %v3952 = vrot.slane %v3871, %v3951
        %v3953 = vsel %vm3258, %v3952, %v3948
        %v3954 = vlaneseq
        %v3955 = vshrl.u32 %v3954, 7
        %v3956 = vsub.s32 %v3065, %v3955
        %v3957 = vrot.slane %v3874, %v3956
        %v3958 = vlaneseq
        %v3959 = vshrl.u32 %v3958, 7
        %v3960 = vsub.s32 %v3253, %v3959
        %v3961 = vrot.slane %v3877, %v3960
        %v3962 = vsel %vm3258, %v3961, %v3957
        %v3963 = vlaneseq
        %v3964 = vshrl.u32 %v3963, 7
        %v3965 = vsub.s32 %v3065, %v3964
        %v3966 = vrot.slane %v3880, %v3965
        %v3967 = vlaneseq
        %v3968 = vshrl.u32 %v3967, 7
        %v3969 = vsub.s32 %v3253, %v3968
        %v3970 = vrot.slane %v3883, %v3969
        %v3971 = vsel %vm3258, %v3970, %v3966
        %v3972 = vsel %vm3130, %v3917, %v3908
        %v3973 = vsel %vm3132, %v3926, %v3972
        %v3974 = vsel %vm3134, %v3935, %v3973
        %v3975 = vsel %vm3136, %v3944, %v3974
        %v3976 = vsel %vm3138, %v3953, %v3975
        %v3977 = vsel %vm3140, %v3962, %v3976
        %v3978 = vsel %vm3142, %v3971, %v3977
        %v3980 = vadd.f32 %v3820, %v3978
        %v3981 = vrcp.pop %v3980
        %v3982 = vpack.c.bf16 %v3493, %v3493
        %v3983 = vpack.c.bf16 %v3495, %v3495
        %v3984 = vpack.c.bf16 %v3497, %v3497
        %v3985 = vpack.c.bf16 %v3499, %v3499
        %v3986 = vpack.c.bf16 %v3501, %v3501
        %v3987 = vpack.c.bf16 %v3503, %v3503
        %v3988 = vpack.c.bf16 %v3505, %v3505
        %v3989 = vpack.c.bf16 %v3507, %v3507
        %v3990 = vpack.c.bf16 %v3509, %v3509
        %v3991 = vpack.c.bf16 %v3511, %v3511
        %v3992 = vpack.c.bf16 %v3513, %v3513
        %v3993 = vpack.c.bf16 %v3515, %v3515
        %v3994 = vpack.c.bf16 %v3517, %v3517
        %v3995 = vpack.c.bf16 %v3519, %v3519
        %v3996 = vpack.c.bf16 %v3521, %v3521
        %v3997 = vpack.c.bf16 %v3523, %v3523
        %v3999 = vsel %vm2999, %v3982, 0
        %vm4001 = vcmask 1043456
        %v4003 = vsel %vm4001, %v1797, 0
        %4005 = vmatprep.subr.bf16.mxu0 0
        %4006 = vmatpush1.bf16.msra.mxu0 0
        %4007 = vmatprep.subr.bf16.mxu0 0
        %4008 = vmatpush1.bf16.msra.mxu0 0
        %4009 = vmatprep.subr.bf16.mxu0 0
        %4010 = vmatpush1.bf16.msra.mxu0 0
        %4011 = vmatprep.subr.bf16.mxu0 0
        %4012 = vmatpush1.bf16.msra.mxu0 0
        %4013 = vmatprep.subr.bf16.mxu0 0
        %4014 = vmatpush1.bf16.msra.mxu0 0
        %4015 = vmatprep.subr.bf16.mxu0 0
        %4016 = vmatpush1.bf16.msra.mxu0 0
        %4017 = vmatprep.subr.bf16.mxu0 0
        %4018 = vmatpush1.bf16.msra.mxu0 0
        %4019 = vmatprep.subr.bf16.mxu0 0
        %4020 = vmatpush1.bf16.msra.mxu0 %v4003
        %4021 = vmatprep.subr.bf16.mxu0 0
        %4022 = vmatpush2.bf16.msra.mxu0 0
        %4023 = vmatprep.subr.bf16.mxu0 0
        %4024 = vmatpush2.bf16.msra.mxu0 0
        %4025 = vmatprep.subr.bf16.mxu0 0
        %4026 = vmatpush2.bf16.msra.mxu0 0
        %4027 = vmatprep.subr.bf16.mxu0 0
        %4028 = vmatpush2.bf16.msra.mxu0 0
        %4029 = vmatprep.subr.bf16.mxu0 0
        %4030 = vmatpush2.bf16.msra.mxu0 0
        %4031 = vmatprep.subr.bf16.mxu0 0
        %4032 = vmatpush2.bf16.msra.mxu0 0
        %4033 = vmatprep.subr.bf16.mxu0 0
        %4034 = vmatpush2.bf16.msra.mxu0 0
        %4035 = vmatprep.subr.bf16.mxu0 0
        %4036 = vmatpush2.bf16.msra.mxu0 0
        %4037 = vmatprep.mubr.bf16.mxu0 0
        %4038 = vmatmul.mubr.bf16.gmra.mxu0 %v3999
        %v4039 = vpop.f32.mrf.mxu0
        %v4040 = vadd.f32 0.0, %v4039
        %v4041 = vpop.f32.mrf.mxu0
        %v4042 = vpop.f32.mrf.mxu0
        %v4043 = vpop.f32.mrf.mxu0
        %4044 = vdwg.mxu0
        %v4046 = vsel %vm2999, %v3983, 0
        %v4049 = vsel %vm4001, %v1798, 0
        %4051 = vmatprep.subr.bf16.mxu0 0
        %4052 = vmatpush1.bf16.msra.mxu0 0
        %4053 = vmatprep.subr.bf16.mxu0 0
        %4054 = vmatpush1.bf16.msra.mxu0 0
        %4055 = vmatprep.subr.bf16.mxu0 0
        %4056 = vmatpush1.bf16.msra.mxu0 0
        %4057 = vmatprep.subr.bf16.mxu0 0
        %4058 = vmatpush1.bf16.msra.mxu0 0
        %4059 = vmatprep.subr.bf16.mxu0 0
        %4060 = vmatpush1.bf16.msra.mxu0 0
        %4061 = vmatprep.subr.bf16.mxu0 0
        %4062 = vmatpush1.bf16.msra.mxu0 0
        %4063 = vmatprep.subr.bf16.mxu0 0
        %4064 = vmatpush1.bf16.msra.mxu0 0
        %4065 = vmatprep.subr.bf16.mxu0 0
        %4066 = vmatpush1.bf16.msra.mxu0 %v4049
        %4067 = vmatprep.subr.bf16.mxu0 0
        %4068 = vmatpush2.bf16.msra.mxu0 0
        %4069 = vmatprep.subr.bf16.mxu0 0
        %4070 = vmatpush2.bf16.msra.mxu0 0
        %4071 = vmatprep.subr.bf16.mxu0 0
        %4072 = vmatpush2.bf16.msra.mxu0 0
        %4073 = vmatprep.subr.bf16.mxu0 0
        %4074 = vmatpush2.bf16.msra.mxu0 0
        %4075 = vmatprep.subr.bf16.mxu0 0
        %4076 = vmatpush2.bf16.msra.mxu0 0
        %4077 = vmatprep.subr.bf16.mxu0 0
        %4078 = vmatpush2.bf16.msra.mxu0 0
        %4079 = vmatprep.subr.bf16.mxu0 0
        %4080 = vmatpush2.bf16.msra.mxu0 0
        %4081 = vmatprep.subr.bf16.mxu0 0
        %4082 = vmatpush2.bf16.msra.mxu0 0
        %4083 = vmatprep.mubr.bf16.mxu0 0
        %4084 = vmatmul.mubr.bf16.gmra.mxu0 %v4046
        %v4085 = vpop.f32.mrf.mxu0
        %v4086 = vadd.f32 0.0, %v4085
        %v4087 = vpop.f32.mrf.mxu0
        %v4088 = vpop.f32.mrf.mxu0
        %v4089 = vpop.f32.mrf.mxu0
        %4090 = vdwg.mxu0
        %v4092 = vsel %vm2999, %v3984, 0
        %v4095 = vsel %vm4001, %v1799, 0
        %4097 = vmatprep.subr.bf16.mxu0 0
        %4098 = vmatpush1.bf16.msra.mxu0 0
        %4099 = vmatprep.subr.bf16.mxu0 0
        %4100 = vmatpush1.bf16.msra.mxu0 0
        %4101 = vmatprep.subr.bf16.mxu0 0
        %4102 = vmatpush1.bf16.msra.mxu0 0
        %4103 = vmatprep.subr.bf16.mxu0 0
        %4104 = vmatpush1.bf16.msra.mxu0 0
        %4105 = vmatprep.subr.bf16.mxu0 0
        %4106 = vmatpush1.bf16.msra.mxu0 0
        %4107 = vmatprep.subr.bf16.mxu0 0
        %4108 = vmatpush1.bf16.msra.mxu0 0
        %4109 = vmatprep.subr.bf16.mxu0 0
        %4110 = vmatpush1.bf16.msra.mxu0 0
        %4111 = vmatprep.subr.bf16.mxu0 0
        %4112 = vmatpush1.bf16.msra.mxu0 %v4095
        %4113 = vmatprep.subr.bf16.mxu0 0
        %4114 = vmatpush2.bf16.msra.mxu0 0
        %4115 = vmatprep.subr.bf16.mxu0 0
        %4116 = vmatpush2.bf16.msra.mxu0 0
        %4117 = vmatprep.subr.bf16.mxu0 0
        %4118 = vmatpush2.bf16.msra.mxu0 0
        %4119 = vmatprep.subr.bf16.mxu0 0
        %4120 = vmatpush2.bf16.msra.mxu0 0
        %4121 = vmatprep.subr.bf16.mxu0 0
        %4122 = vmatpush2.bf16.msra.mxu0 0
        %4123 = vmatprep.subr.bf16.mxu0 0
        %4124 = vmatpush2.bf16.msra.mxu0 0
        %4125 = vmatprep.subr.bf16.mxu0 0
        %4126 = vmatpush2.bf16.msra.mxu0 0
        %4127 = vmatprep.subr.bf16.mxu0 0
        %4128 = vmatpush2.bf16.msra.mxu0 0
        %4129 = vmatprep.mubr.bf16.mxu0 0
        %4130 = vmatmul.mubr.bf16.gmra.mxu0 %v4092
        %v4131 = vpop.f32.mrf.mxu0
        %v4132 = vadd.f32 0.0, %v4131
        %v4133 = vpop.f32.mrf.mxu0
        %v4134 = vpop.f32.mrf.mxu0
        %v4135 = vpop.f32.mrf.mxu0
        %4136 = vdwg.mxu0
        %v4138 = vsel %vm2999, %v3985, 0
        %v4141 = vsel %vm4001, %v1800, 0
        %4143 = vmatprep.subr.bf16.mxu0 0
        %4144 = vmatpush1.bf16.msra.mxu0 0
        %4145 = vmatprep.subr.bf16.mxu0 0
        %4146 = vmatpush1.bf16.msra.mxu0 0
        %4147 = vmatprep.subr.bf16.mxu0 0
        %4148 = vmatpush1.bf16.msra.mxu0 0
        %4149 = vmatprep.subr.bf16.mxu0 0
        %4150 = vmatpush1.bf16.msra.mxu0 0
        %4151 = vmatprep.subr.bf16.mxu0 0
        %4152 = vmatpush1.bf16.msra.mxu0 0
        %4153 = vmatprep.subr.bf16.mxu0 0
        %4154 = vmatpush1.bf16.msra.mxu0 0
        %4155 = vmatprep.subr.bf16.mxu0 0
        %4156 = vmatpush1.bf16.msra.mxu0 0
        %4157 = vmatprep.subr.bf16.mxu0 0
        %4158 = vmatpush1.bf16.msra.mxu0 %v4141
        %4159 = vmatprep.subr.bf16.mxu0 0
        %4160 = vmatpush2.bf16.msra.mxu0 0
        %4161 = vmatprep.subr.bf16.mxu0 0
        %4162 = vmatpush2.bf16.msra.mxu0 0
        %4163 = vmatprep.subr.bf16.mxu0 0
        %4164 = vmatpush2.bf16.msra.mxu0 0
        %4165 = vmatprep.subr.bf16.mxu0 0
        %4166 = vmatpush2.bf16.msra.mxu0 0
        %4167 = vmatprep.subr.bf16.mxu0 0
        %4168 = vmatpush2.bf16.msra.mxu0 0
        %4169 = vmatprep.subr.bf16.mxu0 0
        %4170 = vmatpush2.bf16.msra.mxu0 0
        %4171 = vmatprep.subr.bf16.mxu0 0
        %4172 = vmatpush2.bf16.msra.mxu0 0
        %4173 = vmatprep.subr.bf16.mxu0 0
        %4174 = vmatpush2.bf16.msra.mxu0 0
        %4175 = vmatprep.mubr.bf16.mxu0 0
        %4176 = vmatmul.mubr.bf16.gmra.mxu0 %v4138
        %v4177 = vpop.f32.mrf.mxu0
        %v4178 = vadd.f32 0.0, %v4177
        %v4179 = vpop.f32.mrf.mxu0
        %v4180 = vpop.f32.mrf.mxu0
        %v4181 = vpop.f32.mrf.mxu0
        %4182 = vdwg.mxu0
        %v4184 = vsel %vm2999, %v3986, 0
        %v4187 = vsel %vm4001, %v1801, 0
        %4189 = vmatprep.subr.bf16.mxu0 0
        %4190 = vmatpush1.bf16.msra.mxu0 0
        %4191 = vmatprep.subr.bf16.mxu0 0
        %4192 = vmatpush1.bf16.msra.mxu0 0
        %4193 = vmatprep.subr.bf16.mxu0 0
        %4194 = vmatpush1.bf16.msra.mxu0 0
        %4195 = vmatprep.subr.bf16.mxu0 0
        %4196 = vmatpush1.bf16.msra.mxu0 0
        %4197 = vmatprep.subr.bf16.mxu0 0
        %4198 = vmatpush1.bf16.msra.mxu0 0
        %4199 = vmatprep.subr.bf16.mxu0 0
        %4200 = vmatpush1.bf16.msra.mxu0 0
        %4201 = vmatprep.subr.bf16.mxu0 0
        %4202 = vmatpush1.bf16.msra.mxu0 0
        %4203 = vmatprep.subr.bf16.mxu0 0
        %4204 = vmatpush1.bf16.msra.mxu0 %v4187
        %4205 = vmatprep.subr.bf16.mxu0 0
        %4206 = vmatpush2.bf16.msra.mxu0 0
        %4207 = vmatprep.subr.bf16.mxu0 0
        %4208 = vmatpush2.bf16.msra.mxu0 0
        %4209 = vmatprep.subr.bf16.mxu0 0
        %4210 = vmatpush2.bf16.msra.mxu0 0
        %4211 = vmatprep.subr.bf16.mxu0 0
        %4212 = vmatpush2.bf16.msra.mxu0 0
        %4213 = vmatprep.subr.bf16.mxu0 0
        %4214 = vmatpush2.bf16.msra.mxu0 0
        %4215 = vmatprep.subr.bf16.mxu0 0
        %4216 = vmatpush2.bf16.msra.mxu0 0
        %4217 = vmatprep.subr.bf16.mxu0 0
        %4218 = vmatpush2.bf16.msra.mxu0 0
        %4219 = vmatprep.subr.bf16.mxu0 0
        %4220 = vmatpush2.bf16.msra.mxu0 0
        %4221 = vmatprep.mubr.bf16.mxu0 0
        %4222 = vmatmul.mubr.bf16.gmra.mxu0 %v4184
        %v4223 = vpop.f32.mrf.mxu0
        %v4224 = vadd.f32 0.0, %v4223
        %v4225 = vpop.f32.mrf.mxu0
        %v4226 = vpop.f32.mrf.mxu0
        %v4227 = vpop.f32.mrf.mxu0
        %4228 = vdwg.mxu0
        %v4230 = vsel %vm2999, %v3987, 0
        %v4233 = vsel %vm4001, %v1802, 0
        %4235 = vmatprep.subr.bf16.mxu0 0
        %4236 = vmatpush1.bf16.msra.mxu0 0
        %4237 = vmatprep.subr.bf16.mxu0 0
        %4238 = vmatpush1.bf16.msra.mxu0 0
        %4239 = vmatprep.subr.bf16.mxu0 0
        %4240 = vmatpush1.bf16.msra.mxu0 0
        %4241 = vmatprep.subr.bf16.mxu0 0
        %4242 = vmatpush1.bf16.msra.mxu0 0
        %4243 = vmatprep.subr.bf16.mxu0 0
        %4244 = vmatpush1.bf16.msra.mxu0 0
        %4245 = vmatprep.subr.bf16.mxu0 0
        %4246 = vmatpush1.bf16.msra.mxu0 0
        %4247 = vmatprep.subr.bf16.mxu0 0
        %4248 = vmatpush1.bf16.msra.mxu0 0
        %4249 = vmatprep.subr.bf16.mxu0 0
        %4250 = vmatpush1.bf16.msra.mxu0 %v4233
        %4251 = vmatprep.subr.bf16.mxu0 0
        %4252 = vmatpush2.bf16.msra.mxu0 0
        %4253 = vmatprep.subr.bf16.mxu0 0
        %4254 = vmatpush2.bf16.msra.mxu0 0
        %4255 = vmatprep.subr.bf16.mxu0 0
        %4256 = vmatpush2.bf16.msra.mxu0 0
        %4257 = vmatprep.subr.bf16.mxu0 0
        %4258 = vmatpush2.bf16.msra.mxu0 0
        %4259 = vmatprep.subr.bf16.mxu0 0
        %4260 = vmatpush2.bf16.msra.mxu0 0
        %4261 = vmatprep.subr.bf16.mxu0 0
        %4262 = vmatpush2.bf16.msra.mxu0 0
        %4263 = vmatprep.subr.bf16.mxu0 0
        %4264 = vmatpush2.bf16.msra.mxu0 0
        %4265 = vmatprep.subr.bf16.mxu0 0
        %4266 = vmatpush2.bf16.msra.mxu0 0
        %4267 = vmatprep.mubr.bf16.mxu0 0
        %4268 = vmatmul.mubr.bf16.gmra.mxu0 %v4230
        %v4269 = vpop.f32.mrf.mxu0
        %v4270 = vadd.f32 0.0, %v4269
        %v4271 = vpop.f32.mrf.mxu0
        %v4272 = vpop.f32.mrf.mxu0
        %v4273 = vpop.f32.mrf.mxu0
        %4274 = vdwg.mxu0
        %v4276 = vsel %vm2999, %v3988, 0
        %v4279 = vsel %vm4001, %v1803, 0
        %4281 = vmatprep.subr.bf16.mxu0 0
        %4282 = vmatpush1.bf16.msra.mxu0 0
        %4283 = vmatprep.subr.bf16.mxu0 0
        %4284 = vmatpush1.bf16.msra.mxu0 0
        %4285 = vmatprep.subr.bf16.mxu0 0
        %4286 = vmatpush1.bf16.msra.mxu0 0
        %4287 = vmatprep.subr.bf16.mxu0 0
        %4288 = vmatpush1.bf16.msra.mxu0 0
        %4289 = vmatprep.subr.bf16.mxu0 0
        %4290 = vmatpush1.bf16.msra.mxu0 0
        %4291 = vmatprep.subr.bf16.mxu0 0
        %4292 = vmatpush1.bf16.msra.mxu0 0
        %4293 = vmatprep.subr.bf16.mxu0 0
        %4294 = vmatpush1.bf16.msra.mxu0 0
        %4295 = vmatprep.subr.bf16.mxu0 0
        %4296 = vmatpush1.bf16.msra.mxu0 %v4279
        %4297 = vmatprep.subr.bf16.mxu0 0
        %4298 = vmatpush2.bf16.msra.mxu0 0
        %4299 = vmatprep.subr.bf16.mxu0 0
        %4300 = vmatpush2.bf16.msra.mxu0 0
        %4301 = vmatprep.subr.bf16.mxu0 0
        %4302 = vmatpush2.bf16.msra.mxu0 0
        %4303 = vmatprep.subr.bf16.mxu0 0
        %4304 = vmatpush2.bf16.msra.mxu0 0
        %4305 = vmatprep.subr.bf16.mxu0 0
        %4306 = vmatpush2.bf16.msra.mxu0 0
        %4307 = vmatprep.subr.bf16.mxu0 0
        %4308 = vmatpush2.bf16.msra.mxu0 0
        %4309 = vmatprep.subr.bf16.mxu0 0
        %4310 = vmatpush2.bf16.msra.mxu0 0
        %4311 = vmatprep.subr.bf16.mxu0 0
        %4312 = vmatpush2.bf16.msra.mxu0 0
        %4313 = vmatprep.mubr.bf16.mxu0 0
        %4314 = vmatmul.mubr.bf16.gmra.mxu0 %v4276
        %v4315 = vpop.f32.mrf.mxu0
        %v4316 = vadd.f32 0.0, %v4315
        %v4317 = vpop.f32.mrf.mxu0
        %v4318 = vpop.f32.mrf.mxu0
        %v4319 = vpop.f32.mrf.mxu0
        %4320 = vdwg.mxu0
        %v4322 = vsel %vm2999, %v3989, 0
        %v4325 = vsel %vm4001, %v1804, 0
        %4327 = vmatprep.subr.bf16.mxu0 0
        %4328 = vmatpush1.bf16.msra.mxu0 0
        %4329 = vmatprep.subr.bf16.mxu0 0
        %4330 = vmatpush1.bf16.msra.mxu0 0
        %4331 = vmatprep.subr.bf16.mxu0 0
        %4332 = vmatpush1.bf16.msra.mxu0 0
        %4333 = vmatprep.subr.bf16.mxu0 0
        %4334 = vmatpush1.bf16.msra.mxu0 0
        %4335 = vmatprep.subr.bf16.mxu0 0
        %4336 = vmatpush1.bf16.msra.mxu0 0
        %4337 = vmatprep.subr.bf16.mxu0 0
        %4338 = vmatpush1.bf16.msra.mxu0 0
        %4339 = vmatprep.subr.bf16.mxu0 0
        %4340 = vmatpush1.bf16.msra.mxu0 0
        %4341 = vmatprep.subr.bf16.mxu0 0
        %4342 = vmatpush1.bf16.msra.mxu0 %v4325
        %4343 = vmatprep.subr.bf16.mxu0 0
        %4344 = vmatpush2.bf16.msra.mxu0 0
        %4345 = vmatprep.subr.bf16.mxu0 0
        %4346 = vmatpush2.bf16.msra.mxu0 0
        %4347 = vmatprep.subr.bf16.mxu0 0
        %4348 = vmatpush2.bf16.msra.mxu0 0
        %4349 = vmatprep.subr.bf16.mxu0 0
        %4350 = vmatpush2.bf16.msra.mxu0 0
        %4351 = vmatprep.subr.bf16.mxu0 0
        %4352 = vmatpush2.bf16.msra.mxu0 0
        %4353 = vmatprep.subr.bf16.mxu0 0
        %4354 = vmatpush2.bf16.msra.mxu0 0
        %4355 = vmatprep.subr.bf16.mxu0 0
        %4356 = vmatpush2.bf16.msra.mxu0 0
        %4357 = vmatprep.subr.bf16.mxu0 0
        %4358 = vmatpush2.bf16.msra.mxu0 0
        %4359 = vmatprep.mubr.bf16.mxu0 0
        %4360 = vmatmul.mubr.bf16.gmra.mxu0 %v4322
        %v4361 = vpop.f32.mrf.mxu0
        %v4362 = vadd.f32 0.0, %v4361
        %v4363 = vpop.f32.mrf.mxu0
        %v4364 = vpop.f32.mrf.mxu0
        %v4365 = vpop.f32.mrf.mxu0
        %4366 = vdwg.mxu0
        %v4368 = vsel %vm2999, %v3990, 0
        %v4371 = vsel %vm4001, %v1805, 0
        %4373 = vmatprep.subr.bf16.mxu0 0
        %4374 = vmatpush1.bf16.msra.mxu0 0
        %4375 = vmatprep.subr.bf16.mxu0 0
        %4376 = vmatpush1.bf16.msra.mxu0 0
        %4377 = vmatprep.subr.bf16.mxu0 0
        %4378 = vmatpush1.bf16.msra.mxu0 0
        %4379 = vmatprep.subr.bf16.mxu0 0
        %4380 = vmatpush1.bf16.msra.mxu0 0
        %4381 = vmatprep.subr.bf16.mxu0 0
        %4382 = vmatpush1.bf16.msra.mxu0 0
        %4383 = vmatprep.subr.bf16.mxu0 0
        %4384 = vmatpush1.bf16.msra.mxu0 0
        %4385 = vmatprep.subr.bf16.mxu0 0
        %4386 = vmatpush1.bf16.msra.mxu0 0
        %4387 = vmatprep.subr.bf16.mxu0 0
        %4388 = vmatpush1.bf16.msra.mxu0 %v4371
        %4389 = vmatprep.subr.bf16.mxu0 0
        %4390 = vmatpush2.bf16.msra.mxu0 0
        %4391 = vmatprep.subr.bf16.mxu0 0
        %4392 = vmatpush2.bf16.msra.mxu0 0
        %4393 = vmatprep.subr.bf16.mxu0 0
        %4394 = vmatpush2.bf16.msra.mxu0 0
        %4395 = vmatprep.subr.bf16.mxu0 0
        %4396 = vmatpush2.bf16.msra.mxu0 0
        %4397 = vmatprep.subr.bf16.mxu0 0
        %4398 = vmatpush2.bf16.msra.mxu0 0
        %4399 = vmatprep.subr.bf16.mxu0 0
        %4400 = vmatpush2.bf16.msra.mxu0 0
        %4401 = vmatprep.subr.bf16.mxu0 0
        %4402 = vmatpush2.bf16.msra.mxu0 0
        %4403 = vmatprep.subr.bf16.mxu0 0
        %4404 = vmatpush2.bf16.msra.mxu0 0
        %4405 = vmatprep.mubr.bf16.mxu0 0
        %4406 = vmatmul.mubr.bf16.gmra.mxu0 %v4368
        %v4407 = vpop.f32.mrf.mxu0
        %v4408 = vadd.f32 0.0, %v4407
        %v4409 = vpop.f32.mrf.mxu0
        %v4410 = vpop.f32.mrf.mxu0
        %v4411 = vpop.f32.mrf.mxu0
        %4412 = vdwg.mxu0
        %v4414 = vsel %vm2999, %v3991, 0
        %v4417 = vsel %vm4001, %v1806, 0
        %4419 = vmatprep.subr.bf16.mxu0 0
        %4420 = vmatpush1.bf16.msra.mxu0 0
        %4421 = vmatprep.subr.bf16.mxu0 0
        %4422 = vmatpush1.bf16.msra.mxu0 0
        %4423 = vmatprep.subr.bf16.mxu0 0
        %4424 = vmatpush1.bf16.msra.mxu0 0
        %4425 = vmatprep.subr.bf16.mxu0 0
        %4426 = vmatpush1.bf16.msra.mxu0 0
        %4427 = vmatprep.subr.bf16.mxu0 0
        %4428 = vmatpush1.bf16.msra.mxu0 0
        %4429 = vmatprep.subr.bf16.mxu0 0
        %4430 = vmatpush1.bf16.msra.mxu0 0
        %4431 = vmatprep.subr.bf16.mxu0 0
        %4432 = vmatpush1.bf16.msra.mxu0 0
        %4433 = vmatprep.subr.bf16.mxu0 0
        %4434 = vmatpush1.bf16.msra.mxu0 %v4417
        %4435 = vmatprep.subr.bf16.mxu0 0
        %4436 = vmatpush2.bf16.msra.mxu0 0
        %4437 = vmatprep.subr.bf16.mxu0 0
        %4438 = vmatpush2.bf16.msra.mxu0 0
        %4439 = vmatprep.subr.bf16.mxu0 0
        %4440 = vmatpush2.bf16.msra.mxu0 0
        %4441 = vmatprep.subr.bf16.mxu0 0
        %4442 = vmatpush2.bf16.msra.mxu0 0
        %4443 = vmatprep.subr.bf16.mxu0 0
        %4444 = vmatpush2.bf16.msra.mxu0 0
        %4445 = vmatprep.subr.bf16.mxu0 0
        %4446 = vmatpush2.bf16.msra.mxu0 0
        %4447 = vmatprep.subr.bf16.mxu0 0
        %4448 = vmatpush2.bf16.msra.mxu0 0
        %4449 = vmatprep.subr.bf16.mxu0 0
        %4450 = vmatpush2.bf16.msra.mxu0 0
        %4451 = vmatprep.mubr.bf16.mxu0 0
        %4452 = vmatmul.mubr.bf16.gmra.mxu0 %v4414
        %v4453 = vpop.f32.mrf.mxu0
        %v4454 = vadd.f32 0.0, %v4453
        %v4455 = vpop.f32.mrf.mxu0
        %v4456 = vpop.f32.mrf.mxu0
        %v4457 = vpop.f32.mrf.mxu0
        %4458 = vdwg.mxu0
        %v4460 = vsel %vm2999, %v3992, 0
        %v4463 = vsel %vm4001, %v1807, 0
        %4465 = vmatprep.subr.bf16.mxu0 0
        %4466 = vmatpush1.bf16.msra.mxu0 0
        %4467 = vmatprep.subr.bf16.mxu0 0
        %4468 = vmatpush1.bf16.msra.mxu0 0
        %4469 = vmatprep.subr.bf16.mxu0 0
        %4470 = vmatpush1.bf16.msra.mxu0 0
        %4471 = vmatprep.subr.bf16.mxu0 0
        %4472 = vmatpush1.bf16.msra.mxu0 0
        %4473 = vmatprep.subr.bf16.mxu0 0
        %4474 = vmatpush1.bf16.msra.mxu0 0
        %4475 = vmatprep.subr.bf16.mxu0 0
        %4476 = vmatpush1.bf16.msra.mxu0 0
        %4477 = vmatprep.subr.bf16.mxu0 0
        %4478 = vmatpush1.bf16.msra.mxu0 0
        %4479 = vmatprep.subr.bf16.mxu0 0
        %4480 = vmatpush1.bf16.msra.mxu0 %v4463
        %4481 = vmatprep.subr.bf16.mxu0 0
        %4482 = vmatpush2.bf16.msra.mxu0 0
        %4483 = vmatprep.subr.bf16.mxu0 0
        %4484 = vmatpush2.bf16.msra.mxu0 0
        %4485 = vmatprep.subr.bf16.mxu0 0
        %4486 = vmatpush2.bf16.msra.mxu0 0
        %4487 = vmatprep.subr.bf16.mxu0 0
        %4488 = vmatpush2.bf16.msra.mxu0 0
        %4489 = vmatprep.subr.bf16.mxu0 0
        %4490 = vmatpush2.bf16.msra.mxu0 0
        %4491 = vmatprep.subr.bf16.mxu0 0
        %4492 = vmatpush2.bf16.msra.mxu0 0
        %4493 = vmatprep.subr.bf16.mxu0 0
        %4494 = vmatpush2.bf16.msra.mxu0 0
        %4495 = vmatprep.subr.bf16.mxu0 0
        %4496 = vmatpush2.bf16.msra.mxu0 0
        %4497 = vmatprep.mubr.bf16.mxu0 0
        %4498 = vmatmul.mubr.bf16.gmra.mxu0 %v4460
        %v4499 = vpop.f32.mrf.mxu0
        %v4500 = vadd.f32 0.0, %v4499
        %v4501 = vpop.f32.mrf.mxu0
        %v4502 = vpop.f32.mrf.mxu0
        %v4503 = vpop.f32.mrf.mxu0
        %4504 = vdwg.mxu0
        %v4506 = vsel %vm2999, %v3993, 0
        %v4509 = vsel %vm4001, %v1808, 0
        %4511 = vmatprep.subr.bf16.mxu0 0
        %4512 = vmatpush1.bf16.msra.mxu0 0
        %4513 = vmatprep.subr.bf16.mxu0 0
        %4514 = vmatpush1.bf16.msra.mxu0 0
        %4515 = vmatprep.subr.bf16.mxu0 0
        %4516 = vmatpush1.bf16.msra.mxu0 0
        %4517 = vmatprep.subr.bf16.mxu0 0
        %4518 = vmatpush1.bf16.msra.mxu0 0
        %4519 = vmatprep.subr.bf16.mxu0 0
        %4520 = vmatpush1.bf16.msra.mxu0 0
        %4521 = vmatprep.subr.bf16.mxu0 0
        %4522 = vmatpush1.bf16.msra.mxu0 0
        %4523 = vmatprep.subr.bf16.mxu0 0
        %4524 = vmatpush1.bf16.msra.mxu0 0
        %4525 = vmatprep.subr.bf16.mxu0 0
        %4526 = vmatpush1.bf16.msra.mxu0 %v4509
        %4527 = vmatprep.subr.bf16.mxu0 0
        %4528 = vmatpush2.bf16.msra.mxu0 0
        %4529 = vmatprep.subr.bf16.mxu0 0
        %4530 = vmatpush2.bf16.msra.mxu0 0
        %4531 = vmatprep.subr.bf16.mxu0 0
        %4532 = vmatpush2.bf16.msra.mxu0 0
        %4533 = vmatprep.subr.bf16.mxu0 0
        %4534 = vmatpush2.bf16.msra.mxu0 0
        %4535 = vmatprep.subr.bf16.mxu0 0
        %4536 = vmatpush2.bf16.msra.mxu0 0
        %4537 = vmatprep.subr.bf16.mxu0 0
        %4538 = vmatpush2.bf16.msra.mxu0 0
        %4539 = vmatprep.subr.bf16.mxu0 0
        %4540 = vmatpush2.bf16.msra.mxu0 0
        %4541 = vmatprep.subr.bf16.mxu0 0
        %4542 = vmatpush2.bf16.msra.mxu0 0
        %4543 = vmatprep.mubr.bf16.mxu0 0
        %4544 = vmatmul.mubr.bf16.gmra.mxu0 %v4506
        %v4545 = vpop.f32.mrf.mxu0
        %v4546 = vadd.f32 0.0, %v4545
        %v4547 = vpop.f32.mrf.mxu0
        %v4548 = vpop.f32.mrf.mxu0
        %v4549 = vpop.f32.mrf.mxu0
        %4550 = vdwg.mxu0
        %v4552 = vsel %vm2999, %v3994, 0
        %v4555 = vsel %vm4001, %v1809, 0
        %4557 = vmatprep.subr.bf16.mxu0 0
        %4558 = vmatpush1.bf16.msra.mxu0 0
        %4559 = vmatprep.subr.bf16.mxu0 0
        %4560 = vmatpush1.bf16.msra.mxu0 0
        %4561 = vmatprep.subr.bf16.mxu0 0
        %4562 = vmatpush1.bf16.msra.mxu0 0
        %4563 = vmatprep.subr.bf16.mxu0 0
        %4564 = vmatpush1.bf16.msra.mxu0 0
        %4565 = vmatprep.subr.bf16.mxu0 0
        %4566 = vmatpush1.bf16.msra.mxu0 0
        %4567 = vmatprep.subr.bf16.mxu0 0
        %4568 = vmatpush1.bf16.msra.mxu0 0
        %4569 = vmatprep.subr.bf16.mxu0 0
        %4570 = vmatpush1.bf16.msra.mxu0 0
        %4571 = vmatprep.subr.bf16.mxu0 0
        %4572 = vmatpush1.bf16.msra.mxu0 %v4555
        %4573 = vmatprep.subr.bf16.mxu0 0
        %4574 = vmatpush2.bf16.msra.mxu0 0
        %4575 = vmatprep.subr.bf16.mxu0 0
        %4576 = vmatpush2.bf16.msra.mxu0 0
        %4577 = vmatprep.subr.bf16.mxu0 0
        %4578 = vmatpush2.bf16.msra.mxu0 0
        %4579 = vmatprep.subr.bf16.mxu0 0
        %4580 = vmatpush2.bf16.msra.mxu0 0
        %4581 = vmatprep.subr.bf16.mxu0 0
        %4582 = vmatpush2.bf16.msra.mxu0 0
        %4583 = vmatprep.subr.bf16.mxu0 0
        %4584 = vmatpush2.bf16.msra.mxu0 0
        %4585 = vmatprep.subr.bf16.mxu0 0
        %4586 = vmatpush2.bf16.msra.mxu0 0
        %4587 = vmatprep.subr.bf16.mxu0 0
        %4588 = vmatpush2.bf16.msra.mxu0 0
        %4589 = vmatprep.mubr.bf16.mxu0 0
        %4590 = vmatmul.mubr.bf16.gmra.mxu0 %v4552
        %v4591 = vpop.f32.mrf.mxu0
        %v4592 = vadd.f32 0.0, %v4591
        %v4593 = vpop.f32.mrf.mxu0
        %v4594 = vpop.f32.mrf.mxu0
        %v4595 = vpop.f32.mrf.mxu0
        %4596 = vdwg.mxu0
        %v4598 = vsel %vm2999, %v3995, 0
        %v4601 = vsel %vm4001, %v1810, 0
        %4603 = vmatprep.subr.bf16.mxu0 0
        %4604 = vmatpush1.bf16.msra.mxu0 0
        %4605 = vmatprep.subr.bf16.mxu0 0
        %4606 = vmatpush1.bf16.msra.mxu0 0
        %4607 = vmatprep.subr.bf16.mxu0 0
        %4608 = vmatpush1.bf16.msra.mxu0 0
        %4609 = vmatprep.subr.bf16.mxu0 0
        %4610 = vmatpush1.bf16.msra.mxu0 0
        %4611 = vmatprep.subr.bf16.mxu0 0
        %4612 = vmatpush1.bf16.msra.mxu0 0
        %4613 = vmatprep.subr.bf16.mxu0 0
        %4614 = vmatpush1.bf16.msra.mxu0 0
        %4615 = vmatprep.subr.bf16.mxu0 0
        %4616 = vmatpush1.bf16.msra.mxu0 0
        %4617 = vmatprep.subr.bf16.mxu0 0
        %4618 = vmatpush1.bf16.msra.mxu0 %v4601
        %4619 = vmatprep.subr.bf16.mxu0 0
        %4620 = vmatpush2.bf16.msra.mxu0 0
        %4621 = vmatprep.subr.bf16.mxu0 0
        %4622 = vmatpush2.bf16.msra.mxu0 0
        %4623 = vmatprep.subr.bf16.mxu0 0
        %4624 = vmatpush2.bf16.msra.mxu0 0
        %4625 = vmatprep.subr.bf16.mxu0 0
        %4626 = vmatpush2.bf16.msra.mxu0 0
        %4627 = vmatprep.subr.bf16.mxu0 0
        %4628 = vmatpush2.bf16.msra.mxu0 0
        %4629 = vmatprep.subr.bf16.mxu0 0
        %4630 = vmatpush2.bf16.msra.mxu0 0
        %4631 = vmatprep.subr.bf16.mxu0 0
        %4632 = vmatpush2.bf16.msra.mxu0 0
        %4633 = vmatprep.subr.bf16.mxu0 0
        %4634 = vmatpush2.bf16.msra.mxu0 0
        %4635 = vmatprep.mubr.bf16.mxu0 0
        %4636 = vmatmul.mubr.bf16.gmra.mxu0 %v4598
        %v4637 = vpop.f32.mrf.mxu0
        %v4638 = vadd.f32 0.0, %v4637
        %v4639 = vpop.f32.mrf.mxu0
        %v4640 = vpop.f32.mrf.mxu0
        %v4641 = vpop.f32.mrf.mxu0
        %4642 = vdwg.mxu0
        %v4644 = vsel %vm2999, %v3996, 0
        %v4647 = vsel %vm4001, %v1811, 0
        %4649 = vmatprep.subr.bf16.mxu0 0
        %4650 = vmatpush1.bf16.msra.mxu0 0
        %4651 = vmatprep.subr.bf16.mxu0 0
        %4652 = vmatpush1.bf16.msra.mxu0 0
        %4653 = vmatprep.subr.bf16.mxu0 0
        %4654 = vmatpush1.bf16.msra.mxu0 0
        %4655 = vmatprep.subr.bf16.mxu0 0
        %4656 = vmatpush1.bf16.msra.mxu0 0
        %4657 = vmatprep.subr.bf16.mxu0 0
        %4658 = vmatpush1.bf16.msra.mxu0 0
        %4659 = vmatprep.subr.bf16.mxu0 0
        %4660 = vmatpush1.bf16.msra.mxu0 0
        %4661 = vmatprep.subr.bf16.mxu0 0
        %4662 = vmatpush1.bf16.msra.mxu0 0
        %4663 = vmatprep.subr.bf16.mxu0 0
        %4664 = vmatpush1.bf16.msra.mxu0 %v4647
        %4665 = vmatprep.subr.bf16.mxu0 0
        %4666 = vmatpush2.bf16.msra.mxu0 0
        %4667 = vmatprep.subr.bf16.mxu0 0
        %4668 = vmatpush2.bf16.msra.mxu0 0
        %4669 = vmatprep.subr.bf16.mxu0 0
        %4670 = vmatpush2.bf16.msra.mxu0 0
        %4671 = vmatprep.subr.bf16.mxu0 0
        %4672 = vmatpush2.bf16.msra.mxu0 0
        %4673 = vmatprep.subr.bf16.mxu0 0
        %4674 = vmatpush2.bf16.msra.mxu0 0
        %4675 = vmatprep.subr.bf16.mxu0 0
        %4676 = vmatpush2.bf16.msra.mxu0 0
        %4677 = vmatprep.subr.bf16.mxu0 0
        %4678 = vmatpush2.bf16.msra.mxu0 0
        %4679 = vmatprep.subr.bf16.mxu0 0
        %4680 = vmatpush2.bf16.msra.mxu0 0
        %4681 = vmatprep.mubr.bf16.mxu0 0
        %4682 = vmatmul.mubr.bf16.gmra.mxu0 %v4644
        %v4683 = vpop.f32.mrf.mxu0
        %v4684 = vadd.f32 0.0, %v4683
        %v4685 = vpop.f32.mrf.mxu0
        %v4686 = vpop.f32.mrf.mxu0
        %v4687 = vpop.f32.mrf.mxu0
        %4688 = vdwg.mxu0
        %v4690 = vsel %vm2999, %v3997, 0
        %v4693 = vsel %vm4001, %v1812, 0
        %4695 = vmatprep.subr.bf16.mxu0 0
        %4696 = vmatpush1.bf16.msra.mxu0 0
        %4697 = vmatprep.subr.bf16.mxu0 0
        %4698 = vmatpush1.bf16.msra.mxu0 0
        %4699 = vmatprep.subr.bf16.mxu0 0
        %4700 = vmatpush1.bf16.msra.mxu0 0
        %4701 = vmatprep.subr.bf16.mxu0 0
        %4702 = vmatpush1.bf16.msra.mxu0 0
        %4703 = vmatprep.subr.bf16.mxu0 0
        %4704 = vmatpush1.bf16.msra.mxu0 0
        %4705 = vmatprep.subr.bf16.mxu0 0
        %4706 = vmatpush1.bf16.msra.mxu0 0
        %4707 = vmatprep.subr.bf16.mxu0 0
        %4708 = vmatpush1.bf16.msra.mxu0 0
        %4709 = vmatprep.subr.bf16.mxu0 0
        %4710 = vmatpush1.bf16.msra.mxu0 %v4693
        %4711 = vmatprep.subr.bf16.mxu0 0
        %4712 = vmatpush2.bf16.msra.mxu0 0
        %4713 = vmatprep.subr.bf16.mxu0 0
        %4714 = vmatpush2.bf16.msra.mxu0 0
        %4715 = vmatprep.subr.bf16.mxu0 0
        %4716 = vmatpush2.bf16.msra.mxu0 0
        %4717 = vmatprep.subr.bf16.mxu0 0
        %4718 = vmatpush2.bf16.msra.mxu0 0
        %4719 = vmatprep.subr.bf16.mxu0 0
        %4720 = vmatpush2.bf16.msra.mxu0 0
        %4721 = vmatprep.subr.bf16.mxu0 0
        %4722 = vmatpush2.bf16.msra.mxu0 0
        %4723 = vmatprep.subr.bf16.mxu0 0
        %4724 = vmatpush2.bf16.msra.mxu0 0
        %4725 = vmatprep.subr.bf16.mxu0 0
        %4726 = vmatpush2.bf16.msra.mxu0 0
        %4727 = vmatprep.mubr.bf16.mxu0 0
        %4728 = vmatmul.mubr.bf16.gmra.mxu0 %v4690
        %v4729 = vpop.f32.mrf.mxu0
        %v4730 = vadd.f32 0.0, %v4729
        %v4731 = vpop.f32.mrf.mxu0
        %v4732 = vpop.f32.mrf.mxu0
        %v4733 = vpop.f32.mrf.mxu0
        %4734 = vdwg.mxu0
        %v4735 = vpack.c.bf16 %v3631, %v3629
        %v4736 = vpack.c.bf16 %v3635, %v3633
        %v4737 = vpack.c.bf16 %v3639, %v3637
        %v4738 = vpack.c.bf16 %v3643, %v3641
        %v4739 = vpack.c.bf16 %v3647, %v3645
        %v4740 = vpack.c.bf16 %v3651, %v3649
        %v4741 = vpack.c.bf16 %v3655, %v3653
        %v4742 = vpack.c.bf16 %v3659, %v3657
        %v4745 = vunpack.c.l.b16 %v1829
        %v4746 = vunpack.c.l.b16 %v1830
        %v4747 = vpack.c.b16 %v4746, %v4745
        %v4750 = vsel %vm748, %v4735, 0
        %4752 = vmatprep.subr.bf16.mxu0 0
        %4753 = vmatpush1.bf16.msra.mxu0 0
        %4754 = vmatprep.subr.bf16.mxu0 0
        %4755 = vmatpush1.bf16.msra.mxu0 0
        %4756 = vmatprep.subr.bf16.mxu0 0
        %4757 = vmatpush1.bf16.msra.mxu0 0
        %4758 = vmatprep.subr.bf16.mxu0 0
        %4759 = vmatpush1.bf16.msra.mxu0 0
        %4760 = vmatprep.subr.bf16.mxu0 0
        %4761 = vmatpush1.bf16.msra.mxu0 0
        %4762 = vmatprep.subr.bf16.mxu0 0
        %4763 = vmatpush1.bf16.msra.mxu0 0
        %4764 = vmatprep.subr.bf16.mxu0 0
        %4765 = vmatpush1.bf16.msra.mxu0 0
        %4766 = vmatprep.subr.bf16.mxu0 0
        %4767 = vmatpush1.bf16.msra.mxu0 %v4747
        %4768 = vmatprep.subr.bf16.mxu0 0
        %4769 = vmatpush2.bf16.msra.mxu0 0
        %4770 = vmatprep.subr.bf16.mxu0 0
        %4771 = vmatpush2.bf16.msra.mxu0 0
        %4772 = vmatprep.subr.bf16.mxu0 0
        %4773 = vmatpush2.bf16.msra.mxu0 0
        %4774 = vmatprep.subr.bf16.mxu0 0
        %4775 = vmatpush2.bf16.msra.mxu0 0
        %4776 = vmatprep.subr.bf16.mxu0 0
        %4777 = vmatpush2.bf16.msra.mxu0 0
        %4778 = vmatprep.subr.bf16.mxu0 0
        %4779 = vmatpush2.bf16.msra.mxu0 0
        %4780 = vmatprep.subr.bf16.mxu0 0
        %4781 = vmatpush2.bf16.msra.mxu0 0
        %4782 = vmatprep.subr.bf16.mxu0 0
        %4783 = vmatpush2.bf16.msra.mxu0 0
        %4784 = vmatprep.mubr.bf16.mxu0 0
        %4785 = vmatmul.mubr.bf16.gmra.mxu0 %v4750
        %v4786 = vpop.f32.mrf.mxu0
        %v4787 = vadd.f32 0.0, %v4786
        %v4788 = vpop.f32.mrf.mxu0
        %v4789 = vpop.f32.mrf.mxu0
        %v4790 = vadd.f32 0.0, %v4789
        %v4791 = vpop.f32.mrf.mxu0
        %4792 = vdwg.mxu0
        %v4795 = vunpack.c.l.b16 %v1831
        %v4796 = vunpack.c.l.b16 %v1832
        %v4797 = vpack.c.b16 %v4796, %v4795
        %v4800 = vsel %vm748, %v4736, 0
        %4802 = vmatprep.subr.bf16.mxu0 0
        %4803 = vmatpush1.bf16.msra.mxu0 0
        %4804 = vmatprep.subr.bf16.mxu0 0
        %4805 = vmatpush1.bf16.msra.mxu0 0
        %4806 = vmatprep.subr.bf16.mxu0 0
        %4807 = vmatpush1.bf16.msra.mxu0 0
        %4808 = vmatprep.subr.bf16.mxu0 0
        %4809 = vmatpush1.bf16.msra.mxu0 0
        %4810 = vmatprep.subr.bf16.mxu0 0
        %4811 = vmatpush1.bf16.msra.mxu0 0
        %4812 = vmatprep.subr.bf16.mxu0 0
        %4813 = vmatpush1.bf16.msra.mxu0 0
        %4814 = vmatprep.subr.bf16.mxu0 0
        %4815 = vmatpush1.bf16.msra.mxu0 0
        %4816 = vmatprep.subr.bf16.mxu0 0
        %4817 = vmatpush1.bf16.msra.mxu0 %v4797
        %4818 = vmatprep.subr.bf16.mxu0 0
        %4819 = vmatpush2.bf16.msra.mxu0 0
        %4820 = vmatprep.subr.bf16.mxu0 0
        %4821 = vmatpush2.bf16.msra.mxu0 0
        %4822 = vmatprep.subr.bf16.mxu0 0
        %4823 = vmatpush2.bf16.msra.mxu0 0
        %4824 = vmatprep.subr.bf16.mxu0 0
        %4825 = vmatpush2.bf16.msra.mxu0 0
        %4826 = vmatprep.subr.bf16.mxu0 0
        %4827 = vmatpush2.bf16.msra.mxu0 0
        %4828 = vmatprep.subr.bf16.mxu0 0
        %4829 = vmatpush2.bf16.msra.mxu0 0
        %4830 = vmatprep.subr.bf16.mxu0 0
        %4831 = vmatpush2.bf16.msra.mxu0 0
        %4832 = vmatprep.subr.bf16.mxu0 0
        %4833 = vmatpush2.bf16.msra.mxu0 0
        %4834 = vmatprep.mubr.bf16.mxu0 0
        %4835 = vmatmul.mubr.bf16.gmra.mxu0 %v4800
        %v4836 = vpop.f32.mrf.mxu0
        %v4837 = vadd.f32 0.0, %v4836
        %v4838 = vpop.f32.mrf.mxu0
        %v4839 = vpop.f32.mrf.mxu0
        %v4840 = vadd.f32 0.0, %v4839
        %v4841 = vpop.f32.mrf.mxu0
        %4842 = vdwg.mxu0
        %v4845 = vunpack.c.l.b16 %v1833
        %v4846 = vunpack.c.l.b16 %v1834
        %v4847 = vpack.c.b16 %v4846, %v4845
        %v4850 = vsel %vm748, %v4737, 0
        %4852 = vmatprep.subr.bf16.mxu0 0
        %4853 = vmatpush1.bf16.msra.mxu0 0
        %4854 = vmatprep.subr.bf16.mxu0 0
        %4855 = vmatpush1.bf16.msra.mxu0 0
        %4856 = vmatprep.subr.bf16.mxu0 0
        %4857 = vmatpush1.bf16.msra.mxu0 0
        %4858 = vmatprep.subr.bf16.mxu0 0
        %4859 = vmatpush1.bf16.msra.mxu0 0
        %4860 = vmatprep.subr.bf16.mxu0 0
        %4861 = vmatpush1.bf16.msra.mxu0 0
        %4862 = vmatprep.subr.bf16.mxu0 0
        %4863 = vmatpush1.bf16.msra.mxu0 0
        %4864 = vmatprep.subr.bf16.mxu0 0
        %4865 = vmatpush1.bf16.msra.mxu0 0
        %4866 = vmatprep.subr.bf16.mxu0 0
        %4867 = vmatpush1.bf16.msra.mxu0 %v4847
        %4868 = vmatprep.subr.bf16.mxu0 0
        %4869 = vmatpush2.bf16.msra.mxu0 0
        %4870 = vmatprep.subr.bf16.mxu0 0
        %4871 = vmatpush2.bf16.msra.mxu0 0
        %4872 = vmatprep.subr.bf16.mxu0 0
        %4873 = vmatpush2.bf16.msra.mxu0 0
        %4874 = vmatprep.subr.bf16.mxu0 0
        %4875 = vmatpush2.bf16.msra.mxu0 0
        %4876 = vmatprep.subr.bf16.mxu0 0
        %4877 = vmatpush2.bf16.msra.mxu0 0
        %4878 = vmatprep.subr.bf16.mxu0 0
        %4879 = vmatpush2.bf16.msra.mxu0 0
        %4880 = vmatprep.subr.bf16.mxu0 0
        %4881 = vmatpush2.bf16.msra.mxu0 0
        %4882 = vmatprep.subr.bf16.mxu0 0
        %4883 = vmatpush2.bf16.msra.mxu0 0
        %4884 = vmatprep.mubr.bf16.mxu0 0
        %4885 = vmatmul.mubr.bf16.gmra.mxu0 %v4850
        %v4886 = vpop.f32.mrf.mxu0
        %v4887 = vadd.f32 0.0, %v4886
        %v4888 = vpop.f32.mrf.mxu0
        %v4889 = vpop.f32.mrf.mxu0
        %v4890 = vadd.f32 0.0, %v4889
        %v4891 = vpop.f32.mrf.mxu0
        %4892 = vdwg.mxu0
        %v4895 = vunpack.c.l.b16 %v1835
        %v4896 = vunpack.c.l.b16 %v1836
        %v4897 = vpack.c.b16 %v4896, %v4895
        %v4900 = vsel %vm748, %v4738, 0
        %4902 = vmatprep.subr.bf16.mxu0 0
        %4903 = vmatpush1.bf16.msra.mxu0 0
        %4904 = vmatprep.subr.bf16.mxu0 0
        %4905 = vmatpush1.bf16.msra.mxu0 0
        %4906 = vmatprep.subr.bf16.mxu0 0
        %4907 = vmatpush1.bf16.msra.mxu0 0
        %4908 = vmatprep.subr.bf16.mxu0 0
        %4909 = vmatpush1.bf16.msra.mxu0 0
        %4910 = vmatprep.subr.bf16.mxu0 0
        %4911 = vmatpush1.bf16.msra.mxu0 0
        %4912 = vmatprep.subr.bf16.mxu0 0
        %4913 = vmatpush1.bf16.msra.mxu0 0
        %4914 = vmatprep.subr.bf16.mxu0 0
        %4915 = vmatpush1.bf16.msra.mxu0 0
        %4916 = vmatprep.subr.bf16.mxu0 0
        %4917 = vmatpush1.bf16.msra.mxu0 %v4897
        %4918 = vmatprep.subr.bf16.mxu0 0
        %4919 = vmatpush2.bf16.msra.mxu0 0
        %4920 = vmatprep.subr.bf16.mxu0 0
        %4921 = vmatpush2.bf16.msra.mxu0 0
        %4922 = vmatprep.subr.bf16.mxu0 0
        %4923 = vmatpush2.bf16.msra.mxu0 0
        %4924 = vmatprep.subr.bf16.mxu0 0
        %4925 = vmatpush2.bf16.msra.mxu0 0
        %4926 = vmatprep.subr.bf16.mxu0 0
        %4927 = vmatpush2.bf16.msra.mxu0 0
        %4928 = vmatprep.subr.bf16.mxu0 0
        %4929 = vmatpush2.bf16.msra.mxu0 0
        %4930 = vmatprep.subr.bf16.mxu0 0
        %4931 = vmatpush2.bf16.msra.mxu0 0
        %4932 = vmatprep.subr.bf16.mxu0 0
        %4933 = vmatpush2.bf16.msra.mxu0 0
        %4934 = vmatprep.mubr.bf16.mxu0 0
        %4935 = vmatmul.mubr.bf16.gmra.mxu0 %v4900
        %v4936 = vpop.f32.mrf.mxu0
        %v4937 = vadd.f32 0.0, %v4936
        %v4938 = vpop.f32.mrf.mxu0
        %v4939 = vpop.f32.mrf.mxu0
        %v4940 = vadd.f32 0.0, %v4939
        %v4941 = vpop.f32.mrf.mxu0
        %4942 = vdwg.mxu0
        %v4945 = vunpack.c.l.b16 %v1837
        %v4946 = vunpack.c.l.b16 %v1838
        %v4947 = vpack.c.b16 %v4946, %v4945
        %v4950 = vsel %vm748, %v4739, 0
        %4952 = vmatprep.subr.bf16.mxu0 0
        %4953 = vmatpush1.bf16.msra.mxu0 0
        %4954 = vmatprep.subr.bf16.mxu0 0
        %4955 = vmatpush1.bf16.msra.mxu0 0
        %4956 = vmatprep.subr.bf16.mxu0 0
        %4957 = vmatpush1.bf16.msra.mxu0 0
        %4958 = vmatprep.subr.bf16.mxu0 0
        %4959 = vmatpush1.bf16.msra.mxu0 0
        %4960 = vmatprep.subr.bf16.mxu0 0
        %4961 = vmatpush1.bf16.msra.mxu0 0
        %4962 = vmatprep.subr.bf16.mxu0 0
        %4963 = vmatpush1.bf16.msra.mxu0 0
        %4964 = vmatprep.subr.bf16.mxu0 0
        %4965 = vmatpush1.bf16.msra.mxu0 0
        %4966 = vmatprep.subr.bf16.mxu0 0
        %4967 = vmatpush1.bf16.msra.mxu0 %v4947
        %4968 = vmatprep.subr.bf16.mxu0 0
        %4969 = vmatpush2.bf16.msra.mxu0 0
        %4970 = vmatprep.subr.bf16.mxu0 0
        %4971 = vmatpush2.bf16.msra.mxu0 0
        %4972 = vmatprep.subr.bf16.mxu0 0
        %4973 = vmatpush2.bf16.msra.mxu0 0
        %4974 = vmatprep.subr.bf16.mxu0 0
        %4975 = vmatpush2.bf16.msra.mxu0 0
        %4976 = vmatprep.subr.bf16.mxu0 0
        %4977 = vmatpush2.bf16.msra.mxu0 0
        %4978 = vmatprep.subr.bf16.mxu0 0
        %4979 = vmatpush2.bf16.msra.mxu0 0
        %4980 = vmatprep.subr.bf16.mxu0 0
        %4981 = vmatpush2.bf16.msra.mxu0 0
        %4982 = vmatprep.subr.bf16.mxu0 0
        %4983 = vmatpush2.bf16.msra.mxu0 0
        %4984 = vmatprep.mubr.bf16.mxu0 0
        %4985 = vmatmul.mubr.bf16.gmra.mxu0 %v4950
        %v4986 = vpop.f32.mrf.mxu0
        %v4987 = vadd.f32 0.0, %v4986
        %v4988 = vpop.f32.mrf.mxu0
        %v4989 = vpop.f32.mrf.mxu0
        %v4990 = vadd.f32 0.0, %v4989
        %v4991 = vpop.f32.mrf.mxu0
        %4992 = vdwg.mxu0
        %v4995 = vunpack.c.l.b16 %v1839
        %v4996 = vunpack.c.l.b16 %v1840
        %v4997 = vpack.c.b16 %v4996, %v4995
        %v5000 = vsel %vm748, %v4740, 0
        %5002 = vmatprep.subr.bf16.mxu0 0
        %5003 = vmatpush1.bf16.msra.mxu0 0
        %5004 = vmatprep.subr.bf16.mxu0 0
        %5005 = vmatpush1.bf16.msra.mxu0 0
        %5006 = vmatprep.subr.bf16.mxu0 0
        %5007 = vmatpush1.bf16.msra.mxu0 0
        %5008 = vmatprep.subr.bf16.mxu0 0
        %5009 = vmatpush1.bf16.msra.mxu0 0
        %5010 = vmatprep.subr.bf16.mxu0 0
        %5011 = vmatpush1.bf16.msra.mxu0 0
        %5012 = vmatprep.subr.bf16.mxu0 0
        %5013 = vmatpush1.bf16.msra.mxu0 0
        %5014 = vmatprep.subr.bf16.mxu0 0
        %5015 = vmatpush1.bf16.msra.mxu0 0
        %5016 = vmatprep.subr.bf16.mxu0 0
        %5017 = vmatpush1.bf16.msra.mxu0 %v4997
        %5018 = vmatprep.subr.bf16.mxu0 0
        %5019 = vmatpush2.bf16.msra.mxu0 0
        %5020 = vmatprep.subr.bf16.mxu0 0
        %5021 = vmatpush2.bf16.msra.mxu0 0
        %5022 = vmatprep.subr.bf16.mxu0 0
        %5023 = vmatpush2.bf16.msra.mxu0 0
        %5024 = vmatprep.subr.bf16.mxu0 0
        %5025 = vmatpush2.bf16.msra.mxu0 0
        %5026 = vmatprep.subr.bf16.mxu0 0
        %5027 = vmatpush2.bf16.msra.mxu0 0
        %5028 = vmatprep.subr.bf16.mxu0 0
        %5029 = vmatpush2.bf16.msra.mxu0 0
        %5030 = vmatprep.subr.bf16.mxu0 0
        %5031 = vmatpush2.bf16.msra.mxu0 0
        %5032 = vmatprep.subr.bf16.mxu0 0
        %5033 = vmatpush2.bf16.msra.mxu0 0
        %5034 = vmatprep.mubr.bf16.mxu0 0
        %5035 = vmatmul.mubr.bf16.gmra.mxu0 %v5000
        %v5036 = vpop.f32.mrf.mxu0
        %v5037 = vadd.f32 0.0, %v5036
        %v5038 = vpop.f32.mrf.mxu0
        %v5039 = vpop.f32.mrf.mxu0
        %v5040 = vadd.f32 0.0, %v5039
        %v5041 = vpop.f32.mrf.mxu0
        %5042 = vdwg.mxu0
        %v5045 = vunpack.c.l.b16 %v1841
        %v5046 = vunpack.c.l.b16 %v1842
        %v5047 = vpack.c.b16 %v5046, %v5045
        %v5050 = vsel %vm748, %v4741, 0
        %5052 = vmatprep.subr.bf16.mxu0 0
        %5053 = vmatpush1.bf16.msra.mxu0 0
        %5054 = vmatprep.subr.bf16.mxu0 0
        %5055 = vmatpush1.bf16.msra.mxu0 0
        %5056 = vmatprep.subr.bf16.mxu0 0
        %5057 = vmatpush1.bf16.msra.mxu0 0
        %5058 = vmatprep.subr.bf16.mxu0 0
        %5059 = vmatpush1.bf16.msra.mxu0 0
        %5060 = vmatprep.subr.bf16.mxu0 0
        %5061 = vmatpush1.bf16.msra.mxu0 0
        %5062 = vmatprep.subr.bf16.mxu0 0
        %5063 = vmatpush1.bf16.msra.mxu0 0
        %5064 = vmatprep.subr.bf16.mxu0 0
        %5065 = vmatpush1.bf16.msra.mxu0 0
        %5066 = vmatprep.subr.bf16.mxu0 0
        %5067 = vmatpush1.bf16.msra.mxu0 %v5047
        %5068 = vmatprep.subr.bf16.mxu0 0
        %5069 = vmatpush2.bf16.msra.mxu0 0
        %5070 = vmatprep.subr.bf16.mxu0 0
        %5071 = vmatpush2.bf16.msra.mxu0 0
        %5072 = vmatprep.subr.bf16.mxu0 0
        %5073 = vmatpush2.bf16.msra.mxu0 0
        %5074 = vmatprep.subr.bf16.mxu0 0
        %5075 = vmatpush2.bf16.msra.mxu0 0
        %5076 = vmatprep.subr.bf16.mxu0 0
        %5077 = vmatpush2.bf16.msra.mxu0 0
        %5078 = vmatprep.subr.bf16.mxu0 0
        %5079 = vmatpush2.bf16.msra.mxu0 0
        %5080 = vmatprep.subr.bf16.mxu0 0
        %5081 = vmatpush2.bf16.msra.mxu0 0
        %5082 = vmatprep.subr.bf16.mxu0 0
        %5083 = vmatpush2.bf16.msra.mxu0 0
        %5084 = vmatprep.mubr.bf16.mxu0 0
        %5085 = vmatmul.mubr.bf16.gmra.mxu0 %v5050
        %v5086 = vpop.f32.mrf.mxu0
        %v5087 = vadd.f32 0.0, %v5086
        %v5088 = vpop.f32.mrf.mxu0
        %v5089 = vpop.f32.mrf.mxu0
        %v5090 = vadd.f32 0.0, %v5089
        %v5091 = vpop.f32.mrf.mxu0
        %5092 = vdwg.mxu0
        %v5095 = vunpack.c.l.b16 %v1843
        %v5096 = vunpack.c.l.b16 %v1844
        %v5097 = vpack.c.b16 %v5096, %v5095
        %v5100 = vsel %vm748, %v4742, 0
        %5102 = vmatprep.subr.bf16.mxu0 0
        %5103 = vmatpush1.bf16.msra.mxu0 0
        %5104 = vmatprep.subr.bf16.mxu0 0
        %5105 = vmatpush1.bf16.msra.mxu0 0
        %5106 = vmatprep.subr.bf16.mxu0 0
        %5107 = vmatpush1.bf16.msra.mxu0 0
        %5108 = vmatprep.subr.bf16.mxu0 0
        %5109 = vmatpush1.bf16.msra.mxu0 0
        %5110 = vmatprep.subr.bf16.mxu0 0
        %5111 = vmatpush1.bf16.msra.mxu0 0
        %5112 = vmatprep.subr.bf16.mxu0 0
        %5113 = vmatpush1.bf16.msra.mxu0 0
        %5114 = vmatprep.subr.bf16.mxu0 0
        %5115 = vmatpush1.bf16.msra.mxu0 0
        %5116 = vmatprep.subr.bf16.mxu0 0
        %5117 = vmatpush1.bf16.msra.mxu0 %v5097
        %5118 = vmatprep.subr.bf16.mxu0 0
        %5119 = vmatpush2.bf16.msra.mxu0 0
        %5120 = vmatprep.subr.bf16.mxu0 0
        %5121 = vmatpush2.bf16.msra.mxu0 0
        %5122 = vmatprep.subr.bf16.mxu0 0
        %5123 = vmatpush2.bf16.msra.mxu0 0
        %5124 = vmatprep.subr.bf16.mxu0 0
        %5125 = vmatpush2.bf16.msra.mxu0 0
        %5126 = vmatprep.subr.bf16.mxu0 0
        %5127 = vmatpush2.bf16.msra.mxu0 0
        %5128 = vmatprep.subr.bf16.mxu0 0
        %5129 = vmatpush2.bf16.msra.mxu0 0
        %5130 = vmatprep.subr.bf16.mxu0 0
        %5131 = vmatpush2.bf16.msra.mxu0 0
        %5132 = vmatprep.subr.bf16.mxu0 0
        %5133 = vmatpush2.bf16.msra.mxu0 0
        %5134 = vmatprep.mubr.bf16.mxu0 0
        %5135 = vmatmul.mubr.bf16.gmra.mxu0 %v5100
        %v5136 = vpop.f32.mrf.mxu0
        %v5137 = vadd.f32 0.0, %v5136
        %v5138 = vpop.f32.mrf.mxu0
        %v5139 = vpop.f32.mrf.mxu0
        %v5140 = vadd.f32 0.0, %v5139
        %v5141 = vpop.f32.mrf.mxu0
        %5142 = vdwg.mxu0
        %v5143 = vcombine.low %v4040, %v4132
        %v5144 = vcombine.high %v4040, %v4132
        %v5146 = vunpack.c.l.s4 1983009808
        %v5147 = vunpack.c.0.s8 %v5146
        %v5148 = vlaneseq
        %v5149 = vshrl.u32 %v5148, 7
        %v5150 = vsub.s32 %v5147, %v5149
        %v5151 = vrot.slane %v5143, %v5150
        %v5153 = vunpack.c.l.s4 1983009808
        %v5154 = vunpack.c.0.s8 %v5153
        %v5155 = vlaneseq
        %v5156 = vshrl.u32 %v5155, 7
        %v5157 = vsub.s32 %v5154, %v5156
        %v5158 = vrot.slane %v5144, %v5157
        %v5159 = vcombine.low %v4086, %v4178
        %v5160 = vcombine.high %v4086, %v4178
        %v5162 = vunpack.c.l.s4 1983009808
        %v5163 = vunpack.c.0.s8 %v5162
        %v5164 = vlaneseq
        %v5165 = vshrl.u32 %v5164, 7
        %v5166 = vsub.s32 %v5163, %v5165
        %v5167 = vrot.slane %v5159, %v5166
        %v5169 = vunpack.c.l.s4 1983009808
        %v5170 = vunpack.c.0.s8 %v5169
        %v5171 = vlaneseq
        %v5172 = vshrl.u32 %v5171, 7
        %v5173 = vsub.s32 %v5170, %v5172
        %v5174 = vrot.slane %v5160, %v5173
        %v5175 = vcombine.low %v4224, %v4316
        %v5176 = vcombine.high %v4224, %v4316
        %v5178 = vunpack.c.l.s4 1983009808
        %v5179 = vunpack.c.0.s8 %v5178
        %v5180 = vlaneseq
        %v5181 = vshrl.u32 %v5180, 7
        %v5182 = vsub.s32 %v5179, %v5181
        %v5183 = vrot.slane %v5175, %v5182
        %v5185 = vunpack.c.l.s4 1983009808
        %v5186 = vunpack.c.0.s8 %v5185
        %v5187 = vlaneseq
        %v5188 = vshrl.u32 %v5187, 7
        %v5189 = vsub.s32 %v5186, %v5188
        %v5190 = vrot.slane %v5176, %v5189
        %v5191 = vcombine.low %v4270, %v4362
        %v5192 = vcombine.high %v4270, %v4362
        %v5194 = vunpack.c.l.s4 1983009808
        %v5195 = vunpack.c.0.s8 %v5194
        %v5196 = vlaneseq
        %v5197 = vshrl.u32 %v5196, 7
        %v5198 = vsub.s32 %v5195, %v5197
        %v5199 = vrot.slane %v5191, %v5198
        %v5201 = vunpack.c.l.s4 1983009808
        %v5202 = vunpack.c.0.s8 %v5201
        %v5203 = vlaneseq
        %v5204 = vshrl.u32 %v5203, 7
        %v5205 = vsub.s32 %v5202, %v5204
        %v5206 = vrot.slane %v5192, %v5205
        %v5207 = vcombine.low %v5151, %v5167
        %v5208 = vcombine.high %v5151, %v5167
        %v5210 = vunpack.c.l.s4 1934713408
        %v5211 = vunpack.c.0.s8 %v5210
        %v5212 = vlaneseq
        %v5213 = vshrl.u32 %v5212, 7
        %v5214 = vsub.s32 %v5211, %v5213
        %v5215 = vrot.slane %v5207, %v5214
        %v5217 = vunpack.c.l.s4 1934713408
        %v5218 = vunpack.c.0.s8 %v5217
        %v5219 = vlaneseq
        %v5220 = vshrl.u32 %v5219, 7
        %v5221 = vsub.s32 %v5218, %v5220
        %v5222 = vrot.slane %v5208, %v5221
        %v5223 = vcombine.low %v5158, %v5174
        %v5224 = vcombine.high %v5158, %v5174
        %v5226 = vunpack.c.l.s4 1934713408
        %v5227 = vunpack.c.0.s8 %v5226
        %v5228 = vlaneseq
        %v5229 = vshrl.u32 %v5228, 7
        %v5230 = vsub.s32 %v5227, %v5229
        %v5231 = vrot.slane %v5223, %v5230
        %v5233 = vunpack.c.l.s4 1934713408
        %v5234 = vunpack.c.0.s8 %v5233
        %v5235 = vlaneseq
        %v5236 = vshrl.u32 %v5235, 7
        %v5237 = vsub.s32 %v5234, %v5236
        %v5238 = vrot.slane %v5224, %v5237
        %v5239 = vcombine.low %v5183, %v5199
        %v5240 = vcombine.high %v5183, %v5199
        %v5242 = vunpack.c.l.s4 1934713408
        %v5243 = vunpack.c.0.s8 %v5242
        %v5244 = vlaneseq
        %v5245 = vshrl.u32 %v5244, 7
        %v5246 = vsub.s32 %v5243, %v5245
        %v5247 = vrot.slane %v5239, %v5246
        %v5249 = vunpack.c.l.s4 1934713408
        %v5250 = vunpack.c.0.s8 %v5249
        %v5251 = vlaneseq
        %v5252 = vshrl.u32 %v5251, 7
        %v5253 = vsub.s32 %v5250, %v5252
        %v5254 = vrot.slane %v5240, %v5253
        %v5255 = vcombine.low %v5190, %v5206
        %v5256 = vcombine.high %v5190, %v5206
        %v5258 = vunpack.c.l.s4 1934713408
        %v5259 = vunpack.c.0.s8 %v5258
        %v5260 = vlaneseq
        %v5261 = vshrl.u32 %v5260, 7
        %v5262 = vsub.s32 %v5259, %v5261
        %v5263 = vrot.slane %v5255, %v5262
        %v5265 = vunpack.c.l.s4 1934713408
        %v5266 = vunpack.c.0.s8 %v5265
        %v5267 = vlaneseq
        %v5268 = vshrl.u32 %v5267, 7
        %v5269 = vsub.s32 %v5266, %v5268
        %v5270 = vrot.slane %v5256, %v5269
        %v5271 = vcombine.low %v5215, %v5247
        %v5272 = vcombine.high %v5215, %v5247
        %v5273 = vcombine.low %v5222, %v5254
        %v5274 = vcombine.high %v5222, %v5254
        %v5275 = vcombine.low %v5231, %v5263
        %v5276 = vcombine.high %v5231, %v5263
        %v5277 = vcombine.low %v5238, %v5270
        %v5278 = vcombine.high %v5238, %v5270
        %v5279 = vcombine.low %v4408, %v4500
        %v5280 = vcombine.high %v4408, %v4500
        %v5282 = vunpack.c.l.s4 1983009808
        %v5283 = vunpack.c.0.s8 %v5282
        %v5284 = vlaneseq
        %v5285 = vshrl.u32 %v5284, 7
        %v5286 = vsub.s32 %v5283, %v5285
        %v5287 = vrot.slane %v5279, %v5286
        %v5289 = vunpack.c.l.s4 1983009808
        %v5290 = vunpack.c.0.s8 %v5289
        %v5291 = vlaneseq
        %v5292 = vshrl.u32 %v5291, 7
        %v5293 = vsub.s32 %v5290, %v5292
        %v5294 = vrot.slane %v5280, %v5293
        %v5295 = vcombine.low %v4454, %v4546
        %v5296 = vcombine.high %v4454, %v4546
        %v5298 = vunpack.c.l.s4 1983009808
        %v5299 = vunpack.c.0.s8 %v5298
        %v5300 = vlaneseq
        %v5301 = vshrl.u32 %v5300, 7
        %v5302 = vsub.s32 %v5299, %v5301
        %v5303 = vrot.slane %v5295, %v5302
        %v5305 = vunpack.c.l.s4 1983009808
        %v5306 = vunpack.c.0.s8 %v5305
        %v5307 = vlaneseq
        %v5308 = vshrl.u32 %v5307, 7
        %v5309 = vsub.s32 %v5306, %v5308
        %v5310 = vrot.slane %v5296, %v5309
        %v5311 = vcombine.low %v4592, %v4684
        %v5312 = vcombine.high %v4592, %v4684
        %v5314 = vunpack.c.l.s4 1983009808
        %v5315 = vunpack.c.0.s8 %v5314
        %v5316 = vlaneseq
        %v5317 = vshrl.u32 %v5316, 7
        %v5318 = vsub.s32 %v5315, %v5317
        %v5319 = vrot.slane %v5311, %v5318
        %v5321 = vunpack.c.l.s4 1983009808
        %v5322 = vunpack.c.0.s8 %v5321
        %v5323 = vlaneseq
        %v5324 = vshrl.u32 %v5323, 7
        %v5325 = vsub.s32 %v5322, %v5324
        %v5326 = vrot.slane %v5312, %v5325
        %v5327 = vcombine.low %v4638, %v4730
        %v5328 = vcombine.high %v4638, %v4730
        %v5330 = vunpack.c.l.s4 1983009808
        %v5331 = vunpack.c.0.s8 %v5330
        %v5332 = vlaneseq
        %v5333 = vshrl.u32 %v5332, 7
        %v5334 = vsub.s32 %v5331, %v5333
        %v5335 = vrot.slane %v5327, %v5334
        %v5337 = vunpack.c.l.s4 1983009808
        %v5338 = vunpack.c.0.s8 %v5337
        %v5339 = vlaneseq
        %v5340 = vshrl.u32 %v5339, 7
        %v5341 = vsub.s32 %v5338, %v5340
        %v5342 = vrot.slane %v5328, %v5341
        %v5343 = vcombine.low %v5287, %v5303
        %v5344 = vcombine.high %v5287, %v5303
        %v5346 = vunpack.c.l.s4 1934713408
        %v5347 = vunpack.c.0.s8 %v5346
        %v5348 = vlaneseq
        %v5349 = vshrl.u32 %v5348, 7
        %v5350 = vsub.s32 %v5347, %v5349
        %v5351 = vrot.slane %v5343, %v5350
        %v5353 = vunpack.c.l.s4 1934713408
        %v5354 = vunpack.c.0.s8 %v5353
        %v5355 = vlaneseq
        %v5356 = vshrl.u32 %v5355, 7
        %v5357 = vsub.s32 %v5354, %v5356
        %v5358 = vrot.slane %v5344, %v5357
        %v5359 = vcombine.low %v5294, %v5310
        %v5360 = vcombine.high %v5294, %v5310
        %v5362 = vunpack.c.l.s4 1934713408
        %v5363 = vunpack.c.0.s8 %v5362
        %v5364 = vlaneseq
        %v5365 = vshrl.u32 %v5364, 7
        %v5366 = vsub.s32 %v5363, %v5365
        %v5367 = vrot.slane %v5359, %v5366
        %v5369 = vunpack.c.l.s4 1934713408
        %v5370 = vunpack.c.0.s8 %v5369
        %v5371 = vlaneseq
        %v5372 = vshrl.u32 %v5371, 7
        %v5373 = vsub.s32 %v5370, %v5372
        %v5374 = vrot.slane %v5360, %v5373
        %v5375 = vcombine.low %v5319, %v5335
        %v5376 = vcombine.high %v5319, %v5335
        %v5378 = vunpack.c.l.s4 1934713408
        %v5379 = vunpack.c.0.s8 %v5378
        %v5380 = vlaneseq
        %v5381 = vshrl.u32 %v5380, 7
        %v5382 = vsub.s32 %v5379, %v5381
        %v5383 = vrot.slane %v5375, %v5382
        %v5385 = vunpack.c.l.s4 1934713408
        %v5386 = vunpack.c.0.s8 %v5385
        %v5387 = vlaneseq
        %v5388 = vshrl.u32 %v5387, 7
        %v5389 = vsub.s32 %v5386, %v5388
        %v5390 = vrot.slane %v5376, %v5389
        %v5391 = vcombine.low %v5326, %v5342
        %v5392 = vcombine.high %v5326, %v5342
        %v5394 = vunpack.c.l.s4 1934713408
        %v5395 = vunpack.c.0.s8 %v5394
        %v5396 = vlaneseq
        %v5397 = vshrl.u32 %v5396, 7
        %v5398 = vsub.s32 %v5395, %v5397
        %v5399 = vrot.slane %v5391, %v5398
        %v5401 = vunpack.c.l.s4 1934713408
        %v5402 = vunpack.c.0.s8 %v5401
        %v5403 = vlaneseq
        %v5404 = vshrl.u32 %v5403, 7
        %v5405 = vsub.s32 %v5402, %v5404
        %v5406 = vrot.slane %v5392, %v5405
        %v5407 = vcombine.low %v5351, %v5383
        %v5408 = vcombine.high %v5351, %v5383
        %v5409 = vcombine.low %v5358, %v5390
        %v5410 = vcombine.high %v5358, %v5390
        %v5411 = vcombine.low %v5367, %v5399
        %v5412 = vcombine.high %v5367, %v5399
        %v5413 = vcombine.low %v5374, %v5406
        %v5414 = vcombine.high %v5374, %v5406
        %v5415 = vadd.f32 %v5271, %v4787
        %v5416 = vadd.f32 %v5407, %v4790
        %v5417 = vadd.f32 %v5272, %v4837
        %v5418 = vadd.f32 %v5408, %v4840
        %v5419 = vadd.f32 %v5273, %v4887
        %v5420 = vadd.f32 %v5409, %v4890
        %v5421 = vadd.f32 %v5274, %v4937
        %v5422 = vadd.f32 %v5410, %v4940
        %v5423 = vadd.f32 %v5275, %v4987
        %v5424 = vadd.f32 %v5411, %v4990
        %v5425 = vadd.f32 %v5276, %v5037
        %v5426 = vadd.f32 %v5412, %v5040
        %v5427 = vadd.f32 %v5277, %v5087
        %v5428 = vadd.f32 %v5413, %v5090
        %v5429 = vadd.f32 %v5278, %v5137
        %v5430 = vadd.f32 %v5414, %v5140
        %v5431 = vlaneseq
        %v5432 = vshrl.u32 %v5431, 7
        %v5433 = vsub.s32 0, %v5432
        %v5434 = vrot.slane %v3981, %v5433
        %5436 = vbcast.lane.b32.xlu0 %v5434, 256
        %v5437 = vpop.permute.xlu0 %5436
        %s5439 = sor.u32 256, 8
        %5440 = vbcast.lane.b32.xlu0 %v5434, %s5439
        %v5441 = vpop.permute.xlu0 %5440
        %v5442 = vlaneseq
        %v5443 = vshrl.u32 %v5442, 7
        %v5444 = vsub.s32 1, %v5443
        %v5445 = vrot.slane %v3981, %v5444
        %5447 = vbcast.lane.b32.xlu0 %v5445, 256
        %v5448 = vpop.permute.xlu0 %5447
        %s5450 = sor.u32 256, 8
        %5451 = vbcast.lane.b32.xlu0 %v5445, %s5450
        %v5452 = vpop.permute.xlu0 %5451
        %v5453 = vlaneseq
        %v5454 = vshrl.u32 %v5453, 7
        %v5455 = vsub.s32 2, %v5454
        %v5456 = vrot.slane %v3981, %v5455
        %5458 = vbcast.lane.b32.xlu0 %v5456, 256
        %v5459 = vpop.permute.xlu0 %5458
        %s5461 = sor.u32 256, 8
        %5462 = vbcast.lane.b32.xlu0 %v5456, %s5461
        %v5463 = vpop.permute.xlu0 %5462
        %v5464 = vlaneseq
        %v5465 = vshrl.u32 %v5464, 7
        %v5466 = vsub.s32 3, %v5465
        %v5467 = vrot.slane %v3981, %v5466
        %5469 = vbcast.lane.b32.xlu0 %v5467, 256
        %v5470 = vpop.permute.xlu0 %5469
        %s5472 = sor.u32 256, 8
        %5473 = vbcast.lane.b32.xlu0 %v5467, %s5472
        %v5474 = vpop.permute.xlu0 %5473
        %v5475 = vlaneseq
        %v5476 = vshrl.u32 %v5475, 7
        %v5477 = vsub.s32 4, %v5476
        %v5478 = vrot.slane %v3981, %v5477
        %5480 = vbcast.lane.b32.xlu0 %v5478, 256
        %v5481 = vpop.permute.xlu0 %5480
        %s5483 = sor.u32 256, 8
        %5484 = vbcast.lane.b32.xlu0 %v5478, %s5483
        %v5485 = vpop.permute.xlu0 %5484
        %v5486 = vlaneseq
        %v5487 = vshrl.u32 %v5486, 7
        %v5488 = vsub.s32 5, %v5487
        %v5489 = vrot.slane %v3981, %v5488
        %5491 = vbcast.lane.b32.xlu0 %v5489, 256
        %v5492 = vpop.permute.xlu0 %5491
        %s5494 = sor.u32 256, 8
        %5495 = vbcast.lane.b32.xlu0 %v5489, %s5494
        %v5496 = vpop.permute.xlu0 %5495
        %v5497 = vlaneseq
        %v5498 = vshrl.u32 %v5497, 7
        %v5499 = vsub.s32 6, %v5498
        %v5500 = vrot.slane %v3981, %v5499
        %5502 = vbcast.lane.b32.xlu0 %v5500, 256
        %v5503 = vpop.permute.xlu0 %5502
        %s5505 = sor.u32 256, 8
        %5506 = vbcast.lane.b32.xlu0 %v5500, %s5505
        %v5507 = vpop.permute.xlu0 %5506
        %v5508 = vlaneseq
        %v5509 = vshrl.u32 %v5508, 7
        %v5510 = vsub.s32 7, %v5509
        %v5511 = vrot.slane %v3981, %v5510
        %5513 = vbcast.lane.b32.xlu0 %v5511, 256
        %v5514 = vpop.permute.xlu0 %5513
        %s5516 = sor.u32 256, 8
        %5517 = vbcast.lane.b32.xlu0 %v5511, %s5516
        %v5518 = vpop.permute.xlu0 %5517
        %v5519 = vmul.f32 %v5415, %v5437
        %v5520 = vmul.f32 %v5416, %v5441
        %v5521 = vmul.f32 %v5417, %v5448
        %v5522 = vmul.f32 %v5418, %v5452
        %v5523 = vmul.f32 %v5419, %v5459
        %v5524 = vmul.f32 %v5420, %v5463
        %v5525 = vmul.f32 %v5421, %v5470
        %v5526 = vmul.f32 %v5422, %v5474
        %v5527 = vmul.f32 %v5423, %v5481
        %v5528 = vmul.f32 %v5424, %v5485
        %v5529 = vmul.f32 %v5425, %v5492
        %v5530 = vmul.f32 %v5426, %v5496
        %v5531 = vmul.f32 %v5427, %v5503
        %v5532 = vmul.f32 %v5428, %v5507
        %v5533 = vmul.f32 %v5429, %v5514
        %v5534 = vmul.f32 %v5430, %v5518
        %s5535 = scalar_lea.vmem %s344, %s1166 [#allocation5]
        %v5536 = vld [vmem:[%s5535] sm:$0xff]
        %v5537 = vld [vmem:[%s5535 + $0x8] sm:$0xff]
        %v5538 = vld [vmem:[%s5535 + $0x10] sm:$0xff]
        %v5539 = vld [vmem:[%s5535 + $0x18] sm:$0xff]
        %v5540 = vld [vmem:[%s5535 + $0x20] sm:$0xff]
        %v5541 = vld [vmem:[%s5535 + $0x28] sm:$0xff]
        %v5542 = vld [vmem:[%s5535 + $0x30] sm:$0xff]
        %v5543 = vld [vmem:[%s5535 + $0x38] sm:$0xff]
        %v5544 = vld [vmem:[%s5535 + $0x40] sm:$0xff]
        %v5545 = vld [vmem:[%s5535 + $0x48] sm:$0xff]
        %v5546 = vld [vmem:[%s5535 + $0x50] sm:$0xff]
        %v5547 = vld [vmem:[%s5535 + $0x58] sm:$0xff]
        %v5548 = vld [vmem:[%s5535 + $0x60] sm:$0xff]
        %v5549 = vld [vmem:[%s5535 + $0x68] sm:$0xff]
        %v5550 = vld [vmem:[%s5535 + $0x70] sm:$0xff]
        %v5551 = vld [vmem:[%s5535 + $0x78] sm:$0xff]
        %s5552 = sld [smem:[#allocation4]]
        %v5553 = vstv %s5552
        %v5554 = vmul.f32 %v5553, %v5519
        %v5555 = vmul.f32 %v5553, %v5520
        %v5556 = vmul.f32 %v5553, %v5521
        %v5557 = vmul.f32 %v5553, %v5522
        %v5558 = vmul.f32 %v5553, %v5523
        %v5559 = vmul.f32 %v5553, %v5524
        %v5560 = vmul.f32 %v5553, %v5525
        %v5561 = vmul.f32 %v5553, %v5526
        %v5562 = vmul.f32 %v5553, %v5527
        %v5563 = vmul.f32 %v5553, %v5528
        %v5564 = vmul.f32 %v5553, %v5529
        %v5565 = vmul.f32 %v5553, %v5530
        %v5566 = vmul.f32 %v5553, %v5531
        %v5567 = vmul.f32 %v5553, %v5532
        %v5568 = vmul.f32 %v5553, %v5533
        %v5569 = vmul.f32 %v5553, %v5534
        %v5570 = vadd.f32 %v5554, %v5536
        %v5571 = vadd.f32 %v5555, %v5537
        %v5572 = vadd.f32 %v5556, %v5538
        %v5573 = vadd.f32 %v5557, %v5539
        %v5574 = vadd.f32 %v5558, %v5540
        %v5575 = vadd.f32 %v5559, %v5541
        %v5576 = vadd.f32 %v5560, %v5542
        %v5577 = vadd.f32 %v5561, %v5543
        %v5578 = vadd.f32 %v5562, %v5544
        %v5579 = vadd.f32 %v5563, %v5545
        %v5580 = vadd.f32 %v5564, %v5546
        %v5581 = vadd.f32 %v5565, %v5547
        %v5582 = vadd.f32 %v5566, %v5548
        %v5583 = vadd.f32 %v5567, %v5549
        %v5584 = vadd.f32 %v5568, %v5550
        %v5585 = vadd.f32 %v5569, %v5551
        %v5586 = vcombine.low %v5570, %v5574
        %v5587 = vcombine.high %v5570, %v5574
        %v5589 = vunpack.c.l.s4 1983009808
        %v5590 = vunpack.c.0.s8 %v5589
        %v5591 = vlaneseq
        %v5592 = vshrl.u32 %v5591, 7
        %v5593 = vsub.s32 %v5590, %v5592
        %v5594 = vrot.slane %v5586, %v5593
        %v5596 = vunpack.c.l.s4 1983009808
        %v5597 = vunpack.c.0.s8 %v5596
        %v5598 = vlaneseq
        %v5599 = vshrl.u32 %v5598, 7
        %v5600 = vsub.s32 %v5597, %v5599
        %v5601 = vrot.slane %v5587, %v5600
        %v5602 = vcombine.low %v5572, %v5576
        %v5603 = vcombine.high %v5572, %v5576
        %v5605 = vunpack.c.l.s4 1983009808
        %v5606 = vunpack.c.0.s8 %v5605
        %v5607 = vlaneseq
        %v5608 = vshrl.u32 %v5607, 7
        %v5609 = vsub.s32 %v5606, %v5608
        %v5610 = vrot.slane %v5602, %v5609
        %v5612 = vunpack.c.l.s4 1983009808
        %v5613 = vunpack.c.0.s8 %v5612
        %v5614 = vlaneseq
        %v5615 = vshrl.u32 %v5614, 7
        %v5616 = vsub.s32 %v5613, %v5615
        %v5617 = vrot.slane %v5603, %v5616
        %v5618 = vcombine.low %v5578, %v5582
        %v5619 = vcombine.high %v5578, %v5582
        %v5621 = vunpack.c.l.s4 1983009808
        %v5622 = vunpack.c.0.s8 %v5621
        %v5623 = vlaneseq
        %v5624 = vshrl.u32 %v5623, 7
        %v5625 = vsub.s32 %v5622, %v5624
        %v5626 = vrot.slane %v5618, %v5625
        %v5628 = vunpack.c.l.s4 1983009808
        %v5629 = vunpack.c.0.s8 %v5628
        %v5630 = vlaneseq
        %v5631 = vshrl.u32 %v5630, 7
        %v5632 = vsub.s32 %v5629, %v5631
        %v5633 = vrot.slane %v5619, %v5632
        %v5634 = vcombine.low %v5580, %v5584
        %v5635 = vcombine.high %v5580, %v5584
        %v5637 = vunpack.c.l.s4 1983009808
        %v5638 = vunpack.c.0.s8 %v5637
        %v5639 = vlaneseq
        %v5640 = vshrl.u32 %v5639, 7
        %v5641 = vsub.s32 %v5638, %v5640
        %v5642 = vrot.slane %v5634, %v5641
        %v5644 = vunpack.c.l.s4 1983009808
        %v5645 = vunpack.c.0.s8 %v5644
        %v5646 = vlaneseq
        %v5647 = vshrl.u32 %v5646, 7
        %v5648 = vsub.s32 %v5645, %v5647
        %v5649 = vrot.slane %v5635, %v5648
        %v5650 = vcombine.low %v5594, %v5610
        %v5651 = vcombine.high %v5594, %v5610
        %v5653 = vunpack.c.l.s4 1934713408
        %v5654 = vunpack.c.0.s8 %v5653
        %v5655 = vlaneseq
        %v5656 = vshrl.u32 %v5655, 7
        %v5657 = vsub.s32 %v5654, %v5656
        %v5658 = vrot.slane %v5650, %v5657
        %v5660 = vunpack.c.l.s4 1934713408
        %v5661 = vunpack.c.0.s8 %v5660
        %v5662 = vlaneseq
        %v5663 = vshrl.u32 %v5662, 7
        %v5664 = vsub.s32 %v5661, %v5663
        %v5665 = vrot.slane %v5651, %v5664
        %v5666 = vcombine.low %v5601, %v5617
        %v5667 = vcombine.high %v5601, %v5617
        %v5669 = vunpack.c.l.s4 1934713408
        %v5670 = vunpack.c.0.s8 %v5669
        %v5671 = vlaneseq
        %v5672 = vshrl.u32 %v5671, 7
        %v5673 = vsub.s32 %v5670, %v5672
        %v5674 = vrot.slane %v5666, %v5673
        %v5676 = vunpack.c.l.s4 1934713408
        %v5677 = vunpack.c.0.s8 %v5676
        %v5678 = vlaneseq
        %v5679 = vshrl.u32 %v5678, 7
        %v5680 = vsub.s32 %v5677, %v5679
        %v5681 = vrot.slane %v5667, %v5680
        %v5682 = vcombine.low %v5626, %v5642
        %v5683 = vcombine.high %v5626, %v5642
        %v5685 = vunpack.c.l.s4 1934713408
        %v5686 = vunpack.c.0.s8 %v5685
        %v5687 = vlaneseq
        %v5688 = vshrl.u32 %v5687, 7
        %v5689 = vsub.s32 %v5686, %v5688
        %v5690 = vrot.slane %v5682, %v5689
        %v5692 = vunpack.c.l.s4 1934713408
        %v5693 = vunpack.c.0.s8 %v5692
        %v5694 = vlaneseq
        %v5695 = vshrl.u32 %v5694, 7
        %v5696 = vsub.s32 %v5693, %v5695
        %v5697 = vrot.slane %v5683, %v5696
        %v5698 = vcombine.low %v5633, %v5649
        %v5699 = vcombine.high %v5633, %v5649
        %v5701 = vunpack.c.l.s4 1934713408
        %v5702 = vunpack.c.0.s8 %v5701
        %v5703 = vlaneseq
        %v5704 = vshrl.u32 %v5703, 7
        %v5705 = vsub.s32 %v5702, %v5704
        %v5706 = vrot.slane %v5698, %v5705
        %v5708 = vunpack.c.l.s4 1934713408
        %v5709 = vunpack.c.0.s8 %v5708
        %v5710 = vlaneseq
        %v5711 = vshrl.u32 %v5710, 7
        %v5712 = vsub.s32 %v5709, %v5711
        %v5713 = vrot.slane %v5699, %v5712
        %v5714 = vcombine.low %v5658, %v5690
        %v5715 = vcombine.high %v5658, %v5690
        %v5716 = vcombine.low %v5665, %v5697
        %v5717 = vcombine.high %v5665, %v5697
        %v5718 = vcombine.low %v5674, %v5706
        %v5719 = vcombine.high %v5674, %v5706
        %v5720 = vcombine.low %v5681, %v5713
        %v5721 = vcombine.high %v5681, %v5713
        %v5722 = vcombine.low %v5571, %v5575
        %v5723 = vcombine.high %v5571, %v5575
        %v5725 = vunpack.c.l.s4 1983009808
        %v5726 = vunpack.c.0.s8 %v5725
        %v5727 = vlaneseq
        %v5728 = vshrl.u32 %v5727, 7
        %v5729 = vsub.s32 %v5726, %v5728
        %v5730 = vrot.slane %v5722, %v5729
        %v5732 = vunpack.c.l.s4 1983009808
        %v5733 = vunpack.c.0.s8 %v5732
        %v5734 = vlaneseq
        %v5735 = vshrl.u32 %v5734, 7
        %v5736 = vsub.s32 %v5733, %v5735
        %v5737 = vrot.slane %v5723, %v5736
        %v5738 = vcombine.low %v5573, %v5577
        %v5739 = vcombine.high %v5573, %v5577
        %v5741 = vunpack.c.l.s4 1983009808
        %v5742 = vunpack.c.0.s8 %v5741
        %v5743 = vlaneseq
        %v5744 = vshrl.u32 %v5743, 7
        %v5745 = vsub.s32 %v5742, %v5744
        %v5746 = vrot.slane %v5738, %v5745
        %v5748 = vunpack.c.l.s4 1983009808
        %v5749 = vunpack.c.0.s8 %v5748
        %v5750 = vlaneseq
        %v5751 = vshrl.u32 %v5750, 7
        %v5752 = vsub.s32 %v5749, %v5751
        %v5753 = vrot.slane %v5739, %v5752
        %v5754 = vcombine.low %v5579, %v5583
        %v5755 = vcombine.high %v5579, %v5583
        %v5757 = vunpack.c.l.s4 1983009808
        %v5758 = vunpack.c.0.s8 %v5757
        %v5759 = vlaneseq
        %v5760 = vshrl.u32 %v5759, 7
        %v5761 = vsub.s32 %v5758, %v5760
        %v5762 = vrot.slane %v5754, %v5761
        %v5764 = vunpack.c.l.s4 1983009808
        %v5765 = vunpack.c.0.s8 %v5764
        %v5766 = vlaneseq
        %v5767 = vshrl.u32 %v5766, 7
        %v5768 = vsub.s32 %v5765, %v5767
        %v5769 = vrot.slane %v5755, %v5768
        %v5770 = vcombine.low %v5581, %v5585
        %v5771 = vcombine.high %v5581, %v5585
        %v5773 = vunpack.c.l.s4 1983009808
        %v5774 = vunpack.c.0.s8 %v5773
        %v5775 = vlaneseq
        %v5776 = vshrl.u32 %v5775, 7
        %v5777 = vsub.s32 %v5774, %v5776
        %v5778 = vrot.slane %v5770, %v5777
        %v5780 = vunpack.c.l.s4 1983009808
        %v5781 = vunpack.c.0.s8 %v5780
        %v5782 = vlaneseq
        %v5783 = vshrl.u32 %v5782, 7
        %v5784 = vsub.s32 %v5781, %v5783
        %v5785 = vrot.slane %v5771, %v5784
        %v5786 = vcombine.low %v5730, %v5746
        %v5787 = vcombine.high %v5730, %v5746
        %v5789 = vunpack.c.l.s4 1934713408
        %v5790 = vunpack.c.0.s8 %v5789
        %v5791 = vlaneseq
        %v5792 = vshrl.u32 %v5791, 7
        %v5793 = vsub.s32 %v5790, %v5792
        %v5794 = vrot.slane %v5786, %v5793
        %v5796 = vunpack.c.l.s4 1934713408
        %v5797 = vunpack.c.0.s8 %v5796
        %v5798 = vlaneseq
        %v5799 = vshrl.u32 %v5798, 7
        %v5800 = vsub.s32 %v5797, %v5799
        %v5801 = vrot.slane %v5787, %v5800
        %v5802 = vcombine.low %v5737, %v5753
        %v5803 = vcombine.high %v5737, %v5753
        %v5805 = vunpack.c.l.s4 1934713408
        %v5806 = vunpack.c.0.s8 %v5805
        %v5807 = vlaneseq
        %v5808 = vshrl.u32 %v5807, 7
        %v5809 = vsub.s32 %v5806, %v5808
        %v5810 = vrot.slane %v5802, %v5809
        %v5812 = vunpack.c.l.s4 1934713408
        %v5813 = vunpack.c.0.s8 %v5812
        %v5814 = vlaneseq
        %v5815 = vshrl.u32 %v5814, 7
        %v5816 = vsub.s32 %v5813, %v5815
        %v5817 = vrot.slane %v5803, %v5816
        %v5818 = vcombine.low %v5762, %v5778
        %v5819 = vcombine.high %v5762, %v5778
        %v5821 = vunpack.c.l.s4 1934713408
        %v5822 = vunpack.c.0.s8 %v5821
        %v5823 = vlaneseq
        %v5824 = vshrl.u32 %v5823, 7
        %v5825 = vsub.s32 %v5822, %v5824
        %v5826 = vrot.slane %v5818, %v5825
        %v5828 = vunpack.c.l.s4 1934713408
        %v5829 = vunpack.c.0.s8 %v5828
        %v5830 = vlaneseq
        %v5831 = vshrl.u32 %v5830, 7
        %v5832 = vsub.s32 %v5829, %v5831
        %v5833 = vrot.slane %v5819, %v5832
        %v5834 = vcombine.low %v5769, %v5785
        %v5835 = vcombine.high %v5769, %v5785
        %v5837 = vunpack.c.l.s4 1934713408
        %v5838 = vunpack.c.0.s8 %v5837
        %v5839 = vlaneseq
        %v5840 = vshrl.u32 %v5839, 7
        %v5841 = vsub.s32 %v5838, %v5840
        %v5842 = vrot.slane %v5834, %v5841
        %v5844 = vunpack.c.l.s4 1934713408
        %v5845 = vunpack.c.0.s8 %v5844
        %v5846 = vlaneseq
        %v5847 = vshrl.u32 %v5846, 7
        %v5848 = vsub.s32 %v5845, %v5847
        %v5849 = vrot.slane %v5835, %v5848
        %v5850 = vcombine.low %v5794, %v5826
        %v5851 = vcombine.high %v5794, %v5826
        %v5852 = vcombine.low %v5801, %v5833
        %v5853 = vcombine.high %v5801, %v5833
        %v5854 = vcombine.low %v5810, %v5842
        %v5855 = vcombine.high %v5810, %v5842
        %v5856 = vcombine.low %v5817, %v5849
        %v5857 = vcombine.high %v5817, %v5849
        %5859 = vrot.lane.b32.xlu0 %v5715, 16
        %v5860 = vpop.permute.xlu0 %5859
        %5863 = vrot.lane.b32.xlu0 %v5716, 32
        %v5864 = vpop.permute.xlu0 %5863
        %5867 = vrot.lane.b32.xlu0 %v5717, 48
        %v5868 = vpop.permute.xlu0 %5867
        %5871 = vrot.lane.b32.xlu0 %v5718, 64
        %v5872 = vpop.permute.xlu0 %5871
        %5875 = vrot.lane.b32.xlu0 %v5719, 80
        %v5876 = vpop.permute.xlu0 %5875
        %5879 = vrot.lane.b32.xlu0 %v5720, 96
        %v5880 = vpop.permute.xlu0 %5879
        %5883 = vrot.lane.b32.xlu0 %v5721, 112
        %v5884 = vpop.permute.xlu0 %5883
        %5887 = vrot.lane.b32.xlu0 %v5851, 16
        %v5888 = vpop.permute.xlu0 %5887
        %5891 = vrot.lane.b32.xlu0 %v5852, 32
        %v5892 = vpop.permute.xlu0 %5891
        %5895 = vrot.lane.b32.xlu0 %v5853, 48
        %v5896 = vpop.permute.xlu0 %5895
        %5899 = vrot.lane.b32.xlu0 %v5854, 64
        %v5900 = vpop.permute.xlu0 %5899
        %5903 = vrot.lane.b32.xlu0 %v5855, 80
        %v5904 = vpop.permute.xlu0 %5903
        %5907 = vrot.lane.b32.xlu0 %v5856, 96
        %v5908 = vpop.permute.xlu0 %5907
        %5911 = vrot.lane.b32.xlu0 %v5857, 112
        %v5912 = vpop.permute.xlu0 %5911
        %v5914 = vsel %vm748, %v5714, %v5860
        %vm5915 = vcmask 261120
        %v5916 = vsel %vm5915, %v5914, %v5864
        %vm5917 = vcmask 392192
        %v5918 = vsel %vm5917, %v5916, %v5868
        %vm5919 = vcmask 523264
        %v5920 = vsel %vm5919, %v5918, %v5872
        %vm5921 = vcmask 654336
        %v5922 = vsel %vm5921, %v5920, %v5876
        %vm5923 = vcmask 785408
        %v5924 = vsel %vm5923, %v5922, %v5880
        %vm5925 = vcmask 916480
        %v5926 = vsel %vm5925, %v5924, %v5884
        %v5927 = vsel %vm748, %v5850, %v5888
        %v5928 = vsel %vm5915, %v5927, %v5892
        %v5929 = vsel %vm5917, %v5928, %v5896
        %v5930 = vsel %vm5919, %v5929, %v5900
        %v5931 = vsel %vm5921, %v5930, %v5904
        %v5932 = vsel %vm5923, %v5931, %v5908
        %v5933 = vsel %vm5925, %v5932, %v5912
        %5934 = vst [vmem:[%s394] sm:$0xff] %v5926
        %5935 = vst [vmem:[%s394 + $0x8] sm:$0xff] %v5933
        %s5936 = sand.u32 %s231, 1
        %s5937 = scalar_lea.sflag [#allocation7], %s5936
        %s5938 = sand.u32 %s231, 1
        %s5939 = smul.addr %s5938, 16
        %s5940 = scalar_lea.vmem [#allocation11], %s5939
        // Predicated region
        $region69: #{tpu_custom_call.1} parent=51 // pred_check
          %p5941 = pneg %p241
        $region70: #{tpu_custom_call.1} parent=51 // pred_check_branch
          %5943 = sbr.rel (%p5941) target = $region72
        $region71: #{tpu_custom_call.1} parent=51 // pred_region
          %s5944 = smul.u32 2, %s34
          %s5946 = ssub.s32 256, 256
          %5947 = vsyncadd %s5937, %s5946
          %s5948 = smul.addr %s33, 2
          %s5949 = sadd.s32 %s5944, %s5948
          %s5950 = smul.addr %s5949, 128
          %s5951 = scalar_lea.hbm %s8, %s5950
          %s5953 = sshll.u32 %s5940, 4
          %s5954 = int_to_ptr.vmem [resolvable:$true] %s5953
          %5956 = dma.vmem_to_hbm [thread:$0]  %s5954, 256, %s5951, %s5937
        $region72: #{tpu_custom_call.1} parent=51 // pred_fallthru
          _
      $region52: #{tpu_custom_call.1} parent=5 // pred_fallthru
        _
      %p5957 = scmp.le.s32.totalorder 2, %s24
      // Predicated region
      $region73: #{tpu_custom_call.1} parent=5 // pred_check
        %p5958 = pneg %p5957
      $region74: #{tpu_custom_call.1} parent=5 // pred_check_branch
        %5960 = sbr.rel (%p5958) target = $region76
      $region75: #{tpu_custom_call.1} parent=5 // pred_region
        %s5961 = ssub.s32 %s24, 2
        // Predicated region
        $region77: #{tpu_custom_call.1} parent=75 // pred_check
          %p5962 = pneg %p247
        $region78: #{tpu_custom_call.1} parent=75 // pred_check_branch
          %5964 = sbr.rel (%p5962) target = $region80
        $region79: #{tpu_custom_call.1} parent=75 // pred_region
          %s5965 = sand.u32 %s232, 1
          %s5966 = scalar_lea.sflag [#allocation7], %s5965
          %s5967 = sand.u32 %s232, 1
          %s5968 = smul.addr %s5967, 16
          %s5969 = scalar_lea.vmem [#allocation11], %s5968
          %5970 = dma.done %s5966, 256
        $region80: #{tpu_custom_call.1} parent=75 // pred_fallthru
          _
      $region76: #{tpu_custom_call.1} parent=5 // pred_fallthru
        _
    $region6: #{tpu_custom_call.1} parent=1 // loop_footer
      %s28 = sadd.s32 1, %s24
    $region7: #{tpu_custom_call.1} parent=1 // loop_footer_branch
      %23 = sbr.rel target = $region3
    $region8: #{tpu_custom_call.1} parent=1 // loop_exit
      _
    %5971 = vsyncpa [#allocation6], 1
    %s5972 = scalar_lea.sflag [#allocation6], 1
    %5973 = vsyncpa %s5972, 1
    %5974 = vsyncpa [#allocation9], 1
    %s5975 = scalar_lea.sflag [#allocation9], 1
    %5976 = vsyncpa %s5975, 1
    %5977 = vsyncpa [#allocation7], 1
    %s5978 = scalar_lea.sflag [#allocation7], 1
    %5979 = vsyncpa %s5978, 1

// kernel: tpu_custom_call.1
$region0: #{tpu_custom_call.1}
  #allocation0 [shape = 'u32[]', space=smem, size = 0x4, offset = 0x4, fixed_abs, tag = 'smem constant byte address 0x4 - core index']
  #allocation1 [shape = 'u32[144,128]{1,0:T(1,128)}', space=vmem, size = 0x12000, scoped, tag = 'internal scratch']
  #allocation2 [shape = 'bf16[8,16,2]{2,1,0:T(8,128)(2,1)}', space=vmem, size = 0x8000, scoped, tag = 'scratch operand']
  #allocation3 [shape = 'bf16[8,16,16]{2,1,0:T(8,128)(2,1)}', space=vmem, size = 0x8000, scoped, tag = 'scratch operand']
  #allocation4 [shape = 'f32[1]{0:T(128)S(6)}', space=smem, size = 0x200, scoped, tag = 'scoped memory for tpu_custom_call.1']
  %s0 = inlined_call_operand.hbm [shape: f32[2,8,16,16], index: 0, kind: input, shape index: {}]
  %s1 = inlined_call_operand.hbm [shape: f32[2,8,16,16], index: 1, kind: input, shape index: {}]
  %s2 = inlined_call_operand.vmem [shape: bf16[16,2], index: 2, kind: input, shape index: {}]
  %s3 = inlined_call_operand.hbm [shape: f32[1,2], index: 3, kind: input, shape index: {}]
  %s4 = inlined_call_operand.vmem [shape: bf16[16,18], index: 4, kind: input, shape index: {}]
  %s5 = inlined_call_operand.vmem [shape: f32[1,18], index: 5, kind: input, shape index: {}]
  %s6 = inlined_call_operand.vmem [shape: f32[8,8], index: 6, kind: input, shape index: {}]
  %s7 = inlined_call_operand.<no memory space> [shape: f32[1], index: 7, kind: input, shape index: {}]
  %s8 = inlined_call_operand.hbm [shape: f32[2,8,16,16], index: 8, kind: output, shape index: {}]
  %s9 = sld [smem:[#allocation0]]
  $region81: #{tpu_custom_call.1} parent=0
    _
  %s11 = ssub.s32 1, %s9
  %s12 = scalar_select 0, %s11, %s9
  %13 = sst [smem:[#allocation4]] %s7
  $region1: #{tpu_custom_call.1} parent=0
    #allocation5 [shape = 'u8[131072]{0}', space=vmem, size = 0x20000, scoped, tag = 'input window, operand 0']
    #allocation6 [shape = 's32[2]{0}', space=sflag, size = 0x8, scoped, tag = 'scoped memory for tpu_custom_call.1']
    #allocation7 [shape = 's32[2]{0}', space=sflag, size = 0x8, scoped, tag = 'scoped memory for tpu_custom_call.1']
    #allocation8 [shape = 'u8[131072]{0}', space=vmem, size = 0x20000, scoped, tag = 'input window, operand 1']
    #allocation9 [shape = 's32[2]{0}', space=sflag, size = 0x8, scoped, tag = 'scoped memory for tpu_custom_call.1']
    #allocation10 [shape = 'u8[512]{0}', space=vmem, size = 0x400, scoped, tag = 'input window, operand 3, single buffered']
    #allocation11 [shape = 'u8[131072]{0}', space=vmem, size = 0x20000, scoped, tag = 'output window, operand 0']
    %14 = vsyncpa [#allocation6], 0
    %s15 = scalar_lea.sflag [#allocation6], 1
    %16 = vsyncpa %s15, 0
    %17 = vsyncpa [#allocation9], 0
    %s18 = scalar_lea.sflag [#allocation9], 1
    %19 = vsyncpa %s18, 0
    %20 = vsyncpa [#allocation7], 0
    %s21 = scalar_lea.sflag [#allocation7], 1
    %22 = vsyncpa %s21, 0
    loop: start=0, step=1, limit=4
    $region2: #{tpu_custom_call.1} parent=1 // loop_pre_header
      _
    $region3: #{tpu_custom_call.1} parent=1 // loop_header
      %s24 = sphi 0, %s28
      %p25 = scmp.ge.s32.totalorder %s24, 4
      %s31 = sphi 0, %s43
      %s32 = sphi 0, %s39
      %s33 = sphi 0, %s31
      %s34 = sphi 0, %s32
      %s35 = sphi 0, %s33
      %s36 = sphi 0, %s34
      %s46 = sphi 0, %s48
      %s49 = sphi 0, %s46
      %s50 = sphi 0, %s49
      %s66 = sphi 0, %s50
      %s74 = sphi 0, %s76
      %s77 = sphi 0, %s74
      %s78 = sphi 0, %s77
      %s94 = sphi 0, %s78
      %s98 = sphi 0, %s98
      %s100 = sphi 0, %s98
      %s101 = sphi 0, %s100
      %s115 = sphi 0, %s101
      %s119 = sphi 0, %s119
      %s121 = sphi 0, %s119
      %s122 = sphi 0, %s121
      %s136 = sphi 0, %s122
      %s140 = sphi 0, %s140
      %s142 = sphi 0, %s140
      %s143 = sphi 0, %s142
      %s157 = sphi 0, %s143
      %s161 = sphi 0, %s161
      %s163 = sphi 0, %s161
      %s164 = sphi 0, %s163
      %s178 = sphi 0, %s164
      %s182 = sphi 0, %s182
      %s184 = sphi 0, %s182
      %s185 = sphi 0, %s184
      %s199 = sphi 0, %s185
      %s203 = sphi 0, %s203
      %s205 = sphi 0, %s203
      %s206 = sphi 0, %s205
      %s220 = sphi 0, %s206
      %s228 = sphi 0, %s230
      %s231 = sphi 0, %s228
      %s232 = sphi 0, %s231
      %s248 = sphi 0, %s232
    $region4: #{tpu_custom_call.1} parent=1 // loop_header_branch
      %27 = sbr.rel (%p25) target = $region8
    $region5: #{tpu_custom_call.1} parent=1 // loop_body
      %s29 = ssub.s32 %s24, 1
      %s30 = ssub.s32 %s24, 2
      %s37 = sadd.s32 1, %s32
      %p38 = scmp.ge.s32.totalorder %s37, 1
      %s39 = scalar_select %p38, 0, %s37
      %s40 = sadd.s32 1, %s31
      %s41 = scalar_select %p38, %s40, %s31
      %p42 = scmp.ge.s32.totalorder %s41, 2
      %s43 = scalar_select %p42, 0, %s41
      %s44 = ssub.s32 %s31, %s43
      %p45 = scmp.eq.s32.totalorder %s44, 0
      %s47 = sadd.s32 %s46, 1
      %s48 = scalar_select %p45, %s46, %s47
      %p51 = pneg %p45
      %p52 = scmp.eq.s32.totalorder %s24, 1
      %p53 = por %p51, %p52
      %p54 = scmp.ne.s32.totalorder %s46, %s49
      %p55 = scmp.eq.s32.totalorder %s24, 0
      %p56 = por %p54, %p55
      %p57 = scmp.ne.s32.totalorder %s46, %s49
      %p58 = scmp.eq.s32.totalorder %s29, 1
      %p59 = por %p57, %p58
      %p60 = scmp.ne.s32.totalorder %s49, %s50
      %p61 = scmp.eq.s32.totalorder %s29, 0
      %p62 = por %p60, %p61
      %p63 = scmp.ne.s32.totalorder %s49, %s50
      %p64 = scmp.eq.s32.totalorder %s30, 1
      %p65 = por %p63, %p64
      %p67 = scmp.ne.s32.totalorder %s50, %s66
      %p68 = scmp.eq.s32.totalorder %s30, 0
      %p69 = por %p67, %p68
      %s70 = ssub.s32 %s31, %s43
      %s71 = ssub.s32 %s32, %s39
      %s72 = sor.u32 %s70, %s71
      %p73 = scmp.eq.s32.totalorder %s72, 0
      %s75 = sadd.s32 %s74, 1
      %s76 = scalar_select %p73, %s74, %s75
      %p79 = pneg %p73
      %p80 = scmp.eq.s32.totalorder %s24, 1
      %p81 = por %p79, %p80
      %p82 = scmp.ne.s32.totalorder %s74, %s77
      %p83 = scmp.eq.s32.totalorder %s24, 0
      %p84 = por %p82, %p83
      %p85 = scmp.ne.s32.totalorder %s74, %s77
      %p86 = scmp.eq.s32.totalorder %s29, 1
      %p87 = por %p85, %p86
      %p88 = scmp.ne.s32.totalorder %s77, %s78
      %p89 = scmp.eq.s32.totalorder %s29, 0
      %p90 = por %p88, %p89
      %p91 = scmp.ne.s32.totalorder %s77, %s78
      %p92 = scmp.eq.s32.totalorder %s30, 1
      %p93 = por %p91, %p92
      %p95 = scmp.ne.s32.totalorder %s78, %s94
      %p96 = scmp.eq.s32.totalorder %s30, 0
      %p97 = por %p95, %p96
      %s99 = sadd.s32 %s98, 1
      %p102 = scmp.eq.s32.totalorder %s24, 1
      %p103 = scmp.ne.s32.totalorder %s98, %s100
      %p104 = scmp.eq.s32.totalorder %s24, 0
      %p105 = por %p103, %p104
      %p106 = scmp.ne.s32.totalorder %s98, %s100
      %p107 = scmp.eq.s32.totalorder %s29, 1
      %p108 = por %p106, %p107
      %p109 = scmp.ne.s32.totalorder %s100, %s101
      %p110 = scmp.eq.s32.totalorder %s29, 0
      %p111 = por %p109, %p110
      %p112 = scmp.ne.s32.totalorder %s100, %s101
      %p113 = scmp.eq.s32.totalorder %s30, 1
      %p114 = por %p112, %p113
      %p116 = scmp.ne.s32.totalorder %s101, %s115
      %p117 = scmp.eq.s32.totalorder %s30, 0
      %p118 = por %p116, %p117
      %s120 = sadd.s32 %s119, 1
      %p123 = scmp.eq.s32.totalorder %s24, 1
      %p124 = scmp.ne.s32.totalorder %s119, %s121
      %p125 = scmp.eq.s32.totalorder %s24, 0
      %p126 = por %p124, %p125
      %p127 = scmp.ne.s32.totalorder %s119, %s121
      %p128 = scmp.eq.s32.totalorder %s29, 1
      %p129 = por %p127, %p128
      %p130 = scmp.ne.s32.totalorder %s121, %s122
      %p131 = scmp.eq.s32.totalorder %s29, 0
      %p132 = por %p130, %p131
      %p133 = scmp.ne.s32.totalorder %s121, %s122
      %p134 = scmp.eq.s32.totalorder %s30, 1
      %p135 = por %p133, %p134
      %p137 = scmp.ne.s32.totalorder %s122, %s136
      %p138 = scmp.eq.s32.totalorder %s30, 0
      %p139 = por %p137, %p138
      %s141 = sadd.s32 %s140, 1
      %p144 = scmp.eq.s32.totalorder %s24, 1
      %p145 = scmp.ne.s32.totalorder %s140, %s142
      %p146 = scmp.eq.s32.totalorder %s24, 0
      %p147 = por %p145, %p146
      %p148 = scmp.ne.s32.totalorder %s140, %s142
      %p149 = scmp.eq.s32.totalorder %s29, 1
      %p150 = por %p148, %p149
      %p151 = scmp.ne.s32.totalorder %s142, %s143
      %p152 = scmp.eq.s32.totalorder %s29, 0
      %p153 = por %p151, %p152
      %p154 = scmp.ne.s32.totalorder %s142, %s143
      %p155 = scmp.eq.s32.totalorder %s30, 1
      %p156 = por %p154, %p155
      %p158 = scmp.ne.s32.totalorder %s143, %s157
      %p159 = scmp.eq.s32.totalorder %s30, 0
      %p160 = por %p158, %p159
      %s162 = sadd.s32 %s161, 1
      %p165 = scmp.eq.s32.totalorder %s24, 1
      %p166 = scmp.ne.s32.totalorder %s161, %s163
      %p167 = scmp.eq.s32.totalorder %s24, 0
      %p168 = por %p166, %p167
      %p169 = scmp.ne.s32.totalorder %s161, %s163
      %p170 = scmp.eq.s32.totalorder %s29, 1
      %p171 = por %p169, %p170
      %p172 = scmp.ne.s32.totalorder %s163, %s164
      %p173 = scmp.eq.s32.totalorder %s29, 0
      %p174 = por %p172, %p173
      %p175 = scmp.ne.s32.totalorder %s163, %s164
      %p176 = scmp.eq.s32.totalorder %s30, 1
      %p177 = por %p175, %p176
      %p179 = scmp.ne.s32.totalorder %s164, %s178
      %p180 = scmp.eq.s32.totalorder %s30, 0
      %p181 = por %p179, %p180
      %s183 = sadd.s32 %s182, 1
      %p186 = scmp.eq.s32.totalorder %s24, 1
      %p187 = scmp.ne.s32.totalorder %s182, %s184
      %p188 = scmp.eq.s32.totalorder %s24, 0
      %p189 = por %p187, %p188
      %p190 = scmp.ne.s32.totalorder %s182, %s184
      %p191 = scmp.eq.s32.totalorder %s29, 1
      %p192 = por %p190, %p191
      %p193 = scmp.ne.s32.totalorder %s184, %s185
      %p194 = scmp.eq.s32.totalorder %s29, 0
      %p195 = por %p193, %p194
      %p196 = scmp.ne.s32.totalorder %s184, %s185
      %p197 = scmp.eq.s32.totalorder %s30, 1
      %p198 = por %p196, %p197
      %p200 = scmp.ne.s32.totalorder %s185, %s199
      %p201 = scmp.eq.s32.totalorder %s30, 0
      %p202 = por %p200, %p201
      %s204 = sadd.s32 %s203, 1
      %p207 = scmp.eq.s32.totalorder %s24, 1
      %p208 = scmp.ne.s32.totalorder %s203, %s205
      %p209 = scmp.eq.s32.totalorder %s24, 0
      %p210 = por %p208, %p209
      %p211 = scmp.ne.s32.totalorder %s203, %s205
      %p212 = scmp.eq.s32.totalorder %s29, 1
      %p213 = por %p211, %p212
      %p214 = scmp.ne.s32.totalorder %s205, %s206
      %p215 = scmp.eq.s32.totalorder %s29, 0
      %p216 = por %p214, %p215
      %p217 = scmp.ne.s32.totalorder %s205, %s206
      %p218 = scmp.eq.s32.totalorder %s30, 1
      %p219 = por %p217, %p218
      %p221 = scmp.ne.s32.totalorder %s206, %s220
      %p222 = scmp.eq.s32.totalorder %s30, 0
      %p223 = por %p221, %p222
      %s224 = ssub.s32 %s31, %s43
      %s225 = ssub.s32 %s32, %s39
      %s226 = sor.u32 %s224, %s225
      %p227 = scmp.eq.s32.totalorder %s226, 0
      %s229 = sadd.s32 %s228, 1
      %s230 = scalar_select %p227, %s228, %s229
      %p233 = pneg %p227
      %p234 = scmp.eq.s32.totalorder %s24, 1
      %p235 = por %p233, %p234
      %p236 = scmp.ne.s32.totalorder %s228, %s231
      %p237 = scmp.eq.s32.totalorder %s24, 0
      %p238 = por %p236, %p237
      %p239 = scmp.ne.s32.totalorder %s228, %s231
      %p240 = scmp.eq.s32.totalorder %s29, 1
      %p241 = por %p239, %p240
      %p242 = scmp.ne.s32.totalorder %s231, %s232
      %p243 = scmp.eq.s32.totalorder %s29, 0
      %p244 = por %p242, %p243
      %p245 = scmp.ne.s32.totalorder %s231, %s232
      %p246 = scmp.eq.s32.totalorder %s30, 1
      %p247 = por %p245, %p246
      %p249 = scmp.ne.s32.totalorder %s232, %s248
      %p250 = scmp.eq.s32.totalorder %s30, 0
      %p251 = por %p249, %p250
      %p252 = scmp.le.s32.totalorder 1, %s24
      %p253 = scmp.lt.s32.totalorder %s24, 3
      %p254 = pnand %p252, %p253
      %p255 = pneg %p254
      // Predicated region
      $region9: #{tpu_custom_call.1} parent=5 // pred_check
        _
      $region10: #{tpu_custom_call.1} parent=5 // pred_check_branch
        %257 = sbr.rel (%p254) target = $region12
      $region11: #{tpu_custom_call.1} parent=5 // pred_region
        %s258 = ssub.s32 %s24, 1
        // Predicated region
        $region13: #{tpu_custom_call.1} parent=11 // pred_check
          %p259 = pneg %p111
        $region14: #{tpu_custom_call.1} parent=11 // pred_check_branch
          %261 = sbr.rel (%p259) target = $region16
        $region15: #{tpu_custom_call.1} parent=11 // pred_region
          _
        $region16: #{tpu_custom_call.1} parent=11 // pred_fallthru
          _
        // Predicated region
        $region17: #{tpu_custom_call.1} parent=11 // pred_check
          %p262 = pneg %p132
        $region18: #{tpu_custom_call.1} parent=11 // pred_check_branch
          %264 = sbr.rel (%p262) target = $region20
        $region19: #{tpu_custom_call.1} parent=11 // pred_region
          %s266 = ssub.s32 16, 16
          %267 = vsyncadd [#allocation9], %s266
          %s269 = sshll.u32 [#allocation10], 4
          %s270 = int_to_ptr.vmem [resolvable:$true] %s269
          %272 = dma.hbm_to_vmem [thread:$0]  %s3, 16, %s270, [#allocation9]
        $region20: #{tpu_custom_call.1} parent=11 // pred_fallthru
          _
        // Predicated region
        $region21: #{tpu_custom_call.1} parent=11 // pred_check
          %p273 = pneg %p153
        $region22: #{tpu_custom_call.1} parent=11 // pred_check_branch
          %275 = sbr.rel (%p273) target = $region24
        $region23: #{tpu_custom_call.1} parent=11 // pred_region
          _
        $region24: #{tpu_custom_call.1} parent=11 // pred_fallthru
          _
        // Predicated region
        $region25: #{tpu_custom_call.1} parent=11 // pred_check
          %p276 = pneg %p174
        $region26: #{tpu_custom_call.1} parent=11 // pred_check_branch
          %278 = sbr.rel (%p276) target = $region28
        $region27: #{tpu_custom_call.1} parent=11 // pred_region
          _
        $region28: #{tpu_custom_call.1} parent=11 // pred_fallthru
          _
        // Predicated region
        $region29: #{tpu_custom_call.1} parent=11 // pred_check
          %p279 = pneg %p195
        $region30: #{tpu_custom_call.1} parent=11 // pred_check_branch
          %281 = sbr.rel (%p279) target = $region32
        $region31: #{tpu_custom_call.1} parent=11 // pred_region
          _
        $region32: #{tpu_custom_call.1} parent=11 // pred_fallthru
          _
        // Predicated region
        $region33: #{tpu_custom_call.1} parent=11 // pred_check
          %p282 = pneg %p216
        $region34: #{tpu_custom_call.1} parent=11 // pred_check_branch
          %284 = sbr.rel (%p282) target = $region36
        $region35: #{tpu_custom_call.1} parent=11 // pred_region
          _
        $region36: #{tpu_custom_call.1} parent=11 // pred_fallthru
          _
      $region12: #{tpu_custom_call.1} parent=5 // pred_fallthru
        _
      %p285 = scmp.lt.s32.totalorder %s24, 2
      // Predicated region
      $region37: #{tpu_custom_call.1} parent=5 // pred_check
        %p286 = pneg %p285
      $region38: #{tpu_custom_call.1} parent=5 // pred_check_branch
        %288 = sbr.rel (%p286) target = $region40
      $region39: #{tpu_custom_call.1} parent=5 // pred_region
        // Predicated region
        $region41: #{tpu_custom_call.1} parent=39 // pred_check
          %p289 = pneg %p56
        $region42: #{tpu_custom_call.1} parent=39 // pred_check_branch
          %291 = sbr.rel (%p289) target = $region44
        $region43: #{tpu_custom_call.1} parent=39 // pred_region
          %s292 = sand.u32 %s46, 1
          %s293 = scalar_lea.sflag [#allocation6], %s292
          %s294 = sand.u32 %s46, 1
          %s295 = smul.addr %s294, 128
          %s296 = scalar_lea.vmem [#allocation5], %s295
          %s298 = ssub.s32 2048, 2048
          %299 = vsyncadd %s293, %s298
          %s300 = smul.addr %s31, 16
          %s301 = smul.addr %s300, 128
          %s302 = scalar_lea.hbm %s0, %s301
          %s303 = sshll.u32 %s296, 4
          %s304 = int_to_ptr.vmem [resolvable:$true] %s303
          %309 = dma.hbm_to_vmem [thread:$0]  %s302, 2048, %s304, %s293, 128, 128, 8
        $region44: #{tpu_custom_call.1} parent=39 // pred_fallthru
          _
        // Predicated region
        $region45: #{tpu_custom_call.1} parent=39 // pred_check
          %p310 = pneg %p84
        $region46: #{tpu_custom_call.1} parent=39 // pred_check_branch
          %312 = sbr.rel (%p310) target = $region48
        $region47: #{tpu_custom_call.1} parent=39 // pred_region
          %s313 = sand.u32 %s24, 1
          %s314 = scalar_lea.sflag [#allocation9], %s313
          %s315 = sand.u32 %s74, 1
          %s316 = smul.addr %s315, 128
          %s317 = scalar_lea.vmem [#allocation8], %s316
          %s318 = smul.u32 2, %s32
          %s320 = ssub.s32 2048, 2048
          %321 = vsyncadd %s314, %s320
          %s322 = smul.addr %s31, 16
          %s323 = sadd.s32 %s318, %s322
          %s324 = smul.addr %s323, 128
          %s325 = scalar_lea.hbm %s1, %s324
          %s326 = sshll.u32 %s317, 4
          %s327 = int_to_ptr.vmem [resolvable:$true] %s326
          %332 = dma.hbm_to_vmem [thread:$0]  %s325, 2048, %s327, %s314, 128, 128, 8
        $region48: #{tpu_custom_call.1} parent=39 // pred_fallthru
          _
      $region40: #{tpu_custom_call.1} parent=5 // pred_fallthru
        _
      %p333 = scmp.le.s32.totalorder 1, %s24
      %p334 = scmp.lt.s32.totalorder %s24, 3
      %p335 = pnand %p333, %p334
      %p336 = pneg %p335
      // Predicated region
      $region49: #{tpu_custom_call.1} parent=5 // pred_check
        _
      $region50: #{tpu_custom_call.1} parent=5 // pred_check_branch
        %338 = sbr.rel (%p335) target = $region52
      $region51: #{tpu_custom_call.1} parent=5 // pred_region
        %s339 = ssub.s32 %s24, 1
        %s340 = sand.u32 %s49, 1
        %s341 = scalar_lea.sflag [#allocation6], %s340
        %s342 = sand.u32 %s49, 1
        %s343 = smul.addr %s342, 128
        %s344 = scalar_lea.vmem [#allocation5], %s343
        // Predicated region
        $region53: #{tpu_custom_call.1} parent=51 // pred_check
          %p345 = pneg %p62
        $region54: #{tpu_custom_call.1} parent=51 // pred_check_branch
          %347 = sbr.rel (%p345) target = $region56
        $region55: #{tpu_custom_call.1} parent=51 // pred_region
          %348 = dma.done %s341, 2048
        $region56: #{tpu_custom_call.1} parent=51 // pred_fallthru
          _
        %s349 = sand.u32 %s29, 1
        %s350 = scalar_lea.sflag [#allocation9], %s349
        %s351 = sand.u32 %s77, 1
        %s352 = smul.addr %s351, 128
        %s353 = scalar_lea.vmem [#allocation8], %s352
        // Predicated region
        $region57: #{tpu_custom_call.1} parent=51 // pred_check
          %p354 = pneg %p90
        $region58: #{tpu_custom_call.1} parent=51 // pred_check_branch
          %356 = sbr.rel (%p354) target = $region60
        $region59: #{tpu_custom_call.1} parent=51 // pred_region
          %357 = dma.done %s350, 2048
        $region60: #{tpu_custom_call.1} parent=51 // pred_fallthru
          _
        // Predicated region
        $region61: #{tpu_custom_call.1} parent=51 // pred_check
          %p358 = pneg %p132
        $region62: #{tpu_custom_call.1} parent=51 // pred_check_branch
          %360 = sbr.rel (%p358) target = $region64
        $region63: #{tpu_custom_call.1} parent=51 // pred_region
          %361 = dma.done [#allocation9], 16
        $region64: #{tpu_custom_call.1} parent=51 // pred_fallthru
          _
        %s362 = sand.u32 %s49, 1
        %s363 = scalar_lea.sflag [#allocation6], %s362
        %s364 = sand.u32 %s49, 1
        %s365 = smul.addr %s364, 128
        %s366 = scalar_lea.vmem [#allocation5], %s365
        %p367 = pneg %p62
        %p368 = pneg %p59
        %s369 = sand.u32 %s29, 1
        %s370 = scalar_lea.sflag [#allocation9], %s369
        %s371 = sand.u32 %s77, 1
        %s372 = smul.addr %s371, 128
        %s373 = scalar_lea.vmem [#allocation8], %s372
        %p374 = pneg %p90
        %p375 = pneg %p87
        %p376 = pneg %p111
        %p377 = pneg %p108
        %p378 = pneg %p132
        %p379 = pneg %p129
        %p380 = pneg %p153
        %p381 = pneg %p150
        %p382 = pneg %p174
        %p383 = pneg %p171
        %p384 = pneg %p195
        %p385 = pneg %p192
        %p386 = pneg %p216
        %p387 = pneg %p213
        %p388 = pneg %p244
        %p389 = pneg %p241
        %s390 = sand.u32 %s231, 1
        %s391 = scalar_lea.sflag [#allocation7], %s390
        %s392 = sand.u32 %s231, 1
        %s393 = smul.addr %s392, 128
        %s394 = scalar_lea.vmem [#allocation11], %s393
        %s395 = smul.u32 2, %s34
        %s396 = smul.u32 2, %s34
        %p398 = scmp.eq.s32.totalorder %s34, 0
        // Predicated region
        $region65: #{tpu_custom_call.1} parent=51 // pred_check
          %p399 = pneg %p398
        $region66: #{tpu_custom_call.1} parent=51 // pred_check_branch
          %401 = sbr.rel (%p399) target = $region68
        $region67: #{tpu_custom_call.1} parent=51 // pred_region
          %v402 = vld [vmem:[%s344] sm:$0xff]
          %v403 = vld [vmem:[%s344 + $0x8] sm:$0xff]
          %v404 = vld [vmem:[%s344 + $0x10] sm:$0xff]
          %v405 = vld [vmem:[%s344 + $0x18] sm:$0xff]
          %v406 = vld [vmem:[%s344 + $0x20] sm:$0xff]
          %v407 = vld [vmem:[%s344 + $0x28] sm:$0xff]
          %v408 = vld [vmem:[%s344 + $0x30] sm:$0xff]
          %v409 = vld [vmem:[%s344 + $0x38] sm:$0xff]
          %v410 = vld [vmem:[%s344 + $0x40] sm:$0xff]
          %v411 = vld [vmem:[%s344 + $0x48] sm:$0xff]
          %v412 = vld [vmem:[%s344 + $0x50] sm:$0xff]
          %v413 = vld [vmem:[%s344 + $0x58] sm:$0xff]
          %v414 = vld [vmem:[%s344 + $0x60] sm:$0xff]
          %v415 = vld [vmem:[%s344 + $0x68] sm:$0xff]
          %v416 = vld [vmem:[%s344 + $0x70] sm:$0xff]
          %v417 = vld [vmem:[%s344 + $0x78] sm:$0xff]
          %v418 = vpack.c.bf16 %v403, %v402
          %v419 = vpack.c.bf16 %v405, %v404
          %v420 = vpack.c.bf16 %v407, %v406
          %v421 = vpack.c.bf16 %v409, %v408
          %v422 = vpack.c.bf16 %v411, %v410
          %v423 = vpack.c.bf16 %v413, %v412
          %v424 = vpack.c.bf16 %v415, %v414
          %v425 = vpack.c.bf16 %v417, %v416
          %v426 = vld [vmem:[%s4] sm:$0xf]
          %v427 = vld [vmem:[%s4 + $0x4] sm:$0xf]
          %v428 = vld [vmem:[%s5] sm:$0x1]
          %v430 = vlaneseq
          %v431 = vshrl.u32 %v430, 7
          %v432 = vsub.s32 0, %v431
          %v433 = vrot.slane %v428, %v432
          %v437 = vunpack.c.l.b16 %v426
          %v438 = vunpack.c.l.b16 %v427
          %v439 = vpack.c.b16 %v438, %v437
          %vm441 = vcmask 130048
          %v443 = vsel %vm441, %v418, 0
          %v446 = vsel %vm441, %v419, 0
          %v449 = vsel %vm441, %v420, 0
          %v452 = vsel %vm441, %v421, 0
          %v455 = vsel %vm441, %v422, 0
          %v458 = vsel %vm441, %v423, 0
          %v461 = vsel %vm441, %v424, 0
          %v464 = vsel %vm441, %v425, 0
          %466 = vmatprep.subr.bf16.mxu0 0
          %467 = vmatpush1.bf16.msra.mxu0 0
          %468 = vmatprep.subr.bf16.mxu0 0
          %469 = vmatpush1.bf16.msra.mxu0 0
          %470 = vmatprep.subr.bf16.mxu0 0
          %471 = vmatpush1.bf16.msra.mxu0 0
          %472 = vmatprep.subr.bf16.mxu0 0
          %473 = vmatpush1.bf16.msra.mxu0 0
          %474 = vmatprep.subr.bf16.mxu0 0
          %475 = vmatpush1.bf16.msra.mxu0 0
          %476 = vmatprep.subr.bf16.mxu0 0
          %477 = vmatpush1.bf16.msra.mxu0 0
          %478 = vmatprep.subr.bf16.mxu0 0
          %479 = vmatpush1.bf16.msra.mxu0 0
          %480 = vmatprep.subr.bf16.mxu0 0
          %481 = vmatpush1.bf16.msra.mxu0 %v439
          %482 = vmatprep.subr.bf16.mxu0 0
          %483 = vmatpush2.bf16.msra.mxu0 0
          %484 = vmatprep.subr.bf16.mxu0 0
          %485 = vmatpush2.bf16.msra.mxu0 0
          %486 = vmatprep.subr.bf16.mxu0 0
          %487 = vmatpush2.bf16.msra.mxu0 0
          %488 = vmatprep.subr.bf16.mxu0 0
          %489 = vmatpush2.bf16.msra.mxu0 0
          %490 = vmatprep.subr.bf16.mxu0 0
          %491 = vmatpush2.bf16.msra.mxu0 0
          %492 = vmatprep.subr.bf16.mxu0 0
          %493 = vmatpush2.bf16.msra.mxu0 0
          %494 = vmatprep.subr.bf16.mxu0 0
          %495 = vmatpush2.bf16.msra.mxu0 0
          %496 = vmatprep.subr.bf16.mxu0 0
          %497 = vmatpush2.bf16.msra.mxu0 0
          %498 = vmatprep.mubr.bf16.mxu0 0
          %499 = vmatmul.mubr.bf16.gmra.mxu0 %v443
          %v500 = vpop.f32.mrf.mxu0
          %v501 = vadd.f32 %v433, %v500
          %v502 = vpop.f32.mrf.mxu0
          %v503 = vpop.f32.mrf.mxu0
          %v504 = vadd.f32 %v433, %v503
          %v505 = vpop.f32.mrf.mxu0
          %506 = vmatprep.mubr.bf16.mxu0 0
          %507 = vmatmul.mubr.bf16.gmra.mxu0 %v446
          %v508 = vpop.f32.mrf.mxu0
          %v509 = vadd.f32 %v433, %v508
          %v510 = vpop.f32.mrf.mxu0
          %v511 = vpop.f32.mrf.mxu0
          %v512 = vadd.f32 %v433, %v511
          %v513 = vpop.f32.mrf.mxu0
          %514 = vmatprep.mubr.bf16.mxu0 0
          %515 = vmatmul.mubr.bf16.gmra.mxu0 %v449
          %v516 = vpop.f32.mrf.mxu0
          %v517 = vadd.f32 %v433, %v516
          %v518 = vpop.f32.mrf.mxu0
          %v519 = vpop.f32.mrf.mxu0
          %v520 = vadd.f32 %v433, %v519
          %v521 = vpop.f32.mrf.mxu0
          %522 = vmatprep.mubr.bf16.mxu0 0
          %523 = vmatmul.mubr.bf16.gmra.mxu0 %v452
          %v524 = vpop.f32.mrf.mxu0
          %v525 = vadd.f32 %v433, %v524
          %v526 = vpop.f32.mrf.mxu0
          %v527 = vpop.f32.mrf.mxu0
          %v528 = vadd.f32 %v433, %v527
          %v529 = vpop.f32.mrf.mxu0
          %530 = vmatprep.mubr.bf16.mxu0 0
          %531 = vmatmul.mubr.bf16.gmra.mxu0 %v455
          %v532 = vpop.f32.mrf.mxu0
          %v533 = vadd.f32 %v433, %v532
          %v534 = vpop.f32.mrf.mxu0
          %v535 = vpop.f32.mrf.mxu0
          %v536 = vadd.f32 %v433, %v535
          %v537 = vpop.f32.mrf.mxu0
          %538 = vmatprep.mubr.bf16.mxu0 0
          %539 = vmatmul.mubr.bf16.gmra.mxu0 %v458
          %v540 = vpop.f32.mrf.mxu0
          %v541 = vadd.f32 %v433, %v540
          %v542 = vpop.f32.mrf.mxu0
          %v543 = vpop.f32.mrf.mxu0
          %v544 = vadd.f32 %v433, %v543
          %v545 = vpop.f32.mrf.mxu0
          %546 = vmatprep.mubr.bf16.mxu0 0
          %547 = vmatmul.mubr.bf16.gmra.mxu0 %v461
          %v548 = vpop.f32.mrf.mxu0
          %v549 = vadd.f32 %v433, %v548
          %v550 = vpop.f32.mrf.mxu0
          %v551 = vpop.f32.mrf.mxu0
          %v552 = vadd.f32 %v433, %v551
          %v553 = vpop.f32.mrf.mxu0
          %554 = vmatprep.mubr.bf16.mxu0 0
          %555 = vmatmul.mubr.bf16.gmra.mxu0 %v464
          %v556 = vpop.f32.mrf.mxu0
          %v557 = vadd.f32 %v433, %v556
          %v558 = vpop.f32.mrf.mxu0
          %v559 = vpop.f32.mrf.mxu0
          %v560 = vadd.f32 %v433, %v559
          %v561 = vpop.f32.mrf.mxu0
          %562 = vdwg.mxu0
          %v563 = vpack.c.bf16 %v504, %v501
          %v564 = vpack.c.bf16 %v512, %v509
          %v565 = vpack.c.bf16 %v520, %v517
          %v566 = vpack.c.bf16 %v528, %v525
          %v567 = vpack.c.bf16 %v536, %v533
          %v568 = vpack.c.bf16 %v544, %v541
          %v569 = vpack.c.bf16 %v552, %v549
          %v570 = vpack.c.bf16 %v560, %v557
          %v579 = vunpack.c.l.b16 %v563
          %v580 = vunpack.c.h.b16 %v563
          %v581 = vunpack.c.l.b16 %v564
          %v582 = vunpack.c.h.b16 %v564
          %v583 = vunpack.c.l.b16 %v565
          %v584 = vunpack.c.h.b16 %v565
          %v585 = vunpack.c.l.b16 %v566
          %v586 = vunpack.c.h.b16 %v566
          %v587 = vunpack.c.l.b16 %v567
          %v588 = vunpack.c.h.b16 %v567
          %v589 = vunpack.c.l.b16 %v568
          %v590 = vunpack.c.h.b16 %v568
          %v591 = vunpack.c.l.b16 %v569
          %v592 = vunpack.c.h.b16 %v569
          %v593 = vunpack.c.l.b16 %v570
          %v594 = vunpack.c.h.b16 %v570
          %v595 = vpack.c.b16 %v579, %v579
          %v596 = vpack.c.b16 %v580, %v580
          %v597 = vpack.c.b16 %v581, %v581
          %v598 = vpack.c.b16 %v582, %v582
          %v599 = vpack.c.b16 %v583, %v583
          %v600 = vpack.c.b16 %v584, %v584
          %v601 = vpack.c.b16 %v585, %v585
          %v602 = vpack.c.b16 %v586, %v586
          %v603 = vpack.c.b16 %v587, %v587
          %v604 = vpack.c.b16 %v588, %v588
          %v605 = vpack.c.b16 %v589, %v589
          %v606 = vpack.c.b16 %v590, %v590
          %v607 = vpack.c.b16 %v591, %v591
          %v608 = vpack.c.b16 %v592, %v592
          %v609 = vpack.c.b16 %v593, %v593
          %v610 = vpack.c.b16 %v594, %v594
          %vm627 = vcmask 125952
          %628 = vst.msk [vmem:[#allocation3] sm:$0xf] %vm627, %v595
          %629 = vst.msk [vmem:[#allocation3 + $0x4] sm:$0xf] %vm627, %v596
          %630 = vst.msk [vmem:[#allocation3 + $0x8] sm:$0xf] %vm627, %v597
          %631 = vst.msk [vmem:[#allocation3 + $0xc] sm:$0xf] %vm627, %v598
          %632 = vst.msk [vmem:[#allocation3 + $0x10] sm:$0xf] %vm627, %v599
          %633 = vst.msk [vmem:[#allocation3 + $0x14] sm:$0xf] %vm627, %v600
          %634 = vst.msk [vmem:[#allocation3 + $0x18] sm:$0xf] %vm627, %v601
          %635 = vst.msk [vmem:[#allocation3 + $0x1c] sm:$0xf] %vm627, %v602
          %636 = vst.msk [vmem:[#allocation3 + $0x20] sm:$0xf] %vm627, %v603
          %637 = vst.msk [vmem:[#allocation3 + $0x24] sm:$0xf] %vm627, %v604
          %638 = vst.msk [vmem:[#allocation3 + $0x28] sm:$0xf] %vm627, %v605
          %639 = vst.msk [vmem:[#allocation3 + $0x2c] sm:$0xf] %vm627, %v606
          %640 = vst.msk [vmem:[#allocation3 + $0x30] sm:$0xf] %vm627, %v607
          %641 = vst.msk [vmem:[#allocation3 + $0x34] sm:$0xf] %vm627, %v608
          %642 = vst.msk [vmem:[#allocation3 + $0x38] sm:$0xf] %vm627, %v609
          %643 = vst.msk [vmem:[#allocation3 + $0x3c] sm:$0xf] %vm627, %v610
          %644 = vrot.lane.b32.xlu0 %v595, 112
          %v645 = vpop.permute.xlu0 %644
          %646 = vrot.lane.b32.xlu0 %v596, 112
          %v647 = vpop.permute.xlu0 %646
          %648 = vrot.lane.b32.xlu0 %v597, 112
          %v649 = vpop.permute.xlu0 %648
          %650 = vrot.lane.b32.xlu0 %v598, 112
          %v651 = vpop.permute.xlu0 %650
          %652 = vrot.lane.b32.xlu0 %v599, 112
          %v653 = vpop.permute.xlu0 %652
          %654 = vrot.lane.b32.xlu0 %v600, 112
          %v655 = vpop.permute.xlu0 %654
          %656 = vrot.lane.b32.xlu0 %v601, 112
          %v657 = vpop.permute.xlu0 %656
          %658 = vrot.lane.b32.xlu0 %v602, 112
          %v659 = vpop.permute.xlu0 %658
          %660 = vrot.lane.b32.xlu0 %v603, 112
          %v661 = vpop.permute.xlu0 %660
          %662 = vrot.lane.b32.xlu0 %v604, 112
          %v663 = vpop.permute.xlu0 %662
          %664 = vrot.lane.b32.xlu0 %v605, 112
          %v665 = vpop.permute.xlu0 %664
          %666 = vrot.lane.b32.xlu0 %v606, 112
          %v667 = vpop.permute.xlu0 %666
          %668 = vrot.lane.b32.xlu0 %v607, 112
          %v669 = vpop.permute.xlu0 %668
          %670 = vrot.lane.b32.xlu0 %v608, 112
          %v671 = vpop.permute.xlu0 %670
          %672 = vrot.lane.b32.xlu0 %v609, 112
          %v673 = vpop.permute.xlu0 %672
          %674 = vrot.lane.b32.xlu0 %v610, 112
          %v675 = vpop.permute.xlu0 %674
          %vm692 = vcmask 11264
          %693 = vst.msk [vmem:[#allocation2] sm:$0xf] %vm692, %v645
          %694 = vst.msk [vmem:[#allocation2 + $0x4] sm:$0xf] %vm692, %v647
          %695 = vst.msk [vmem:[#allocation2 + $0x8] sm:$0xf] %vm692, %v649
          %696 = vst.msk [vmem:[#allocation2 + $0xc] sm:$0xf] %vm692, %v651
          %697 = vst.msk [vmem:[#allocation2 + $0x10] sm:$0xf] %vm692, %v653
          %698 = vst.msk [vmem:[#allocation2 + $0x14] sm:$0xf] %vm692, %v655
          %699 = vst.msk [vmem:[#allocation2 + $0x18] sm:$0xf] %vm692, %v657
          %700 = vst.msk [vmem:[#allocation2 + $0x1c] sm:$0xf] %vm692, %v659
          %701 = vst.msk [vmem:[#allocation2 + $0x20] sm:$0xf] %vm692, %v661
          %702 = vst.msk [vmem:[#allocation2 + $0x24] sm:$0xf] %vm692, %v663
          %703 = vst.msk [vmem:[#allocation2 + $0x28] sm:$0xf] %vm692, %v665
          %704 = vst.msk [vmem:[#allocation2 + $0x2c] sm:$0xf] %vm692, %v667
          %705 = vst.msk [vmem:[#allocation2 + $0x30] sm:$0xf] %vm692, %v669
          %706 = vst.msk [vmem:[#allocation2 + $0x34] sm:$0xf] %vm692, %v671
          %707 = vst.msk [vmem:[#allocation2 + $0x38] sm:$0xf] %vm692, %v673
          %708 = vst.msk [vmem:[#allocation2 + $0x3c] sm:$0xf] %vm692, %v675
        $region68: #{tpu_custom_call.1} parent=51 // pred_fallthru
          _
        %v709 = vld [vmem:[%s353] sm:$0xff]
        %v710 = vld [vmem:[%s353 + $0x8] sm:$0xff]
        %v711 = vld [vmem:[%s353 + $0x10] sm:$0xff]
        %v712 = vld [vmem:[%s353 + $0x18] sm:$0xff]
        %v713 = vld [vmem:[%s353 + $0x20] sm:$0xff]
        %v714 = vld [vmem:[%s353 + $0x28] sm:$0xff]
        %v715 = vld [vmem:[%s353 + $0x30] sm:$0xff]
        %v716 = vld [vmem:[%s353 + $0x38] sm:$0xff]
        %v717 = vld [vmem:[%s353 + $0x40] sm:$0xff]
        %v718 = vld [vmem:[%s353 + $0x48] sm:$0xff]
        %v719 = vld [vmem:[%s353 + $0x50] sm:$0xff]
        %v720 = vld [vmem:[%s353 + $0x58] sm:$0xff]
        %v721 = vld [vmem:[%s353 + $0x60] sm:$0xff]
        %v722 = vld [vmem:[%s353 + $0x68] sm:$0xff]
        %v723 = vld [vmem:[%s353 + $0x70] sm:$0xff]
        %v724 = vld [vmem:[%s353 + $0x78] sm:$0xff]
        %v725 = vpack.c.bf16 %v710, %v709
        %v726 = vpack.c.bf16 %v712, %v711
        %v727 = vpack.c.bf16 %v714, %v713
        %v728 = vpack.c.bf16 %v716, %v715
        %v729 = vpack.c.bf16 %v718, %v717
        %v730 = vpack.c.bf16 %v720, %v719
        %v731 = vpack.c.bf16 %v722, %v721
        %v732 = vpack.c.bf16 %v724, %v723
        %v733 = vld [vmem:[%s2] sm:$0xf]
        %v734 = vld [vmem:[%s2 + $0x4] sm:$0xf]
        %v735 = vld [vmem:[#allocation10] sm:$0x1]
        %v737 = vlaneseq
        %v738 = vshrl.u32 %v737, 7
        %v739 = vsub.s32 0, %v738
        %v740 = vrot.slane %v735, %v739
        %v744 = vunpack.c.l.b16 %v733
        %v745 = vunpack.c.l.b16 %v734
        %v746 = vpack.c.b16 %v745, %v744
        %vm748 = vcmask 130048
        %v750 = vsel %vm748, %v725, 0
        %v753 = vsel %vm748, %v726, 0
        %v756 = vsel %vm748, %v727, 0
        %v759 = vsel %vm748, %v728, 0
        %v762 = vsel %vm748, %v729, 0
        %v765 = vsel %vm748, %v730, 0
        %v768 = vsel %vm748, %v731, 0
        %v771 = vsel %vm748, %v732, 0
        %773 = vmatprep.subr.bf16.mxu0 0
        %774 = vmatpush1.bf16.msra.mxu0 0
        %775 = vmatprep.subr.bf16.mxu0 0
        %776 = vmatpush1.bf16.msra.mxu0 0
        %777 = vmatprep.subr.bf16.mxu0 0
        %778 = vmatpush1.bf16.msra.mxu0 0
        %779 = vmatprep.subr.bf16.mxu0 0
        %780 = vmatpush1.bf16.msra.mxu0 0
        %781 = vmatprep.subr.bf16.mxu0 0
        %782 = vmatpush1.bf16.msra.mxu0 0
        %783 = vmatprep.subr.bf16.mxu0 0
        %784 = vmatpush1.bf16.msra.mxu0 0
        %785 = vmatprep.subr.bf16.mxu0 0
        %786 = vmatpush1.bf16.msra.mxu0 0
        %787 = vmatprep.subr.bf16.mxu0 0
        %788 = vmatpush1.bf16.msra.mxu0 %v746
        %789 = vmatprep.subr.bf16.mxu0 0
        %790 = vmatpush2.bf16.msra.mxu0 0
        %791 = vmatprep.subr.bf16.mxu0 0
        %792 = vmatpush2.bf16.msra.mxu0 0
        %793 = vmatprep.subr.bf16.mxu0 0
        %794 = vmatpush2.bf16.msra.mxu0 0
        %795 = vmatprep.subr.bf16.mxu0 0
        %796 = vmatpush2.bf16.msra.mxu0 0
        %797 = vmatprep.subr.bf16.mxu0 0
        %798 = vmatpush2.bf16.msra.mxu0 0
        %799 = vmatprep.subr.bf16.mxu0 0
        %800 = vmatpush2.bf16.msra.mxu0 0
        %801 = vmatprep.subr.bf16.mxu0 0
        %802 = vmatpush2.bf16.msra.mxu0 0
        %803 = vmatprep.subr.bf16.mxu0 0
        %804 = vmatpush2.bf16.msra.mxu0 0
        %805 = vmatprep.mubr.bf16.mxu0 0
        %806 = vmatmul.mubr.bf16.gmra.mxu0 %v750
        %v807 = vpop.f32.mrf.mxu0
        %v808 = vadd.f32 %v740, %v807
        %v809 = vpop.f32.mrf.mxu0
        %v810 = vpop.f32.mrf.mxu0
        %v811 = vadd.f32 %v740, %v810
        %v812 = vpop.f32.mrf.mxu0
        %813 = vmatprep.mubr.bf16.mxu0 0
        %814 = vmatmul.mubr.bf16.gmra.mxu0 %v753
        %v815 = vpop.f32.mrf.mxu0
        %v816 = vadd.f32 %v740, %v815
        %v817 = vpop.f32.mrf.mxu0
        %v818 = vpop.f32.mrf.mxu0
        %v819 = vadd.f32 %v740, %v818
        %v820 = vpop.f32.mrf.mxu0
        %821 = vmatprep.mubr.bf16.mxu0 0
        %822 = vmatmul.mubr.bf16.gmra.mxu0 %v756
        %v823 = vpop.f32.mrf.mxu0
        %v824 = vadd.f32 %v740, %v823
        %v825 = vpop.f32.mrf.mxu0
        %v826 = vpop.f32.mrf.mxu0
        %v827 = vadd.f32 %v740, %v826
        %v828 = vpop.f32.mrf.mxu0
        %829 = vmatprep.mubr.bf16.mxu0 0
        %830 = vmatmul.mubr.bf16.gmra.mxu0 %v759
        %v831 = vpop.f32.mrf.mxu0
        %v832 = vadd.f32 %v740, %v831
        %v833 = vpop.f32.mrf.mxu0
        %v834 = vpop.f32.mrf.mxu0
        %v835 = vadd.f32 %v740, %v834
        %v836 = vpop.f32.mrf.mxu0
        %837 = vmatprep.mubr.bf16.mxu0 0
        %838 = vmatmul.mubr.bf16.gmra.mxu0 %v762
        %v839 = vpop.f32.mrf.mxu0
        %v840 = vadd.f32 %v740, %v839
        %v841 = vpop.f32.mrf.mxu0
        %v842 = vpop.f32.mrf.mxu0
        %v843 = vadd.f32 %v740, %v842
        %v844 = vpop.f32.mrf.mxu0
        %845 = vmatprep.mubr.bf16.mxu0 0
        %846 = vmatmul.mubr.bf16.gmra.mxu0 %v765
        %v847 = vpop.f32.mrf.mxu0
        %v848 = vadd.f32 %v740, %v847
        %v849 = vpop.f32.mrf.mxu0
        %v850 = vpop.f32.mrf.mxu0
        %v851 = vadd.f32 %v740, %v850
        %v852 = vpop.f32.mrf.mxu0
        %853 = vmatprep.mubr.bf16.mxu0 0
        %854 = vmatmul.mubr.bf16.gmra.mxu0 %v768
        %v855 = vpop.f32.mrf.mxu0
        %v856 = vadd.f32 %v740, %v855
        %v857 = vpop.f32.mrf.mxu0
        %v858 = vpop.f32.mrf.mxu0
        %v859 = vadd.f32 %v740, %v858
        %v860 = vpop.f32.mrf.mxu0
        %861 = vmatprep.mubr.bf16.mxu0 0
        %862 = vmatmul.mubr.bf16.gmra.mxu0 %v771
        %v863 = vpop.f32.mrf.mxu0
        %v864 = vadd.f32 %v740, %v863
        %v865 = vpop.f32.mrf.mxu0
        %v866 = vpop.f32.mrf.mxu0
        %v867 = vadd.f32 %v740, %v866
        %v868 = vpop.f32.mrf.mxu0
        %869 = vdwg.mxu0
        %v870 = vpack.c.bf16 %v811, %v808
        %v871 = vpack.c.bf16 %v819, %v816
        %v872 = vpack.c.bf16 %v827, %v824
        %v873 = vpack.c.bf16 %v835, %v832
        %v874 = vpack.c.bf16 %v843, %v840
        %v875 = vpack.c.bf16 %v851, %v848
        %v876 = vpack.c.bf16 %v859, %v856
        %v877 = vpack.c.bf16 %v867, %v864
        %v878 = vcombine.low %v808, %v824
        %v879 = vcombine.high %v808, %v824
        %v881 = vunpack.c.l.s4 1983009808
        %v882 = vunpack.c.0.s8 %v881
        %v883 = vlaneseq
        %v884 = vshrl.u32 %v883, 7
        %v885 = vsub.s32 %v882, %v884
        %v886 = vrot.slane %v878, %v885
        %v888 = vunpack.c.l.s4 1983009808
        %v889 = vunpack.c.0.s8 %v888
        %v890 = vlaneseq
        %v891 = vshrl.u32 %v890, 7
        %v892 = vsub.s32 %v889, %v891
        %v893 = vrot.slane %v879, %v892
        %v894 = vcombine.low %v816, %v832
        %v895 = vcombine.high %v816, %v832
        %v897 = vunpack.c.l.s4 1983009808
        %v898 = vunpack.c.0.s8 %v897
        %v899 = vlaneseq
        %v900 = vshrl.u32 %v899, 7
        %v901 = vsub.s32 %v898, %v900
        %v902 = vrot.slane %v894, %v901
        %v904 = vunpack.c.l.s4 1983009808
        %v905 = vunpack.c.0.s8 %v904
        %v906 = vlaneseq
        %v907 = vshrl.u32 %v906, 7
        %v908 = vsub.s32 %v905, %v907
        %v909 = vrot.slane %v895, %v908
        %v910 = vcombine.low %v840, %v856
        %v911 = vcombine.high %v840, %v856
        %v913 = vunpack.c.l.s4 1983009808
        %v914 = vunpack.c.0.s8 %v913
        %v915 = vlaneseq
        %v916 = vshrl.u32 %v915, 7
        %v917 = vsub.s32 %v914, %v916
        %v918 = vrot.slane %v910, %v917
        %v920 = vunpack.c.l.s4 1983009808
        %v921 = vunpack.c.0.s8 %v920
        %v922 = vlaneseq
        %v923 = vshrl.u32 %v922, 7
        %v924 = vsub.s32 %v921, %v923
        %v925 = vrot.slane %v911, %v924
        %v926 = vcombine.low %v848, %v864
        %v927 = vcombine.high %v848, %v864
        %v929 = vunpack.c.l.s4 1983009808
        %v930 = vunpack.c.0.s8 %v929
        %v931 = vlaneseq
        %v932 = vshrl.u32 %v931, 7
        %v933 = vsub.s32 %v930, %v932
        %v934 = vrot.slane %v926, %v933
        %v936 = vunpack.c.l.s4 1983009808
        %v937 = vunpack.c.0.s8 %v936
        %v938 = vlaneseq
        %v939 = vshrl.u32 %v938, 7
        %v940 = vsub.s32 %v937, %v939
        %v941 = vrot.slane %v927, %v940
        %v942 = vcombine.low %v886, %v902
        %v943 = vcombine.high %v886, %v902
        %v945 = vunpack.c.l.s4 1934713408
        %v946 = vunpack.c.0.s8 %v945
        %v947 = vlaneseq
        %v948 = vshrl.u32 %v947, 7
        %v949 = vsub.s32 %v946, %v948
        %v950 = vrot.slane %v942, %v949
        %v952 = vunpack.c.l.s4 1934713408
        %v953 = vunpack.c.0.s8 %v952
        %v954 = vlaneseq
        %v955 = vshrl.u32 %v954, 7
        %v956 = vsub.s32 %v953, %v955
        %v957 = vrot.slane %v943, %v956
        %v958 = vcombine.low %v893, %v909
        %v959 = vcombine.high %v893, %v909
        %v961 = vunpack.c.l.s4 1934713408
        %v962 = vunpack.c.0.s8 %v961
        %v963 = vlaneseq
        %v964 = vshrl.u32 %v963, 7
        %v965 = vsub.s32 %v962, %v964
        %v966 = vrot.slane %v958, %v965
        %v968 = vunpack.c.l.s4 1934713408
        %v969 = vunpack.c.0.s8 %v968
        %v970 = vlaneseq
        %v971 = vshrl.u32 %v970, 7
        %v972 = vsub.s32 %v969, %v971
        %v973 = vrot.slane %v959, %v972
        %v974 = vcombine.low %v918, %v934
        %v975 = vcombine.high %v918, %v934
        %v977 = vunpack.c.l.s4 1934713408
        %v978 = vunpack.c.0.s8 %v977
        %v979 = vlaneseq
        %v980 = vshrl.u32 %v979, 7
        %v981 = vsub.s32 %v978, %v980
        %v982 = vrot.slane %v974, %v981
        %v984 = vunpack.c.l.s4 1934713408
        %v985 = vunpack.c.0.s8 %v984
        %v986 = vlaneseq
        %v987 = vshrl.u32 %v986, 7
        %v988 = vsub.s32 %v985, %v987
        %v989 = vrot.slane %v975, %v988
        %v990 = vcombine.low %v925, %v941
        %v991 = vcombine.high %v925, %v941
        %v993 = vunpack.c.l.s4 1934713408
        %v994 = vunpack.c.0.s8 %v993
        %v995 = vlaneseq
        %v996 = vshrl.u32 %v995, 7
        %v997 = vsub.s32 %v994, %v996
        %v998 = vrot.slane %v990, %v997
        %v1000 = vunpack.c.l.s4 1934713408
        %v1001 = vunpack.c.0.s8 %v1000
        %v1002 = vlaneseq
        %v1003 = vshrl.u32 %v1002, 7
        %v1004 = vsub.s32 %v1001, %v1003
        %v1005 = vrot.slane %v991, %v1004
        %v1006 = vcombine.low %v950, %v982
        %v1007 = vcombine.high %v950, %v982
        %v1008 = vcombine.low %v957, %v989
        %v1009 = vcombine.high %v957, %v989
        %v1010 = vcombine.low %v966, %v998
        %v1011 = vcombine.high %v966, %v998
        %v1012 = vcombine.low %v973, %v1005
        %v1013 = vcombine.high %v973, %v1005
        %v1014 = vcombine.low %v811, %v827
        %v1015 = vcombine.high %v811, %v827
        %v1017 = vunpack.c.l.s4 1983009808
        %v1018 = vunpack.c.0.s8 %v1017
        %v1019 = vlaneseq
        %v1020 = vshrl.u32 %v1019, 7
        %v1021 = vsub.s32 %v1018, %v1020
        %v1022 = vrot.slane %v1014, %v1021
        %v1024 = vunpack.c.l.s4 1983009808
        %v1025 = vunpack.c.0.s8 %v1024
        %v1026 = vlaneseq
        %v1027 = vshrl.u32 %v1026, 7
        %v1028 = vsub.s32 %v1025, %v1027
        %v1029 = vrot.slane %v1015, %v1028
        %v1030 = vcombine.low %v819, %v835
        %v1031 = vcombine.high %v819, %v835
        %v1033 = vunpack.c.l.s4 1983009808
        %v1034 = vunpack.c.0.s8 %v1033
        %v1035 = vlaneseq
        %v1036 = vshrl.u32 %v1035, 7
        %v1037 = vsub.s32 %v1034, %v1036
        %v1038 = vrot.slane %v1030, %v1037
        %v1040 = vunpack.c.l.s4 1983009808
        %v1041 = vunpack.c.0.s8 %v1040
        %v1042 = vlaneseq
        %v1043 = vshrl.u32 %v1042, 7
        %v1044 = vsub.s32 %v1041, %v1043
        %v1045 = vrot.slane %v1031, %v1044
        %v1046 = vcombine.low %v843, %v859
        %v1047 = vcombine.high %v843, %v859
        %v1049 = vunpack.c.l.s4 1983009808
        %v1050 = vunpack.c.0.s8 %v1049
        %v1051 = vlaneseq
        %v1052 = vshrl.u32 %v1051, 7
        %v1053 = vsub.s32 %v1050, %v1052
        %v1054 = vrot.slane %v1046, %v1053
        %v1056 = vunpack.c.l.s4 1983009808
        %v1057 = vunpack.c.0.s8 %v1056
        %v1058 = vlaneseq
        %v1059 = vshrl.u32 %v1058, 7
        %v1060 = vsub.s32 %v1057, %v1059
        %v1061 = vrot.slane %v1047, %v1060
        %v1062 = vcombine.low %v851, %v867
        %v1063 = vcombine.high %v851, %v867
        %v1065 = vunpack.c.l.s4 1983009808
        %v1066 = vunpack.c.0.s8 %v1065
        %v1067 = vlaneseq
        %v1068 = vshrl.u32 %v1067, 7
        %v1069 = vsub.s32 %v1066, %v1068
        %v1070 = vrot.slane %v1062, %v1069
        %v1072 = vunpack.c.l.s4 1983009808
        %v1073 = vunpack.c.0.s8 %v1072
        %v1074 = vlaneseq
        %v1075 = vshrl.u32 %v1074, 7
        %v1076 = vsub.s32 %v1073, %v1075
        %v1077 = vrot.slane %v1063, %v1076
        %v1078 = vcombine.low %v1022, %v1038
        %v1079 = vcombine.high %v1022, %v1038
        %v1081 = vunpack.c.l.s4 1934713408
        %v1082 = vunpack.c.0.s8 %v1081
        %v1083 = vlaneseq
        %v1084 = vshrl.u32 %v1083, 7
        %v1085 = vsub.s32 %v1082, %v1084
        %v1086 = vrot.slane %v1078, %v1085
        %v1088 = vunpack.c.l.s4 1934713408
        %v1089 = vunpack.c.0.s8 %v1088
        %v1090 = vlaneseq
        %v1091 = vshrl.u32 %v1090, 7
        %v1092 = vsub.s32 %v1089, %v1091
        %v1093 = vrot.slane %v1079, %v1092
        %v1094 = vcombine.low %v1029, %v1045
        %v1095 = vcombine.high %v1029, %v1045
        %v1097 = vunpack.c.l.s4 1934713408
        %v1098 = vunpack.c.0.s8 %v1097
        %v1099 = vlaneseq
        %v1100 = vshrl.u32 %v1099, 7
        %v1101 = vsub.s32 %v1098, %v1100
        %v1102 = vrot.slane %v1094, %v1101
        %v1104 = vunpack.c.l.s4 1934713408
        %v1105 = vunpack.c.0.s8 %v1104
        %v1106 = vlaneseq
        %v1107 = vshrl.u32 %v1106, 7
        %v1108 = vsub.s32 %v1105, %v1107
        %v1109 = vrot.slane %v1095, %v1108
        %v1110 = vcombine.low %v1054, %v1070
        %v1111 = vcombine.high %v1054, %v1070
        %v1113 = vunpack.c.l.s4 1934713408
        %v1114 = vunpack.c.0.s8 %v1113
        %v1115 = vlaneseq
        %v1116 = vshrl.u32 %v1115, 7
        %v1117 = vsub.s32 %v1114, %v1116
        %v1118 = vrot.slane %v1110, %v1117
        %v1120 = vunpack.c.l.s4 1934713408
        %v1121 = vunpack.c.0.s8 %v1120
        %v1122 = vlaneseq
        %v1123 = vshrl.u32 %v1122, 7
        %v1124 = vsub.s32 %v1121, %v1123
        %v1125 = vrot.slane %v1111, %v1124
        %v1126 = vcombine.low %v1061, %v1077
        %v1127 = vcombine.high %v1061, %v1077
        %v1129 = vunpack.c.l.s4 1934713408
        %v1130 = vunpack.c.0.s8 %v1129
        %v1131 = vlaneseq
        %v1132 = vshrl.u32 %v1131, 7
        %v1133 = vsub.s32 %v1130, %v1132
        %v1134 = vrot.slane %v1126, %v1133
        %v1136 = vunpack.c.l.s4 1934713408
        %v1137 = vunpack.c.0.s8 %v1136
        %v1138 = vlaneseq
        %v1139 = vshrl.u32 %v1138, 7
        %v1140 = vsub.s32 %v1137, %v1139
        %v1141 = vrot.slane %v1127, %v1140
        %v1142 = vcombine.low %v1086, %v1118
        %v1143 = vcombine.high %v1086, %v1118
        %v1144 = vcombine.low %v1093, %v1125
        %v1145 = vcombine.high %v1093, %v1125
        %v1146 = vcombine.low %v1102, %v1134
        %v1147 = vcombine.high %v1102, %v1134
        %v1148 = vcombine.low %v1109, %v1141
        %v1149 = vcombine.high %v1109, %v1141
        %v1150 = vpack.c.bf16 %v1006, %v1006
        %v1151 = vpack.c.bf16 %v1007, %v1007
        %v1152 = vpack.c.bf16 %v1008, %v1008
        %v1153 = vpack.c.bf16 %v1009, %v1009
        %v1154 = vpack.c.bf16 %v1010, %v1010
        %v1155 = vpack.c.bf16 %v1011, %v1011
        %v1156 = vpack.c.bf16 %v1012, %v1012
        %v1157 = vpack.c.bf16 %v1013, %v1013
        %v1158 = vpack.c.bf16 %v1142, %v1142
        %v1159 = vpack.c.bf16 %v1143, %v1143
        %v1160 = vpack.c.bf16 %v1144, %v1144
        %v1161 = vpack.c.bf16 %v1145, %v1145
        %v1162 = vpack.c.bf16 %v1146, %v1146
        %v1163 = vpack.c.bf16 %v1147, %v1147
        %v1164 = vpack.c.bf16 %v1148, %v1148
        %v1165 = vpack.c.bf16 %v1149, %v1149
        %s1166 = smul.u32 %s34, 16
        %s1167 = sshra.s32 %s1166, 3
        %s1168 = sand.u32 %s1166, 7
        %s1169 = smul.addr %s1167, 4
        %s1170 = scalar_lea.vmem [#allocation2], %s1169
        %v1171 = vld [vmem:[%s1170] sm:$0xf]
        %v1172 = vld [vmem:[%s1170 + $0x4] sm:$0xf]
        %v1173 = vld [vmem:[%s1170 + $0x8] sm:$0xf]
        %v1174 = vld [vmem:[%s1170 + $0xc] sm:$0xf]
        %v1175 = vld [vmem:[%s1170 + $0x10] sm:$0xf]
        %v1176 = vld [vmem:[%s1170 + $0x14] sm:$0xf]
        %v1177 = vld [vmem:[%s1170 + $0x18] sm:$0xf]
        %v1178 = vld [vmem:[%s1170 + $0x1c] sm:$0xf]
        %v1179 = vld [vmem:[%s1170 + $0x20] sm:$0xf]
        %v1180 = vld [vmem:[%s1170 + $0x24] sm:$0xf]
        %v1181 = vld [vmem:[%s1170 + $0x28] sm:$0xf]
        %v1182 = vld [vmem:[%s1170 + $0x2c] sm:$0xf]
        %v1183 = vld [vmem:[%s1170 + $0x30] sm:$0xf]
        %v1184 = vld [vmem:[%s1170 + $0x34] sm:$0xf]
        %v1185 = vld [vmem:[%s1170 + $0x38] sm:$0xf]
        %v1186 = vld [vmem:[%s1170 + $0x3c] sm:$0xf]
        %v1187 = vunpack.c.l.bf16 %v1171
        %v1188 = vunpack.c.l.bf16 %v1172
        %v1189 = vunpack.c.l.bf16 %v1173
        %v1190 = vunpack.c.l.bf16 %v1174
        %v1191 = vunpack.c.l.bf16 %v1175
        %v1192 = vunpack.c.l.bf16 %v1176
        %v1193 = vunpack.c.l.bf16 %v1177
        %v1194 = vunpack.c.l.bf16 %v1178
        %v1195 = vunpack.c.l.bf16 %v1179
        %v1196 = vunpack.c.l.bf16 %v1180
        %v1197 = vunpack.c.l.bf16 %v1181
        %v1198 = vunpack.c.l.bf16 %v1182
        %v1199 = vunpack.c.l.bf16 %v1183
        %v1200 = vunpack.c.l.bf16 %v1184
        %v1201 = vunpack.c.l.bf16 %v1185
        %v1202 = vunpack.c.l.bf16 %v1186
        %v1203 = vcombine.low %v1187, %v1191
        %v1204 = vcombine.high %v1187, %v1191
        %v1206 = vunpack.c.l.s4 1983009808
        %v1207 = vunpack.c.0.s8 %v1206
        %v1208 = vlaneseq
        %v1209 = vshrl.u32 %v1208, 7
        %v1210 = vsub.s32 %v1207, %v1209
        %v1211 = vrot.slane %v1203, %v1210
        %v1213 = vunpack.c.l.s4 1983009808
        %v1214 = vunpack.c.0.s8 %v1213
        %v1215 = vlaneseq
        %v1216 = vshrl.u32 %v1215, 7
        %v1217 = vsub.s32 %v1214, %v1216
        %v1218 = vrot.slane %v1204, %v1217
        %v1219 = vcombine.low %v1189, %v1193
        %v1220 = vcombine.high %v1189, %v1193
        %v1222 = vunpack.c.l.s4 1983009808
        %v1223 = vunpack.c.0.s8 %v1222
        %v1224 = vlaneseq
        %v1225 = vshrl.u32 %v1224, 7
        %v1226 = vsub.s32 %v1223, %v1225
        %v1227 = vrot.slane %v1219, %v1226
        %v1229 = vunpack.c.l.s4 1983009808
        %v1230 = vunpack.c.0.s8 %v1229
        %v1231 = vlaneseq
        %v1232 = vshrl.u32 %v1231, 7
        %v1233 = vsub.s32 %v1230, %v1232
        %v1234 = vrot.slane %v1220, %v1233
        %v1235 = vcombine.low %v1195, %v1199
        %v1236 = vcombine.high %v1195, %v1199
        %v1238 = vunpack.c.l.s4 1983009808
        %v1239 = vunpack.c.0.s8 %v1238
        %v1240 = vlaneseq
        %v1241 = vshrl.u32 %v1240, 7
        %v1242 = vsub.s32 %v1239, %v1241
        %v1243 = vrot.slane %v1235, %v1242
        %v1245 = vunpack.c.l.s4 1983009808
        %v1246 = vunpack.c.0.s8 %v1245
        %v1247 = vlaneseq
        %v1248 = vshrl.u32 %v1247, 7
        %v1249 = vsub.s32 %v1246, %v1248
        %v1250 = vrot.slane %v1236, %v1249
        %v1251 = vcombine.low %v1197, %v1201
        %v1252 = vcombine.high %v1197, %v1201
        %v1254 = vunpack.c.l.s4 1983009808
        %v1255 = vunpack.c.0.s8 %v1254
        %v1256 = vlaneseq
        %v1257 = vshrl.u32 %v1256, 7
        %v1258 = vsub.s32 %v1255, %v1257
        %v1259 = vrot.slane %v1251, %v1258
        %v1261 = vunpack.c.l.s4 1983009808
        %v1262 = vunpack.c.0.s8 %v1261
        %v1263 = vlaneseq
        %v1264 = vshrl.u32 %v1263, 7
        %v1265 = vsub.s32 %v1262, %v1264
        %v1266 = vrot.slane %v1252, %v1265
        %v1267 = vcombine.low %v1211, %v1227
        %v1268 = vcombine.high %v1211, %v1227
        %v1270 = vunpack.c.l.s4 1934713408
        %v1271 = vunpack.c.0.s8 %v1270
        %v1272 = vlaneseq
        %v1273 = vshrl.u32 %v1272, 7
        %v1274 = vsub.s32 %v1271, %v1273
        %v1275 = vrot.slane %v1267, %v1274
        %v1277 = vunpack.c.l.s4 1934713408
        %v1278 = vunpack.c.0.s8 %v1277
        %v1279 = vlaneseq
        %v1280 = vshrl.u32 %v1279, 7
        %v1281 = vsub.s32 %v1278, %v1280
        %v1282 = vrot.slane %v1268, %v1281
        %v1283 = vcombine.low %v1218, %v1234
        %v1284 = vcombine.high %v1218, %v1234
        %v1286 = vunpack.c.l.s4 1934713408
        %v1287 = vunpack.c.0.s8 %v1286
        %v1288 = vlaneseq
        %v1289 = vshrl.u32 %v1288, 7
        %v1290 = vsub.s32 %v1287, %v1289
        %v1291 = vrot.slane %v1283, %v1290
        %v1293 = vunpack.c.l.s4 1934713408
        %v1294 = vunpack.c.0.s8 %v1293
        %v1295 = vlaneseq
        %v1296 = vshrl.u32 %v1295, 7
        %v1297 = vsub.s32 %v1294, %v1296
        %v1298 = vrot.slane %v1284, %v1297
        %v1299 = vcombine.low %v1243, %v1259
        %v1300 = vcombine.high %v1243, %v1259
        %v1302 = vunpack.c.l.s4 1934713408
        %v1303 = vunpack.c.0.s8 %v1302
        %v1304 = vlaneseq
        %v1305 = vshrl.u32 %v1304, 7
        %v1306 = vsub.s32 %v1303, %v1305
        %v1307 = vrot.slane %v1299, %v1306
        %v1309 = vunpack.c.l.s4 1934713408
        %v1310 = vunpack.c.0.s8 %v1309
        %v1311 = vlaneseq
        %v1312 = vshrl.u32 %v1311, 7
        %v1313 = vsub.s32 %v1310, %v1312
        %v1314 = vrot.slane %v1300, %v1313
        %v1315 = vcombine.low %v1250, %v1266
        %v1316 = vcombine.high %v1250, %v1266
        %v1318 = vunpack.c.l.s4 1934713408
        %v1319 = vunpack.c.0.s8 %v1318
        %v1320 = vlaneseq
        %v1321 = vshrl.u32 %v1320, 7
        %v1322 = vsub.s32 %v1319, %v1321
        %v1323 = vrot.slane %v1315, %v1322
        %v1325 = vunpack.c.l.s4 1934713408
        %v1326 = vunpack.c.0.s8 %v1325
        %v1327 = vlaneseq
        %v1328 = vshrl.u32 %v1327, 7
        %v1329 = vsub.s32 %v1326, %v1328
        %v1330 = vrot.slane %v1316, %v1329
        %v1331 = vcombine.low %v1275, %v1307
        %v1332 = vcombine.high %v1275, %v1307
        %v1333 = vcombine.low %v1282, %v1314
        %v1334 = vcombine.high %v1282, %v1314
        %v1335 = vcombine.low %v1291, %v1323
        %v1336 = vcombine.high %v1291, %v1323
        %v1337 = vcombine.low %v1298, %v1330
        %v1338 = vcombine.high %v1298, %v1330
        %v1339 = vcombine.low %v1188, %v1192
        %v1340 = vcombine.high %v1188, %v1192
        %v1342 = vunpack.c.l.s4 1983009808
        %v1343 = vunpack.c.0.s8 %v1342
        %v1344 = vlaneseq
        %v1345 = vshrl.u32 %v1344, 7
        %v1346 = vsub.s32 %v1343, %v1345
        %v1347 = vrot.slane %v1339, %v1346
        %v1349 = vunpack.c.l.s4 1983009808
        %v1350 = vunpack.c.0.s8 %v1349
        %v1351 = vlaneseq
        %v1352 = vshrl.u32 %v1351, 7
        %v1353 = vsub.s32 %v1350, %v1352
        %v1354 = vrot.slane %v1340, %v1353
        %v1355 = vcombine.low %v1190, %v1194
        %v1356 = vcombine.high %v1190, %v1194
        %v1358 = vunpack.c.l.s4 1983009808
        %v1359 = vunpack.c.0.s8 %v1358
        %v1360 = vlaneseq
        %v1361 = vshrl.u32 %v1360, 7
        %v1362 = vsub.s32 %v1359, %v1361
        %v1363 = vrot.slane %v1355, %v1362
        %v1365 = vunpack.c.l.s4 1983009808
        %v1366 = vunpack.c.0.s8 %v1365
        %v1367 = vlaneseq
        %v1368 = vshrl.u32 %v1367, 7
        %v1369 = vsub.s32 %v1366, %v1368
        %v1370 = vrot.slane %v1356, %v1369
        %v1371 = vcombine.low %v1196, %v1200
        %v1372 = vcombine.high %v1196, %v1200
        %v1374 = vunpack.c.l.s4 1983009808
        %v1375 = vunpack.c.0.s8 %v1374
        %v1376 = vlaneseq
        %v1377 = vshrl.u32 %v1376, 7
        %v1378 = vsub.s32 %v1375, %v1377
        %v1379 = vrot.slane %v1371, %v1378
        %v1381 = vunpack.c.l.s4 1983009808
        %v1382 = vunpack.c.0.s8 %v1381
        %v1383 = vlaneseq
        %v1384 = vshrl.u32 %v1383, 7
        %v1385 = vsub.s32 %v1382, %v1384
        %v1386 = vrot.slane %v1372, %v1385
        %v1387 = vcombine.low %v1198, %v1202
        %v1388 = vcombine.high %v1198, %v1202
        %v1390 = vunpack.c.l.s4 1983009808
        %v1391 = vunpack.c.0.s8 %v1390
        %v1392 = vlaneseq
        %v1393 = vshrl.u32 %v1392, 7
        %v1394 = vsub.s32 %v1391, %v1393
        %v1395 = vrot.slane %v1387, %v1394
        %v1397 = vunpack.c.l.s4 1983009808
        %v1398 = vunpack.c.0.s8 %v1397
        %v1399 = vlaneseq
        %v1400 = vshrl.u32 %v1399, 7
        %v1401 = vsub.s32 %v1398, %v1400
        %v1402 = vrot.slane %v1388, %v1401
        %v1403 = vcombine.low %v1347, %v1363
        %v1404 = vcombine.high %v1347, %v1363
        %v1406 = vunpack.c.l.s4 1934713408
        %v1407 = vunpack.c.0.s8 %v1406
        %v1408 = vlaneseq
        %v1409 = vshrl.u32 %v1408, 7
        %v1410 = vsub.s32 %v1407, %v1409
        %v1411 = vrot.slane %v1403, %v1410
        %v1413 = vunpack.c.l.s4 1934713408
        %v1414 = vunpack.c.0.s8 %v1413
        %v1415 = vlaneseq
        %v1416 = vshrl.u32 %v1415, 7
        %v1417 = vsub.s32 %v1414, %v1416
        %v1418 = vrot.slane %v1404, %v1417
        %v1419 = vcombine.low %v1354, %v1370
        %v1420 = vcombine.high %v1354, %v1370
        %v1422 = vunpack.c.l.s4 1934713408
        %v1423 = vunpack.c.0.s8 %v1422
        %v1424 = vlaneseq
        %v1425 = vshrl.u32 %v1424, 7
        %v1426 = vsub.s32 %v1423, %v1425
        %v1427 = vrot.slane %v1419, %v1426
        %v1429 = vunpack.c.l.s4 1934713408
        %v1430 = vunpack.c.0.s8 %v1429
        %v1431 = vlaneseq
        %v1432 = vshrl.u32 %v1431, 7
        %v1433 = vsub.s32 %v1430, %v1432
        %v1434 = vrot.slane %v1420, %v1433
        %v1435 = vcombine.low %v1379, %v1395
        %v1436 = vcombine.high %v1379, %v1395
        %v1438 = vunpack.c.l.s4 1934713408
        %v1439 = vunpack.c.0.s8 %v1438
        %v1440 = vlaneseq
        %v1441 = vshrl.u32 %v1440, 7
        %v1442 = vsub.s32 %v1439, %v1441
        %v1443 = vrot.slane %v1435, %v1442
        %v1445 = vunpack.c.l.s4 1934713408
        %v1446 = vunpack.c.0.s8 %v1445
        %v1447 = vlaneseq
        %v1448 = vshrl.u32 %v1447, 7
        %v1449 = vsub.s32 %v1446, %v1448
        %v1450 = vrot.slane %v1436, %v1449
        %v1451 = vcombine.low %v1386, %v1402
        %v1452 = vcombine.high %v1386, %v1402
        %v1454 = vunpack.c.l.s4 1934713408
        %v1455 = vunpack.c.0.s8 %v1454
        %v1456 = vlaneseq
        %v1457 = vshrl.u32 %v1456, 7
        %v1458 = vsub.s32 %v1455, %v1457
        %v1459 = vrot.slane %v1451, %v1458
        %v1461 = vunpack.c.l.s4 1934713408
        %v1462 = vunpack.c.0.s8 %v1461
        %v1463 = vlaneseq
        %v1464 = vshrl.u32 %v1463, 7
        %v1465 = vsub.s32 %v1462, %v1464
        %v1466 = vrot.slane %v1452, %v1465
        %v1467 = vcombine.low %v1411, %v1443
        %v1468 = vcombine.high %v1411, %v1443
        %v1469 = vcombine.low %v1418, %v1450
        %v1470 = vcombine.high %v1418, %v1450
        %v1471 = vcombine.low %v1427, %v1459
        %v1472 = vcombine.high %v1427, %v1459
        %v1473 = vcombine.low %v1434, %v1466
        %v1474 = vcombine.high %v1434, %v1466
        %v1475 = vpack.c.bf16 %v1331, %v1331
        %v1476 = vpack.c.bf16 %v1332, %v1332
        %v1477 = vpack.c.bf16 %v1333, %v1333
        %v1478 = vpack.c.bf16 %v1334, %v1334
        %v1479 = vpack.c.bf16 %v1335, %v1335
        %v1480 = vpack.c.bf16 %v1336, %v1336
        %v1481 = vpack.c.bf16 %v1337, %v1337
        %v1482 = vpack.c.bf16 %v1338, %v1338
        %v1483 = vpack.c.bf16 %v1467, %v1467
        %v1484 = vpack.c.bf16 %v1468, %v1468
        %v1485 = vpack.c.bf16 %v1469, %v1469
        %v1486 = vpack.c.bf16 %v1470, %v1470
        %v1487 = vpack.c.bf16 %v1471, %v1471
        %v1488 = vpack.c.bf16 %v1472, %v1472
        %v1489 = vpack.c.bf16 %v1473, %v1473
        %v1490 = vpack.c.bf16 %v1474, %v1474
        %s1491 = smul.addr %s1167, 4
        %s1492 = scalar_lea.vmem [#allocation3], %s1491
        %v1493 = vld [vmem:[%s1492] sm:$0xf]
        %v1494 = vld [vmem:[%s1492 + $0x4] sm:$0xf]
        %v1495 = vld [vmem:[%s1492 + $0x8] sm:$0xf]
        %v1496 = vld [vmem:[%s1492 + $0xc] sm:$0xf]
        %v1497 = vld [vmem:[%s1492 + $0x10] sm:$0xf]
        %v1498 = vld [vmem:[%s1492 + $0x14] sm:$0xf]
        %v1499 = vld [vmem:[%s1492 + $0x18] sm:$0xf]
        %v1500 = vld [vmem:[%s1492 + $0x1c] sm:$0xf]
        %v1501 = vld [vmem:[%s1492 + $0x20] sm:$0xf]
        %v1502 = vld [vmem:[%s1492 + $0x24] sm:$0xf]
        %v1503 = vld [vmem:[%s1492 + $0x28] sm:$0xf]
        %v1504 = vld [vmem:[%s1492 + $0x2c] sm:$0xf]
        %v1505 = vld [vmem:[%s1492 + $0x30] sm:$0xf]
        %v1506 = vld [vmem:[%s1492 + $0x34] sm:$0xf]
        %v1507 = vld [vmem:[%s1492 + $0x38] sm:$0xf]
        %v1508 = vld [vmem:[%s1492 + $0x3c] sm:$0xf]
        %v1509 = vunpack.c.l.bf16 %v1493
        %v1510 = vunpack.c.l.bf16 %v1494
        %v1511 = vunpack.c.l.bf16 %v1495
        %v1512 = vunpack.c.l.bf16 %v1496
        %v1513 = vunpack.c.l.bf16 %v1497
        %v1514 = vunpack.c.l.bf16 %v1498
        %v1515 = vunpack.c.l.bf16 %v1499
        %v1516 = vunpack.c.l.bf16 %v1500
        %v1517 = vunpack.c.l.bf16 %v1501
        %v1518 = vunpack.c.l.bf16 %v1502
        %v1519 = vunpack.c.l.bf16 %v1503
        %v1520 = vunpack.c.l.bf16 %v1504
        %v1521 = vunpack.c.l.bf16 %v1505
        %v1522 = vunpack.c.l.bf16 %v1506
        %v1523 = vunpack.c.l.bf16 %v1507
        %v1524 = vunpack.c.l.bf16 %v1508
        %v1525 = vcombine.low %v1509, %v1513
        %v1526 = vcombine.high %v1509, %v1513
        %v1528 = vunpack.c.l.s4 1983009808
        %v1529 = vunpack.c.0.s8 %v1528
        %v1530 = vlaneseq
        %v1531 = vshrl.u32 %v1530, 7
        %v1532 = vsub.s32 %v1529, %v1531
        %v1533 = vrot.slane %v1525, %v1532
        %v1535 = vunpack.c.l.s4 1983009808
        %v1536 = vunpack.c.0.s8 %v1535
        %v1537 = vlaneseq
        %v1538 = vshrl.u32 %v1537, 7
        %v1539 = vsub.s32 %v1536, %v1538
        %v1540 = vrot.slane %v1526, %v1539
        %v1541 = vcombine.low %v1511, %v1515
        %v1542 = vcombine.high %v1511, %v1515
        %v1544 = vunpack.c.l.s4 1983009808
        %v1545 = vunpack.c.0.s8 %v1544
        %v1546 = vlaneseq
        %v1547 = vshrl.u32 %v1546, 7
        %v1548 = vsub.s32 %v1545, %v1547
        %v1549 = vrot.slane %v1541, %v1548
        %v1551 = vunpack.c.l.s4 1983009808
        %v1552 = vunpack.c.0.s8 %v1551
        %v1553 = vlaneseq
        %v1554 = vshrl.u32 %v1553, 7
        %v1555 = vsub.s32 %v1552, %v1554
        %v1556 = vrot.slane %v1542, %v1555
        %v1557 = vcombine.low %v1517, %v1521
        %v1558 = vcombine.high %v1517, %v1521
        %v1560 = vunpack.c.l.s4 1983009808
        %v1561 = vunpack.c.0.s8 %v1560
        %v1562 = vlaneseq
        %v1563 = vshrl.u32 %v1562, 7
        %v1564 = vsub.s32 %v1561, %v1563
        %v1565 = vrot.slane %v1557, %v1564
        %v1567 = vunpack.c.l.s4 1983009808
        %v1568 = vunpack.c.0.s8 %v1567
        %v1569 = vlaneseq
        %v1570 = vshrl.u32 %v1569, 7
        %v1571 = vsub.s32 %v1568, %v1570
        %v1572 = vrot.slane %v1558, %v1571
        %v1573 = vcombine.low %v1519, %v1523
        %v1574 = vcombine.high %v1519, %v1523
        %v1576 = vunpack.c.l.s4 1983009808
        %v1577 = vunpack.c.0.s8 %v1576
        %v1578 = vlaneseq
        %v1579 = vshrl.u32 %v1578, 7
        %v1580 = vsub.s32 %v1577, %v1579
        %v1581 = vrot.slane %v1573, %v1580
        %v1583 = vunpack.c.l.s4 1983009808
        %v1584 = vunpack.c.0.s8 %v1583
        %v1585 = vlaneseq
        %v1586 = vshrl.u32 %v1585, 7
        %v1587 = vsub.s32 %v1584, %v1586
        %v1588 = vrot.slane %v1574, %v1587
        %v1589 = vcombine.low %v1533, %v1549
        %v1590 = vcombine.high %v1533, %v1549
        %v1592 = vunpack.c.l.s4 1934713408
        %v1593 = vunpack.c.0.s8 %v1592
        %v1594 = vlaneseq
        %v1595 = vshrl.u32 %v1594, 7
        %v1596 = vsub.s32 %v1593, %v1595
        %v1597 = vrot.slane %v1589, %v1596
        %v1599 = vunpack.c.l.s4 1934713408
        %v1600 = vunpack.c.0.s8 %v1599
        %v1601 = vlaneseq
        %v1602 = vshrl.u32 %v1601, 7
        %v1603 = vsub.s32 %v1600, %v1602
        %v1604 = vrot.slane %v1590, %v1603
        %v1605 = vcombine.low %v1540, %v1556
        %v1606 = vcombine.high %v1540, %v1556
        %v1608 = vunpack.c.l.s4 1934713408
        %v1609 = vunpack.c.0.s8 %v1608
        %v1610 = vlaneseq
        %v1611 = vshrl.u32 %v1610, 7
        %v1612 = vsub.s32 %v1609, %v1611
        %v1613 = vrot.slane %v1605, %v1612
        %v1615 = vunpack.c.l.s4 1934713408
        %v1616 = vunpack.c.0.s8 %v1615
        %v1617 = vlaneseq
        %v1618 = vshrl.u32 %v1617, 7
        %v1619 = vsub.s32 %v1616, %v1618
        %v1620 = vrot.slane %v1606, %v1619
        %v1621 = vcombine.low %v1565, %v1581
        %v1622 = vcombine.high %v1565, %v1581
        %v1624 = vunpack.c.l.s4 1934713408
        %v1625 = vunpack.c.0.s8 %v1624
        %v1626 = vlaneseq
        %v1627 = vshrl.u32 %v1626, 7
        %v1628 = vsub.s32 %v1625, %v1627
        %v1629 = vrot.slane %v1621, %v1628
        %v1631 = vunpack.c.l.s4 1934713408
        %v1632 = vunpack.c.0.s8 %v1631
        %v1633 = vlaneseq
        %v1634 = vshrl.u32 %v1633, 7
        %v1635 = vsub.s32 %v1632, %v1634
        %v1636 = vrot.slane %v1622, %v1635
        %v1637 = vcombine.low %v1572, %v1588
        %v1638 = vcombine.high %v1572, %v1588
        %v1640 = vunpack.c.l.s4 1934713408
        %v1641 = vunpack.c.0.s8 %v1640
        %v1642 = vlaneseq
        %v1643 = vshrl.u32 %v1642, 7
        %v1644 = vsub.s32 %v1641, %v1643
        %v1645 = vrot.slane %v1637, %v1644
        %v1647 = vunpack.c.l.s4 1934713408
        %v1648 = vunpack.c.0.s8 %v1647
        %v1649 = vlaneseq
        %v1650 = vshrl.u32 %v1649, 7
        %v1651 = vsub.s32 %v1648, %v1650
        %v1652 = vrot.slane %v1638, %v1651
        %v1653 = vcombine.low %v1597, %v1629
        %v1654 = vcombine.high %v1597, %v1629
        %v1655 = vcombine.low %v1604, %v1636
        %v1656 = vcombine.high %v1604, %v1636
        %v1657 = vcombine.low %v1613, %v1645
        %v1658 = vcombine.high %v1613, %v1645
        %v1659 = vcombine.low %v1620, %v1652
        %v1660 = vcombine.high %v1620, %v1652
        %v1661 = vcombine.low %v1510, %v1514
        %v1662 = vcombine.high %v1510, %v1514
        %v1664 = vunpack.c.l.s4 1983009808
        %v1665 = vunpack.c.0.s8 %v1664
        %v1666 = vlaneseq
        %v1667 = vshrl.u32 %v1666, 7
        %v1668 = vsub.s32 %v1665, %v1667
        %v1669 = vrot.slane %v1661, %v1668
        %v1671 = vunpack.c.l.s4 1983009808
        %v1672 = vunpack.c.0.s8 %v1671
        %v1673 = vlaneseq
        %v1674 = vshrl.u32 %v1673, 7
        %v1675 = vsub.s32 %v1672, %v1674
        %v1676 = vrot.slane %v1662, %v1675
        %v1677 = vcombine.low %v1512, %v1516
        %v1678 = vcombine.high %v1512, %v1516
        %v1680 = vunpack.c.l.s4 1983009808
        %v1681 = vunpack.c.0.s8 %v1680
        %v1682 = vlaneseq
        %v1683 = vshrl.u32 %v1682, 7
        %v1684 = vsub.s32 %v1681, %v1683
        %v1685 = vrot.slane %v1677, %v1684
        %v1687 = vunpack.c.l.s4 1983009808
        %v1688 = vunpack.c.0.s8 %v1687
        %v1689 = vlaneseq
        %v1690 = vshrl.u32 %v1689, 7
        %v1691 = vsub.s32 %v1688, %v1690
        %v1692 = vrot.slane %v1678, %v1691
        %v1693 = vcombine.low %v1518, %v1522
        %v1694 = vcombine.high %v1518, %v1522
        %v1696 = vunpack.c.l.s4 1983009808
        %v1697 = vunpack.c.0.s8 %v1696
        %v1698 = vlaneseq
        %v1699 = vshrl.u32 %v1698, 7
        %v1700 = vsub.s32 %v1697, %v1699
        %v1701 = vrot.slane %v1693, %v1700
        %v1703 = vunpack.c.l.s4 1983009808
        %v1704 = vunpack.c.0.s8 %v1703
        %v1705 = vlaneseq
        %v1706 = vshrl.u32 %v1705, 7
        %v1707 = vsub.s32 %v1704, %v1706
        %v1708 = vrot.slane %v1694, %v1707
        %v1709 = vcombine.low %v1520, %v1524
        %v1710 = vcombine.high %v1520, %v1524
        %v1712 = vunpack.c.l.s4 1983009808
        %v1713 = vunpack.c.0.s8 %v1712
        %v1714 = vlaneseq
        %v1715 = vshrl.u32 %v1714, 7
        %v1716 = vsub.s32 %v1713, %v1715
        %v1717 = vrot.slane %v1709, %v1716
        %v1719 = vunpack.c.l.s4 1983009808
        %v1720 = vunpack.c.0.s8 %v1719
        %v1721 = vlaneseq
        %v1722 = vshrl.u32 %v1721, 7
        %v1723 = vsub.s32 %v1720, %v1722
        %v1724 = vrot.slane %v1710, %v1723
        %v1725 = vcombine.low %v1669, %v1685
        %v1726 = vcombine.high %v1669, %v1685
        %v1728 = vunpack.c.l.s4 1934713408
        %v1729 = vunpack.c.0.s8 %v1728
        %v1730 = vlaneseq
        %v1731 = vshrl.u32 %v1730, 7
        %v1732 = vsub.s32 %v1729, %v1731
        %v1733 = vrot.slane %v1725, %v1732
        %v1735 = vunpack.c.l.s4 1934713408
        %v1736 = vunpack.c.0.s8 %v1735
        %v1737 = vlaneseq
        %v1738 = vshrl.u32 %v1737, 7
        %v1739 = vsub.s32 %v1736, %v1738
        %v1740 = vrot.slane %v1726, %v1739
        %v1741 = vcombine.low %v1676, %v1692
        %v1742 = vcombine.high %v1676, %v1692
        %v1744 = vunpack.c.l.s4 1934713408
        %v1745 = vunpack.c.0.s8 %v1744
        %v1746 = vlaneseq
        %v1747 = vshrl.u32 %v1746, 7
        %v1748 = vsub.s32 %v1745, %v1747
        %v1749 = vrot.slane %v1741, %v1748
        %v1751 = vunpack.c.l.s4 1934713408
        %v1752 = vunpack.c.0.s8 %v1751
        %v1753 = vlaneseq
        %v1754 = vshrl.u32 %v1753, 7
        %v1755 = vsub.s32 %v1752, %v1754
        %v1756 = vrot.slane %v1742, %v1755
        %v1757 = vcombine.low %v1701, %v1717
        %v1758 = vcombine.high %v1701, %v1717
        %v1760 = vunpack.c.l.s4 1934713408
        %v1761 = vunpack.c.0.s8 %v1760
        %v1762 = vlaneseq
        %v1763 = vshrl.u32 %v1762, 7
        %v1764 = vsub.s32 %v1761, %v1763
        %v1765 = vrot.slane %v1757, %v1764
        %v1767 = vunpack.c.l.s4 1934713408
        %v1768 = vunpack.c.0.s8 %v1767
        %v1769 = vlaneseq
        %v1770 = vshrl.u32 %v1769, 7
        %v1771 = vsub.s32 %v1768, %v1770
        %v1772 = vrot.slane %v1758, %v1771
        %v1773 = vcombine.low %v1708, %v1724
        %v1774 = vcombine.high %v1708, %v1724
        %v1776 = vunpack.c.l.s4 1934713408
        %v1777 = vunpack.c.0.s8 %v1776
        %v1778 = vlaneseq
        %v1779 = vshrl.u32 %v1778, 7
        %v1780 = vsub.s32 %v1777, %v1779
        %v1781 = vrot.slane %v1773, %v1780
        %v1783 = vunpack.c.l.s4 1934713408
        %v1784 = vunpack.c.0.s8 %v1783
        %v1785 = vlaneseq
        %v1786 = vshrl.u32 %v1785, 7
        %v1787 = vsub.s32 %v1784, %v1786
        %v1788 = vrot.slane %v1774, %v1787
        %v1789 = vcombine.low %v1733, %v1765
        %v1790 = vcombine.high %v1733, %v1765
        %v1791 = vcombine.low %v1740, %v1772
        %v1792 = vcombine.high %v1740, %v1772
        %v1793 = vcombine.low %v1749, %v1781
        %v1794 = vcombine.high %v1749, %v1781
        %v1795 = vcombine.low %v1756, %v1788
        %v1796 = vcombine.high %v1756, %v1788
        %v1797 = vpack.c.bf16 %v1653, %v1653
        %v1798 = vpack.c.bf16 %v1654, %v1654
        %v1799 = vpack.c.bf16 %v1655, %v1655
        %v1800 = vpack.c.bf16 %v1656, %v1656
        %v1801 = vpack.c.bf16 %v1657, %v1657
        %v1802 = vpack.c.bf16 %v1658, %v1658
        %v1803 = vpack.c.bf16 %v1659, %v1659
        %v1804 = vpack.c.bf16 %v1660, %v1660
        %v1805 = vpack.c.bf16 %v1789, %v1789
        %v1806 = vpack.c.bf16 %v1790, %v1790
        %v1807 = vpack.c.bf16 %v1791, %v1791
        %v1808 = vpack.c.bf16 %v1792, %v1792
        %v1809 = vpack.c.bf16 %v1793, %v1793
        %v1810 = vpack.c.bf16 %v1794, %v1794
        %v1811 = vpack.c.bf16 %v1795, %v1795
        %v1812 = vpack.c.bf16 %v1796, %v1796
        %v1813 = vld [vmem:[#allocation2] sm:$0xf]
        %v1814 = vld [vmem:[#allocation2 + $0x4] sm:$0xf]
        %v1815 = vld [vmem:[#allocation2 + $0x8] sm:$0xf]
        %v1816 = vld [vmem:[#allocation2 + $0xc] sm:$0xf]
        %v1817 = vld [vmem:[#allocation2 + $0x10] sm:$0xf]
        %v1818 = vld [vmem:[#allocation2 + $0x14] sm:$0xf]
        %v1819 = vld [vmem:[#allocation2 + $0x18] sm:$0xf]
        %v1820 = vld [vmem:[#allocation2 + $0x1c] sm:$0xf]
        %v1821 = vld [vmem:[#allocation2 + $0x20] sm:$0xf]
        %v1822 = vld [vmem:[#allocation2 + $0x24] sm:$0xf]
        %v1823 = vld [vmem:[#allocation2 + $0x28] sm:$0xf]
        %v1824 = vld [vmem:[#allocation2 + $0x2c] sm:$0xf]
        %v1825 = vld [vmem:[#allocation2 + $0x30] sm:$0xf]
        %v1826 = vld [vmem:[#allocation2 + $0x34] sm:$0xf]
        %v1827 = vld [vmem:[#allocation2 + $0x38] sm:$0xf]
        %v1828 = vld [vmem:[#allocation2 + $0x3c] sm:$0xf]
        %v1829 = vld [vmem:[#allocation3] sm:$0xf]
        %v1830 = vld [vmem:[#allocation3 + $0x4] sm:$0xf]
        %v1831 = vld [vmem:[#allocation3 + $0x8] sm:$0xf]
        %v1832 = vld [vmem:[#allocation3 + $0xc] sm:$0xf]
        %v1833 = vld [vmem:[#allocation3 + $0x10] sm:$0xf]
        %v1834 = vld [vmem:[#allocation3 + $0x14] sm:$0xf]
        %v1835 = vld [vmem:[#allocation3 + $0x18] sm:$0xf]
        %v1836 = vld [vmem:[#allocation3 + $0x1c] sm:$0xf]
        %v1837 = vld [vmem:[#allocation3 + $0x20] sm:$0xf]
        %v1838 = vld [vmem:[#allocation3 + $0x24] sm:$0xf]
        %v1839 = vld [vmem:[#allocation3 + $0x28] sm:$0xf]
        %v1840 = vld [vmem:[#allocation3 + $0x2c] sm:$0xf]
        %v1841 = vld [vmem:[#allocation3 + $0x30] sm:$0xf]
        %v1842 = vld [vmem:[#allocation3 + $0x34] sm:$0xf]
        %v1843 = vld [vmem:[#allocation3 + $0x38] sm:$0xf]
        %v1844 = vld [vmem:[#allocation3 + $0x3c] sm:$0xf]
        %v1845 = vld [vmem:[%s6] sm:$0xff]
        %vm1846 = vcmask 15360
        %v1848 = vsel %vm1846, %v1150, 0
        %v1851 = vsel %vm1846, %v1475, 0
        %1853 = vmatprep.subr.bf16.mxu0 0
        %1854 = vmatpush1.bf16.xpose.msra.mxu0 0
        %1855 = vmatprep.subr.bf16.mxu0 0
        %1856 = vmatpush1.bf16.xpose.msra.mxu0 0
        %1857 = vmatprep.subr.bf16.mxu0 0
        %1858 = vmatpush1.bf16.xpose.msra.mxu0 0
        %1859 = vmatprep.subr.bf16.mxu0 0
        %1860 = vmatpush1.bf16.xpose.msra.mxu0 0
        %1861 = vmatprep.subr.bf16.mxu0 0
        %1862 = vmatpush1.bf16.xpose.msra.mxu0 0
        %1863 = vmatprep.subr.bf16.mxu0 0
        %1864 = vmatpush1.bf16.xpose.msra.mxu0 0
        %1865 = vmatprep.subr.bf16.mxu0 0
        %1866 = vmatpush1.bf16.xpose.msra.mxu0 0
        %1867 = vmatprep.subr.bf16.mxu0 0
        %1868 = vmatpush1.bf16.xpose.msra.mxu0 %v1851
        %1869 = vmatprep.subr.bf16.mxu0 0
        %1870 = vmatpush2.bf16.xpose.msra.mxu0 0
        %1871 = vmatprep.subr.bf16.mxu0 0
        %1872 = vmatpush2.bf16.xpose.msra.mxu0 0
        %1873 = vmatprep.subr.bf16.mxu0 0
        %1874 = vmatpush2.bf16.xpose.msra.mxu0 0
        %1875 = vmatprep.subr.bf16.mxu0 0
        %1876 = vmatpush2.bf16.xpose.msra.mxu0 0
        %1877 = vmatprep.subr.bf16.mxu0 0
        %1878 = vmatpush2.bf16.xpose.msra.mxu0 0
        %1879 = vmatprep.subr.bf16.mxu0 0
        %1880 = vmatpush2.bf16.xpose.msra.mxu0 0
        %1881 = vmatprep.subr.bf16.mxu0 0
        %1882 = vmatpush2.bf16.xpose.msra.mxu0 0
        %1883 = vmatprep.subr.bf16.mxu0 0
        %1884 = vmatpush2.bf16.xpose.msra.mxu0 0
        %1885 = vmatprep.mubr.bf16.mxu0 0
        %1886 = vmatmul.mubr.bf16.gmra.mxu0 %v1848
        %v1887 = vpop.f32.mrf.mxu0
        %v1888 = vadd.f32 %v1845, %v1887
        %v1889 = vpop.f32.mrf.mxu0
        %v1890 = vpop.f32.mrf.mxu0
        %v1891 = vpop.f32.mrf.mxu0
        %1892 = vdwg.mxu0
        %v1894 = vsel %vm1846, %v1151, 0
        %v1897 = vsel %vm1846, %v1476, 0
        %1899 = vmatprep.subr.bf16.mxu0 0
        %1900 = vmatpush1.bf16.xpose.msra.mxu0 0
        %1901 = vmatprep.subr.bf16.mxu0 0
        %1902 = vmatpush1.bf16.xpose.msra.mxu0 0
        %1903 = vmatprep.subr.bf16.mxu0 0
        %1904 = vmatpush1.bf16.xpose.msra.mxu0 0
        %1905 = vmatprep.subr.bf16.mxu0 0
        %1906 = vmatpush1.bf16.xpose.msra.mxu0 0
        %1907 = vmatprep.subr.bf16.mxu0 0
        %1908 = vmatpush1.bf16.xpose.msra.mxu0 0
        %1909 = vmatprep.subr.bf16.mxu0 0
        %1910 = vmatpush1.bf16.xpose.msra.mxu0 0
        %1911 = vmatprep.subr.bf16.mxu0 0
        %1912 = vmatpush1.bf16.xpose.msra.mxu0 0
        %1913 = vmatprep.subr.bf16.mxu0 0
        %1914 = vmatpush1.bf16.xpose.msra.mxu0 %v1897
        %1915 = vmatprep.subr.bf16.mxu0 0
        %1916 = vmatpush2.bf16.xpose.msra.mxu0 0
        %1917 = vmatprep.subr.bf16.mxu0 0
        %1918 = vmatpush2.bf16.xpose.msra.mxu0 0
        %1919 = vmatprep.subr.bf16.mxu0 0
        %1920 = vmatpush2.bf16.xpose.msra.mxu0 0
        %1921 = vmatprep.subr.bf16.mxu0 0
        %1922 = vmatpush2.bf16.xpose.msra.mxu0 0
        %1923 = vmatprep.subr.bf16.mxu0 0
        %1924 = vmatpush2.bf16.xpose.msra.mxu0 0
        %1925 = vmatprep.subr.bf16.mxu0 0
        %1926 = vmatpush2.bf16.xpose.msra.mxu0 0
        %1927 = vmatprep.subr.bf16.mxu0 0
        %1928 = vmatpush2.bf16.xpose.msra.mxu0 0
        %1929 = vmatprep.subr.bf16.mxu0 0
        %1930 = vmatpush2.bf16.xpose.msra.mxu0 0
        %1931 = vmatprep.mubr.bf16.mxu0 0
        %1932 = vmatmul.mubr.bf16.gmra.mxu0 %v1894
        %v1933 = vpop.f32.mrf.mxu0
        %v1934 = vadd.f32 %v1845, %v1933
        %v1935 = vpop.f32.mrf.mxu0
        %v1936 = vpop.f32.mrf.mxu0
        %v1937 = vpop.f32.mrf.mxu0
        %1938 = vdwg.mxu0
        %v1940 = vsel %vm1846, %v1152, 0
        %v1943 = vsel %vm1846, %v1477, 0
        %1945 = vmatprep.subr.bf16.mxu0 0
        %1946 = vmatpush1.bf16.xpose.msra.mxu0 0
        %1947 = vmatprep.subr.bf16.mxu0 0
        %1948 = vmatpush1.bf16.xpose.msra.mxu0 0
        %1949 = vmatprep.subr.bf16.mxu0 0
        %1950 = vmatpush1.bf16.xpose.msra.mxu0 0
        %1951 = vmatprep.subr.bf16.mxu0 0
        %1952 = vmatpush1.bf16.xpose.msra.mxu0 0
        %1953 = vmatprep.subr.bf16.mxu0 0
        %1954 = vmatpush1.bf16.xpose.msra.mxu0 0
        %1955 = vmatprep.subr.bf16.mxu0 0
        %1956 = vmatpush1.bf16.xpose.msra.mxu0 0
        %1957 = vmatprep.subr.bf16.mxu0 0
        %1958 = vmatpush1.bf16.xpose.msra.mxu0 0
        %1959 = vmatprep.subr.bf16.mxu0 0
        %1960 = vmatpush1.bf16.xpose.msra.mxu0 %v1943
        %1961 = vmatprep.subr.bf16.mxu0 0
        %1962 = vmatpush2.bf16.xpose.msra.mxu0 0
        %1963 = vmatprep.subr.bf16.mxu0 0
        %1964 = vmatpush2.bf16.xpose.msra.mxu0 0
        %1965 = vmatprep.subr.bf16.mxu0 0
        %1966 = vmatpush2.bf16.xpose.msra.mxu0 0
        %1967 = vmatprep.subr.bf16.mxu0 0
        %1968 = vmatpush2.bf16.xpose.msra.mxu0 0
        %1969 = vmatprep.subr.bf16.mxu0 0
        %1970 = vmatpush2.bf16.xpose.msra.mxu0 0
        %1971 = vmatprep.subr.bf16.mxu0 0
        %1972 = vmatpush2.bf16.xpose.msra.mxu0 0
        %1973 = vmatprep.subr.bf16.mxu0 0
        %1974 = vmatpush2.bf16.xpose.msra.mxu0 0
        %1975 = vmatprep.subr.bf16.mxu0 0
        %1976 = vmatpush2.bf16.xpose.msra.mxu0 0
        %1977 = vmatprep.mubr.bf16.mxu0 0
        %1978 = vmatmul.mubr.bf16.gmra.mxu0 %v1940
        %v1979 = vpop.f32.mrf.mxu0
        %v1980 = vadd.f32 %v1845, %v1979
        %v1981 = vpop.f32.mrf.mxu0
        %v1982 = vpop.f32.mrf.mxu0
        %v1983 = vpop.f32.mrf.mxu0
        %1984 = vdwg.mxu0
        %v1986 = vsel %vm1846, %v1153, 0
        %v1989 = vsel %vm1846, %v1478, 0
        %1991 = vmatprep.subr.bf16.mxu0 0
        %1992 = vmatpush1.bf16.xpose.msra.mxu0 0
        %1993 = vmatprep.subr.bf16.mxu0 0
        %1994 = vmatpush1.bf16.xpose.msra.mxu0 0
        %1995 = vmatprep.subr.bf16.mxu0 0
        %1996 = vmatpush1.bf16.xpose.msra.mxu0 0
        %1997 = vmatprep.subr.bf16.mxu0 0
        %1998 = vmatpush1.bf16.xpose.msra.mxu0 0
        %1999 = vmatprep.subr.bf16.mxu0 0
        %2000 = vmatpush1.bf16.xpose.msra.mxu0 0
        %2001 = vmatprep.subr.bf16.mxu0 0
        %2002 = vmatpush1.bf16.xpose.msra.mxu0 0
        %2003 = vmatprep.subr.bf16.mxu0 0
        %2004 = vmatpush1.bf16.xpose.msra.mxu0 0
        %2005 = vmatprep.subr.bf16.mxu0 0
        %2006 = vmatpush1.bf16.xpose.msra.mxu0 %v1989
        %2007 = vmatprep.subr.bf16.mxu0 0
        %2008 = vmatpush2.bf16.xpose.msra.mxu0 0
        %2009 = vmatprep.subr.bf16.mxu0 0
        %2010 = vmatpush2.bf16.xpose.msra.mxu0 0
        %2011 = vmatprep.subr.bf16.mxu0 0
        %2012 = vmatpush2.bf16.xpose.msra.mxu0 0
        %2013 = vmatprep.subr.bf16.mxu0 0
        %2014 = vmatpush2.bf16.xpose.msra.mxu0 0
        %2015 = vmatprep.subr.bf16.mxu0 0
        %2016 = vmatpush2.bf16.xpose.msra.mxu0 0
        %2017 = vmatprep.subr.bf16.mxu0 0
        %2018 = vmatpush2.bf16.xpose.msra.mxu0 0
        %2019 = vmatprep.subr.bf16.mxu0 0
        %2020 = vmatpush2.bf16.xpose.msra.mxu0 0
        %2021 = vmatprep.subr.bf16.mxu0 0
        %2022 = vmatpush2.bf16.xpose.msra.mxu0 0
        %2023 = vmatprep.mubr.bf16.mxu0 0
        %2024 = vmatmul.mubr.bf16.gmra.mxu0 %v1986
        %v2025 = vpop.f32.mrf.mxu0
        %v2026 = vadd.f32 %v1845, %v2025
        %v2027 = vpop.f32.mrf.mxu0
        %v2028 = vpop.f32.mrf.mxu0
        %v2029 = vpop.f32.mrf.mxu0
        %2030 = vdwg.mxu0
        %v2032 = vsel %vm1846, %v1154, 0
        %v2035 = vsel %vm1846, %v1479, 0
        %2037 = vmatprep.subr.bf16.mxu0 0
        %2038 = vmatpush1.bf16.xpose.msra.mxu0 0
        %2039 = vmatprep.subr.bf16.mxu0 0
        %2040 = vmatpush1.bf16.xpose.msra.mxu0 0
        %2041 = vmatprep.subr.bf16.mxu0 0
        %2042 = vmatpush1.bf16.xpose.msra.mxu0 0
        %2043 = vmatprep.subr.bf16.mxu0 0
        %2044 = vmatpush1.bf16.xpose.msra.mxu0 0
        %2045 = vmatprep.subr.bf16.mxu0 0
        %2046 = vmatpush1.bf16.xpose.msra.mxu0 0
        %2047 = vmatprep.subr.bf16.mxu0 0
        %2048 = vmatpush1.bf16.xpose.msra.mxu0 0
        %2049 = vmatprep.subr.bf16.mxu0 0
        %2050 = vmatpush1.bf16.xpose.msra.mxu0 0
        %2051 = vmatprep.subr.bf16.mxu0 0
        %2052 = vmatpush1.bf16.xpose.msra.mxu0 %v2035
        %2053 = vmatprep.subr.bf16.mxu0 0
        %2054 = vmatpush2.bf16.xpose.msra.mxu0 0
        %2055 = vmatprep.subr.bf16.mxu0 0
        %2056 = vmatpush2.bf16.xpose.msra.mxu0 0
        %2057 = vmatprep.subr.bf16.mxu0 0
        %2058 = vmatpush2.bf16.xpose.msra.mxu0 0
        %2059 = vmatprep.subr.bf16.mxu0 0
        %2060 = vmatpush2.bf16.xpose.msra.mxu0 0
        %2061 = vmatprep.subr.bf16.mxu0 0
        %2062 = vmatpush2.bf16.xpose.msra.mxu0 0
        %2063 = vmatprep.subr.bf16.mxu0 0
        %2064 = vmatpush2.bf16.xpose.msra.mxu0 0
        %2065 = vmatprep.subr.bf16.mxu0 0
        %2066 = vmatpush2.bf16.xpose.msra.mxu0 0
        %2067 = vmatprep.subr.bf16.mxu0 0
        %2068 = vmatpush2.bf16.xpose.msra.mxu0 0
        %2069 = vmatprep.mubr.bf16.mxu0 0
        %2070 = vmatmul.mubr.bf16.gmra.mxu0 %v2032
        %v2071 = vpop.f32.mrf.mxu0
        %v2072 = vadd.f32 %v1845, %v2071
        %v2073 = vpop.f32.mrf.mxu0
        %v2074 = vpop.f32.mrf.mxu0
        %v2075 = vpop.f32.mrf.mxu0
        %2076 = vdwg.mxu0
        %v2078 = vsel %vm1846, %v1155, 0
        %v2081 = vsel %vm1846, %v1480, 0
        %2083 = vmatprep.subr.bf16.mxu0 0
        %2084 = vmatpush1.bf16.xpose.msra.mxu0 0
        %2085 = vmatprep.subr.bf16.mxu0 0
        %2086 = vmatpush1.bf16.xpose.msra.mxu0 0
        %2087 = vmatprep.subr.bf16.mxu0 0
        %2088 = vmatpush1.bf16.xpose.msra.mxu0 0
        %2089 = vmatprep.subr.bf16.mxu0 0
        %2090 = vmatpush1.bf16.xpose.msra.mxu0 0
        %2091 = vmatprep.subr.bf16.mxu0 0
        %2092 = vmatpush1.bf16.xpose.msra.mxu0 0
        %2093 = vmatprep.subr.bf16.mxu0 0
        %2094 = vmatpush1.bf16.xpose.msra.mxu0 0
        %2095 = vmatprep.subr.bf16.mxu0 0
        %2096 = vmatpush1.bf16.xpose.msra.mxu0 0
        %2097 = vmatprep.subr.bf16.mxu0 0
        %2098 = vmatpush1.bf16.xpose.msra.mxu0 %v2081
        %2099 = vmatprep.subr.bf16.mxu0 0
        %2100 = vmatpush2.bf16.xpose.msra.mxu0 0
        %2101 = vmatprep.subr.bf16.mxu0 0
        %2102 = vmatpush2.bf16.xpose.msra.mxu0 0
        %2103 = vmatprep.subr.bf16.mxu0 0
        %2104 = vmatpush2.bf16.xpose.msra.mxu0 0
        %2105 = vmatprep.subr.bf16.mxu0 0
        %2106 = vmatpush2.bf16.xpose.msra.mxu0 0
        %2107 = vmatprep.subr.bf16.mxu0 0
        %2108 = vmatpush2.bf16.xpose.msra.mxu0 0
        %2109 = vmatprep.subr.bf16.mxu0 0
        %2110 = vmatpush2.bf16.xpose.msra.mxu0 0
        %2111 = vmatprep.subr.bf16.mxu0 0
        %2112 = vmatpush2.bf16.xpose.msra.mxu0 0
        %2113 = vmatprep.subr.bf16.mxu0 0
        %2114 = vmatpush2.bf16.xpose.msra.mxu0 0
        %2115 = vmatprep.mubr.bf16.mxu0 0
        %2116 = vmatmul.mubr.bf16.gmra.mxu0 %v2078
        %v2117 = vpop.f32.mrf.mxu0
        %v2118 = vadd.f32 %v1845, %v2117
        %v2119 = vpop.f32.mrf.mxu0
        %v2120 = vpop.f32.mrf.mxu0
        %v2121 = vpop.f32.mrf.mxu0
        %2122 = vdwg.mxu0
        %v2124 = vsel %vm1846, %v1156, 0
        %v2127 = vsel %vm1846, %v1481, 0
        %2129 = vmatprep.subr.bf16.mxu0 0
        %2130 = vmatpush1.bf16.xpose.msra.mxu0 0
        %2131 = vmatprep.subr.bf16.mxu0 0
        %2132 = vmatpush1.bf16.xpose.msra.mxu0 0
        %2133 = vmatprep.subr.bf16.mxu0 0
        %2134 = vmatpush1.bf16.xpose.msra.mxu0 0
        %2135 = vmatprep.subr.bf16.mxu0 0
        %2136 = vmatpush1.bf16.xpose.msra.mxu0 0
        %2137 = vmatprep.subr.bf16.mxu0 0
        %2138 = vmatpush1.bf16.xpose.msra.mxu0 0
        %2139 = vmatprep.subr.bf16.mxu0 0
        %2140 = vmatpush1.bf16.xpose.msra.mxu0 0
        %2141 = vmatprep.subr.bf16.mxu0 0
        %2142 = vmatpush1.bf16.xpose.msra.mxu0 0
        %2143 = vmatprep.subr.bf16.mxu0 0
        %2144 = vmatpush1.bf16.xpose.msra.mxu0 %v2127
        %2145 = vmatprep.subr.bf16.mxu0 0
        %2146 = vmatpush2.bf16.xpose.msra.mxu0 0
        %2147 = vmatprep.subr.bf16.mxu0 0
        %2148 = vmatpush2.bf16.xpose.msra.mxu0 0
        %2149 = vmatprep.subr.bf16.mxu0 0
        %2150 = vmatpush2.bf16.xpose.msra.mxu0 0
        %2151 = vmatprep.subr.bf16.mxu0 0
        %2152 = vmatpush2.bf16.xpose.msra.mxu0 0
        %2153 = vmatprep.subr.bf16.mxu0 0
        %2154 = vmatpush2.bf16.xpose.msra.mxu0 0
        %2155 = vmatprep.subr.bf16.mxu0 0
        %2156 = vmatpush2.bf16.xpose.msra.mxu0 0
        %2157 = vmatprep.subr.bf16.mxu0 0
        %2158 = vmatpush2.bf16.xpose.msra.mxu0 0
        %2159 = vmatprep.subr.bf16.mxu0 0
        %2160 = vmatpush2.bf16.xpose.msra.mxu0 0
        %2161 = vmatprep.mubr.bf16.mxu0 0
        %2162 = vmatmul.mubr.bf16.gmra.mxu0 %v2124
        %v2163 = vpop.f32.mrf.mxu0
        %v2164 = vadd.f32 %v1845, %v2163
        %v2165 = vpop.f32.mrf.mxu0
        %v2166 = vpop.f32.mrf.mxu0
        %v2167 = vpop.f32.mrf.mxu0
        %2168 = vdwg.mxu0
        %v2170 = vsel %vm1846, %v1157, 0
        %v2173 = vsel %vm1846, %v1482, 0
        %2175 = vmatprep.subr.bf16.mxu0 0
        %2176 = vmatpush1.bf16.xpose.msra.mxu0 0
        %2177 = vmatprep.subr.bf16.mxu0 0
        %2178 = vmatpush1.bf16.xpose.msra.mxu0 0
        %2179 = vmatprep.subr.bf16.mxu0 0
        %2180 = vmatpush1.bf16.xpose.msra.mxu0 0
        %2181 = vmatprep.subr.bf16.mxu0 0
        %2182 = vmatpush1.bf16.xpose.msra.mxu0 0
        %2183 = vmatprep.subr.bf16.mxu0 0
        %2184 = vmatpush1.bf16.xpose.msra.mxu0 0
        %2185 = vmatprep.subr.bf16.mxu0 0
        %2186 = vmatpush1.bf16.xpose.msra.mxu0 0
        %2187 = vmatprep.subr.bf16.mxu0 0
        %2188 = vmatpush1.bf16.xpose.msra.mxu0 0
        %2189 = vmatprep.subr.bf16.mxu0 0
        %2190 = vmatpush1.bf16.xpose.msra.mxu0 %v2173
        %2191 = vmatprep.subr.bf16.mxu0 0
        %2192 = vmatpush2.bf16.xpose.msra.mxu0 0
        %2193 = vmatprep.subr.bf16.mxu0 0
        %2194 = vmatpush2.bf16.xpose.msra.mxu0 0
        %2195 = vmatprep.subr.bf16.mxu0 0
        %2196 = vmatpush2.bf16.xpose.msra.mxu0 0
        %2197 = vmatprep.subr.bf16.mxu0 0
        %2198 = vmatpush2.bf16.xpose.msra.mxu0 0
        %2199 = vmatprep.subr.bf16.mxu0 0
        %2200 = vmatpush2.bf16.xpose.msra.mxu0 0
        %2201 = vmatprep.subr.bf16.mxu0 0
        %2202 = vmatpush2.bf16.xpose.msra.mxu0 0
        %2203 = vmatprep.subr.bf16.mxu0 0
        %2204 = vmatpush2.bf16.xpose.msra.mxu0 0
        %2205 = vmatprep.subr.bf16.mxu0 0
        %2206 = vmatpush2.bf16.xpose.msra.mxu0 0
        %2207 = vmatprep.mubr.bf16.mxu0 0
        %2208 = vmatmul.mubr.bf16.gmra.mxu0 %v2170
        %v2209 = vpop.f32.mrf.mxu0
        %v2210 = vadd.f32 %v1845, %v2209
        %v2211 = vpop.f32.mrf.mxu0
        %v2212 = vpop.f32.mrf.mxu0
        %v2213 = vpop.f32.mrf.mxu0
        %2214 = vdwg.mxu0
        %v2216 = vsel %vm1846, %v1158, 0
        %v2219 = vsel %vm1846, %v1483, 0
        %2221 = vmatprep.subr.bf16.mxu0 0
        %2222 = vmatpush1.bf16.xpose.msra.mxu0 0
        %2223 = vmatprep.subr.bf16.mxu0 0
        %2224 = vmatpush1.bf16.xpose.msra.mxu0 0
        %2225 = vmatprep.subr.bf16.mxu0 0
        %2226 = vmatpush1.bf16.xpose.msra.mxu0 0
        %2227 = vmatprep.subr.bf16.mxu0 0
        %2228 = vmatpush1.bf16.xpose.msra.mxu0 0
        %2229 = vmatprep.subr.bf16.mxu0 0
        %2230 = vmatpush1.bf16.xpose.msra.mxu0 0
        %2231 = vmatprep.subr.bf16.mxu0 0
        %2232 = vmatpush1.bf16.xpose.msra.mxu0 0
        %2233 = vmatprep.subr.bf16.mxu0 0
        %2234 = vmatpush1.bf16.xpose.msra.mxu0 0
        %2235 = vmatprep.subr.bf16.mxu0 0
        %2236 = vmatpush1.bf16.xpose.msra.mxu0 %v2219
        %2237 = vmatprep.subr.bf16.mxu0 0
        %2238 = vmatpush2.bf16.xpose.msra.mxu0 0
        %2239 = vmatprep.subr.bf16.mxu0 0
        %2240 = vmatpush2.bf16.xpose.msra.mxu0 0
        %2241 = vmatprep.subr.bf16.mxu0 0
        %2242 = vmatpush2.bf16.xpose.msra.mxu0 0
        %2243 = vmatprep.subr.bf16.mxu0 0
        %2244 = vmatpush2.bf16.xpose.msra.mxu0 0
        %2245 = vmatprep.subr.bf16.mxu0 0
        %2246 = vmatpush2.bf16.xpose.msra.mxu0 0
        %2247 = vmatprep.subr.bf16.mxu0 0
        %2248 = vmatpush2.bf16.xpose.msra.mxu0 0
        %2249 = vmatprep.subr.bf16.mxu0 0
        %2250 = vmatpush2.bf16.xpose.msra.mxu0 0
        %2251 = vmatprep.subr.bf16.mxu0 0
        %2252 = vmatpush2.bf16.xpose.msra.mxu0 0
        %2253 = vmatprep.mubr.bf16.mxu0 0
        %2254 = vmatmul.mubr.bf16.gmra.mxu0 %v2216
        %v2255 = vpop.f32.mrf.mxu0
        %v2256 = vadd.f32 %v1845, %v2255
        %v2257 = vpop.f32.mrf.mxu0
        %v2258 = vpop.f32.mrf.mxu0
        %v2259 = vpop.f32.mrf.mxu0
        %2260 = vdwg.mxu0
        %v2262 = vsel %vm1846, %v1159, 0
        %v2265 = vsel %vm1846, %v1484, 0
        %2267 = vmatprep.subr.bf16.mxu0 0
        %2268 = vmatpush1.bf16.xpose.msra.mxu0 0
        %2269 = vmatprep.subr.bf16.mxu0 0
        %2270 = vmatpush1.bf16.xpose.msra.mxu0 0
        %2271 = vmatprep.subr.bf16.mxu0 0
        %2272 = vmatpush1.bf16.xpose.msra.mxu0 0
        %2273 = vmatprep.subr.bf16.mxu0 0
        %2274 = vmatpush1.bf16.xpose.msra.mxu0 0
        %2275 = vmatprep.subr.bf16.mxu0 0
        %2276 = vmatpush1.bf16.xpose.msra.mxu0 0
        %2277 = vmatprep.subr.bf16.mxu0 0
        %2278 = vmatpush1.bf16.xpose.msra.mxu0 0
        %2279 = vmatprep.subr.bf16.mxu0 0
        %2280 = vmatpush1.bf16.xpose.msra.mxu0 0
        %2281 = vmatprep.subr.bf16.mxu0 0
        %2282 = vmatpush1.bf16.xpose.msra.mxu0 %v2265
        %2283 = vmatprep.subr.bf16.mxu0 0
        %2284 = vmatpush2.bf16.xpose.msra.mxu0 0
        %2285 = vmatprep.subr.bf16.mxu0 0
        %2286 = vmatpush2.bf16.xpose.msra.mxu0 0
        %2287 = vmatprep.subr.bf16.mxu0 0
        %2288 = vmatpush2.bf16.xpose.msra.mxu0 0
        %2289 = vmatprep.subr.bf16.mxu0 0
        %2290 = vmatpush2.bf16.xpose.msra.mxu0 0
        %2291 = vmatprep.subr.bf16.mxu0 0
        %2292 = vmatpush2.bf16.xpose.msra.mxu0 0
        %2293 = vmatprep.subr.bf16.mxu0 0
        %2294 = vmatpush2.bf16.xpose.msra.mxu0 0
        %2295 = vmatprep.subr.bf16.mxu0 0
        %2296 = vmatpush2.bf16.xpose.msra.mxu0 0
        %2297 = vmatprep.subr.bf16.mxu0 0
        %2298 = vmatpush2.bf16.xpose.msra.mxu0 0
        %2299 = vmatprep.mubr.bf16.mxu0 0
        %2300 = vmatmul.mubr.bf16.gmra.mxu0 %v2262
        %v2301 = vpop.f32.mrf.mxu0
        %v2302 = vadd.f32 %v1845, %v2301
        %v2303 = vpop.f32.mrf.mxu0
        %v2304 = vpop.f32.mrf.mxu0
        %v2305 = vpop.f32.mrf.mxu0
        %2306 = vdwg.mxu0
        %v2308 = vsel %vm1846, %v1160, 0
        %v2311 = vsel %vm1846, %v1485, 0
        %2313 = vmatprep.subr.bf16.mxu0 0
        %2314 = vmatpush1.bf16.xpose.msra.mxu0 0
        %2315 = vmatprep.subr.bf16.mxu0 0
        %2316 = vmatpush1.bf16.xpose.msra.mxu0 0
        %2317 = vmatprep.subr.bf16.mxu0 0
        %2318 = vmatpush1.bf16.xpose.msra.mxu0 0
        %2319 = vmatprep.subr.bf16.mxu0 0
        %2320 = vmatpush1.bf16.xpose.msra.mxu0 0
        %2321 = vmatprep.subr.bf16.mxu0 0
        %2322 = vmatpush1.bf16.xpose.msra.mxu0 0
        %2323 = vmatprep.subr.bf16.mxu0 0
        %2324 = vmatpush1.bf16.xpose.msra.mxu0 0
        %2325 = vmatprep.subr.bf16.mxu0 0
        %2326 = vmatpush1.bf16.xpose.msra.mxu0 0
        %2327 = vmatprep.subr.bf16.mxu0 0
        %2328 = vmatpush1.bf16.xpose.msra.mxu0 %v2311
        %2329 = vmatprep.subr.bf16.mxu0 0
        %2330 = vmatpush2.bf16.xpose.msra.mxu0 0
        %2331 = vmatprep.subr.bf16.mxu0 0
        %2332 = vmatpush2.bf16.xpose.msra.mxu0 0
        %2333 = vmatprep.subr.bf16.mxu0 0
        %2334 = vmatpush2.bf16.xpose.msra.mxu0 0
        %2335 = vmatprep.subr.bf16.mxu0 0
        %2336 = vmatpush2.bf16.xpose.msra.mxu0 0
        %2337 = vmatprep.subr.bf16.mxu0 0
        %2338 = vmatpush2.bf16.xpose.msra.mxu0 0
        %2339 = vmatprep.subr.bf16.mxu0 0
        %2340 = vmatpush2.bf16.xpose.msra.mxu0 0
        %2341 = vmatprep.subr.bf16.mxu0 0
        %2342 = vmatpush2.bf16.xpose.msra.mxu0 0
        %2343 = vmatprep.subr.bf16.mxu0 0
        %2344 = vmatpush2.bf16.xpose.msra.mxu0 0
        %2345 = vmatprep.mubr.bf16.mxu0 0
        %2346 = vmatmul.mubr.bf16.gmra.mxu0 %v2308
        %v2347 = vpop.f32.mrf.mxu0
        %v2348 = vadd.f32 %v1845, %v2347
        %v2349 = vpop.f32.mrf.mxu0
        %v2350 = vpop.f32.mrf.mxu0
        %v2351 = vpop.f32.mrf.mxu0
        %2352 = vdwg.mxu0
        %v2354 = vsel %vm1846, %v1161, 0
        %v2357 = vsel %vm1846, %v1486, 0
        %2359 = vmatprep.subr.bf16.mxu0 0
        %2360 = vmatpush1.bf16.xpose.msra.mxu0 0
        %2361 = vmatprep.subr.bf16.mxu0 0
        %2362 = vmatpush1.bf16.xpose.msra.mxu0 0
        %2363 = vmatprep.subr.bf16.mxu0 0
        %2364 = vmatpush1.bf16.xpose.msra.mxu0 0
        %2365 = vmatprep.subr.bf16.mxu0 0
        %2366 = vmatpush1.bf16.xpose.msra.mxu0 0
        %2367 = vmatprep.subr.bf16.mxu0 0
        %2368 = vmatpush1.bf16.xpose.msra.mxu0 0
        %2369 = vmatprep.subr.bf16.mxu0 0
        %2370 = vmatpush1.bf16.xpose.msra.mxu0 0
        %2371 = vmatprep.subr.bf16.mxu0 0
        %2372 = vmatpush1.bf16.xpose.msra.mxu0 0
        %2373 = vmatprep.subr.bf16.mxu0 0
        %2374 = vmatpush1.bf16.xpose.msra.mxu0 %v2357
        %2375 = vmatprep.subr.bf16.mxu0 0
        %2376 = vmatpush2.bf16.xpose.msra.mxu0 0
        %2377 = vmatprep.subr.bf16.mxu0 0
        %2378 = vmatpush2.bf16.xpose.msra.mxu0 0
        %2379 = vmatprep.subr.bf16.mxu0 0
        %2380 = vmatpush2.bf16.xpose.msra.mxu0 0
        %2381 = vmatprep.subr.bf16.mxu0 0
        %2382 = vmatpush2.bf16.xpose.msra.mxu0 0
        %2383 = vmatprep.subr.bf16.mxu0 0
        %2384 = vmatpush2.bf16.xpose.msra.mxu0 0
        %2385 = vmatprep.subr.bf16.mxu0 0
        %2386 = vmatpush2.bf16.xpose.msra.mxu0 0
        %2387 = vmatprep.subr.bf16.mxu0 0
        %2388 = vmatpush2.bf16.xpose.msra.mxu0 0
        %2389 = vmatprep.subr.bf16.mxu0 0
        %2390 = vmatpush2.bf16.xpose.msra.mxu0 0
        %2391 = vmatprep.mubr.bf16.mxu0 0
        %2392 = vmatmul.mubr.bf16.gmra.mxu0 %v2354
        %v2393 = vpop.f32.mrf.mxu0
        %v2394 = vadd.f32 %v1845, %v2393
        %v2395 = vpop.f32.mrf.mxu0
        %v2396 = vpop.f32.mrf.mxu0
        %v2397 = vpop.f32.mrf.mxu0
        %2398 = vdwg.mxu0
        %v2400 = vsel %vm1846, %v1162, 0
        %v2403 = vsel %vm1846, %v1487, 0
        %2405 = vmatprep.subr.bf16.mxu0 0
        %2406 = vmatpush1.bf16.xpose.msra.mxu0 0
        %2407 = vmatprep.subr.bf16.mxu0 0
        %2408 = vmatpush1.bf16.xpose.msra.mxu0 0
        %2409 = vmatprep.subr.bf16.mxu0 0
        %2410 = vmatpush1.bf16.xpose.msra.mxu0 0
        %2411 = vmatprep.subr.bf16.mxu0 0
        %2412 = vmatpush1.bf16.xpose.msra.mxu0 0
        %2413 = vmatprep.subr.bf16.mxu0 0
        %2414 = vmatpush1.bf16.xpose.msra.mxu0 0
        %2415 = vmatprep.subr.bf16.mxu0 0
        %2416 = vmatpush1.bf16.xpose.msra.mxu0 0
        %2417 = vmatprep.subr.bf16.mxu0 0
        %2418 = vmatpush1.bf16.xpose.msra.mxu0 0
        %2419 = vmatprep.subr.bf16.mxu0 0
        %2420 = vmatpush1.bf16.xpose.msra.mxu0 %v2403
        %2421 = vmatprep.subr.bf16.mxu0 0
        %2422 = vmatpush2.bf16.xpose.msra.mxu0 0
        %2423 = vmatprep.subr.bf16.mxu0 0
        %2424 = vmatpush2.bf16.xpose.msra.mxu0 0
        %2425 = vmatprep.subr.bf16.mxu0 0
        %2426 = vmatpush2.bf16.xpose.msra.mxu0 0
        %2427 = vmatprep.subr.bf16.mxu0 0
        %2428 = vmatpush2.bf16.xpose.msra.mxu0 0
        %2429 = vmatprep.subr.bf16.mxu0 0
        %2430 = vmatpush2.bf16.xpose.msra.mxu0 0
        %2431 = vmatprep.subr.bf16.mxu0 0
        %2432 = vmatpush2.bf16.xpose.msra.mxu0 0
        %2433 = vmatprep.subr.bf16.mxu0 0
        %2434 = vmatpush2.bf16.xpose.msra.mxu0 0
        %2435 = vmatprep.subr.bf16.mxu0 0
        %2436 = vmatpush2.bf16.xpose.msra.mxu0 0
        %2437 = vmatprep.mubr.bf16.mxu0 0
        %2438 = vmatmul.mubr.bf16.gmra.mxu0 %v2400
        %v2439 = vpop.f32.mrf.mxu0
        %v2440 = vadd.f32 %v1845, %v2439
        %v2441 = vpop.f32.mrf.mxu0
        %v2442 = vpop.f32.mrf.mxu0
        %v2443 = vpop.f32.mrf.mxu0
        %2444 = vdwg.mxu0
        %v2446 = vsel %vm1846, %v1163, 0
        %v2449 = vsel %vm1846, %v1488, 0
        %2451 = vmatprep.subr.bf16.mxu0 0
        %2452 = vmatpush1.bf16.xpose.msra.mxu0 0
        %2453 = vmatprep.subr.bf16.mxu0 0
        %2454 = vmatpush1.bf16.xpose.msra.mxu0 0
        %2455 = vmatprep.subr.bf16.mxu0 0
        %2456 = vmatpush1.bf16.xpose.msra.mxu0 0
        %2457 = vmatprep.subr.bf16.mxu0 0
        %2458 = vmatpush1.bf16.xpose.msra.mxu0 0
        %2459 = vmatprep.subr.bf16.mxu0 0
        %2460 = vmatpush1.bf16.xpose.msra.mxu0 0
        %2461 = vmatprep.subr.bf16.mxu0 0
        %2462 = vmatpush1.bf16.xpose.msra.mxu0 0
        %2463 = vmatprep.subr.bf16.mxu0 0
        %2464 = vmatpush1.bf16.xpose.msra.mxu0 0
        %2465 = vmatprep.subr.bf16.mxu0 0
        %2466 = vmatpush1.bf16.xpose.msra.mxu0 %v2449
        %2467 = vmatprep.subr.bf16.mxu0 0
        %2468 = vmatpush2.bf16.xpose.msra.mxu0 0
        %2469 = vmatprep.subr.bf16.mxu0 0
        %2470 = vmatpush2.bf16.xpose.msra.mxu0 0
        %2471 = vmatprep.subr.bf16.mxu0 0
        %2472 = vmatpush2.bf16.xpose.msra.mxu0 0
        %2473 = vmatprep.subr.bf16.mxu0 0
        %2474 = vmatpush2.bf16.xpose.msra.mxu0 0
        %2475 = vmatprep.subr.bf16.mxu0 0
        %2476 = vmatpush2.bf16.xpose.msra.mxu0 0
        %2477 = vmatprep.subr.bf16.mxu0 0
        %2478 = vmatpush2.bf16.xpose.msra.mxu0 0
        %2479 = vmatprep.subr.bf16.mxu0 0
        %2480 = vmatpush2.bf16.xpose.msra.mxu0 0
        %2481 = vmatprep.subr.bf16.mxu0 0
        %2482 = vmatpush2.bf16.xpose.msra.mxu0 0
        %2483 = vmatprep.mubr.bf16.mxu0 0
        %2484 = vmatmul.mubr.bf16.gmra.mxu0 %v2446
        %v2485 = vpop.f32.mrf.mxu0
        %v2486 = vadd.f32 %v1845, %v2485
        %v2487 = vpop.f32.mrf.mxu0
        %v2488 = vpop.f32.mrf.mxu0
        %v2489 = vpop.f32.mrf.mxu0
        %2490 = vdwg.mxu0
        %v2492 = vsel %vm1846, %v1164, 0
        %v2495 = vsel %vm1846, %v1489, 0
        %2497 = vmatprep.subr.bf16.mxu0 0
        %2498 = vmatpush1.bf16.xpose.msra.mxu0 0
        %2499 = vmatprep.subr.bf16.mxu0 0
        %2500 = vmatpush1.bf16.xpose.msra.mxu0 0
        %2501 = vmatprep.subr.bf16.mxu0 0
        %2502 = vmatpush1.bf16.xpose.msra.mxu0 0
        %2503 = vmatprep.subr.bf16.mxu0 0
        %2504 = vmatpush1.bf16.xpose.msra.mxu0 0
        %2505 = vmatprep.subr.bf16.mxu0 0
        %2506 = vmatpush1.bf16.xpose.msra.mxu0 0
        %2507 = vmatprep.subr.bf16.mxu0 0
        %2508 = vmatpush1.bf16.xpose.msra.mxu0 0
        %2509 = vmatprep.subr.bf16.mxu0 0
        %2510 = vmatpush1.bf16.xpose.msra.mxu0 0
        %2511 = vmatprep.subr.bf16.mxu0 0
        %2512 = vmatpush1.bf16.xpose.msra.mxu0 %v2495
        %2513 = vmatprep.subr.bf16.mxu0 0
        %2514 = vmatpush2.bf16.xpose.msra.mxu0 0
        %2515 = vmatprep.subr.bf16.mxu0 0
        %2516 = vmatpush2.bf16.xpose.msra.mxu0 0
        %2517 = vmatprep.subr.bf16.mxu0 0
        %2518 = vmatpush2.bf16.xpose.msra.mxu0 0
        %2519 = vmatprep.subr.bf16.mxu0 0
        %2520 = vmatpush2.bf16.xpose.msra.mxu0 0
        %2521 = vmatprep.subr.bf16.mxu0 0
        %2522 = vmatpush2.bf16.xpose.msra.mxu0 0
        %2523 = vmatprep.subr.bf16.mxu0 0
        %2524 = vmatpush2.bf16.xpose.msra.mxu0 0
        %2525 = vmatprep.subr.bf16.mxu0 0
        %2526 = vmatpush2.bf16.xpose.msra.mxu0 0
        %2527 = vmatprep.subr.bf16.mxu0 0
        %2528 = vmatpush2.bf16.xpose.msra.mxu0 0
        %2529 = vmatprep.mubr.bf16.mxu0 0
        %2530 = vmatmul.mubr.bf16.gmra.mxu0 %v2492
        %v2531 = vpop.f32.mrf.mxu0
        %v2532 = vadd.f32 %v1845, %v2531
        %v2533 = vpop.f32.mrf.mxu0
        %v2534 = vpop.f32.mrf.mxu0
        %v2535 = vpop.f32.mrf.mxu0
        %2536 = vdwg.mxu0
        %v2538 = vsel %vm1846, %v1165, 0
        %v2541 = vsel %vm1846, %v1490, 0
        %2543 = vmatprep.subr.bf16.mxu0 0
        %2544 = vmatpush1.bf16.xpose.msra.mxu0 0
        %2545 = vmatprep.subr.bf16.mxu0 0
        %2546 = vmatpush1.bf16.xpose.msra.mxu0 0
        %2547 = vmatprep.subr.bf16.mxu0 0
        %2548 = vmatpush1.bf16.xpose.msra.mxu0 0
        %2549 = vmatprep.subr.bf16.mxu0 0
        %2550 = vmatpush1.bf16.xpose.msra.mxu0 0
        %2551 = vmatprep.subr.bf16.mxu0 0
        %2552 = vmatpush1.bf16.xpose.msra.mxu0 0
        %2553 = vmatprep.subr.bf16.mxu0 0
        %2554 = vmatpush1.bf16.xpose.msra.mxu0 0
        %2555 = vmatprep.subr.bf16.mxu0 0
        %2556 = vmatpush1.bf16.xpose.msra.mxu0 0
        %2557 = vmatprep.subr.bf16.mxu0 0
        %2558 = vmatpush1.bf16.xpose.msra.mxu0 %v2541
        %2559 = vmatprep.subr.bf16.mxu0 0
        %2560 = vmatpush2.bf16.xpose.msra.mxu0 0
        %2561 = vmatprep.subr.bf16.mxu0 0
        %2562 = vmatpush2.bf16.xpose.msra.mxu0 0
        %2563 = vmatprep.subr.bf16.mxu0 0
        %2564 = vmatpush2.bf16.xpose.msra.mxu0 0
        %2565 = vmatprep.subr.bf16.mxu0 0
        %2566 = vmatpush2.bf16.xpose.msra.mxu0 0
        %2567 = vmatprep.subr.bf16.mxu0 0
        %2568 = vmatpush2.bf16.xpose.msra.mxu0 0
        %2569 = vmatprep.subr.bf16.mxu0 0
        %2570 = vmatpush2.bf16.xpose.msra.mxu0 0
        %2571 = vmatprep.subr.bf16.mxu0 0
        %2572 = vmatpush2.bf16.xpose.msra.mxu0 0
        %2573 = vmatprep.subr.bf16.mxu0 0
        %2574 = vmatpush2.bf16.xpose.msra.mxu0 0
        %2575 = vmatprep.mubr.bf16.mxu0 0
        %2576 = vmatmul.mubr.bf16.gmra.mxu0 %v2538
        %v2577 = vpop.f32.mrf.mxu0
        %v2578 = vadd.f32 %v1845, %v2577
        %v2579 = vpop.f32.mrf.mxu0
        %v2580 = vpop.f32.mrf.mxu0
        %v2581 = vpop.f32.mrf.mxu0
        %2582 = vdwg.mxu0
        %v2585 = vunpack.c.l.b16 %v1813
        %v2586 = vunpack.c.l.b16 %v1814
        %v2587 = vpack.c.b16 %v2586, %v2585
        %v2589 = vsel %vm1846, %v870, 0
        %v2592 = vsel %vm1846, %v2587, 0
        %2594 = vmatprep.subr.bf16.mxu0 0
        %2595 = vmatpush1.bf16.xpose.msra.mxu0 0
        %2596 = vmatprep.subr.bf16.mxu0 0
        %2597 = vmatpush1.bf16.xpose.msra.mxu0 0
        %2598 = vmatprep.subr.bf16.mxu0 0
        %2599 = vmatpush1.bf16.xpose.msra.mxu0 0
        %2600 = vmatprep.subr.bf16.mxu0 0
        %2601 = vmatpush1.bf16.xpose.msra.mxu0 0
        %2602 = vmatprep.subr.bf16.mxu0 0
        %2603 = vmatpush1.bf16.xpose.msra.mxu0 0
        %2604 = vmatprep.subr.bf16.mxu0 0
        %2605 = vmatpush1.bf16.xpose.msra.mxu0 0
        %2606 = vmatprep.subr.bf16.mxu0 0
        %2607 = vmatpush1.bf16.xpose.msra.mxu0 0
        %2608 = vmatprep.subr.bf16.mxu0 0
        %2609 = vmatpush1.bf16.xpose.msra.mxu0 %v2592
        %2610 = vmatprep.subr.bf16.mxu0 0
        %2611 = vmatpush2.bf16.xpose.msra.mxu0 0
        %2612 = vmatprep.subr.bf16.mxu0 0
        %2613 = vmatpush2.bf16.xpose.msra.mxu0 0
        %2614 = vmatprep.subr.bf16.mxu0 0
        %2615 = vmatpush2.bf16.xpose.msra.mxu0 0
        %2616 = vmatprep.subr.bf16.mxu0 0
        %2617 = vmatpush2.bf16.xpose.msra.mxu0 0
        %2618 = vmatprep.subr.bf16.mxu0 0
        %2619 = vmatpush2.bf16.xpose.msra.mxu0 0
        %2620 = vmatprep.subr.bf16.mxu0 0
        %2621 = vmatpush2.bf16.xpose.msra.mxu0 0
        %2622 = vmatprep.subr.bf16.mxu0 0
        %2623 = vmatpush2.bf16.xpose.msra.mxu0 0
        %2624 = vmatprep.subr.bf16.mxu0 0
        %2625 = vmatpush2.bf16.xpose.msra.mxu0 0
        %2626 = vmatprep.mubr.bf16.mxu0 0
        %2627 = vmatmul.mubr.bf16.gmra.mxu0 %v2589
        %v2628 = vpop.f32.mrf.mxu0
        %v2629 = vadd.f32 0.0, %v2628
        %v2630 = vpop.f32.mrf.mxu0
        %v2631 = vpop.f32.mrf.mxu0
        %v2632 = vadd.f32 0.0, %v2631
        %v2633 = vpop.f32.mrf.mxu0
        %2634 = vdwg.mxu0
        %v2637 = vunpack.c.l.b16 %v1815
        %v2638 = vunpack.c.l.b16 %v1816
        %v2639 = vpack.c.b16 %v2638, %v2637
        %v2641 = vsel %vm1846, %v871, 0
        %v2644 = vsel %vm1846, %v2639, 0
        %2646 = vmatprep.subr.bf16.mxu0 0
        %2647 = vmatpush1.bf16.xpose.msra.mxu0 0
        %2648 = vmatprep.subr.bf16.mxu0 0
        %2649 = vmatpush1.bf16.xpose.msra.mxu0 0
        %2650 = vmatprep.subr.bf16.mxu0 0
        %2651 = vmatpush1.bf16.xpose.msra.mxu0 0
        %2652 = vmatprep.subr.bf16.mxu0 0
        %2653 = vmatpush1.bf16.xpose.msra.mxu0 0
        %2654 = vmatprep.subr.bf16.mxu0 0
        %2655 = vmatpush1.bf16.xpose.msra.mxu0 0
        %2656 = vmatprep.subr.bf16.mxu0 0
        %2657 = vmatpush1.bf16.xpose.msra.mxu0 0
        %2658 = vmatprep.subr.bf16.mxu0 0
        %2659 = vmatpush1.bf16.xpose.msra.mxu0 0
        %2660 = vmatprep.subr.bf16.mxu0 0
        %2661 = vmatpush1.bf16.xpose.msra.mxu0 %v2644
        %2662 = vmatprep.subr.bf16.mxu0 0
        %2663 = vmatpush2.bf16.xpose.msra.mxu0 0
        %2664 = vmatprep.subr.bf16.mxu0 0
        %2665 = vmatpush2.bf16.xpose.msra.mxu0 0
        %2666 = vmatprep.subr.bf16.mxu0 0
        %2667 = vmatpush2.bf16.xpose.msra.mxu0 0
        %2668 = vmatprep.subr.bf16.mxu0 0
        %2669 = vmatpush2.bf16.xpose.msra.mxu0 0
        %2670 = vmatprep.subr.bf16.mxu0 0
        %2671 = vmatpush2.bf16.xpose.msra.mxu0 0
        %2672 = vmatprep.subr.bf16.mxu0 0
        %2673 = vmatpush2.bf16.xpose.msra.mxu0 0
        %2674 = vmatprep.subr.bf16.mxu0 0
        %2675 = vmatpush2.bf16.xpose.msra.mxu0 0
        %2676 = vmatprep.subr.bf16.mxu0 0
        %2677 = vmatpush2.bf16.xpose.msra.mxu0 0
        %2678 = vmatprep.mubr.bf16.mxu0 0
        %2679 = vmatmul.mubr.bf16.gmra.mxu0 %v2641
        %v2680 = vpop.f32.mrf.mxu0
        %v2681 = vadd.f32 0.0, %v2680
        %v2682 = vpop.f32.mrf.mxu0
        %v2683 = vpop.f32.mrf.mxu0
        %v2684 = vadd.f32 0.0, %v2683
        %v2685 = vpop.f32.mrf.mxu0
        %2686 = vdwg.mxu0
        %v2689 = vunpack.c.l.b16 %v1817
        %v2690 = vunpack.c.l.b16 %v1818
        %v2691 = vpack.c.b16 %v2690, %v2689
        %v2693 = vsel %vm1846, %v872, 0
        %v2696 = vsel %vm1846, %v2691, 0
        %2698 = vmatprep.subr.bf16.mxu0 0
        %2699 = vmatpush1.bf16.xpose.msra.mxu0 0
        %2700 = vmatprep.subr.bf16.mxu0 0
        %2701 = vmatpush1.bf16.xpose.msra.mxu0 0
        %2702 = vmatprep.subr.bf16.mxu0 0
        %2703 = vmatpush1.bf16.xpose.msra.mxu0 0
        %2704 = vmatprep.subr.bf16.mxu0 0
        %2705 = vmatpush1.bf16.xpose.msra.mxu0 0
        %2706 = vmatprep.subr.bf16.mxu0 0
        %2707 = vmatpush1.bf16.xpose.msra.mxu0 0
        %2708 = vmatprep.subr.bf16.mxu0 0
        %2709 = vmatpush1.bf16.xpose.msra.mxu0 0
        %2710 = vmatprep.subr.bf16.mxu0 0
        %2711 = vmatpush1.bf16.xpose.msra.mxu0 0
        %2712 = vmatprep.subr.bf16.mxu0 0
        %2713 = vmatpush1.bf16.xpose.msra.mxu0 %v2696
        %2714 = vmatprep.subr.bf16.mxu0 0
        %2715 = vmatpush2.bf16.xpose.msra.mxu0 0
        %2716 = vmatprep.subr.bf16.mxu0 0
        %2717 = vmatpush2.bf16.xpose.msra.mxu0 0
        %2718 = vmatprep.subr.bf16.mxu0 0
        %2719 = vmatpush2.bf16.xpose.msra.mxu0 0
        %2720 = vmatprep.subr.bf16.mxu0 0
        %2721 = vmatpush2.bf16.xpose.msra.mxu0 0
        %2722 = vmatprep.subr.bf16.mxu0 0
        %2723 = vmatpush2.bf16.xpose.msra.mxu0 0
        %2724 = vmatprep.subr.bf16.mxu0 0
        %2725 = vmatpush2.bf16.xpose.msra.mxu0 0
        %2726 = vmatprep.subr.bf16.mxu0 0
        %2727 = vmatpush2.bf16.xpose.msra.mxu0 0
        %2728 = vmatprep.subr.bf16.mxu0 0
        %2729 = vmatpush2.bf16.xpose.msra.mxu0 0
        %2730 = vmatprep.mubr.bf16.mxu0 0
        %2731 = vmatmul.mubr.bf16.gmra.mxu0 %v2693
        %v2732 = vpop.f32.mrf.mxu0
        %v2733 = vadd.f32 0.0, %v2732
        %v2734 = vpop.f32.mrf.mxu0
        %v2735 = vpop.f32.mrf.mxu0
        %v2736 = vadd.f32 0.0, %v2735
        %v2737 = vpop.f32.mrf.mxu0
        %2738 = vdwg.mxu0
        %v2741 = vunpack.c.l.b16 %v1819
        %v2742 = vunpack.c.l.b16 %v1820
        %v2743 = vpack.c.b16 %v2742, %v2741
        %v2745 = vsel %vm1846, %v873, 0
        %v2748 = vsel %vm1846, %v2743, 0
        %2750 = vmatprep.subr.bf16.mxu0 0
        %2751 = vmatpush1.bf16.xpose.msra.mxu0 0
        %2752 = vmatprep.subr.bf16.mxu0 0
        %2753 = vmatpush1.bf16.xpose.msra.mxu0 0
        %2754 = vmatprep.subr.bf16.mxu0 0
        %2755 = vmatpush1.bf16.xpose.msra.mxu0 0
        %2756 = vmatprep.subr.bf16.mxu0 0
        %2757 = vmatpush1.bf16.xpose.msra.mxu0 0
        %2758 = vmatprep.subr.bf16.mxu0 0
        %2759 = vmatpush1.bf16.xpose.msra.mxu0 0
        %2760 = vmatprep.subr.bf16.mxu0 0
        %2761 = vmatpush1.bf16.xpose.msra.mxu0 0
        %2762 = vmatprep.subr.bf16.mxu0 0
        %2763 = vmatpush1.bf16.xpose.msra.mxu0 0
        %2764 = vmatprep.subr.bf16.mxu0 0
        %2765 = vmatpush1.bf16.xpose.msra.mxu0 %v2748
        %2766 = vmatprep.subr.bf16.mxu0 0
        %2767 = vmatpush2.bf16.xpose.msra.mxu0 0
        %2768 = vmatprep.subr.bf16.mxu0 0
        %2769 = vmatpush2.bf16.xpose.msra.mxu0 0
        %2770 = vmatprep.subr.bf16.mxu0 0
        %2771 = vmatpush2.bf16.xpose.msra.mxu0 0
        %2772 = vmatprep.subr.bf16.mxu0 0
        %2773 = vmatpush2.bf16.xpose.msra.mxu0 0
        %2774 = vmatprep.subr.bf16.mxu0 0
        %2775 = vmatpush2.bf16.xpose.msra.mxu0 0
        %2776 = vmatprep.subr.bf16.mxu0 0
        %2777 = vmatpush2.bf16.xpose.msra.mxu0 0
        %2778 = vmatprep.subr.bf16.mxu0 0
        %2779 = vmatpush2.bf16.xpose.msra.mxu0 0
        %2780 = vmatprep.subr.bf16.mxu0 0
        %2781 = vmatpush2.bf16.xpose.msra.mxu0 0
        %2782 = vmatprep.mubr.bf16.mxu0 0
        %2783 = vmatmul.mubr.bf16.gmra.mxu0 %v2745
        %v2784 = vpop.f32.mrf.mxu0
        %v2785 = vadd.f32 0.0, %v2784
        %v2786 = vpop.f32.mrf.mxu0
        %v2787 = vpop.f32.mrf.mxu0
        %v2788 = vadd.f32 0.0, %v2787
        %v2789 = vpop.f32.mrf.mxu0
        %2790 = vdwg.mxu0
        %v2793 = vunpack.c.l.b16 %v1821
        %v2794 = vunpack.c.l.b16 %v1822
        %v2795 = vpack.c.b16 %v2794, %v2793
        %v2797 = vsel %vm1846, %v874, 0
        %v2800 = vsel %vm1846, %v2795, 0
        %2802 = vmatprep.subr.bf16.mxu0 0
        %2803 = vmatpush1.bf16.xpose.msra.mxu0 0
        %2804 = vmatprep.subr.bf16.mxu0 0
        %2805 = vmatpush1.bf16.xpose.msra.mxu0 0
        %2806 = vmatprep.subr.bf16.mxu0 0
        %2807 = vmatpush1.bf16.xpose.msra.mxu0 0
        %2808 = vmatprep.subr.bf16.mxu0 0
        %2809 = vmatpush1.bf16.xpose.msra.mxu0 0
        %2810 = vmatprep.subr.bf16.mxu0 0
        %2811 = vmatpush1.bf16.xpose.msra.mxu0 0
        %2812 = vmatprep.subr.bf16.mxu0 0
        %2813 = vmatpush1.bf16.xpose.msra.mxu0 0
        %2814 = vmatprep.subr.bf16.mxu0 0
        %2815 = vmatpush1.bf16.xpose.msra.mxu0 0
        %2816 = vmatprep.subr.bf16.mxu0 0
        %2817 = vmatpush1.bf16.xpose.msra.mxu0 %v2800
        %2818 = vmatprep.subr.bf16.mxu0 0
        %2819 = vmatpush2.bf16.xpose.msra.mxu0 0
        %2820 = vmatprep.subr.bf16.mxu0 0
        %2821 = vmatpush2.bf16.xpose.msra.mxu0 0
        %2822 = vmatprep.subr.bf16.mxu0 0
        %2823 = vmatpush2.bf16.xpose.msra.mxu0 0
        %2824 = vmatprep.subr.bf16.mxu0 0
        %2825 = vmatpush2.bf16.xpose.msra.mxu0 0
        %2826 = vmatprep.subr.bf16.mxu0 0
        %2827 = vmatpush2.bf16.xpose.msra.mxu0 0
        %2828 = vmatprep.subr.bf16.mxu0 0
        %2829 = vmatpush2.bf16.xpose.msra.mxu0 0
        %2830 = vmatprep.subr.bf16.mxu0 0
        %2831 = vmatpush2.bf16.xpose.msra.mxu0 0
        %2832 = vmatprep.subr.bf16.mxu0 0
        %2833 = vmatpush2.bf16.xpose.msra.mxu0 0
        %2834 = vmatprep.mubr.bf16.mxu0 0
        %2835 = vmatmul.mubr.bf16.gmra.mxu0 %v2797
        %v2836 = vpop.f32.mrf.mxu0
        %v2837 = vadd.f32 0.0, %v2836
        %v2838 = vpop.f32.mrf.mxu0
        %v2839 = vpop.f32.mrf.mxu0
        %v2840 = vadd.f32 0.0, %v2839
        %v2841 = vpop.f32.mrf.mxu0
        %2842 = vdwg.mxu0
        %v2845 = vunpack.c.l.b16 %v1823
        %v2846 = vunpack.c.l.b16 %v1824
        %v2847 = vpack.c.b16 %v2846, %v2845
        %v2849 = vsel %vm1846, %v875, 0
        %v2852 = vsel %vm1846, %v2847, 0
        %2854 = vmatprep.subr.bf16.mxu0 0
        %2855 = vmatpush1.bf16.xpose.msra.mxu0 0
        %2856 = vmatprep.subr.bf16.mxu0 0
        %2857 = vmatpush1.bf16.xpose.msra.mxu0 0
        %2858 = vmatprep.subr.bf16.mxu0 0
        %2859 = vmatpush1.bf16.xpose.msra.mxu0 0
        %2860 = vmatprep.subr.bf16.mxu0 0
        %2861 = vmatpush1.bf16.xpose.msra.mxu0 0
        %2862 = vmatprep.subr.bf16.mxu0 0
        %2863 = vmatpush1.bf16.xpose.msra.mxu0 0
        %2864 = vmatprep.subr.bf16.mxu0 0
        %2865 = vmatpush1.bf16.xpose.msra.mxu0 0
        %2866 = vmatprep.subr.bf16.mxu0 0
        %2867 = vmatpush1.bf16.xpose.msra.mxu0 0
        %2868 = vmatprep.subr.bf16.mxu0 0
        %2869 = vmatpush1.bf16.xpose.msra.mxu0 %v2852
        %2870 = vmatprep.subr.bf16.mxu0 0
        %2871 = vmatpush2.bf16.xpose.msra.mxu0 0
        %2872 = vmatprep.subr.bf16.mxu0 0
        %2873 = vmatpush2.bf16.xpose.msra.mxu0 0
        %2874 = vmatprep.subr.bf16.mxu0 0
        %2875 = vmatpush2.bf16.xpose.msra.mxu0 0
        %2876 = vmatprep.subr.bf16.mxu0 0
        %2877 = vmatpush2.bf16.xpose.msra.mxu0 0
        %2878 = vmatprep.subr.bf16.mxu0 0
        %2879 = vmatpush2.bf16.xpose.msra.mxu0 0
        %2880 = vmatprep.subr.bf16.mxu0 0
        %2881 = vmatpush2.bf16.xpose.msra.mxu0 0
        %2882 = vmatprep.subr.bf16.mxu0 0
        %2883 = vmatpush2.bf16.xpose.msra.mxu0 0
        %2884 = vmatprep.subr.bf16.mxu0 0
        %2885 = vmatpush2.bf16.xpose.msra.mxu0 0
        %2886 = vmatprep.mubr.bf16.mxu0 0
        %2887 = vmatmul.mubr.bf16.gmra.mxu0 %v2849
        %v2888 = vpop.f32.mrf.mxu0
        %v2889 = vadd.f32 0.0, %v2888
        %v2890 = vpop.f32.mrf.mxu0
        %v2891 = vpop.f32.mrf.mxu0
        %v2892 = vadd.f32 0.0, %v2891
        %v2893 = vpop.f32.mrf.mxu0
        %2894 = vdwg.mxu0
        %v2897 = vunpack.c.l.b16 %v1825
        %v2898 = vunpack.c.l.b16 %v1826
        %v2899 = vpack.c.b16 %v2898, %v2897
        %v2901 = vsel %vm1846, %v876, 0
        %v2904 = vsel %vm1846, %v2899, 0
        %2906 = vmatprep.subr.bf16.mxu0 0
        %2907 = vmatpush1.bf16.xpose.msra.mxu0 0
        %2908 = vmatprep.subr.bf16.mxu0 0
        %2909 = vmatpush1.bf16.xpose.msra.mxu0 0
        %2910 = vmatprep.subr.bf16.mxu0 0
        %2911 = vmatpush1.bf16.xpose.msra.mxu0 0
        %2912 = vmatprep.subr.bf16.mxu0 0
        %2913 = vmatpush1.bf16.xpose.msra.mxu0 0
        %2914 = vmatprep.subr.bf16.mxu0 0
        %2915 = vmatpush1.bf16.xpose.msra.mxu0 0
        %2916 = vmatprep.subr.bf16.mxu0 0
        %2917 = vmatpush1.bf16.xpose.msra.mxu0 0
        %2918 = vmatprep.subr.bf16.mxu0 0
        %2919 = vmatpush1.bf16.xpose.msra.mxu0 0
        %2920 = vmatprep.subr.bf16.mxu0 0
        %2921 = vmatpush1.bf16.xpose.msra.mxu0 %v2904
        %2922 = vmatprep.subr.bf16.mxu0 0
        %2923 = vmatpush2.bf16.xpose.msra.mxu0 0
        %2924 = vmatprep.subr.bf16.mxu0 0
        %2925 = vmatpush2.bf16.xpose.msra.mxu0 0
        %2926 = vmatprep.subr.bf16.mxu0 0
        %2927 = vmatpush2.bf16.xpose.msra.mxu0 0
        %2928 = vmatprep.subr.bf16.mxu0 0
        %2929 = vmatpush2.bf16.xpose.msra.mxu0 0
        %2930 = vmatprep.subr.bf16.mxu0 0
        %2931 = vmatpush2.bf16.xpose.msra.mxu0 0
        %2932 = vmatprep.subr.bf16.mxu0 0
        %2933 = vmatpush2.bf16.xpose.msra.mxu0 0
        %2934 = vmatprep.subr.bf16.mxu0 0
        %2935 = vmatpush2.bf16.xpose.msra.mxu0 0
        %2936 = vmatprep.subr.bf16.mxu0 0
        %2937 = vmatpush2.bf16.xpose.msra.mxu0 0
        %2938 = vmatprep.mubr.bf16.mxu0 0
        %2939 = vmatmul.mubr.bf16.gmra.mxu0 %v2901
        %v2940 = vpop.f32.mrf.mxu0
        %v2941 = vadd.f32 0.0, %v2940
        %v2942 = vpop.f32.mrf.mxu0
        %v2943 = vpop.f32.mrf.mxu0
        %v2944 = vadd.f32 0.0, %v2943
        %v2945 = vpop.f32.mrf.mxu0
        %2946 = vdwg.mxu0
        %v2949 = vunpack.c.l.b16 %v1827
        %v2950 = vunpack.c.l.b16 %v1828
        %v2951 = vpack.c.b16 %v2950, %v2949
        %v2953 = vsel %vm1846, %v877, 0
        %v2956 = vsel %vm1846, %v2951, 0
        %2958 = vmatprep.subr.bf16.mxu0 0
        %2959 = vmatpush1.bf16.xpose.msra.mxu0 0
        %2960 = vmatprep.subr.bf16.mxu0 0
        %2961 = vmatpush1.bf16.xpose.msra.mxu0 0
        %2962 = vmatprep.subr.bf16.mxu0 0
        %2963 = vmatpush1.bf16.xpose.msra.mxu0 0
        %2964 = vmatprep.subr.bf16.mxu0 0
        %2965 = vmatpush1.bf16.xpose.msra.mxu0 0
        %2966 = vmatprep.subr.bf16.mxu0 0
        %2967 = vmatpush1.bf16.xpose.msra.mxu0 0
        %2968 = vmatprep.subr.bf16.mxu0 0
        %2969 = vmatpush1.bf16.xpose.msra.mxu0 0
        %2970 = vmatprep.subr.bf16.mxu0 0
        %2971 = vmatpush1.bf16.xpose.msra.mxu0 0
        %2972 = vmatprep.subr.bf16.mxu0 0
        %2973 = vmatpush1.bf16.xpose.msra.mxu0 %v2956
        %2974 = vmatprep.subr.bf16.mxu0 0
        %2975 = vmatpush2.bf16.xpose.msra.mxu0 0
        %2976 = vmatprep.subr.bf16.mxu0 0
        %2977 = vmatpush2.bf16.xpose.msra.mxu0 0
        %2978 = vmatprep.subr.bf16.mxu0 0
        %2979 = vmatpush2.bf16.xpose.msra.mxu0 0
        %2980 = vmatprep.subr.bf16.mxu0 0
        %2981 = vmatpush2.bf16.xpose.msra.mxu0 0
        %2982 = vmatprep.subr.bf16.mxu0 0
        %2983 = vmatpush2.bf16.xpose.msra.mxu0 0
        %2984 = vmatprep.subr.bf16.mxu0 0
        %2985 = vmatpush2.bf16.xpose.msra.mxu0 0
        %2986 = vmatprep.subr.bf16.mxu0 0
        %2987 = vmatpush2.bf16.xpose.msra.mxu0 0
        %2988 = vmatprep.subr.bf16.mxu0 0
        %2989 = vmatpush2.bf16.xpose.msra.mxu0 0
        %2990 = vmatprep.mubr.bf16.mxu0 0
        %2991 = vmatmul.mubr.bf16.gmra.mxu0 %v2953
        %v2992 = vpop.f32.mrf.mxu0
        %v2993 = vadd.f32 0.0, %v2992
        %v2994 = vpop.f32.mrf.mxu0
        %v2995 = vpop.f32.mrf.mxu0
        %v2996 = vadd.f32 0.0, %v2995
        %v2997 = vpop.f32.mrf.mxu0
        %2998 = vdwg.mxu0
        %vm2999 = vcmask 64512
        %v3000 = vsel %vm2999, %v1888, -inf
        %3001 = vmax.xlane.f32.xlu0 %v3000
        %v3002 = vpop.xlane.xlu0 %3001
        %v3003 = vsel %vm2999, %v1934, -inf
        %3004 = vmax.xlane.f32.xlu0 %v3003
        %v3005 = vpop.xlane.xlu0 %3004
        %v3006 = vsel %vm2999, %v1980, -inf
        %3007 = vmax.xlane.f32.xlu0 %v3006
        %v3008 = vpop.xlane.xlu0 %3007
        %v3009 = vsel %vm2999, %v2026, -inf
        %3010 = vmax.xlane.f32.xlu0 %v3009
        %v3011 = vpop.xlane.xlu0 %3010
        %v3012 = vsel %vm2999, %v2072, -inf
        %3013 = vmax.xlane.f32.xlu0 %v3012
        %v3014 = vpop.xlane.xlu0 %3013
        %v3015 = vsel %vm2999, %v2118, -inf
        %3016 = vmax.xlane.f32.xlu0 %v3015
        %v3017 = vpop.xlane.xlu0 %3016
        %v3018 = vsel %vm2999, %v2164, -inf
        %3019 = vmax.xlane.f32.xlu0 %v3018
        %v3020 = vpop.xlane.xlu0 %3019
        %v3021 = vsel %vm2999, %v2210, -inf
        %3022 = vmax.xlane.f32.xlu0 %v3021
        %v3023 = vpop.xlane.xlu0 %3022
        %v3024 = vsel %vm2999, %v2256, -inf
        %3025 = vmax.xlane.f32.xlu0 %v3024
        %v3026 = vpop.xlane.xlu0 %3025
        %v3027 = vsel %vm2999, %v2302, -inf
        %3028 = vmax.xlane.f32.xlu0 %v3027
        %v3029 = vpop.xlane.xlu0 %3028
        %v3030 = vsel %vm2999, %v2348, -inf
        %3031 = vmax.xlane.f32.xlu0 %v3030
        %v3032 = vpop.xlane.xlu0 %3031
        %v3033 = vsel %vm2999, %v2394, -inf
        %3034 = vmax.xlane.f32.xlu0 %v3033
        %v3035 = vpop.xlane.xlu0 %3034
        %v3036 = vsel %vm2999, %v2440, -inf
        %3037 = vmax.xlane.f32.xlu0 %v3036
        %v3038 = vpop.xlane.xlu0 %3037
        %v3039 = vsel %vm2999, %v2486, -inf
        %3040 = vmax.xlane.f32.xlu0 %v3039
        %v3041 = vpop.xlane.xlu0 %3040
        %v3042 = vsel %vm2999, %v2532, -inf
        %3043 = vmax.xlane.f32.xlu0 %v3042
        %v3044 = vpop.xlane.xlu0 %3043
        %v3045 = vsel %vm2999, %v2578, -inf
        %3046 = vmax.xlane.f32.xlu0 %v3045
        %v3047 = vpop.xlane.xlu0 %3046
        %v3064 = vlaneseq
        %v3065 = vand.u32 %v3064, 127
        %v3066 = vlaneseq
        %v3067 = vshrl.u32 %v3066, 7
        %v3068 = vsub.s32 %v3065, %v3067
        %v3069 = vrot.slane %v3002, %v3068
        %v3070 = vlaneseq
        %v3071 = vshrl.u32 %v3070, 7
        %v3072 = vsub.s32 %v3065, %v3071
        %v3073 = vrot.slane %v3005, %v3072
        %v3074 = vlaneseq
        %v3075 = vshrl.u32 %v3074, 7
        %v3076 = vsub.s32 %v3065, %v3075
        %v3077 = vrot.slane %v3008, %v3076
        %v3078 = vlaneseq
        %v3079 = vshrl.u32 %v3078, 7
        %v3080 = vsub.s32 %v3065, %v3079
        %v3081 = vrot.slane %v3011, %v3080
        %v3082 = vlaneseq
        %v3083 = vshrl.u32 %v3082, 7
        %v3084 = vsub.s32 %v3065, %v3083
        %v3085 = vrot.slane %v3014, %v3084
        %v3086 = vlaneseq
        %v3087 = vshrl.u32 %v3086, 7
        %v3088 = vsub.s32 %v3065, %v3087
        %v3089 = vrot.slane %v3017, %v3088
        %v3090 = vlaneseq
        %v3091 = vshrl.u32 %v3090, 7
        %v3092 = vsub.s32 %v3065, %v3091
        %v3093 = vrot.slane %v3020, %v3092
        %v3094 = vlaneseq
        %v3095 = vshrl.u32 %v3094, 7
        %v3096 = vsub.s32 %v3065, %v3095
        %v3097 = vrot.slane %v3023, %v3096
        %v3098 = vlaneseq
        %v3099 = vshrl.u32 %v3098, 7
        %v3100 = vsub.s32 %v3065, %v3099
        %v3101 = vrot.slane %v3026, %v3100
        %v3102 = vlaneseq
        %v3103 = vshrl.u32 %v3102, 7
        %v3104 = vsub.s32 %v3065, %v3103
        %v3105 = vrot.slane %v3029, %v3104
        %v3106 = vlaneseq
        %v3107 = vshrl.u32 %v3106, 7
        %v3108 = vsub.s32 %v3065, %v3107
        %v3109 = vrot.slane %v3032, %v3108
        %v3110 = vlaneseq
        %v3111 = vshrl.u32 %v3110, 7
        %v3112 = vsub.s32 %v3065, %v3111
        %v3113 = vrot.slane %v3035, %v3112
        %v3114 = vlaneseq
        %v3115 = vshrl.u32 %v3114, 7
        %v3116 = vsub.s32 %v3065, %v3115
        %v3117 = vrot.slane %v3038, %v3116
        %v3118 = vlaneseq
        %v3119 = vshrl.u32 %v3118, 7
        %v3120 = vsub.s32 %v3065, %v3119
        %v3121 = vrot.slane %v3041, %v3120
        %v3122 = vlaneseq
        %v3123 = vshrl.u32 %v3122, 7
        %v3124 = vsub.s32 %v3065, %v3123
        %v3125 = vrot.slane %v3044, %v3124
        %v3126 = vlaneseq
        %v3127 = vshrl.u32 %v3126, 7
        %v3128 = vsub.s32 %v3065, %v3127
        %v3129 = vrot.slane %v3047, %v3128
        %vm3130 = vcmask 1041409
        %v3131 = vsel %vm3130, %v3073, %v3069
        %vm3132 = vcmask 1042434
        %v3133 = vsel %vm3132, %v3077, %v3131
        %vm3134 = vcmask 1043459
        %v3135 = vsel %vm3134, %v3081, %v3133
        %vm3136 = vcmask 1044484
        %v3137 = vsel %vm3136, %v3085, %v3135
        %vm3138 = vcmask 1045509
        %v3139 = vsel %vm3138, %v3089, %v3137
        %vm3140 = vcmask 1046534
        %v3141 = vsel %vm3140, %v3093, %v3139
        %vm3142 = vcmask 1047559
        %v3143 = vsel %vm3142, %v3097, %v3141
        %v3144 = vsel %vm3130, %v3105, %v3101
        %v3145 = vsel %vm3132, %v3109, %v3144
        %v3146 = vsel %vm3134, %v3113, %v3145
        %v3147 = vsel %vm3136, %v3117, %v3146
        %v3148 = vsel %vm3138, %v3121, %v3147
        %v3149 = vsel %vm3140, %v3125, %v3148
        %v3150 = vsel %vm3142, %v3129, %v3149
        %3153 = vxpose.xlu0.b32.start [1/16] %v3143, 128
        %3154 = vxpose.xlu0.b32.cont [2/16] %v3150, 128
        %3155 = vxpose.xlu0.b32.cont [3/16] 0.0, 128
        %3156 = vxpose.xlu0.b32.cont [4/16] 0.0, 128
        %3157 = vxpose.xlu0.b32.cont [5/16] 0.0, 128
        %3158 = vxpose.xlu0.b32.cont [6/16] 0.0, 128
        %3159 = vxpose.xlu0.b32.cont [7/16] 0.0, 128
        %3160 = vxpose.xlu0.b32.cont [8/16] 0.0, 128
        %3161 = vxpose.xlu0.b32.cont [9/16] 0.0, 128
        %3162 = vxpose.xlu0.b32.cont [10/16] 0.0, 128
        %3163 = vxpose.xlu0.b32.cont [11/16] 0.0, 128
        %3164 = vxpose.xlu0.b32.cont [12/16] 0.0, 128
        %3165 = vxpose.xlu0.b32.cont [13/16] 0.0, 128
        %3166 = vxpose.xlu0.b32.cont [14/16] 0.0, 128
        %3167 = vxpose.xlu0.b32.cont [15/16] 0.0, 128
        %3168 = vxpose.xlu0.b32.end [16/16] 0.0, 128
        %v3169 = vpop.trf.xlu0
        %v3170 = vpop.trf.xlu0
        %v3171 = vpop.trf.xlu0
        %v3172 = vpop.trf.xlu0
        %v3173 = vpop.trf.xlu0
        %v3174 = vpop.trf.xlu0
        %v3175 = vpop.trf.xlu0
        %v3176 = vpop.trf.xlu0
        %v3177 = vpop.trf.xlu0
        %v3178 = vpop.trf.xlu0
        %v3179 = vpop.trf.xlu0
        %v3180 = vpop.trf.xlu0
        %v3181 = vpop.trf.xlu0
        %v3182 = vpop.trf.xlu0
        %v3183 = vpop.trf.xlu0
        %v3184 = vpop.trf.xlu0
        %v3185 = vsel %vm748, %v2629, -inf
        %3186 = vmax.xlane.f32.xlu0 %v3185
        %v3187 = vpop.xlane.xlu0 %3186
        %v3188 = vsel %vm748, %v2632, -inf
        %3189 = vmax.xlane.f32.xlu0 %v3188
        %v3190 = vpop.xlane.xlu0 %3189
        %v3191 = vsel %vm748, %v2681, -inf
        %3192 = vmax.xlane.f32.xlu0 %v3191
        %v3193 = vpop.xlane.xlu0 %3192
        %v3194 = vsel %vm748, %v2684, -inf
        %3195 = vmax.xlane.f32.xlu0 %v3194
        %v3196 = vpop.xlane.xlu0 %3195
        %v3197 = vsel %vm748, %v2733, -inf
        %3198 = vmax.xlane.f32.xlu0 %v3197
        %v3199 = vpop.xlane.xlu0 %3198
        %v3200 = vsel %vm748, %v2736, -inf
        %3201 = vmax.xlane.f32.xlu0 %v3200
        %v3202 = vpop.xlane.xlu0 %3201
        %v3203 = vsel %vm748, %v2785, -inf
        %3204 = vmax.xlane.f32.xlu0 %v3203
        %v3205 = vpop.xlane.xlu0 %3204
        %v3206 = vsel %vm748, %v2788, -inf
        %3207 = vmax.xlane.f32.xlu0 %v3206
        %v3208 = vpop.xlane.xlu0 %3207
        %v3209 = vsel %vm748, %v2837, -inf
        %3210 = vmax.xlane.f32.xlu0 %v3209
        %v3211 = vpop.xlane.xlu0 %3210
        %v3212 = vsel %vm748, %v2840, -inf
        %3213 = vmax.xlane.f32.xlu0 %v3212
        %v3214 = vpop.xlane.xlu0 %3213
        %v3215 = vsel %vm748, %v2889, -inf
        %3216 = vmax.xlane.f32.xlu0 %v3215
        %v3217 = vpop.xlane.xlu0 %3216
        %v3218 = vsel %vm748, %v2892, -inf
        %3219 = vmax.xlane.f32.xlu0 %v3218
        %v3220 = vpop.xlane.xlu0 %3219
        %v3221 = vsel %vm748, %v2941, -inf
        %3222 = vmax.xlane.f32.xlu0 %v3221
        %v3223 = vpop.xlane.xlu0 %3222
        %v3224 = vsel %vm748, %v2944, -inf
        %3225 = vmax.xlane.f32.xlu0 %v3224
        %v3226 = vpop.xlane.xlu0 %3225
        %v3227 = vsel %vm748, %v2993, -inf
        %3228 = vmax.xlane.f32.xlu0 %v3227
        %v3229 = vpop.xlane.xlu0 %3228
        %v3230 = vsel %vm748, %v2996, -inf
        %3231 = vmax.xlane.f32.xlu0 %v3230
        %v3232 = vpop.xlane.xlu0 %3231
        %v3249 = vlaneseq
        %v3250 = vshrl.u32 %v3249, 7
        %v3251 = vsub.s32 %v3065, %v3250
        %v3252 = vrot.slane %v3187, %v3251
        %v3253 = vadd.s32 %v3065, 4294967288
        %v3254 = vlaneseq
        %v3255 = vshrl.u32 %v3254, 7
        %v3256 = vsub.s32 %v3253, %v3255
        %v3257 = vrot.slane %v3190, %v3256
        %vm3258 = vcmask 130112
        %v3259 = vsel %vm3258, %v3257, %v3252
        %v3260 = vlaneseq
        %v3261 = vshrl.u32 %v3260, 7
        %v3262 = vsub.s32 %v3065, %v3261
        %v3263 = vrot.slane %v3193, %v3262
        %v3264 = vlaneseq
        %v3265 = vshrl.u32 %v3264, 7
        %v3266 = vsub.s32 %v3253, %v3265
        %v3267 = vrot.slane %v3196, %v3266
        %v3268 = vsel %vm3258, %v3267, %v3263
        %v3269 = vlaneseq
        %v3270 = vshrl.u32 %v3269, 7
        %v3271 = vsub.s32 %v3065, %v3270
        %v3272 = vrot.slane %v3199, %v3271
        %v3273 = vlaneseq
        %v3274 = vshrl.u32 %v3273, 7
        %v3275 = vsub.s32 %v3253, %v3274
        %v3276 = vrot.slane %v3202, %v3275
        %v3277 = vsel %vm3258, %v3276, %v3272
        %v3278 = vlaneseq
        %v3279 = vshrl.u32 %v3278, 7
        %v3280 = vsub.s32 %v3065, %v3279
        %v3281 = vrot.slane %v3205, %v3280
        %v3282 = vlaneseq
        %v3283 = vshrl.u32 %v3282, 7
        %v3284 = vsub.s32 %v3253, %v3283
        %v3285 = vrot.slane %v3208, %v3284
        %v3286 = vsel %vm3258, %v3285, %v3281
        %v3287 = vlaneseq
        %v3288 = vshrl.u32 %v3287, 7
        %v3289 = vsub.s32 %v3065, %v3288
        %v3290 = vrot.slane %v3211, %v3289
        %v3291 = vlaneseq
        %v3292 = vshrl.u32 %v3291, 7
        %v3293 = vsub.s32 %v3253, %v3292
        %v3294 = vrot.slane %v3214, %v3293
        %v3295 = vsel %vm3258, %v3294, %v3290
        %v3296 = vlaneseq
        %v3297 = vshrl.u32 %v3296, 7
        %v3298 = vsub.s32 %v3065, %v3297
        %v3299 = vrot.slane %v3217, %v3298
        %v3300 = vlaneseq
        %v3301 = vshrl.u32 %v3300, 7
        %v3302 = vsub.s32 %v3253, %v3301
        %v3303 = vrot.slane %v3220, %v3302
        %v3304 = vsel %vm3258, %v3303, %v3299
        %v3305 = vlaneseq
        %v3306 = vshrl.u32 %v3305, 7
        %v3307 = vsub.s32 %v3065, %v3306
        %v3308 = vrot.slane %v3223, %v3307
        %v3309 = vlaneseq
        %v3310 = vshrl.u32 %v3309, 7
        %v3311 = vsub.s32 %v3253, %v3310
        %v3312 = vrot.slane %v3226, %v3311
        %v3313 = vsel %vm3258, %v3312, %v3308
        %v3314 = vlaneseq
        %v3315 = vshrl.u32 %v3314, 7
        %v3316 = vsub.s32 %v3065, %v3315
        %v3317 = vrot.slane %v3229, %v3316
        %v3318 = vlaneseq
        %v3319 = vshrl.u32 %v3318, 7
        %v3320 = vsub.s32 %v3253, %v3319
        %v3321 = vrot.slane %v3232, %v3320
        %v3322 = vsel %vm3258, %v3321, %v3317
        %v3323 = vsel %vm3130, %v3268, %v3259
        %v3324 = vsel %vm3132, %v3277, %v3323
        %v3325 = vsel %vm3134, %v3286, %v3324
        %v3326 = vsel %vm3136, %v3295, %v3325
        %v3327 = vsel %vm3138, %v3304, %v3326
        %v3328 = vsel %vm3140, %v3313, %v3327
        %v3329 = vsel %vm3142, %v3322, %v3328
        %v3331 = vmax.f32 %v3169, %v3329
        %3332 = vxpose.xlu0.b32.start [1/16] %v3331, 128
        %3333 = vxpose.xlu0.b32.cont [2/16] 0.0, 128
        %3334 = vxpose.xlu0.b32.cont [3/16] 0.0, 128
        %3335 = vxpose.xlu0.b32.cont [4/16] 0.0, 128
        %3336 = vxpose.xlu0.b32.cont [5/16] 0.0, 128
        %3337 = vxpose.xlu0.b32.cont [6/16] 0.0, 128
        %3338 = vxpose.xlu0.b32.cont [7/16] 0.0, 128
        %3339 = vxpose.xlu0.b32.cont [8/16] 0.0, 128
        %3340 = vxpose.xlu0.b32.cont [9/16] 0.0, 128
        %3341 = vxpose.xlu0.b32.cont [10/16] 0.0, 128
        %3342 = vxpose.xlu0.b32.cont [11/16] 0.0, 128
        %3343 = vxpose.xlu0.b32.cont [12/16] 0.0, 128
        %3344 = vxpose.xlu0.b32.cont [13/16] 0.0, 128
        %3345 = vxpose.xlu0.b32.cont [14/16] 0.0, 128
        %3346 = vxpose.xlu0.b32.cont [15/16] 0.0, 128
        %3347 = vxpose.xlu0.b32.end [16/16] 0.0, 128
        %v3348 = vpop.trf.xlu0
        %v3349 = vpop.trf.xlu0
        %v3350 = vpop.trf.xlu0
        %v3351 = vpop.trf.xlu0
        %v3352 = vpop.trf.xlu0
        %v3353 = vpop.trf.xlu0
        %v3354 = vpop.trf.xlu0
        %v3355 = vpop.trf.xlu0
        %v3356 = vpop.trf.xlu0
        %v3357 = vpop.trf.xlu0
        %v3358 = vpop.trf.xlu0
        %v3359 = vpop.trf.xlu0
        %v3360 = vpop.trf.xlu0
        %v3361 = vpop.trf.xlu0
        %v3362 = vpop.trf.xlu0
        %v3363 = vpop.trf.xlu0
        %v3364 = vlaneseq
        %v3365 = vshrl.u32 %v3364, 7
        %v3366 = vsub.s32 0, %v3365
        %v3367 = vrot.slane %v3348, %v3366
        %3369 = vbcast.lane.b32.xlu0 %v3367, 256
        %v3370 = vpop.permute.xlu0 %3369
        %v3371 = vlaneseq
        %v3372 = vshrl.u32 %v3371, 7
        %v3373 = vsub.s32 1, %v3372
        %v3374 = vrot.slane %v3348, %v3373
        %3376 = vbcast.lane.b32.xlu0 %v3374, 256
        %v3377 = vpop.permute.xlu0 %3376
        %v3378 = vlaneseq
        %v3379 = vshrl.u32 %v3378, 7
        %v3380 = vsub.s32 2, %v3379
        %v3381 = vrot.slane %v3348, %v3380
        %3383 = vbcast.lane.b32.xlu0 %v3381, 256
        %v3384 = vpop.permute.xlu0 %3383
        %v3385 = vlaneseq
        %v3386 = vshrl.u32 %v3385, 7
        %v3387 = vsub.s32 3, %v3386
        %v3388 = vrot.slane %v3348, %v3387
        %3390 = vbcast.lane.b32.xlu0 %v3388, 256
        %v3391 = vpop.permute.xlu0 %3390
        %v3392 = vlaneseq
        %v3393 = vshrl.u32 %v3392, 7
        %v3394 = vsub.s32 4, %v3393
        %v3395 = vrot.slane %v3348, %v3394
        %3397 = vbcast.lane.b32.xlu0 %v3395, 256
        %v3398 = vpop.permute.xlu0 %3397
        %v3399 = vlaneseq
        %v3400 = vshrl.u32 %v3399, 7
        %v3401 = vsub.s32 5, %v3400
        %v3402 = vrot.slane %v3348, %v3401
        %3404 = vbcast.lane.b32.xlu0 %v3402, 256
        %v3405 = vpop.permute.xlu0 %3404
        %v3406 = vlaneseq
        %v3407 = vshrl.u32 %v3406, 7
        %v3408 = vsub.s32 6, %v3407
        %v3409 = vrot.slane %v3348, %v3408
        %3411 = vbcast.lane.b32.xlu0 %v3409, 256
        %v3412 = vpop.permute.xlu0 %3411
        %v3413 = vlaneseq
        %v3414 = vshrl.u32 %v3413, 7
        %v3415 = vsub.s32 7, %v3414
        %v3416 = vrot.slane %v3348, %v3415
        %3418 = vbcast.lane.b32.xlu0 %v3416, 256
        %v3419 = vpop.permute.xlu0 %3418
        %v3420 = vlaneseq
        %v3421 = vshrl.u32 %v3420, 7
        %v3422 = vsub.s32 0, %v3421
        %v3423 = vrot.slane %v3349, %v3422
        %3425 = vbcast.lane.b32.xlu0 %v3423, 256
        %v3426 = vpop.permute.xlu0 %3425
        %v3427 = vlaneseq
        %v3428 = vshrl.u32 %v3427, 7
        %v3429 = vsub.s32 1, %v3428
        %v3430 = vrot.slane %v3349, %v3429
        %3432 = vbcast.lane.b32.xlu0 %v3430, 256
        %v3433 = vpop.permute.xlu0 %3432
        %v3434 = vlaneseq
        %v3435 = vshrl.u32 %v3434, 7
        %v3436 = vsub.s32 2, %v3435
        %v3437 = vrot.slane %v3349, %v3436
        %3439 = vbcast.lane.b32.xlu0 %v3437, 256
        %v3440 = vpop.permute.xlu0 %3439
        %v3441 = vlaneseq
        %v3442 = vshrl.u32 %v3441, 7
        %v3443 = vsub.s32 3, %v3442
        %v3444 = vrot.slane %v3349, %v3443
        %3446 = vbcast.lane.b32.xlu0 %v3444, 256
        %v3447 = vpop.permute.xlu0 %3446
        %v3448 = vlaneseq
        %v3449 = vshrl.u32 %v3448, 7
        %v3450 = vsub.s32 4, %v3449
        %v3451 = vrot.slane %v3349, %v3450
        %3453 = vbcast.lane.b32.xlu0 %v3451, 256
        %v3454 = vpop.permute.xlu0 %3453
        %v3455 = vlaneseq
        %v3456 = vshrl.u32 %v3455, 7
        %v3457 = vsub.s32 5, %v3456
        %v3458 = vrot.slane %v3349, %v3457
        %3460 = vbcast.lane.b32.xlu0 %v3458, 256
        %v3461 = vpop.permute.xlu0 %3460
        %v3462 = vlaneseq
        %v3463 = vshrl.u32 %v3462, 7
        %v3464 = vsub.s32 6, %v3463
        %v3465 = vrot.slane %v3349, %v3464
        %3467 = vbcast.lane.b32.xlu0 %v3465, 256
        %v3468 = vpop.permute.xlu0 %3467
        %v3469 = vlaneseq
        %v3470 = vshrl.u32 %v3469, 7
        %v3471 = vsub.s32 7, %v3470
        %v3472 = vrot.slane %v3349, %v3471
        %3474 = vbcast.lane.b32.xlu0 %v3472, 256
        %v3475 = vpop.permute.xlu0 %3474
        %v3476 = vsub.f32 %v1888, %v3370
        %v3477 = vsub.f32 %v1934, %v3377
        %v3478 = vsub.f32 %v1980, %v3384
        %v3479 = vsub.f32 %v2026, %v3391
        %v3480 = vsub.f32 %v2072, %v3398
        %v3481 = vsub.f32 %v2118, %v3405
        %v3482 = vsub.f32 %v2164, %v3412
        %v3483 = vsub.f32 %v2210, %v3419
        %v3484 = vsub.f32 %v2256, %v3426
        %v3485 = vsub.f32 %v2302, %v3433
        %v3486 = vsub.f32 %v2348, %v3440
        %v3487 = vsub.f32 %v2394, %v3447
        %v3488 = vsub.f32 %v2440, %v3454
        %v3489 = vsub.f32 %v2486, %v3461
        %v3490 = vsub.f32 %v2532, %v3468
        %v3491 = vsub.f32 %v2578, %v3475
        %v3492 = vmul.f32 %v3476, 1.442695
        %v3493 = vpow.pop %v3492
        %v3494 = vmul.f32 %v3477, 1.442695
        %v3495 = vpow.pop %v3494
        %v3496 = vmul.f32 %v3478, 1.442695
        %v3497 = vpow.pop %v3496
        %v3498 = vmul.f32 %v3479, 1.442695
        %v3499 = vpow.pop %v3498
        %v3500 = vmul.f32 %v3480, 1.442695
        %v3501 = vpow.pop %v3500
        %v3502 = vmul.f32 %v3481, 1.442695
        %v3503 = vpow.pop %v3502
        %v3504 = vmul.f32 %v3482, 1.442695
        %v3505 = vpow.pop %v3504
        %v3506 = vmul.f32 %v3483, 1.442695
        %v3507 = vpow.pop %v3506
        %v3508 = vmul.f32 %v3484, 1.442695
        %v3509 = vpow.pop %v3508
        %v3510 = vmul.f32 %v3485, 1.442695
        %v3511 = vpow.pop %v3510
        %v3512 = vmul.f32 %v3486, 1.442695
        %v3513 = vpow.pop %v3512
        %v3514 = vmul.f32 %v3487, 1.442695
        %v3515 = vpow.pop %v3514
        %v3516 = vmul.f32 %v3488, 1.442695
        %v3517 = vpow.pop %v3516
        %v3518 = vmul.f32 %v3489, 1.442695
        %v3519 = vpow.pop %v3518
        %v3520 = vmul.f32 %v3490, 1.442695
        %v3521 = vpow.pop %v3520
        %v3522 = vmul.f32 %v3491, 1.442695
        %v3523 = vpow.pop %v3522
        %v3524 = vlaneseq
        %v3525 = vshrl.u32 %v3524, 7
        %v3526 = vsub.s32 0, %v3525
        %v3527 = vrot.slane %v3331, %v3526
        %3529 = vbcast.lane.b32.xlu0 %v3527, 256
        %v3530 = vpop.permute.xlu0 %3529
        %s3532 = sor.u32 256, 8
        %3533 = vbcast.lane.b32.xlu0 %v3527, %s3532
        %v3534 = vpop.permute.xlu0 %3533
        %v3535 = vlaneseq
        %v3536 = vshrl.u32 %v3535, 7
        %v3537 = vsub.s32 1, %v3536
        %v3538 = vrot.slane %v3331, %v3537
        %3540 = vbcast.lane.b32.xlu0 %v3538, 256
        %v3541 = vpop.permute.xlu0 %3540
        %s3543 = sor.u32 256, 8
        %3544 = vbcast.lane.b32.xlu0 %v3538, %s3543
        %v3545 = vpop.permute.xlu0 %3544
        %v3546 = vlaneseq
        %v3547 = vshrl.u32 %v3546, 7
        %v3548 = vsub.s32 2, %v3547
        %v3549 = vrot.slane %v3331, %v3548
        %3551 = vbcast.lane.b32.xlu0 %v3549, 256
        %v3552 = vpop.permute.xlu0 %3551
        %s3554 = sor.u32 256, 8
        %3555 = vbcast.lane.b32.xlu0 %v3549, %s3554
        %v3556 = vpop.permute.xlu0 %3555
        %v3557 = vlaneseq
        %v3558 = vshrl.u32 %v3557, 7
        %v3559 = vsub.s32 3, %v3558
        %v3560 = vrot.slane %v3331, %v3559
        %3562 = vbcast.lane.b32.xlu0 %v3560, 256
        %v3563 = vpop.permute.xlu0 %3562
        %s3565 = sor.u32 256, 8
        %3566 = vbcast.lane.b32.xlu0 %v3560, %s3565
        %v3567 = vpop.permute.xlu0 %3566
        %v3568 = vlaneseq
        %v3569 = vshrl.u32 %v3568, 7
        %v3570 = vsub.s32 4, %v3569
        %v3571 = vrot.slane %v3331, %v3570
        %3573 = vbcast.lane.b32.xlu0 %v3571, 256
        %v3574 = vpop.permute.xlu0 %3573
        %s3576 = sor.u32 256, 8
        %3577 = vbcast.lane.b32.xlu0 %v3571, %s3576
        %v3578 = vpop.permute.xlu0 %3577
        %v3579 = vlaneseq
        %v3580 = vshrl.u32 %v3579, 7
        %v3581 = vsub.s32 5, %v3580
        %v3582 = vrot.slane %v3331, %v3581
        %3584 = vbcast.lane.b32.xlu0 %v3582, 256
        %v3585 = vpop.permute.xlu0 %3584
        %s3587 = sor.u32 256, 8
        %3588 = vbcast.lane.b32.xlu0 %v3582, %s3587
        %v3589 = vpop.permute.xlu0 %3588
        %v3590 = vlaneseq
        %v3591 = vshrl.u32 %v3590, 7
        %v3592 = vsub.s32 6, %v3591
        %v3593 = vrot.slane %v3331, %v3592
        %3595 = vbcast.lane.b32.xlu0 %v3593, 256
        %v3596 = vpop.permute.xlu0 %3595
        %s3598 = sor.u32 256, 8
        %3599 = vbcast.lane.b32.xlu0 %v3593, %s3598
        %v3600 = vpop.permute.xlu0 %3599
        %v3601 = vlaneseq
        %v3602 = vshrl.u32 %v3601, 7
        %v3603 = vsub.s32 7, %v3602
        %v3604 = vrot.slane %v3331, %v3603
        %3606 = vbcast.lane.b32.xlu0 %v3604, 256
        %v3607 = vpop.permute.xlu0 %3606
        %s3609 = sor.u32 256, 8
        %3610 = vbcast.lane.b32.xlu0 %v3604, %s3609
        %v3611 = vpop.permute.xlu0 %3610
        %v3612 = vsub.f32 %v2629, %v3530
        %v3613 = vsub.f32 %v2632, %v3534
        %v3614 = vsub.f32 %v2681, %v3541
        %v3615 = vsub.f32 %v2684, %v3545
        %v3616 = vsub.f32 %v2733, %v3552
        %v3617 = vsub.f32 %v2736, %v3556
        %v3618 = vsub.f32 %v2785, %v3563
        %v3619 = vsub.f32 %v2788, %v3567
        %v3620 = vsub.f32 %v2837, %v3574
        %v3621 = vsub.f32 %v2840, %v3578
        %v3622 = vsub.f32 %v2889, %v3585
        %v3623 = vsub.f32 %v2892, %v3589
        %v3624 = vsub.f32 %v2941, %v3596
        %v3625 = vsub.f32 %v2944, %v3600
        %v3626 = vsub.f32 %v2993, %v3607
        %v3627 = vsub.f32 %v2996, %v3611
        %v3628 = vmul.f32 %v3612, 1.442695
        %v3629 = vpow.pop %v3628
        %v3630 = vmul.f32 %v3613, 1.442695
        %v3631 = vpow.pop %v3630
        %v3632 = vmul.f32 %v3614, 1.442695
        %v3633 = vpow.pop %v3632
        %v3634 = vmul.f32 %v3615, 1.442695
        %v3635 = vpow.pop %v3634
        %v3636 = vmul.f32 %v3616, 1.442695
        %v3637 = vpow.pop %v3636
        %v3638 = vmul.f32 %v3617, 1.442695
        %v3639 = vpow.pop %v3638
        %v3640 = vmul.f32 %v3618, 1.442695
        %v3641 = vpow.pop %v3640
        %v3642 = vmul.f32 %v3619, 1.442695
        %v3643 = vpow.pop %v3642
        %v3644 = vmul.f32 %v3620, 1.442695
        %v3645 = vpow.pop %v3644
        %v3646 = vmul.f32 %v3621, 1.442695
        %v3647 = vpow.pop %v3646
        %v3648 = vmul.f32 %v3622, 1.442695
        %v3649 = vpow.pop %v3648
        %v3650 = vmul.f32 %v3623, 1.442695
        %v3651 = vpow.pop %v3650
        %v3652 = vmul.f32 %v3624, 1.442695
        %v3653 = vpow.pop %v3652
        %v3654 = vmul.f32 %v3625, 1.442695
        %v3655 = vpow.pop %v3654
        %v3656 = vmul.f32 %v3626, 1.442695
        %v3657 = vpow.pop %v3656
        %v3658 = vmul.f32 %v3627, 1.442695
        %v3659 = vpow.pop %v3658
        %v3660 = vsel %vm2999, %v3493, 0.0
        %3661 = vadd.xlane.f32.xlu0 %v3660
        %v3662 = vpop.xlane.xlu0 %3661
        %v3663 = vsel %vm2999, %v3495, 0.0
        %3664 = vadd.xlane.f32.xlu0 %v3663
        %v3665 = vpop.xlane.xlu0 %3664
        %v3666 = vsel %vm2999, %v3497, 0.0
        %3667 = vadd.xlane.f32.xlu0 %v3666
        %v3668 = vpop.xlane.xlu0 %3667
        %v3669 = vsel %vm2999, %v3499, 0.0
        %3670 = vadd.xlane.f32.xlu0 %v3669
        %v3671 = vpop.xlane.xlu0 %3670
        %v3672 = vsel %vm2999, %v3501, 0.0
        %3673 = vadd.xlane.f32.xlu0 %v3672
        %v3674 = vpop.xlane.xlu0 %3673
        %v3675 = vsel %vm2999, %v3503, 0.0
        %3676 = vadd.xlane.f32.xlu0 %v3675
        %v3677 = vpop.xlane.xlu0 %3676
        %v3678 = vsel %vm2999, %v3505, 0.0
        %3679 = vadd.xlane.f32.xlu0 %v3678
        %v3680 = vpop.xlane.xlu0 %3679
        %v3681 = vsel %vm2999, %v3507, 0.0
        %3682 = vadd.xlane.f32.xlu0 %v3681
        %v3683 = vpop.xlane.xlu0 %3682
        %v3684 = vsel %vm2999, %v3509, 0.0
        %3685 = vadd.xlane.f32.xlu0 %v3684
        %v3686 = vpop.xlane.xlu0 %3685
        %v3687 = vsel %vm2999, %v3511, 0.0
        %3688 = vadd.xlane.f32.xlu0 %v3687
        %v3689 = vpop.xlane.xlu0 %3688
        %v3690 = vsel %vm2999, %v3513, 0.0
        %3691 = vadd.xlane.f32.xlu0 %v3690
        %v3692 = vpop.xlane.xlu0 %3691
        %v3693 = vsel %vm2999, %v3515, 0.0
        %3694 = vadd.xlane.f32.xlu0 %v3693
        %v3695 = vpop.xlane.xlu0 %3694
        %v3696 = vsel %vm2999, %v3517, 0.0
        %3697 = vadd.xlane.f32.xlu0 %v3696
        %v3698 = vpop.xlane.xlu0 %3697
        %v3699 = vsel %vm2999, %v3519, 0.0
        %3700 = vadd.xlane.f32.xlu0 %v3699
        %v3701 = vpop.xlane.xlu0 %3700
        %v3702 = vsel %vm2999, %v3521, 0.0
        %3703 = vadd.xlane.f32.xlu0 %v3702
        %v3704 = vpop.xlane.xlu0 %3703
        %v3705 = vsel %vm2999, %v3523, 0.0
        %3706 = vadd.xlane.f32.xlu0 %v3705
        %v3707 = vpop.xlane.xlu0 %3706
        %v3724 = vlaneseq
        %v3725 = vshrl.u32 %v3724, 7
        %v3726 = vsub.s32 %v3065, %v3725
        %v3727 = vrot.slane %v3662, %v3726
        %v3728 = vlaneseq
        %v3729 = vshrl.u32 %v3728, 7
        %v3730 = vsub.s32 %v3065, %v3729
        %v3731 = vrot.slane %v3665, %v3730
        %v3732 = vlaneseq
        %v3733 = vshrl.u32 %v3732, 7
        %v3734 = vsub.s32 %v3065, %v3733
        %v3735 = vrot.slane %v3668, %v3734
        %v3736 = vlaneseq
        %v3737 = vshrl.u32 %v3736, 7
        %v3738 = vsub.s32 %v3065, %v3737
        %v3739 = vrot.slane %v3671, %v3738
        %v3740 = vlaneseq
        %v3741 = vshrl.u32 %v3740, 7
        %v3742 = vsub.s32 %v3065, %v3741
        %v3743 = vrot.slane %v3674, %v3742
        %v3744 = vlaneseq
        %v3745 = vshrl.u32 %v3744, 7
        %v3746 = vsub.s32 %v3065, %v3745
        %v3747 = vrot.slane %v3677, %v3746
        %v3748 = vlaneseq
        %v3749 = vshrl.u32 %v3748, 7
        %v3750 = vsub.s32 %v3065, %v3749
        %v3751 = vrot.slane %v3680, %v3750
        %v3752 = vlaneseq
        %v3753 = vshrl.u32 %v3752, 7
        %v3754 = vsub.s32 %v3065, %v3753
        %v3755 = vrot.slane %v3683, %v3754
        %v3756 = vlaneseq
        %v3757 = vshrl.u32 %v3756, 7
        %v3758 = vsub.s32 %v3065, %v3757
        %v3759 = vrot.slane %v3686, %v3758
        %v3760 = vlaneseq
        %v3761 = vshrl.u32 %v3760, 7
        %v3762 = vsub.s32 %v3065, %v3761
        %v3763 = vrot.slane %v3689, %v3762
        %v3764 = vlaneseq
        %v3765 = vshrl.u32 %v3764, 7
        %v3766 = vsub.s32 %v3065, %v3765
        %v3767 = vrot.slane %v3692, %v3766
        %v3768 = vlaneseq
        %v3769 = vshrl.u32 %v3768, 7
        %v3770 = vsub.s32 %v3065, %v3769
        %v3771 = vrot.slane %v3695, %v3770
        %v3772 = vlaneseq
        %v3773 = vshrl.u32 %v3772, 7
        %v3774 = vsub.s32 %v3065, %v3773
        %v3775 = vrot.slane %v3698, %v3774
        %v3776 = vlaneseq
        %v3777 = vshrl.u32 %v3776, 7
        %v3778 = vsub.s32 %v3065, %v3777
        %v3779 = vrot.slane %v3701, %v3778
        %v3780 = vlaneseq
        %v3781 = vshrl.u32 %v3780, 7
        %v3782 = vsub.s32 %v3065, %v3781
        %v3783 = vrot.slane %v3704, %v3782
        %v3784 = vlaneseq
        %v3785 = vshrl.u32 %v3784, 7
        %v3786 = vsub.s32 %v3065, %v3785
        %v3787 = vrot.slane %v3707, %v3786
        %v3788 = vsel %vm3130, %v3731, %v3727
        %v3789 = vsel %vm3132, %v3735, %v3788
        %v3790 = vsel %vm3134, %v3739, %v3789
        %v3791 = vsel %vm3136, %v3743, %v3790
        %v3792 = vsel %vm3138, %v3747, %v3791
        %v3793 = vsel %vm3140, %v3751, %v3792
        %v3794 = vsel %vm3142, %v3755, %v3793
        %v3795 = vsel %vm3130, %v3763, %v3759
        %v3796 = vsel %vm3132, %v3767, %v3795
        %v3797 = vsel %vm3134, %v3771, %v3796
        %v3798 = vsel %vm3136, %v3775, %v3797
        %v3799 = vsel %vm3138, %v3779, %v3798
        %v3800 = vsel %vm3140, %v3783, %v3799
        %v3801 = vsel %vm3142, %v3787, %v3800
        %3804 = vxpose.xlu0.b32.start [1/16] %v3794, 128
        %3805 = vxpose.xlu0.b32.cont [2/16] %v3801, 128
        %3806 = vxpose.xlu0.b32.cont [3/16] 0.0, 128
        %3807 = vxpose.xlu0.b32.cont [4/16] 0.0, 128
        %3808 = vxpose.xlu0.b32.cont [5/16] 0.0, 128
        %3809 = vxpose.xlu0.b32.cont [6/16] 0.0, 128
        %3810 = vxpose.xlu0.b32.cont [7/16] 0.0, 128
        %3811 = vxpose.xlu0.b32.cont [8/16] 0.0, 128
        %3812 = vxpose.xlu0.b32.cont [9/16] 0.0, 128
        %3813 = vxpose.xlu0.b32.cont [10/16] 0.0, 128
        %3814 = vxpose.xlu0.b32.cont [11/16] 0.0, 128
        %3815 = vxpose.xlu0.b32.cont [12/16] 0.0, 128
        %3816 = vxpose.xlu0.b32.cont [13/16] 0.0, 128
        %3817 = vxpose.xlu0.b32.cont [14/16] 0.0, 128
        %3818 = vxpose.xlu0.b32.cont [15/16] 0.0, 128
        %3819 = vxpose.xlu0.b32.end [16/16] 0.0, 128
        %v3820 = vpop.trf.xlu0
        %v3821 = vpop.trf.xlu0
        %v3822 = vpop.trf.xlu0
        %v3823 = vpop.trf.xlu0
        %v3824 = vpop.trf.xlu0
        %v3825 = vpop.trf.xlu0
        %v3826 = vpop.trf.xlu0
        %v3827 = vpop.trf.xlu0
        %v3828 = vpop.trf.xlu0
        %v3829 = vpop.trf.xlu0
        %v3830 = vpop.trf.xlu0
        %v3831 = vpop.trf.xlu0
        %v3832 = vpop.trf.xlu0
        %v3833 = vpop.trf.xlu0
        %v3834 = vpop.trf.xlu0
        %v3835 = vpop.trf.xlu0
        %v3836 = vsel %vm748, %v3629, 0.0
        %3837 = vadd.xlane.f32.xlu0 %v3836
        %v3838 = vpop.xlane.xlu0 %3837
        %v3839 = vsel %vm748, %v3631, 0.0
        %3840 = vadd.xlane.f32.xlu0 %v3839
        %v3841 = vpop.xlane.xlu0 %3840
        %v3842 = vsel %vm748, %v3633, 0.0
        %3843 = vadd.xlane.f32.xlu0 %v3842
        %v3844 = vpop.xlane.xlu0 %3843
        %v3845 = vsel %vm748, %v3635, 0.0
        %3846 = vadd.xlane.f32.xlu0 %v3845
        %v3847 = vpop.xlane.xlu0 %3846
        %v3848 = vsel %vm748, %v3637, 0.0
        %3849 = vadd.xlane.f32.xlu0 %v3848
        %v3850 = vpop.xlane.xlu0 %3849
        %v3851 = vsel %vm748, %v3639, 0.0
        %3852 = vadd.xlane.f32.xlu0 %v3851
        %v3853 = vpop.xlane.xlu0 %3852
        %v3854 = vsel %vm748, %v3641, 0.0
        %3855 = vadd.xlane.f32.xlu0 %v3854
        %v3856 = vpop.xlane.xlu0 %3855
        %v3857 = vsel %vm748, %v3643, 0.0
        %3858 = vadd.xlane.f32.xlu0 %v3857
        %v3859 = vpop.xlane.xlu0 %3858
        %v3860 = vsel %vm748, %v3645, 0.0
        %3861 = vadd.xlane.f32.xlu0 %v3860
        %v3862 = vpop.xlane.xlu0 %3861
        %v3863 = vsel %vm748, %v3647, 0.0
        %3864 = vadd.xlane.f32.xlu0 %v3863
        %v3865 = vpop.xlane.xlu0 %3864
        %v3866 = vsel %vm748, %v3649, 0.0
        %3867 = vadd.xlane.f32.xlu0 %v3866
        %v3868 = vpop.xlane.xlu0 %3867
        %v3869 = vsel %vm748, %v3651, 0.0
        %3870 = vadd.xlane.f32.xlu0 %v3869
        %v3871 = vpop.xlane.xlu0 %3870
        %v3872 = vsel %vm748, %v3653, 0.0
        %3873 = vadd.xlane.f32.xlu0 %v3872
        %v3874 = vpop.xlane.xlu0 %3873
        %v3875 = vsel %vm748, %v3655, 0.0
        %3876 = vadd.xlane.f32.xlu0 %v3875
        %v3877 = vpop.xlane.xlu0 %3876
        %v3878 = vsel %vm748, %v3657, 0.0
        %3879 = vadd.xlane.f32.xlu0 %v3878
        %v3880 = vpop.xlane.xlu0 %3879
        %v3881 = vsel %vm748, %v3659, 0.0
        %3882 = vadd.xlane.f32.xlu0 %v3881
        %v3883 = vpop.xlane.xlu0 %3882
        %v3900 = vlaneseq
        %v3901 = vshrl.u32 %v3900, 7
        %v3902 = vsub.s32 %v3065, %v3901
        %v3903 = vrot.slane %v3838, %v3902
        %v3904 = vlaneseq
        %v3905 = vshrl.u32 %v3904, 7
        %v3906 = vsub.s32 %v3253, %v3905
        %v3907 = vrot.slane %v3841, %v3906
        %v3908 = vsel %vm3258, %v3907, %v3903
        %v3909 = vlaneseq
        %v3910 = vshrl.u32 %v3909, 7
        %v3911 = vsub.s32 %v3065, %v3910
        %v3912 = vrot.slane %v3844, %v3911
        %v3913 = vlaneseq
        %v3914 = vshrl.u32 %v3913, 7
        %v3915 = vsub.s32 %v3253, %v3914
        %v3916 = vrot.slane %v3847, %v3915
        %v3917 = vsel %vm3258, %v3916, %v3912
        %v3918 = vlaneseq
        %v3919 = vshrl.u32 %v3918, 7
        %v3920 = vsub.s32 %v3065, %v3919
        %v3921 = vrot.slane %v3850, %v3920
        %v3922 = vlaneseq
        %v3923 = vshrl.u32 %v3922, 7
        %v3924 = vsub.s32 %v3253, %v3923
        %v3925 = vrot.slane %v3853, %v3924
        %v3926 = vsel %vm3258, %v3925, %v3921
        %v3927 = vlaneseq
        %v3928 = vshrl.u32 %v3927, 7
        %v3929 = vsub.s32 %v3065, %v3928
        %v3930 = vrot.slane %v3856, %v3929
        %v3931 = vlaneseq
        %v3932 = vshrl.u32 %v3931, 7
        %v3933 = vsub.s32 %v3253, %v3932
        %v3934 = vrot.slane %v3859, %v3933
        %v3935 = vsel %vm3258, %v3934, %v3930
        %v3936 = vlaneseq
        %v3937 = vshrl.u32 %v3936, 7
        %v3938 = vsub.s32 %v3065, %v3937
        %v3939 = vrot.slane %v3862, %v3938
        %v3940 = vlaneseq
        %v3941 = vshrl.u32 %v3940, 7
        %v3942 = vsub.s32 %v3253, %v3941
        %v3943 = vrot.slane %v3865, %v3942
        %v3944 = vsel %vm3258, %v3943, %v3939
        %v3945 = vlaneseq
        %v3946 = vshrl.u32 %v3945, 7
        %v3947 = vsub.s32 %v3065, %v3946
        %v3948 = vrot.slane %v3868, %v3947
        %v3949 = vlaneseq
        %v3950 = vshrl.u32 %v3949, 7
        %v3951 = vsub.s32 %v3253, %v3950
        %v3952 = vrot.slane %v3871, %v3951
        %v3953 = vsel %vm3258, %v3952, %v3948
        %v3954 = vlaneseq
        %v3955 = vshrl.u32 %v3954, 7
        %v3956 = vsub.s32 %v3065, %v3955
        %v3957 = vrot.slane %v3874, %v3956
        %v3958 = vlaneseq
        %v3959 = vshrl.u32 %v3958, 7
        %v3960 = vsub.s32 %v3253, %v3959
        %v3961 = vrot.slane %v3877, %v3960
        %v3962 = vsel %vm3258, %v3961, %v3957
        %v3963 = vlaneseq
        %v3964 = vshrl.u32 %v3963, 7
        %v3965 = vsub.s32 %v3065, %v3964
        %v3966 = vrot.slane %v3880, %v3965
        %v3967 = vlaneseq
        %v3968 = vshrl.u32 %v3967, 7
        %v3969 = vsub.s32 %v3253, %v3968
        %v3970 = vrot.slane %v3883, %v3969
        %v3971 = vsel %vm3258, %v3970, %v3966
        %v3972 = vsel %vm3130, %v3917, %v3908
        %v3973 = vsel %vm3132, %v3926, %v3972
        %v3974 = vsel %vm3134, %v3935, %v3973
        %v3975 = vsel %vm3136, %v3944, %v3974
        %v3976 = vsel %vm3138, %v3953, %v3975
        %v3977 = vsel %vm3140, %v3962, %v3976
        %v3978 = vsel %vm3142, %v3971, %v3977
        %v3980 = vadd.f32 %v3820, %v3978
        %v3981 = vrcp.pop %v3980
        %v3982 = vpack.c.bf16 %v3493, %v3493
        %v3983 = vpack.c.bf16 %v3495, %v3495
        %v3984 = vpack.c.bf16 %v3497, %v3497
        %v3985 = vpack.c.bf16 %v3499, %v3499
        %v3986 = vpack.c.bf16 %v3501, %v3501
        %v3987 = vpack.c.bf16 %v3503, %v3503
        %v3988 = vpack.c.bf16 %v3505, %v3505
        %v3989 = vpack.c.bf16 %v3507, %v3507
        %v3990 = vpack.c.bf16 %v3509, %v3509
        %v3991 = vpack.c.bf16 %v3511, %v3511
        %v3992 = vpack.c.bf16 %v3513, %v3513
        %v3993 = vpack.c.bf16 %v3515, %v3515
        %v3994 = vpack.c.bf16 %v3517, %v3517
        %v3995 = vpack.c.bf16 %v3519, %v3519
        %v3996 = vpack.c.bf16 %v3521, %v3521
        %v3997 = vpack.c.bf16 %v3523, %v3523
        %v3999 = vsel %vm2999, %v3982, 0
        %vm4001 = vcmask 1043456
        %v4003 = vsel %vm4001, %v1797, 0
        %4005 = vmatprep.subr.bf16.mxu0 0
        %4006 = vmatpush1.bf16.msra.mxu0 0
        %4007 = vmatprep.subr.bf16.mxu0 0
        %4008 = vmatpush1.bf16.msra.mxu0 0
        %4009 = vmatprep.subr.bf16.mxu0 0
        %4010 = vmatpush1.bf16.msra.mxu0 0
        %4011 = vmatprep.subr.bf16.mxu0 0
        %4012 = vmatpush1.bf16.msra.mxu0 0
        %4013 = vmatprep.subr.bf16.mxu0 0
        %4014 = vmatpush1.bf16.msra.mxu0 0
        %4015 = vmatprep.subr.bf16.mxu0 0
        %4016 = vmatpush1.bf16.msra.mxu0 0
        %4017 = vmatprep.subr.bf16.mxu0 0
        %4018 = vmatpush1.bf16.msra.mxu0 0
        %4019 = vmatprep.subr.bf16.mxu0 0
        %4020 = vmatpush1.bf16.msra.mxu0 %v4003
        %4021 = vmatprep.subr.bf16.mxu0 0
        %4022 = vmatpush2.bf16.msra.mxu0 0
        %4023 = vmatprep.subr.bf16.mxu0 0
        %4024 = vmatpush2.bf16.msra.mxu0 0
        %4025 = vmatprep.subr.bf16.mxu0 0
        %4026 = vmatpush2.bf16.msra.mxu0 0
        %4027 = vmatprep.subr.bf16.mxu0 0
        %4028 = vmatpush2.bf16.msra.mxu0 0
        %4029 = vmatprep.subr.bf16.mxu0 0
        %4030 = vmatpush2.bf16.msra.mxu0 0
        %4031 = vmatprep.subr.bf16.mxu0 0
        %4032 = vmatpush2.bf16.msra.mxu0 0
        %4033 = vmatprep.subr.bf16.mxu0 0
        %4034 = vmatpush2.bf16.msra.mxu0 0
        %4035 = vmatprep.subr.bf16.mxu0 0
        %4036 = vmatpush2.bf16.msra.mxu0 0
        %4037 = vmatprep.mubr.bf16.mxu0 0
        %4038 = vmatmul.mubr.bf16.gmra.mxu0 %v3999
        %v4039 = vpop.f32.mrf.mxu0
        %v4040 = vadd.f32 0.0, %v4039
        %v4041 = vpop.f32.mrf.mxu0
        %v4042 = vpop.f32.mrf.mxu0
        %v4043 = vpop.f32.mrf.mxu0
        %4044 = vdwg.mxu0
        %v4046 = vsel %vm2999, %v3983, 0
        %v4049 = vsel %vm4001, %v1798, 0
        %4051 = vmatprep.subr.bf16.mxu0 0
        %4052 = vmatpush1.bf16.msra.mxu0 0
        %4053 = vmatprep.subr.bf16.mxu0 0
        %4054 = vmatpush1.bf16.msra.mxu0 0
        %4055 = vmatprep.subr.bf16.mxu0 0
        %4056 = vmatpush1.bf16.msra.mxu0 0
        %4057 = vmatprep.subr.bf16.mxu0 0
        %4058 = vmatpush1.bf16.msra.mxu0 0
        %4059 = vmatprep.subr.bf16.mxu0 0
        %4060 = vmatpush1.bf16.msra.mxu0 0
        %4061 = vmatprep.subr.bf16.mxu0 0
        %4062 = vmatpush1.bf16.msra.mxu0 0
        %4063 = vmatprep.subr.bf16.mxu0 0
        %4064 = vmatpush1.bf16.msra.mxu0 0
        %4065 = vmatprep.subr.bf16.mxu0 0
        %4066 = vmatpush1.bf16.msra.mxu0 %v4049
        %4067 = vmatprep.subr.bf16.mxu0 0
        %4068 = vmatpush2.bf16.msra.mxu0 0
        %4069 = vmatprep.subr.bf16.mxu0 0
        %4070 = vmatpush2.bf16.msra.mxu0 0
        %4071 = vmatprep.subr.bf16.mxu0 0
        %4072 = vmatpush2.bf16.msra.mxu0 0
        %4073 = vmatprep.subr.bf16.mxu0 0
        %4074 = vmatpush2.bf16.msra.mxu0 0
        %4075 = vmatprep.subr.bf16.mxu0 0
        %4076 = vmatpush2.bf16.msra.mxu0 0
        %4077 = vmatprep.subr.bf16.mxu0 0
        %4078 = vmatpush2.bf16.msra.mxu0 0
        %4079 = vmatprep.subr.bf16.mxu0 0
        %4080 = vmatpush2.bf16.msra.mxu0 0
        %4081 = vmatprep.subr.bf16.mxu0 0
        %4082 = vmatpush2.bf16.msra.mxu0 0
        %4083 = vmatprep.mubr.bf16.mxu0 0
        %4084 = vmatmul.mubr.bf16.gmra.mxu0 %v4046
        %v4085 = vpop.f32.mrf.mxu0
        %v4086 = vadd.f32 0.0, %v4085
        %v4087 = vpop.f32.mrf.mxu0
        %v4088 = vpop.f32.mrf.mxu0
        %v4089 = vpop.f32.mrf.mxu0
        %4090 = vdwg.mxu0
        %v4092 = vsel %vm2999, %v3984, 0
        %v4095 = vsel %vm4001, %v1799, 0
        %4097 = vmatprep.subr.bf16.mxu0 0
        %4098 = vmatpush1.bf16.msra.mxu0 0
        %4099 = vmatprep.subr.bf16.mxu0 0
        %4100 = vmatpush1.bf16.msra.mxu0 0
        %4101 = vmatprep.subr.bf16.mxu0 0
        %4102 = vmatpush1.bf16.msra.mxu0 0
        %4103 = vmatprep.subr.bf16.mxu0 0
        %4104 = vmatpush1.bf16.msra.mxu0 0
        %4105 = vmatprep.subr.bf16.mxu0 0
        %4106 = vmatpush1.bf16.msra.mxu0 0
        %4107 = vmatprep.subr.bf16.mxu0 0
        %4108 = vmatpush1.bf16.msra.mxu0 0
        %4109 = vmatprep.subr.bf16.mxu0 0
        %4110 = vmatpush1.bf16.msra.mxu0 0
        %4111 = vmatprep.subr.bf16.mxu0 0
        %4112 = vmatpush1.bf16.msra.mxu0 %v4095
        %4113 = vmatprep.subr.bf16.mxu0 0
        %4114 = vmatpush2.bf16.msra.mxu0 0
        %4115 = vmatprep.subr.bf16.mxu0 0
        %4116 = vmatpush2.bf16.msra.mxu0 0
        %4117 = vmatprep.subr.bf16.mxu0 0
        %4118 = vmatpush2.bf16.msra.mxu0 0
        %4119 = vmatprep.subr.bf16.mxu0 0
        %4120 = vmatpush2.bf16.msra.mxu0 0
        %4121 = vmatprep.subr.bf16.mxu0 0
        %4122 = vmatpush2.bf16.msra.mxu0 0
        %4123 = vmatprep.subr.bf16.mxu0 0
        %4124 = vmatpush2.bf16.msra.mxu0 0
        %4125 = vmatprep.subr.bf16.mxu0 0
        %4126 = vmatpush2.bf16.msra.mxu0 0
        %4127 = vmatprep.subr.bf16.mxu0 0
        %4128 = vmatpush2.bf16.msra.mxu0 0
        %4129 = vmatprep.mubr.bf16.mxu0 0
        %4130 = vmatmul.mubr.bf16.gmra.mxu0 %v4092
        %v4131 = vpop.f32.mrf.mxu0
        %v4132 = vadd.f32 0.0, %v4131
        %v4133 = vpop.f32.mrf.mxu0
        %v4134 = vpop.f32.mrf.mxu0
        %v4135 = vpop.f32.mrf.mxu0
        %4136 = vdwg.mxu0
        %v4138 = vsel %vm2999, %v3985, 0
        %v4141 = vsel %vm4001, %v1800, 0
        %4143 = vmatprep.subr.bf16.mxu0 0
        %4144 = vmatpush1.bf16.msra.mxu0 0
        %4145 = vmatprep.subr.bf16.mxu0 0
        %4146 = vmatpush1.bf16.msra.mxu0 0
        %4147 = vmatprep.subr.bf16.mxu0 0
        %4148 = vmatpush1.bf16.msra.mxu0 0
        %4149 = vmatprep.subr.bf16.mxu0 0
        %4150 = vmatpush1.bf16.msra.mxu0 0
        %4151 = vmatprep.subr.bf16.mxu0 0
        %4152 = vmatpush1.bf16.msra.mxu0 0
        %4153 = vmatprep.subr.bf16.mxu0 0
        %4154 = vmatpush1.bf16.msra.mxu0 0
        %4155 = vmatprep.subr.bf16.mxu0 0
        %4156 = vmatpush1.bf16.msra.mxu0 0
        %4157 = vmatprep.subr.bf16.mxu0 0
        %4158 = vmatpush1.bf16.msra.mxu0 %v4141
        %4159 = vmatprep.subr.bf16.mxu0 0
        %4160 = vmatpush2.bf16.msra.mxu0 0
        %4161 = vmatprep.subr.bf16.mxu0 0
        %4162 = vmatpush2.bf16.msra.mxu0 0
        %4163 = vmatprep.subr.bf16.mxu0 0
        %4164 = vmatpush2.bf16.msra.mxu0 0
        %4165 = vmatprep.subr.bf16.mxu0 0
        %4166 = vmatpush2.bf16.msra.mxu0 0
        %4167 = vmatprep.subr.bf16.mxu0 0
        %4168 = vmatpush2.bf16.msra.mxu0 0
        %4169 = vmatprep.subr.bf16.mxu0 0
        %4170 = vmatpush2.bf16.msra.mxu0 0
        %4171 = vmatprep.subr.bf16.mxu0 0
        %4172 = vmatpush2.bf16.msra.mxu0 0
        %4173 = vmatprep.subr.bf16.mxu0 0
        %4174 = vmatpush2.bf16.msra.mxu0 0
        %4175 = vmatprep.mubr.bf16.mxu0 0
        %4176 = vmatmul.mubr.bf16.gmra.mxu0 %v4138
        %v4177 = vpop.f32.mrf.mxu0
        %v4178 = vadd.f32 0.0, %v4177
        %v4179 = vpop.f32.mrf.mxu0
        %v4180 = vpop.f32.mrf.mxu0
        %v4181 = vpop.f32.mrf.mxu0
        %4182 = vdwg.mxu0
        %v4184 = vsel %vm2999, %v3986, 0
        %v4187 = vsel %vm4001, %v1801, 0
        %4189 = vmatprep.subr.bf16.mxu0 0
        %4190 = vmatpush1.bf16.msra.mxu0 0
        %4191 = vmatprep.subr.bf16.mxu0 0
        %4192 = vmatpush1.bf16.msra.mxu0 0
        %4193 = vmatprep.subr.bf16.mxu0 0
        %4194 = vmatpush1.bf16.msra.mxu0 0
        %4195 = vmatprep.subr.bf16.mxu0 0
        %4196 = vmatpush1.bf16.msra.mxu0 0
        %4197 = vmatprep.subr.bf16.mxu0 0
        %4198 = vmatpush1.bf16.msra.mxu0 0
        %4199 = vmatprep.subr.bf16.mxu0 0
        %4200 = vmatpush1.bf16.msra.mxu0 0
        %4201 = vmatprep.subr.bf16.mxu0 0
        %4202 = vmatpush1.bf16.msra.mxu0 0
        %4203 = vmatprep.subr.bf16.mxu0 0
        %4204 = vmatpush1.bf16.msra.mxu0 %v4187
        %4205 = vmatprep.subr.bf16.mxu0 0
        %4206 = vmatpush2.bf16.msra.mxu0 0
        %4207 = vmatprep.subr.bf16.mxu0 0
        %4208 = vmatpush2.bf16.msra.mxu0 0
        %4209 = vmatprep.subr.bf16.mxu0 0
        %4210 = vmatpush2.bf16.msra.mxu0 0
        %4211 = vmatprep.subr.bf16.mxu0 0
        %4212 = vmatpush2.bf16.msra.mxu0 0
        %4213 = vmatprep.subr.bf16.mxu0 0
        %4214 = vmatpush2.bf16.msra.mxu0 0
        %4215 = vmatprep.subr.bf16.mxu0 0
        %4216 = vmatpush2.bf16.msra.mxu0 0
        %4217 = vmatprep.subr.bf16.mxu0 0
        %4218 = vmatpush2.bf16.msra.mxu0 0
        %4219 = vmatprep.subr.bf16.mxu0 0
        %4220 = vmatpush2.bf16.msra.mxu0 0
        %4221 = vmatprep.mubr.bf16.mxu0 0
        %4222 = vmatmul.mubr.bf16.gmra.mxu0 %v4184
        %v4223 = vpop.f32.mrf.mxu0
        %v4224 = vadd.f32 0.0, %v4223
        %v4225 = vpop.f32.mrf.mxu0
        %v4226 = vpop.f32.mrf.mxu0
        %v4227 = vpop.f32.mrf.mxu0
        %4228 = vdwg.mxu0
        %v4230 = vsel %vm2999, %v3987, 0
        %v4233 = vsel %vm4001, %v1802, 0
        %4235 = vmatprep.subr.bf16.mxu0 0
        %4236 = vmatpush1.bf16.msra.mxu0 0
        %4237 = vmatprep.subr.bf16.mxu0 0
        %4238 = vmatpush1.bf16.msra.mxu0 0
        %4239 = vmatprep.subr.bf16.mxu0 0
        %4240 = vmatpush1.bf16.msra.mxu0 0
        %4241 = vmatprep.subr.bf16.mxu0 0
        %4242 = vmatpush1.bf16.msra.mxu0 0
        %4243 = vmatprep.subr.bf16.mxu0 0
        %4244 = vmatpush1.bf16.msra.mxu0 0
        %4245 = vmatprep.subr.bf16.mxu0 0
        %4246 = vmatpush1.bf16.msra.mxu0 0
        %4247 = vmatprep.subr.bf16.mxu0 0
        %4248 = vmatpush1.bf16.msra.mxu0 0
        %4249 = vmatprep.subr.bf16.mxu0 0
        %4250 = vmatpush1.bf16.msra.mxu0 %v4233
        %4251 = vmatprep.subr.bf16.mxu0 0
        %4252 = vmatpush2.bf16.msra.mxu0 0
        %4253 = vmatprep.subr.bf16.mxu0 0
        %4254 = vmatpush2.bf16.msra.mxu0 0
        %4255 = vmatprep.subr.bf16.mxu0 0
        %4256 = vmatpush2.bf16.msra.mxu0 0
        %4257 = vmatprep.subr.bf16.mxu0 0
        %4258 = vmatpush2.bf16.msra.mxu0 0
        %4259 = vmatprep.subr.bf16.mxu0 0
        %4260 = vmatpush2.bf16.msra.mxu0 0
        %4261 = vmatprep.subr.bf16.mxu0 0
        %4262 = vmatpush2.bf16.msra.mxu0 0
        %4263 = vmatprep.subr.bf16.mxu0 0
        %4264 = vmatpush2.bf16.msra.mxu0 0
        %4265 = vmatprep.subr.bf16.mxu0 0
        %4266 = vmatpush2.bf16.msra.mxu0 0
        %4267 = vmatprep.mubr.bf16.mxu0 0
        %4268 = vmatmul.mubr.bf16.gmra.mxu0 %v4230
        %v4269 = vpop.f32.mrf.mxu0
        %v4270 = vadd.f32 0.0, %v4269
        %v4271 = vpop.f32.mrf.mxu0
        %v4272 = vpop.f32.mrf.mxu0
        %v4273 = vpop.f32.mrf.mxu0
        %4274 = vdwg.mxu0
        %v4276 = vsel %vm2999, %v3988, 0
        %v4279 = vsel %vm4001, %v1803, 0
        %4281 = vmatprep.subr.bf16.mxu0 0
        %4282 = vmatpush1.bf16.msra.mxu0 0
        %4283 = vmatprep.subr.bf16.mxu0 0
        %4284 = vmatpush1.bf16.msra.mxu0 0
        %4285 = vmatprep.subr.bf16.mxu0 0
        %4286 = vmatpush1.bf16.msra.mxu0 0
        %4287 = vmatprep.subr.bf16.mxu0 0
        %4288 = vmatpush1.bf16.msra.mxu0 0
        %4289 = vmatprep.subr.bf16.mxu0 0
        %4290 = vmatpush1.bf16.msra.mxu0 0
        %4291 = vmatprep.subr.bf16.mxu0 0
        %4292 = vmatpush1.bf16.msra.mxu0 0
        %4293 = vmatprep.subr.bf16.mxu0 0
        %4294 = vmatpush1.bf16.msra.mxu0 0
        %4295 = vmatprep.subr.bf16.mxu0 0
        %4296 = vmatpush1.bf16.msra.mxu0 %v4279
        %4297 = vmatprep.subr.bf16.mxu0 0
        %4298 = vmatpush2.bf16.msra.mxu0 0
        %4299 = vmatprep.subr.bf16.mxu0 0
        %4300 = vmatpush2.bf16.msra.mxu0 0
        %4301 = vmatprep.subr.bf16.mxu0 0
        %4302 = vmatpush2.bf16.msra.mxu0 0
        %4303 = vmatprep.subr.bf16.mxu0 0
        %4304 = vmatpush2.bf16.msra.mxu0 0
        %4305 = vmatprep.subr.bf16.mxu0 0
        %4306 = vmatpush2.bf16.msra.mxu0 0
        %4307 = vmatprep.subr.bf16.mxu0 0
        %4308 = vmatpush2.bf16.msra.mxu0 0
        %4309 = vmatprep.subr.bf16.mxu0 0
        %4310 = vmatpush2.bf16.msra.mxu0 0
        %4311 = vmatprep.subr.bf16.mxu0 0
        %4312 = vmatpush2.bf16.msra.mxu0 0
        %4313 = vmatprep.mubr.bf16.mxu0 0
        %4314 = vmatmul.mubr.bf16.gmra.mxu0 %v4276
        %v4315 = vpop.f32.mrf.mxu0
        %v4316 = vadd.f32 0.0, %v4315
        %v4317 = vpop.f32.mrf.mxu0
        %v4318 = vpop.f32.mrf.mxu0
        %v4319 = vpop.f32.mrf.mxu0
        %4320 = vdwg.mxu0
        %v4322 = vsel %vm2999, %v3989, 0
        %v4325 = vsel %vm4001, %v1804, 0
        %4327 = vmatprep.subr.bf16.mxu0 0
        %4328 = vmatpush1.bf16.msra.mxu0 0
        %4329 = vmatprep.subr.bf16.mxu0 0
        %4330 = vmatpush1.bf16.msra.mxu0 0
        %4331 = vmatprep.subr.bf16.mxu0 0
        %4332 = vmatpush1.bf16.msra.mxu0 0
        %4333 = vmatprep.subr.bf16.mxu0 0
        %4334 = vmatpush1.bf16.msra.mxu0 0
        %4335 = vmatprep.subr.bf16.mxu0 0
        %4336 = vmatpush1.bf16.msra.mxu0 0
        %4337 = vmatprep.subr.bf16.mxu0 0
        %4338 = vmatpush1.bf16.msra.mxu0 0
        %4339 = vmatprep.subr.bf16.mxu0 0
        %4340 = vmatpush1.bf16.msra.mxu0 0
        %4341 = vmatprep.subr.bf16.mxu0 0
        %4342 = vmatpush1.bf16.msra.mxu0 %v4325
        %4343 = vmatprep.subr.bf16.mxu0 0
        %4344 = vmatpush2.bf16.msra.mxu0 0
        %4345 = vmatprep.subr.bf16.mxu0 0
        %4346 = vmatpush2.bf16.msra.mxu0 0
        %4347 = vmatprep.subr.bf16.mxu0 0
        %4348 = vmatpush2.bf16.msra.mxu0 0
        %4349 = vmatprep.subr.bf16.mxu0 0
        %4350 = vmatpush2.bf16.msra.mxu0 0
        %4351 = vmatprep.subr.bf16.mxu0 0
        %4352 = vmatpush2.bf16.msra.mxu0 0
        %4353 = vmatprep.subr.bf16.mxu0 0
        %4354 = vmatpush2.bf16.msra.mxu0 0
        %4355 = vmatprep.subr.bf16.mxu0 0
        %4356 = vmatpush2.bf16.msra.mxu0 0
        %4357 = vmatprep.subr.bf16.mxu0 0
        %4358 = vmatpush2.bf16.msra.mxu0 0
        %4359 = vmatprep.mubr.bf16.mxu0 0
        %4360 = vmatmul.mubr.bf16.gmra.mxu0 %v4322
        %v4361 = vpop.f32.mrf.mxu0
        %v4362 = vadd.f32 0.0, %v4361
        %v4363 = vpop.f32.mrf.mxu0
        %v4364 = vpop.f32.mrf.mxu0
        %v4365 = vpop.f32.mrf.mxu0
        %4366 = vdwg.mxu0
        %v4368 = vsel %vm2999, %v3990, 0
        %v4371 = vsel %vm4001, %v1805, 0
        %4373 = vmatprep.subr.bf16.mxu0 0
        %4374 = vmatpush1.bf16.msra.mxu0 0
        %4375 = vmatprep.subr.bf16.mxu0 0
        %4376 = vmatpush1.bf16.msra.mxu0 0
        %4377 = vmatprep.subr.bf16.mxu0 0
        %4378 = vmatpush1.bf16.msra.mxu0 0
        %4379 = vmatprep.subr.bf16.mxu0 0
        %4380 = vmatpush1.bf16.msra.mxu0 0
        %4381 = vmatprep.subr.bf16.mxu0 0
        %4382 = vmatpush1.bf16.msra.mxu0 0
        %4383 = vmatprep.subr.bf16.mxu0 0
        %4384 = vmatpush1.bf16.msra.mxu0 0
        %4385 = vmatprep.subr.bf16.mxu0 0
        %4386 = vmatpush1.bf16.msra.mxu0 0
        %4387 = vmatprep.subr.bf16.mxu0 0
        %4388 = vmatpush1.bf16.msra.mxu0 %v4371
        %4389 = vmatprep.subr.bf16.mxu0 0
        %4390 = vmatpush2.bf16.msra.mxu0 0
        %4391 = vmatprep.subr.bf16.mxu0 0
        %4392 = vmatpush2.bf16.msra.mxu0 0
        %4393 = vmatprep.subr.bf16.mxu0 0
        %4394 = vmatpush2.bf16.msra.mxu0 0
        %4395 = vmatprep.subr.bf16.mxu0 0
        %4396 = vmatpush2.bf16.msra.mxu0 0
        %4397 = vmatprep.subr.bf16.mxu0 0
        %4398 = vmatpush2.bf16.msra.mxu0 0
        %4399 = vmatprep.subr.bf16.mxu0 0
        %4400 = vmatpush2.bf16.msra.mxu0 0
        %4401 = vmatprep.subr.bf16.mxu0 0
        %4402 = vmatpush2.bf16.msra.mxu0 0
        %4403 = vmatprep.subr.bf16.mxu0 0
        %4404 = vmatpush2.bf16.msra.mxu0 0
        %4405 = vmatprep.mubr.bf16.mxu0 0
        %4406 = vmatmul.mubr.bf16.gmra.mxu0 %v4368
        %v4407 = vpop.f32.mrf.mxu0
        %v4408 = vadd.f32 0.0, %v4407
        %v4409 = vpop.f32.mrf.mxu0
        %v4410 = vpop.f32.mrf.mxu0
        %v4411 = vpop.f32.mrf.mxu0
        %4412 = vdwg.mxu0
        %v4414 = vsel %vm2999, %v3991, 0
        %v4417 = vsel %vm4001, %v1806, 0
        %4419 = vmatprep.subr.bf16.mxu0 0
        %4420 = vmatpush1.bf16.msra.mxu0 0
        %4421 = vmatprep.subr.bf16.mxu0 0
        %4422 = vmatpush1.bf16.msra.mxu0 0
        %4423 = vmatprep.subr.bf16.mxu0 0
        %4424 = vmatpush1.bf16.msra.mxu0 0
        %4425 = vmatprep.subr.bf16.mxu0 0
        %4426 = vmatpush1.bf16.msra.mxu0 0
        %4427 = vmatprep.subr.bf16.mxu0 0
        %4428 = vmatpush1.bf16.msra.mxu0 0
        %4429 = vmatprep.subr.bf16.mxu0 0
        %4430 = vmatpush1.bf16.msra.mxu0 0
        %4431 = vmatprep.subr.bf16.mxu0 0
        %4432 = vmatpush1.bf16.msra.mxu0 0
        %4433 = vmatprep.subr.bf16.mxu0 0
        %4434 = vmatpush1.bf16.msra.mxu0 %v4417
        %4435 = vmatprep.subr.bf16.mxu0 0
        %4436 = vmatpush2.bf16.msra.mxu0 0
        %4437 = vmatprep.subr.bf16.mxu0 0
        %4438 = vmatpush2.bf16.msra.mxu0 0
        %4439 = vmatprep.subr.bf16.mxu0 0
        %4440 = vmatpush2.bf16.msra.mxu0 0
        %4441 = vmatprep.subr.bf16.mxu0 0
        %4442 = vmatpush2.bf16.msra.mxu0 0
        %4443 = vmatprep.subr.bf16.mxu0 0
        %4444 = vmatpush2.bf16.msra.mxu0 0
        %4445 = vmatprep.subr.bf16.mxu0 0
        %4446 = vmatpush2.bf16.msra.mxu0 0
        %4447 = vmatprep.subr.bf16.mxu0 0
        %4448 = vmatpush2.bf16.msra.mxu0 0
        %4449 = vmatprep.subr.bf16.mxu0 0
        %4450 = vmatpush2.bf16.msra.mxu0 0
        %4451 = vmatprep.mubr.bf16.mxu0 0
        %4452 = vmatmul.mubr.bf16.gmra.mxu0 %v4414
        %v4453 = vpop.f32.mrf.mxu0
        %v4454 = vadd.f32 0.0, %v4453
        %v4455 = vpop.f32.mrf.mxu0
        %v4456 = vpop.f32.mrf.mxu0
        %v4457 = vpop.f32.mrf.mxu0
        %4458 = vdwg.mxu0
        %v4460 = vsel %vm2999, %v3992, 0
        %v4463 = vsel %vm4001, %v1807, 0
        %4465 = vmatprep.subr.bf16.mxu0 0
        %4466 = vmatpush1.bf16.msra.mxu0 0
        %4467 = vmatprep.subr.bf16.mxu0 0
        %4468 = vmatpush1.bf16.msra.mxu0 0
        %4469 = vmatprep.subr.bf16.mxu0 0
        %4470 = vmatpush1.bf16.msra.mxu0 0
        %4471 = vmatprep.subr.bf16.mxu0 0
        %4472 = vmatpush1.bf16.msra.mxu0 0
        %4473 = vmatprep.subr.bf16.mxu0 0
        %4474 = vmatpush1.bf16.msra.mxu0 0
        %4475 = vmatprep.subr.bf16.mxu0 0
        %4476 = vmatpush1.bf16.msra.mxu0 0
        %4477 = vmatprep.subr.bf16.mxu0 0
        %4478 = vmatpush1.bf16.msra.mxu0 0
        %4479 = vmatprep.subr.bf16.mxu0 0
        %4480 = vmatpush1.bf16.msra.mxu0 %v4463
        %4481 = vmatprep.subr.bf16.mxu0 0
        %4482 = vmatpush2.bf16.msra.mxu0 0
        %4483 = vmatprep.subr.bf16.mxu0 0
        %4484 = vmatpush2.bf16.msra.mxu0 0
        %4485 = vmatprep.subr.bf16.mxu0 0
        %4486 = vmatpush2.bf16.msra.mxu0 0
        %4487 = vmatprep.subr.bf16.mxu0 0
        %4488 = vmatpush2.bf16.msra.mxu0 0
        %4489 = vmatprep.subr.bf16.mxu0 0
        %4490 = vmatpush2.bf16.msra.mxu0 0
        %4491 = vmatprep.subr.bf16.mxu0 0
        %4492 = vmatpush2.bf16.msra.mxu0 0
        %4493 = vmatprep.subr.bf16.mxu0 0
        %4494 = vmatpush2.bf16.msra.mxu0 0
        %4495 = vmatprep.subr.bf16.mxu0 0
        %4496 = vmatpush2.bf16.msra.mxu0 0
        %4497 = vmatprep.mubr.bf16.mxu0 0
        %4498 = vmatmul.mubr.bf16.gmra.mxu0 %v4460
        %v4499 = vpop.f32.mrf.mxu0
        %v4500 = vadd.f32 0.0, %v4499
        %v4501 = vpop.f32.mrf.mxu0
        %v4502 = vpop.f32.mrf.mxu0
        %v4503 = vpop.f32.mrf.mxu0
        %4504 = vdwg.mxu0
        %v4506 = vsel %vm2999, %v3993, 0
        %v4509 = vsel %vm4001, %v1808, 0
        %4511 = vmatprep.subr.bf16.mxu0 0
        %4512 = vmatpush1.bf16.msra.mxu0 0
        %4513 = vmatprep.subr.bf16.mxu0 0
        %4514 = vmatpush1.bf16.msra.mxu0 0
        %4515 = vmatprep.subr.bf16.mxu0 0
        %4516 = vmatpush1.bf16.msra.mxu0 0
        %4517 = vmatprep.subr.bf16.mxu0 0
        %4518 = vmatpush1.bf16.msra.mxu0 0
        %4519 = vmatprep.subr.bf16.mxu0 0
        %4520 = vmatpush1.bf16.msra.mxu0 0
        %4521 = vmatprep.subr.bf16.mxu0 0
        %4522 = vmatpush1.bf16.msra.mxu0 0
        %4523 = vmatprep.subr.bf16.mxu0 0
        %4524 = vmatpush1.bf16.msra.mxu0 0
        %4525 = vmatprep.subr.bf16.mxu0 0
        %4526 = vmatpush1.bf16.msra.mxu0 %v4509
        %4527 = vmatprep.subr.bf16.mxu0 0
        %4528 = vmatpush2.bf16.msra.mxu0 0
        %4529 = vmatprep.subr.bf16.mxu0 0
        %4530 = vmatpush2.bf16.msra.mxu0 0
        %4531 = vmatprep.subr.bf16.mxu0 0
        %4532 = vmatpush2.bf16.msra.mxu0 0
        %4533 = vmatprep.subr.bf16.mxu0 0
        %4534 = vmatpush2.bf16.msra.mxu0 0
        %4535 = vmatprep.subr.bf16.mxu0 0
        %4536 = vmatpush2.bf16.msra.mxu0 0
        %4537 = vmatprep.subr.bf16.mxu0 0
        %4538 = vmatpush2.bf16.msra.mxu0 0
        %4539 = vmatprep.subr.bf16.mxu0 0
        %4540 = vmatpush2.bf16.msra.mxu0 0
        %4541 = vmatprep.subr.bf16.mxu0 0
        %4542 = vmatpush2.bf16.msra.mxu0 0
        %4543 = vmatprep.mubr.bf16.mxu0 0
        %4544 = vmatmul.mubr.bf16.gmra.mxu0 %v4506
        %v4545 = vpop.f32.mrf.mxu0
        %v4546 = vadd.f32 0.0, %v4545
        %v4547 = vpop.f32.mrf.mxu0
        %v4548 = vpop.f32.mrf.mxu0
        %v4549 = vpop.f32.mrf.mxu0
        %4550 = vdwg.mxu0
        %v4552 = vsel %vm2999, %v3994, 0
        %v4555 = vsel %vm4001, %v1809, 0
        %4557 = vmatprep.subr.bf16.mxu0 0
        %4558 = vmatpush1.bf16.msra.mxu0 0
        %4559 = vmatprep.subr.bf16.mxu0 0
        %4560 = vmatpush1.bf16.msra.mxu0 0
        %4561 = vmatprep.subr.bf16.mxu0 0
        %4562 = vmatpush1.bf16.msra.mxu0 0
        %4563 = vmatprep.subr.bf16.mxu0 0
        %4564 = vmatpush1.bf16.msra.mxu0 0
        %4565 = vmatprep.subr.bf16.mxu0 0
        %4566 = vmatpush1.bf16.msra.mxu0 0
        %4567 = vmatprep.subr.bf16.mxu0 0
        %4568 = vmatpush1.bf16.msra.mxu0 0
        %4569 = vmatprep.subr.bf16.mxu0 0
        %4570 = vmatpush1.bf16.msra.mxu0 0
        %4571 = vmatprep.subr.bf16.mxu0 0
        %4572 = vmatpush1.bf16.msra.mxu0 %v4555
        %4573 = vmatprep.subr.bf16.mxu0 0
        %4574 = vmatpush2.bf16.msra.mxu0 0
        %4575 = vmatprep.subr.bf16.mxu0 0
        %4576 = vmatpush2.bf16.msra.mxu0 0
        %4577 = vmatprep.subr.bf16.mxu0 0
        %4578 = vmatpush2.bf16.msra.mxu0 0
        %4579 = vmatprep.subr.bf16.mxu0 0
        %4580 = vmatpush2.bf16.msra.mxu0 0
        %4581 = vmatprep.subr.bf16.mxu0 0
        %4582 = vmatpush2.bf16.msra.mxu0 0
        %4583 = vmatprep.subr.bf16.mxu0 0
        %4584 = vmatpush2.bf16.msra.mxu0 0
        %4585 = vmatprep.subr.bf16.mxu0 0
        %4586 = vmatpush2.bf16.msra.mxu0 0
        %4587 = vmatprep.subr.bf16.mxu0 0
        %4588 = vmatpush2.bf16.msra.mxu0 0
        %4589 = vmatprep.mubr.bf16.mxu0 0
        %4590 = vmatmul.mubr.bf16.gmra.mxu0 %v4552
        %v4591 = vpop.f32.mrf.mxu0
        %v4592 = vadd.f32 0.0, %v4591
        %v4593 = vpop.f32.mrf.mxu0
        %v4594 = vpop.f32.mrf.mxu0
        %v4595 = vpop.f32.mrf.mxu0
        %4596 = vdwg.mxu0
        %v4598 = vsel %vm2999, %v3995, 0
        %v4601 = vsel %vm4001, %v1810, 0
        %4603 = vmatprep.subr.bf16.mxu0 0
        %4604 = vmatpush1.bf16.msra.mxu0 0
        %4605 = vmatprep.subr.bf16.mxu0 0
        %4606 = vmatpush1.bf16.msra.mxu0 0
        %4607 = vmatprep.subr.bf16.mxu0 0
        %4608 = vmatpush1.bf16.msra.mxu0 0
        %4609 = vmatprep.subr.bf16.mxu0 0
        %4610 = vmatpush1.bf16.msra.mxu0 0
        %4611 = vmatprep.subr.bf16.mxu0 0
        %4612 = vmatpush1.bf16.msra.mxu0 0
        %4613 = vmatprep.subr.bf16.mxu0 0
        %4614 = vmatpush1.bf16.msra.mxu0 0
        %4615 = vmatprep.subr.bf16.mxu0 0
        %4616 = vmatpush1.bf16.msra.mxu0 0
        %4617 = vmatprep.subr.bf16.mxu0 0
        %4618 = vmatpush1.bf16.msra.mxu0 %v4601
        %4619 = vmatprep.subr.bf16.mxu0 0
        %4620 = vmatpush2.bf16.msra.mxu0 0
        %4621 = vmatprep.subr.bf16.mxu0 0
        %4622 = vmatpush2.bf16.msra.mxu0 0
        %4623 = vmatprep.subr.bf16.mxu0 0
        %4624 = vmatpush2.bf16.msra.mxu0 0
        %4625 = vmatprep.subr.bf16.mxu0 0
        %4626 = vmatpush2.bf16.msra.mxu0 0
        %4627 = vmatprep.subr.bf16.mxu0 0
        %4628 = vmatpush2.bf16.msra.mxu0 0
        %4629 = vmatprep.subr.bf16.mxu0 0
        %4630 = vmatpush2.bf16.msra.mxu0 0
        %4631 = vmatprep.subr.bf16.mxu0 0
        %4632 = vmatpush2.bf16.msra.mxu0 0
        %4633 = vmatprep.subr.bf16.mxu0 0
        %4634 = vmatpush2.bf16.msra.mxu0 0
        %4635 = vmatprep.mubr.bf16.mxu0 0
        %4636 = vmatmul.mubr.bf16.gmra.mxu0 %v4598
        %v4637 = vpop.f32.mrf.mxu0
        %v4638 = vadd.f32 0.0, %v4637
        %v4639 = vpop.f32.mrf.mxu0
        %v4640 = vpop.f32.mrf.mxu0
        %v4641 = vpop.f32.mrf.mxu0
        %4642 = vdwg.mxu0
        %v4644 = vsel %vm2999, %v3996, 0
        %v4647 = vsel %vm4001, %v1811, 0
        %4649 = vmatprep.subr.bf16.mxu0 0
        %4650 = vmatpush1.bf16.msra.mxu0 0
        %4651 = vmatprep.subr.bf16.mxu0 0
        %4652 = vmatpush1.bf16.msra.mxu0 0
        %4653 = vmatprep.subr.bf16.mxu0 0
        %4654 = vmatpush1.bf16.msra.mxu0 0
        %4655 = vmatprep.subr.bf16.mxu0 0
        %4656 = vmatpush1.bf16.msra.mxu0 0
        %4657 = vmatprep.subr.bf16.mxu0 0
        %4658 = vmatpush1.bf16.msra.mxu0 0
        %4659 = vmatprep.subr.bf16.mxu0 0
        %4660 = vmatpush1.bf16.msra.mxu0 0
        %4661 = vmatprep.subr.bf16.mxu0 0
        %4662 = vmatpush1.bf16.msra.mxu0 0
        %4663 = vmatprep.subr.bf16.mxu0 0
        %4664 = vmatpush1.bf16.msra.mxu0 %v4647
        %4665 = vmatprep.subr.bf16.mxu0 0
        %4666 = vmatpush2.bf16.msra.mxu0 0
        %4667 = vmatprep.subr.bf16.mxu0 0
        %4668 = vmatpush2.bf16.msra.mxu0 0
        %4669 = vmatprep.subr.bf16.mxu0 0
        %4670 = vmatpush2.bf16.msra.mxu0 0
        %4671 = vmatprep.subr.bf16.mxu0 0
        %4672 = vmatpush2.bf16.msra.mxu0 0
        %4673 = vmatprep.subr.bf16.mxu0 0
        %4674 = vmatpush2.bf16.msra.mxu0 0
        %4675 = vmatprep.subr.bf16.mxu0 0
        %4676 = vmatpush2.bf16.msra.mxu0 0
        %4677 = vmatprep.subr.bf16.mxu0 0
        %4678 = vmatpush2.bf16.msra.mxu0 0
        %4679 = vmatprep.subr.bf16.mxu0 0
        %4680 = vmatpush2.bf16.msra.mxu0 0
        %4681 = vmatprep.mubr.bf16.mxu0 0
        %4682 = vmatmul.mubr.bf16.gmra.mxu0 %v4644
        %v4683 = vpop.f32.mrf.mxu0
        %v4684 = vadd.f32 0.0, %v4683
        %v4685 = vpop.f32.mrf.mxu0
        %v4686 = vpop.f32.mrf.mxu0
        %v4687 = vpop.f32.mrf.mxu0
        %4688 = vdwg.mxu0
        %v4690 = vsel %vm2999, %v3997, 0
        %v4693 = vsel %vm4001, %v1812, 0
        %4695 = vmatprep.subr.bf16.mxu0 0
        %4696 = vmatpush1.bf16.msra.mxu0 0
        %4697 = vmatprep.subr.bf16.mxu0 0
        %4698 = vmatpush1.bf16.msra.mxu0 0
        %4699 = vmatprep.subr.bf16.mxu0 0
        %4700 = vmatpush1.bf16.msra.mxu0 0
        %4701 = vmatprep.subr.bf16.mxu0 0
        %4702 = vmatpush1.bf16.msra.mxu0 0
        %4703 = vmatprep.subr.bf16.mxu0 0
        %4704 = vmatpush1.bf16.msra.mxu0 0
        %4705 = vmatprep.subr.bf16.mxu0 0
        %4706 = vmatpush1.bf16.msra.mxu0 0
        %4707 = vmatprep.subr.bf16.mxu0 0
        %4708 = vmatpush1.bf16.msra.mxu0 0
        %4709 = vmatprep.subr.bf16.mxu0 0
        %4710 = vmatpush1.bf16.msra.mxu0 %v4693
        %4711 = vmatprep.subr.bf16.mxu0 0
        %4712 = vmatpush2.bf16.msra.mxu0 0
        %4713 = vmatprep.subr.bf16.mxu0 0
        %4714 = vmatpush2.bf16.msra.mxu0 0
        %4715 = vmatprep.subr.bf16.mxu0 0
        %4716 = vmatpush2.bf16.msra.mxu0 0
        %4717 = vmatprep.subr.bf16.mxu0 0
        %4718 = vmatpush2.bf16.msra.mxu0 0
        %4719 = vmatprep.subr.bf16.mxu0 0
        %4720 = vmatpush2.bf16.msra.mxu0 0
        %4721 = vmatprep.subr.bf16.mxu0 0
        %4722 = vmatpush2.bf16.msra.mxu0 0
        %4723 = vmatprep.subr.bf16.mxu0 0
        %4724 = vmatpush2.bf16.msra.mxu0 0
        %4725 = vmatprep.subr.bf16.mxu0 0
        %4726 = vmatpush2.bf16.msra.mxu0 0
        %4727 = vmatprep.mubr.bf16.mxu0 0
        %4728 = vmatmul.mubr.bf16.gmra.mxu0 %v4690
        %v4729 = vpop.f32.mrf.mxu0
        %v4730 = vadd.f32 0.0, %v4729
        %v4731 = vpop.f32.mrf.mxu0
        %v4732 = vpop.f32.mrf.mxu0
        %v4733 = vpop.f32.mrf.mxu0
        %4734 = vdwg.mxu0
        %v4735 = vpack.c.bf16 %v3631, %v3629
        %v4736 = vpack.c.bf16 %v3635, %v3633
        %v4737 = vpack.c.bf16 %v3639, %v3637
        %v4738 = vpack.c.bf16 %v3643, %v3641
        %v4739 = vpack.c.bf16 %v3647, %v3645
        %v4740 = vpack.c.bf16 %v3651, %v3649
        %v4741 = vpack.c.bf16 %v3655, %v3653
        %v4742 = vpack.c.bf16 %v3659, %v3657
        %v4745 = vunpack.c.l.b16 %v1829
        %v4746 = vunpack.c.l.b16 %v1830
        %v4747 = vpack.c.b16 %v4746, %v4745
        %v4750 = vsel %vm748, %v4735, 0
        %4752 = vmatprep.subr.bf16.mxu0 0
        %4753 = vmatpush1.bf16.msra.mxu0 0
        %4754 = vmatprep.subr.bf16.mxu0 0
        %4755 = vmatpush1.bf16.msra.mxu0 0
        %4756 = vmatprep.subr.bf16.mxu0 0
        %4757 = vmatpush1.bf16.msra.mxu0 0
        %4758 = vmatprep.subr.bf16.mxu0 0
        %4759 = vmatpush1.bf16.msra.mxu0 0
        %4760 = vmatprep.subr.bf16.mxu0 0
        %4761 = vmatpush1.bf16.msra.mxu0 0
        %4762 = vmatprep.subr.bf16.mxu0 0
        %4763 = vmatpush1.bf16.msra.mxu0 0
        %4764 = vmatprep.subr.bf16.mxu0 0
        %4765 = vmatpush1.bf16.msra.mxu0 0
        %4766 = vmatprep.subr.bf16.mxu0 0
        %4767 = vmatpush1.bf16.msra.mxu0 %v4747
        %4768 = vmatprep.subr.bf16.mxu0 0
        %4769 = vmatpush2.bf16.msra.mxu0 0
        %4770 = vmatprep.subr.bf16.mxu0 0
        %4771 = vmatpush2.bf16.msra.mxu0 0
        %4772 = vmatprep.subr.bf16.mxu0 0
        %4773 = vmatpush2.bf16.msra.mxu0 0
        %4774 = vmatprep.subr.bf16.mxu0 0
        %4775 = vmatpush2.bf16.msra.mxu0 0
        %4776 = vmatprep.subr.bf16.mxu0 0
        %4777 = vmatpush2.bf16.msra.mxu0 0
        %4778 = vmatprep.subr.bf16.mxu0 0
        %4779 = vmatpush2.bf16.msra.mxu0 0
        %4780 = vmatprep.subr.bf16.mxu0 0
        %4781 = vmatpush2.bf16.msra.mxu0 0
        %4782 = vmatprep.subr.bf16.mxu0 0
        %4783 = vmatpush2.bf16.msra.mxu0 0
        %4784 = vmatprep.mubr.bf16.mxu0 0
        %4785 = vmatmul.mubr.bf16.gmra.mxu0 %v4750
        %v4786 = vpop.f32.mrf.mxu0
        %v4787 = vadd.f32 0.0, %v4786
        %v4788 = vpop.f32.mrf.mxu0
        %v4789 = vpop.f32.mrf.mxu0
        %v4790 = vadd.f32 0.0, %v4789
        %v4791 = vpop.f32.mrf.mxu0
        %4792 = vdwg.mxu0
        %v4795 = vunpack.c.l.b16 %v1831
        %v4796 = vunpack.c.l.b16 %v1832
        %v4797 = vpack.c.b16 %v4796, %v4795
        %v4800 = vsel %vm748, %v4736, 0
        %4802 = vmatprep.subr.bf16.mxu0 0
        %4803 = vmatpush1.bf16.msra.mxu0 0
        %4804 = vmatprep.subr.bf16.mxu0 0
        %4805 = vmatpush1.bf16.msra.mxu0 0
        %4806 = vmatprep.subr.bf16.mxu0 0
        %4807 = vmatpush1.bf16.msra.mxu0 0
        %4808 = vmatprep.subr.bf16.mxu0 0
        %4809 = vmatpush1.bf16.msra.mxu0 0
        %4810 = vmatprep.subr.bf16.mxu0 0
        %4811 = vmatpush1.bf16.msra.mxu0 0
        %4812 = vmatprep.subr.bf16.mxu0 0
        %4813 = vmatpush1.bf16.msra.mxu0 0
        %4814 = vmatprep.subr.bf16.mxu0 0
        %4815 = vmatpush1.bf16.msra.mxu0 0
        %4816 = vmatprep.subr.bf16.mxu0 0
        %4817 = vmatpush1.bf16.msra.mxu0 %v4797
        %4818 = vmatprep.subr.bf16.mxu0 0
        %4819 = vmatpush2.bf16.msra.mxu0 0
        %4820 = vmatprep.subr.bf16.mxu0 0
        %4821 = vmatpush2.bf16.msra.mxu0 0
        %4822 = vmatprep.subr.bf16.mxu0 0
        %4823 = vmatpush2.bf16.msra.mxu0 0
        %4824 = vmatprep.subr.bf16.mxu0 0
        %4825 = vmatpush2.bf16.msra.mxu0 0
        %4826 = vmatprep.subr.bf16.mxu0 0
        %4827 = vmatpush2.bf16.msra.mxu0 0
        %4828 = vmatprep.subr.bf16.mxu0 0
        %4829 = vmatpush2.bf16.msra.mxu0 0
        %4830 = vmatprep.subr.bf16.mxu0 0
        %4831 = vmatpush2.bf16.msra.mxu0 0
        %4832 = vmatprep.subr.bf16.mxu0 0
        %4833 = vmatpush2.bf16.msra.mxu0 0
        %4834 = vmatprep.mubr.bf16.mxu0 0
        %4835 = vmatmul.mubr.bf16.gmra.mxu0 %v4800
        %v4836 = vpop.f32.mrf.mxu0
        %v4837 = vadd.f32 0.0, %v4836
        %v4838 = vpop.f32.mrf.mxu0
        %v4839 = vpop.f32.mrf.mxu0
        %v4840 = vadd.f32 0.0, %v4839
        %v4841 = vpop.f32.mrf.mxu0
        %4842 = vdwg.mxu0
        %v4845 = vunpack.c.l.b16 %v1833
        %v4846 = vunpack.c.l.b16 %v1834
        %v4847 = vpack.c.b16 %v4846, %v4845
        %v4850 = vsel %vm748, %v4737, 0
        %4852 = vmatprep.subr.bf16.mxu0 0
        %4853 = vmatpush1.bf16.msra.mxu0 0
        %4854 = vmatprep.subr.bf16.mxu0 0
        %4855 = vmatpush1.bf16.msra.mxu0 0
        %4856 = vmatprep.subr.bf16.mxu0 0
        %4857 = vmatpush1.bf16.msra.mxu0 0
        %4858 = vmatprep.subr.bf16.mxu0 0
        %4859 = vmatpush1.bf16.msra.mxu0 0
        %4860 = vmatprep.subr.bf16.mxu0 0
        %4861 = vmatpush1.bf16.msra.mxu0 0
        %4862 = vmatprep.subr.bf16.mxu0 0
        %4863 = vmatpush1.bf16.msra.mxu0 0
        %4864 = vmatprep.subr.bf16.mxu0 0
        %4865 = vmatpush1.bf16.msra.mxu0 0
        %4866 = vmatprep.subr.bf16.mxu0 0
        %4867 = vmatpush1.bf16.msra.mxu0 %v4847
        %4868 = vmatprep.subr.bf16.mxu0 0
        %4869 = vmatpush2.bf16.msra.mxu0 0
        %4870 = vmatprep.subr.bf16.mxu0 0
        %4871 = vmatpush2.bf16.msra.mxu0 0
        %4872 = vmatprep.subr.bf16.mxu0 0
        %4873 = vmatpush2.bf16.msra.mxu0 0
        %4874 = vmatprep.subr.bf16.mxu0 0
        %4875 = vmatpush2.bf16.msra.mxu0 0
        %4876 = vmatprep.subr.bf16.mxu0 0
        %4877 = vmatpush2.bf16.msra.mxu0 0
        %4878 = vmatprep.subr.bf16.mxu0 0
        %4879 = vmatpush2.bf16.msra.mxu0 0
        %4880 = vmatprep.subr.bf16.mxu0 0
        %4881 = vmatpush2.bf16.msra.mxu0 0
        %4882 = vmatprep.subr.bf16.mxu0 0
        %4883 = vmatpush2.bf16.msra.mxu0 0
        %4884 = vmatprep.mubr.bf16.mxu0 0
        %4885 = vmatmul.mubr.bf16.gmra.mxu0 %v4850
        %v4886 = vpop.f32.mrf.mxu0
        %v4887 = vadd.f32 0.0, %v4886
        %v4888 = vpop.f32.mrf.mxu0
        %v4889 = vpop.f32.mrf.mxu0
        %v4890 = vadd.f32 0.0, %v4889
        %v4891 = vpop.f32.mrf.mxu0
        %4892 = vdwg.mxu0
        %v4895 = vunpack.c.l.b16 %v1835
        %v4896 = vunpack.c.l.b16 %v1836
        %v4897 = vpack.c.b16 %v4896, %v4895
        %v4900 = vsel %vm748, %v4738, 0
        %4902 = vmatprep.subr.bf16.mxu0 0
        %4903 = vmatpush1.bf16.msra.mxu0 0
        %4904 = vmatprep.subr.bf16.mxu0 0
        %4905 = vmatpush1.bf16.msra.mxu0 0
        %4906 = vmatprep.subr.bf16.mxu0 0
        %4907 = vmatpush1.bf16.msra.mxu0 0
        %4908 = vmatprep.subr.bf16.mxu0 0
        %4909 = vmatpush1.bf16.msra.mxu0 0
        %4910 = vmatprep.subr.bf16.mxu0 0
        %4911 = vmatpush1.bf16.msra.mxu0 0
        %4912 = vmatprep.subr.bf16.mxu0 0
        %4913 = vmatpush1.bf16.msra.mxu0 0
        %4914 = vmatprep.subr.bf16.mxu0 0
        %4915 = vmatpush1.bf16.msra.mxu0 0
        %4916 = vmatprep.subr.bf16.mxu0 0
        %4917 = vmatpush1.bf16.msra.mxu0 %v4897
        %4918 = vmatprep.subr.bf16.mxu0 0
        %4919 = vmatpush2.bf16.msra.mxu0 0
        %4920 = vmatprep.subr.bf16.mxu0 0
        %4921 = vmatpush2.bf16.msra.mxu0 0
        %4922 = vmatprep.subr.bf16.mxu0 0
        %4923 = vmatpush2.bf16.msra.mxu0 0
        %4924 = vmatprep.subr.bf16.mxu0 0
        %4925 = vmatpush2.bf16.msra.mxu0 0
        %4926 = vmatprep.subr.bf16.mxu0 0
        %4927 = vmatpush2.bf16.msra.mxu0 0
        %4928 = vmatprep.subr.bf16.mxu0 0
        %4929 = vmatpush2.bf16.msra.mxu0 0
        %4930 = vmatprep.subr.bf16.mxu0 0
        %4931 = vmatpush2.bf16.msra.mxu0 0
        %4932 = vmatprep.subr.bf16.mxu0 0
        %4933 = vmatpush2.bf16.msra.mxu0 0
        %4934 = vmatprep.mubr.bf16.mxu0 0
        %4935 = vmatmul.mubr.bf16.gmra.mxu0 %v4900
        %v4936 = vpop.f32.mrf.mxu0
        %v4937 = vadd.f32 0.0, %v4936
        %v4938 = vpop.f32.mrf.mxu0
        %v4939 = vpop.f32.mrf.mxu0
        %v4940 = vadd.f32 0.0, %v4939
        %v4941 = vpop.f32.mrf.mxu0
        %4942 = vdwg.mxu0
        %v4945 = vunpack.c.l.b16 %v1837
        %v4946 = vunpack.c.l.b16 %v1838
        %v4947 = vpack.c.b16 %v4946, %v4945
        %v4950 = vsel %vm748, %v4739, 0
        %4952 = vmatprep.subr.bf16.mxu0 0
        %4953 = vmatpush1.bf16.msra.mxu0 0
        %4954 = vmatprep.subr.bf16.mxu0 0
        %4955 = vmatpush1.bf16.msra.mxu0 0
        %4956 = vmatprep.subr.bf16.mxu0 0
        %4957 = vmatpush1.bf16.msra.mxu0 0
        %4958 = vmatprep.subr.bf16.mxu0 0
        %4959 = vmatpush1.bf16.msra.mxu0 0
        %4960 = vmatprep.subr.bf16.mxu0 0
        %4961 = vmatpush1.bf16.msra.mxu0 0
        %4962 = vmatprep.subr.bf16.mxu0 0
        %4963 = vmatpush1.bf16.msra.mxu0 0
        %4964 = vmatprep.subr.bf16.mxu0 0
        %4965 = vmatpush1.bf16.msra.mxu0 0
        %4966 = vmatprep.subr.bf16.mxu0 0
        %4967 = vmatpush1.bf16.msra.mxu0 %v4947
        %4968 = vmatprep.subr.bf16.mxu0 0
        %4969 = vmatpush2.bf16.msra.mxu0 0
        %4970 = vmatprep.subr.bf16.mxu0 0
        %4971 = vmatpush2.bf16.msra.mxu0 0
        %4972 = vmatprep.subr.bf16.mxu0 0
        %4973 = vmatpush2.bf16.msra.mxu0 0
        %4974 = vmatprep.subr.bf16.mxu0 0
        %4975 = vmatpush2.bf16.msra.mxu0 0
        %4976 = vmatprep.subr.bf16.mxu0 0
        %4977 = vmatpush2.bf16.msra.mxu0 0
        %4978 = vmatprep.subr.bf16.mxu0 0
        %4979 = vmatpush2.bf16.msra.mxu0 0
        %4980 = vmatprep.subr.bf16.mxu0 0
        %4981 = vmatpush2.bf16.msra.mxu0 0
        %4982 = vmatprep.subr.bf16.mxu0 0
        %4983 = vmatpush2.bf16.msra.mxu0 0
        %4984 = vmatprep.mubr.bf16.mxu0 0
        %4985 = vmatmul.mubr.bf16.gmra.mxu0 %v4950
        %v4986 = vpop.f32.mrf.mxu0
        %v4987 = vadd.f32 0.0, %v4986
        %v4988 = vpop.f32.mrf.mxu0
        %v4989 = vpop.f32.mrf.mxu0
        %v4990 = vadd.f32 0.0, %v4989
        %v4991 = vpop.f32.mrf.mxu0
        %4992 = vdwg.mxu0
        %v4995 = vunpack.c.l.b16 %v1839
        %v4996 = vunpack.c.l.b16 %v1840
        %v4997 = vpack.c.b16 %v4996, %v4995
        %v5000 = vsel %vm748, %v4740, 0
        %5002 = vmatprep.subr.bf16.mxu0 0
        %5003 = vmatpush1.bf16.msra.mxu0 0
        %5004 = vmatprep.subr.bf16.mxu0 0
        %5005 = vmatpush1.bf16.msra.mxu0 0
        %5006 = vmatprep.subr.bf16.mxu0 0
        %5007 = vmatpush1.bf16.msra.mxu0 0
        %5008 = vmatprep.subr.bf16.mxu0 0
        %5009 = vmatpush1.bf16.msra.mxu0 0
        %5010 = vmatprep.subr.bf16.mxu0 0
        %5011 = vmatpush1.bf16.msra.mxu0 0
        %5012 = vmatprep.subr.bf16.mxu0 0
        %5013 = vmatpush1.bf16.msra.mxu0 0
        %5014 = vmatprep.subr.bf16.mxu0 0
        %5015 = vmatpush1.bf16.msra.mxu0 0
        %5016 = vmatprep.subr.bf16.mxu0 0
        %5017 = vmatpush1.bf16.msra.mxu0 %v4997
        %5018 = vmatprep.subr.bf16.mxu0 0
        %5019 = vmatpush2.bf16.msra.mxu0 0
        %5020 = vmatprep.subr.bf16.mxu0 0
        %5021 = vmatpush2.bf16.msra.mxu0 0
        %5022 = vmatprep.subr.bf16.mxu0 0
        %5023 = vmatpush2.bf16.msra.mxu0 0
        %5024 = vmatprep.subr.bf16.mxu0 0
        %5025 = vmatpush2.bf16.msra.mxu0 0
        %5026 = vmatprep.subr.bf16.mxu0 0
        %5027 = vmatpush2.bf16.msra.mxu0 0
        %5028 = vmatprep.subr.bf16.mxu0 0
        %5029 = vmatpush2.bf16.msra.mxu0 0
        %5030 = vmatprep.subr.bf16.mxu0 0
        %5031 = vmatpush2.bf16.msra.mxu0 0
        %5032 = vmatprep.subr.bf16.mxu0 0
        %5033 = vmatpush2.bf16.msra.mxu0 0
        %5034 = vmatprep.mubr.bf16.mxu0 0
        %5035 = vmatmul.mubr.bf16.gmra.mxu0 %v5000
        %v5036 = vpop.f32.mrf.mxu0
        %v5037 = vadd.f32 0.0, %v5036
        %v5038 = vpop.f32.mrf.mxu0
        %v5039 = vpop.f32.mrf.mxu0
        %v5040 = vadd.f32 0.0, %v5039
        %v5041 = vpop.f32.mrf.mxu0
        %5042 = vdwg.mxu0
        %v5045 = vunpack.c.l.b16 %v1841
        %v5046 = vunpack.c.l.b16 %v1842
        %v5047 = vpack.c.b16 %v5046, %v5045
        %v5050 = vsel %vm748, %v4741, 0
        %5052 = vmatprep.subr.bf16.mxu0 0
        %5053 = vmatpush1.bf16.msra.mxu0 0
        %5054 = vmatprep.subr.bf16.mxu0 0
        %5055 = vmatpush1.bf16.msra.mxu0 0
        %5056 = vmatprep.subr.bf16.mxu0 0
        %5057 = vmatpush1.bf16.msra.mxu0 0
        %5058 = vmatprep.subr.bf16.mxu0 0
        %5059 = vmatpush1.bf16.msra.mxu0 0
        %5060 = vmatprep.subr.bf16.mxu0 0
        %5061 = vmatpush1.bf16.msra.mxu0 0
        %5062 = vmatprep.subr.bf16.mxu0 0
        %5063 = vmatpush1.bf16.msra.mxu0 0
        %5064 = vmatprep.subr.bf16.mxu0 0
        %5065 = vmatpush1.bf16.msra.mxu0 0
        %5066 = vmatprep.subr.bf16.mxu0 0
        %5067 = vmatpush1.bf16.msra.mxu0 %v5047
        %5068 = vmatprep.subr.bf16.mxu0 0
        %5069 = vmatpush2.bf16.msra.mxu0 0
        %5070 = vmatprep.subr.bf16.mxu0 0
        %5071 = vmatpush2.bf16.msra.mxu0 0
        %5072 = vmatprep.subr.bf16.mxu0 0
        %5073 = vmatpush2.bf16.msra.mxu0 0
        %5074 = vmatprep.subr.bf16.mxu0 0
        %5075 = vmatpush2.bf16.msra.mxu0 0
        %5076 = vmatprep.subr.bf16.mxu0 0
        %5077 = vmatpush2.bf16.msra.mxu0 0
        %5078 = vmatprep.subr.bf16.mxu0 0
        %5079 = vmatpush2.bf16.msra.mxu0 0
        %5080 = vmatprep.subr.bf16.mxu0 0
        %5081 = vmatpush2.bf16.msra.mxu0 0
        %5082 = vmatprep.subr.bf16.mxu0 0
        %5083 = vmatpush2.bf16.msra.mxu0 0
        %5084 = vmatprep.mubr.bf16.mxu0 0
        %5085 = vmatmul.mubr.bf16.gmra.mxu0 %v5050
        %v5086 = vpop.f32.mrf.mxu0
        %v5087 = vadd.f32 0.0, %v5086
        %v5088 = vpop.f32.mrf.mxu0
        %v5089 = vpop.f32.mrf.mxu0
        %v5090 = vadd.f32 0.0, %v5089
        %v5091 = vpop.f32.mrf.mxu0
        %5092 = vdwg.mxu0
        %v5095 = vunpack.c.l.b16 %v1843
        %v5096 = vunpack.c.l.b16 %v1844
        %v5097 = vpack.c.b16 %v5096, %v5095
        %v5100 = vsel %vm748, %v4742, 0
        %5102 = vmatprep.subr.bf16.mxu0 0
        %5103 = vmatpush1.bf16.msra.mxu0 0
        %5104 = vmatprep.subr.bf16.mxu0 0
        %5105 = vmatpush1.bf16.msra.mxu0 0
        %5106 = vmatprep.subr.bf16.mxu0 0
        %5107 = vmatpush1.bf16.msra.mxu0 0
        %5108 = vmatprep.subr.bf16.mxu0 0
        %5109 = vmatpush1.bf16.msra.mxu0 0
        %5110 = vmatprep.subr.bf16.mxu0 0
        %5111 = vmatpush1.bf16.msra.mxu0 0
        %5112 = vmatprep.subr.bf16.mxu0 0
        %5113 = vmatpush1.bf16.msra.mxu0 0
        %5114 = vmatprep.subr.bf16.mxu0 0
        %5115 = vmatpush1.bf16.msra.mxu0 0
        %5116 = vmatprep.subr.bf16.mxu0 0
        %5117 = vmatpush1.bf16.msra.mxu0 %v5097
        %5118 = vmatprep.subr.bf16.mxu0 0
        %5119 = vmatpush2.bf16.msra.mxu0 0
        %5120 = vmatprep.subr.bf16.mxu0 0
        %5121 = vmatpush2.bf16.msra.mxu0 0
        %5122 = vmatprep.subr.bf16.mxu0 0
        %5123 = vmatpush2.bf16.msra.mxu0 0
        %5124 = vmatprep.subr.bf16.mxu0 0
        %5125 = vmatpush2.bf16.msra.mxu0 0
        %5126 = vmatprep.subr.bf16.mxu0 0
        %5127 = vmatpush2.bf16.msra.mxu0 0
        %5128 = vmatprep.subr.bf16.mxu0 0
        %5129 = vmatpush2.bf16.msra.mxu0 0
        %5130 = vmatprep.subr.bf16.mxu0 0
        %5131 = vmatpush2.bf16.msra.mxu0 0
        %5132 = vmatprep.subr.bf16.mxu0 0
        %5133 = vmatpush2.bf16.msra.mxu0 0
        %5134 = vmatprep.mubr.bf16.mxu0 0
        %5135 = vmatmul.mubr.bf16.gmra.mxu0 %v5100
        %v5136 = vpop.f32.mrf.mxu0
        %v5137 = vadd.f32 0.0, %v5136
        %v5138 = vpop.f32.mrf.mxu0
        %v5139 = vpop.f32.mrf.mxu0
        %v5140 = vadd.f32 0.0, %v5139
        %v5141 = vpop.f32.mrf.mxu0
        %5142 = vdwg.mxu0
        %v5143 = vcombine.low %v4040, %v4132
        %v5144 = vcombine.high %v4040, %v4132
        %v5146 = vunpack.c.l.s4 1983009808
        %v5147 = vunpack.c.0.s8 %v5146
        %v5148 = vlaneseq
        %v5149 = vshrl.u32 %v5148, 7
        %v5150 = vsub.s32 %v5147, %v5149
        %v5151 = vrot.slane %v5143, %v5150
        %v5153 = vunpack.c.l.s4 1983009808
        %v5154 = vunpack.c.0.s8 %v5153
        %v5155 = vlaneseq
        %v5156 = vshrl.u32 %v5155, 7
        %v5157 = vsub.s32 %v5154, %v5156
        %v5158 = vrot.slane %v5144, %v5157
        %v5159 = vcombine.low %v4086, %v4178
        %v5160 = vcombine.high %v4086, %v4178
        %v5162 = vunpack.c.l.s4 1983009808
        %v5163 = vunpack.c.0.s8 %v5162
        %v5164 = vlaneseq
        %v5165 = vshrl.u32 %v5164, 7
        %v5166 = vsub.s32 %v5163, %v5165
        %v5167 = vrot.slane %v5159, %v5166
        %v5169 = vunpack.c.l.s4 1983009808
        %v5170 = vunpack.c.0.s8 %v5169
        %v5171 = vlaneseq
        %v5172 = vshrl.u32 %v5171, 7
        %v5173 = vsub.s32 %v5170, %v5172
        %v5174 = vrot.slane %v5160, %v5173
        %v5175 = vcombine.low %v4224, %v4316
        %v5176 = vcombine.high %v4224, %v4316
        %v5178 = vunpack.c.l.s4 1983009808
        %v5179 = vunpack.c.0.s8 %v5178
        %v5180 = vlaneseq
        %v5181 = vshrl.u32 %v5180, 7
        %v5182 = vsub.s32 %v5179, %v5181
        %v5183 = vrot.slane %v5175, %v5182
        %v5185 = vunpack.c.l.s4 1983009808
        %v5186 = vunpack.c.0.s8 %v5185
        %v5187 = vlaneseq
        %v5188 = vshrl.u32 %v5187, 7
        %v5189 = vsub.s32 %v5186, %v5188
        %v5190 = vrot.slane %v5176, %v5189
        %v5191 = vcombine.low %v4270, %v4362
        %v5192 = vcombine.high %v4270, %v4362
        %v5194 = vunpack.c.l.s4 1983009808
        %v5195 = vunpack.c.0.s8 %v5194
        %v5196 = vlaneseq
        %v5197 = vshrl.u32 %v5196, 7
        %v5198 = vsub.s32 %v5195, %v5197
        %v5199 = vrot.slane %v5191, %v5198
        %v5201 = vunpack.c.l.s4 1983009808
        %v5202 = vunpack.c.0.s8 %v5201
        %v5203 = vlaneseq
        %v5204 = vshrl.u32 %v5203, 7
        %v5205 = vsub.s32 %v5202, %v5204
        %v5206 = vrot.slane %v5192, %v5205
        %v5207 = vcombine.low %v5151, %v5167
        %v5208 = vcombine.high %v5151, %v5167
        %v5210 = vunpack.c.l.s4 1934713408
        %v5211 = vunpack.c.0.s8 %v5210
        %v5212 = vlaneseq
        %v5213 = vshrl.u32 %v5212, 7
        %v5214 = vsub.s32 %v5211, %v5213
        %v5215 = vrot.slane %v5207, %v5214
        %v5217 = vunpack.c.l.s4 1934713408
        %v5218 = vunpack.c.0.s8 %v5217
        %v5219 = vlaneseq
        %v5220 = vshrl.u32 %v5219, 7
        %v5221 = vsub.s32 %v5218, %v5220
        %v5222 = vrot.slane %v5208, %v5221
        %v5223 = vcombine.low %v5158, %v5174
        %v5224 = vcombine.high %v5158, %v5174
        %v5226 = vunpack.c.l.s4 1934713408
        %v5227 = vunpack.c.0.s8 %v5226
        %v5228 = vlaneseq
        %v5229 = vshrl.u32 %v5228, 7
        %v5230 = vsub.s32 %v5227, %v5229
        %v5231 = vrot.slane %v5223, %v5230
        %v5233 = vunpack.c.l.s4 1934713408
        %v5234 = vunpack.c.0.s8 %v5233
        %v5235 = vlaneseq
        %v5236 = vshrl.u32 %v5235, 7
        %v5237 = vsub.s32 %v5234, %v5236
        %v5238 = vrot.slane %v5224, %v5237
        %v5239 = vcombine.low %v5183, %v5199
        %v5240 = vcombine.high %v5183, %v5199
        %v5242 = vunpack.c.l.s4 1934713408
        %v5243 = vunpack.c.0.s8 %v5242
        %v5244 = vlaneseq
        %v5245 = vshrl.u32 %v5244, 7
        %v5246 = vsub.s32 %v5243, %v5245
        %v5247 = vrot.slane %v5239, %v5246
        %v5249 = vunpack.c.l.s4 1934713408
        %v5250 = vunpack.c.0.s8 %v5249
        %v5251 = vlaneseq
        %v5252 = vshrl.u32 %v5251, 7
        %v5253 = vsub.s32 %v5250, %v5252
        %v5254 = vrot.slane %v5240, %v5253
        %v5255 = vcombine.low %v5190, %v5206
        %v5256 = vcombine.high %v5190, %v5206
        %v5258 = vunpack.c.l.s4 1934713408
        %v5259 = vunpack.c.0.s8 %v5258
        %v5260 = vlaneseq
        %v5261 = vshrl.u32 %v5260, 7
        %v5262 = vsub.s32 %v5259, %v5261
        %v5263 = vrot.slane %v5255, %v5262
        %v5265 = vunpack.c.l.s4 1934713408
        %v5266 = vunpack.c.0.s8 %v5265
        %v5267 = vlaneseq
        %v5268 = vshrl.u32 %v5267, 7
        %v5269 = vsub.s32 %v5266, %v5268
        %v5270 = vrot.slane %v5256, %v5269
        %v5271 = vcombine.low %v5215, %v5247
        %v5272 = vcombine.high %v5215, %v5247
        %v5273 = vcombine.low %v5222, %v5254
        %v5274 = vcombine.high %v5222, %v5254
        %v5275 = vcombine.low %v5231, %v5263
        %v5276 = vcombine.high %v5231, %v5263
        %v5277 = vcombine.low %v5238, %v5270
        %v5278 = vcombine.high %v5238, %v5270
        %v5279 = vcombine.low %v4408, %v4500
        %v5280 = vcombine.high %v4408, %v4500
        %v5282 = vunpack.c.l.s4 1983009808
        %v5283 = vunpack.c.0.s8 %v5282
        %v5284 = vlaneseq
        %v5285 = vshrl.u32 %v5284, 7
        %v5286 = vsub.s32 %v5283, %v5285
        %v5287 = vrot.slane %v5279, %v5286
        %v5289 = vunpack.c.l.s4 1983009808
        %v5290 = vunpack.c.0.s8 %v5289
        %v5291 = vlaneseq
        %v5292 = vshrl.u32 %v5291, 7
        %v5293 = vsub.s32 %v5290, %v5292
        %v5294 = vrot.slane %v5280, %v5293
        %v5295 = vcombine.low %v4454, %v4546
        %v5296 = vcombine.high %v4454, %v4546
        %v5298 = vunpack.c.l.s4 1983009808
        %v5299 = vunpack.c.0.s8 %v5298
        %v5300 = vlaneseq
        %v5301 = vshrl.u32 %v5300, 7
        %v5302 = vsub.s32 %v5299, %v5301
        %v5303 = vrot.slane %v5295, %v5302
        %v5305 = vunpack.c.l.s4 1983009808
        %v5306 = vunpack.c.0.s8 %v5305
        %v5307 = vlaneseq
        %v5308 = vshrl.u32 %v5307, 7
        %v5309 = vsub.s32 %v5306, %v5308
        %v5310 = vrot.slane %v5296, %v5309
        %v5311 = vcombine.low %v4592, %v4684
        %v5312 = vcombine.high %v4592, %v4684
        %v5314 = vunpack.c.l.s4 1983009808
        %v5315 = vunpack.c.0.s8 %v5314
        %v5316 = vlaneseq
        %v5317 = vshrl.u32 %v5316, 7
        %v5318 = vsub.s32 %v5315, %v5317
        %v5319 = vrot.slane %v5311, %v5318
        %v5321 = vunpack.c.l.s4 1983009808
        %v5322 = vunpack.c.0.s8 %v5321
        %v5323 = vlaneseq
        %v5324 = vshrl.u32 %v5323, 7
        %v5325 = vsub.s32 %v5322, %v5324
        %v5326 = vrot.slane %v5312, %v5325
        %v5327 = vcombine.low %v4638, %v4730
        %v5328 = vcombine.high %v4638, %v4730
        %v5330 = vunpack.c.l.s4 1983009808
        %v5331 = vunpack.c.0.s8 %v5330
        %v5332 = vlaneseq
        %v5333 = vshrl.u32 %v5332, 7
        %v5334 = vsub.s32 %v5331, %v5333
        %v5335 = vrot.slane %v5327, %v5334
        %v5337 = vunpack.c.l.s4 1983009808
        %v5338 = vunpack.c.0.s8 %v5337
        %v5339 = vlaneseq
        %v5340 = vshrl.u32 %v5339, 7
        %v5341 = vsub.s32 %v5338, %v5340
        %v5342 = vrot.slane %v5328, %v5341
        %v5343 = vcombine.low %v5287, %v5303
        %v5344 = vcombine.high %v5287, %v5303
        %v5346 = vunpack.c.l.s4 1934713408
        %v5347 = vunpack.c.0.s8 %v5346
        %v5348 = vlaneseq
        %v5349 = vshrl.u32 %v5348, 7
        %v5350 = vsub.s32 %v5347, %v5349
        %v5351 = vrot.slane %v5343, %v5350
        %v5353 = vunpack.c.l.s4 1934713408
        %v5354 = vunpack.c.0.s8 %v5353
        %v5355 = vlaneseq
        %v5356 = vshrl.u32 %v5355, 7
        %v5357 = vsub.s32 %v5354, %v5356
        %v5358 = vrot.slane %v5344, %v5357
        %v5359 = vcombine.low %v5294, %v5310
        %v5360 = vcombine.high %v5294, %v5310
        %v5362 = vunpack.c.l.s4 1934713408
        %v5363 = vunpack.c.0.s8 %v5362
        %v5364 = vlaneseq
        %v5365 = vshrl.u32 %v5364, 7
        %v5366 = vsub.s32 %v5363, %v5365
        %v5367 = vrot.slane %v5359, %v5366
        %v5369 = vunpack.c.l.s4 1934713408
        %v5370 = vunpack.c.0.s8 %v5369
        %v5371 = vlaneseq
        %v5372 = vshrl.u32 %v5371, 7
        %v5373 = vsub.s32 %v5370, %v5372
        %v5374 = vrot.slane %v5360, %v5373
        %v5375 = vcombine.low %v5319, %v5335
        %v5376 = vcombine.high %v5319, %v5335
        %v5378 = vunpack.c.l.s4 1934713408
        %v5379 = vunpack.c.0.s8 %v5378
        %v5380 = vlaneseq
        %v5381 = vshrl.u32 %v5380, 7
        %v5382 = vsub.s32 %v5379, %v5381
        %v5383 = vrot.slane %v5375, %v5382
        %v5385 = vunpack.c.l.s4 1934713408
        %v5386 = vunpack.c.0.s8 %v5385
        %v5387 = vlaneseq
        %v5388 = vshrl.u32 %v5387, 7
        %v5389 = vsub.s32 %v5386, %v5388
        %v5390 = vrot.slane %v5376, %v5389
        %v5391 = vcombine.low %v5326, %v5342
        %v5392 = vcombine.high %v5326, %v5342
        %v5394 = vunpack.c.l.s4 1934713408
        %v5395 = vunpack.c.0.s8 %v5394
        %v5396 = vlaneseq
        %v5397 = vshrl.u32 %v5396, 7
        %v5398 = vsub.s32 %v5395, %v5397
        %v5399 = vrot.slane %v5391, %v5398
        %v5401 = vunpack.c.l.s4 1934713408
        %v5402 = vunpack.c.0.s8 %v5401
        %v5403 = vlaneseq
        %v5404 = vshrl.u32 %v5403, 7
        %v5405 = vsub.s32 %v5402, %v5404
        %v5406 = vrot.slane %v5392, %v5405
        %v5407 = vcombine.low %v5351, %v5383
        %v5408 = vcombine.high %v5351, %v5383
        %v5409 = vcombine.low %v5358, %v5390
        %v5410 = vcombine.high %v5358, %v5390
        %v5411 = vcombine.low %v5367, %v5399
        %v5412 = vcombine.high %v5367, %v5399
        %v5413 = vcombine.low %v5374, %v5406
        %v5414 = vcombine.high %v5374, %v5406
        %v5415 = vadd.f32 %v5271, %v4787
        %v5416 = vadd.f32 %v5407, %v4790
        %v5417 = vadd.f32 %v5272, %v4837
        %v5418 = vadd.f32 %v5408, %v4840
        %v5419 = vadd.f32 %v5273, %v4887
        %v5420 = vadd.f32 %v5409, %v4890
        %v5421 = vadd.f32 %v5274, %v4937
        %v5422 = vadd.f32 %v5410, %v4940
        %v5423 = vadd.f32 %v5275, %v4987
        %v5424 = vadd.f32 %v5411, %v4990
        %v5425 = vadd.f32 %v5276, %v5037
        %v5426 = vadd.f32 %v5412, %v5040
        %v5427 = vadd.f32 %v5277, %v5087
        %v5428 = vadd.f32 %v5413, %v5090
        %v5429 = vadd.f32 %v5278, %v5137
        %v5430 = vadd.f32 %v5414, %v5140
        %v5431 = vlaneseq
        %v5432 = vshrl.u32 %v5431, 7
        %v5433 = vsub.s32 0, %v5432
        %v5434 = vrot.slane %v3981, %v5433
        %5436 = vbcast.lane.b32.xlu0 %v5434, 256
        %v5437 = vpop.permute.xlu0 %5436
        %s5439 = sor.u32 256, 8
        %5440 = vbcast.lane.b32.xlu0 %v5434, %s5439
        %v5441 = vpop.permute.xlu0 %5440
        %v5442 = vlaneseq
        %v5443 = vshrl.u32 %v5442, 7
        %v5444 = vsub.s32 1, %v5443
        %v5445 = vrot.slane %v3981, %v5444
        %5447 = vbcast.lane.b32.xlu0 %v5445, 256
        %v5448 = vpop.permute.xlu0 %5447
        %s5450 = sor.u32 256, 8
        %5451 = vbcast.lane.b32.xlu0 %v5445, %s5450
        %v5452 = vpop.permute.xlu0 %5451
        %v5453 = vlaneseq
        %v5454 = vshrl.u32 %v5453, 7
        %v5455 = vsub.s32 2, %v5454
        %v5456 = vrot.slane %v3981, %v5455
        %5458 = vbcast.lane.b32.xlu0 %v5456, 256
        %v5459 = vpop.permute.xlu0 %5458
        %s5461 = sor.u32 256, 8
        %5462 = vbcast.lane.b32.xlu0 %v5456, %s5461
        %v5463 = vpop.permute.xlu0 %5462
        %v5464 = vlaneseq
        %v5465 = vshrl.u32 %v5464, 7
        %v5466 = vsub.s32 3, %v5465
        %v5467 = vrot.slane %v3981, %v5466
        %5469 = vbcast.lane.b32.xlu0 %v5467, 256
        %v5470 = vpop.permute.xlu0 %5469
        %s5472 = sor.u32 256, 8
        %5473 = vbcast.lane.b32.xlu0 %v5467, %s5472
        %v5474 = vpop.permute.xlu0 %5473
        %v5475 = vlaneseq
        %v5476 = vshrl.u32 %v5475, 7
        %v5477 = vsub.s32 4, %v5476
        %v5478 = vrot.slane %v3981, %v5477
        %5480 = vbcast.lane.b32.xlu0 %v5478, 256
        %v5481 = vpop.permute.xlu0 %5480
        %s5483 = sor.u32 256, 8
        %5484 = vbcast.lane.b32.xlu0 %v5478, %s5483
        %v5485 = vpop.permute.xlu0 %5484
        %v5486 = vlaneseq
        %v5487 = vshrl.u32 %v5486, 7
        %v5488 = vsub.s32 5, %v5487
        %v5489 = vrot.slane %v3981, %v5488
        %5491 = vbcast.lane.b32.xlu0 %v5489, 256
        %v5492 = vpop.permute.xlu0 %5491
        %s5494 = sor.u32 256, 8
        %5495 = vbcast.lane.b32.xlu0 %v5489, %s5494
        %v5496 = vpop.permute.xlu0 %5495
        %v5497 = vlaneseq
        %v5498 = vshrl.u32 %v5497, 7
        %v5499 = vsub.s32 6, %v5498
        %v5500 = vrot.slane %v3981, %v5499
        %5502 = vbcast.lane.b32.xlu0 %v5500, 256
        %v5503 = vpop.permute.xlu0 %5502
        %s5505 = sor.u32 256, 8
        %5506 = vbcast.lane.b32.xlu0 %v5500, %s5505
        %v5507 = vpop.permute.xlu0 %5506
        %v5508 = vlaneseq
        %v5509 = vshrl.u32 %v5508, 7
        %v5510 = vsub.s32 7, %v5509
        %v5511 = vrot.slane %v3981, %v5510
        %5513 = vbcast.lane.b32.xlu0 %v5511, 256
        %v5514 = vpop.permute.xlu0 %5513
        %s5516 = sor.u32 256, 8
        %5517 = vbcast.lane.b32.xlu0 %v5511, %s5516
        %v5518 = vpop.permute.xlu0 %5517
        %v5519 = vmul.f32 %v5415, %v5437
        %v5520 = vmul.f32 %v5416, %v5441
        %v5521 = vmul.f32 %v5417, %v5448
        %v5522 = vmul.f32 %v5418, %v5452
        %v5523 = vmul.f32 %v5419, %v5459
        %v5524 = vmul.f32 %v5420, %v5463
        %v5525 = vmul.f32 %v5421, %v5470
        %v5526 = vmul.f32 %v5422, %v5474
        %v5527 = vmul.f32 %v5423, %v5481
        %v5528 = vmul.f32 %v5424, %v5485
        %v5529 = vmul.f32 %v5425, %v5492
        %v5530 = vmul.f32 %v5426, %v5496
        %v5531 = vmul.f32 %v5427, %v5503
        %v5532 = vmul.f32 %v5428, %v5507
        %v5533 = vmul.f32 %v5429, %v5514
        %v5534 = vmul.f32 %v5430, %v5518
        %s5535 = scalar_lea.vmem %s344, %s1166 [#allocation5]
        %v5536 = vld [vmem:[%s5535] sm:$0xff]
        %v5537 = vld [vmem:[%s5535 + $0x8] sm:$0xff]
        %v5538 = vld [vmem:[%s5535 + $0x10] sm:$0xff]
        %v5539 = vld [vmem:[%s5535 + $0x18] sm:$0xff]
        %v5540 = vld [vmem:[%s5535 + $0x20] sm:$0xff]
        %v5541 = vld [vmem:[%s5535 + $0x28] sm:$0xff]
        %v5542 = vld [vmem:[%s5535 + $0x30] sm:$0xff]
        %v5543 = vld [vmem:[%s5535 + $0x38] sm:$0xff]
        %v5544 = vld [vmem:[%s5535 + $0x40] sm:$0xff]
        %v5545 = vld [vmem:[%s5535 + $0x48] sm:$0xff]
        %v5546 = vld [vmem:[%s5535 + $0x50] sm:$0xff]
        %v5547 = vld [vmem:[%s5535 + $0x58] sm:$0xff]
        %v5548 = vld [vmem:[%s5535 + $0x60] sm:$0xff]
        %v5549 = vld [vmem:[%s5535 + $0x68] sm:$0xff]
        %v5550 = vld [vmem:[%s5535 + $0x70] sm:$0xff]
        %v5551 = vld [vmem:[%s5535 + $0x78] sm:$0xff]
        %s5552 = sld [smem:[#allocation4]]
        %v5553 = vstv %s5552
        %v5554 = vmul.f32 %v5553, %v5519
        %v5555 = vmul.f32 %v5553, %v5520
        %v5556 = vmul.f32 %v5553, %v5521
        %v5557 = vmul.f32 %v5553, %v5522
        %v5558 = vmul.f32 %v5553, %v5523
        %v5559 = vmul.f32 %v5553, %v5524
        %v5560 = vmul.f32 %v5553, %v5525
        %v5561 = vmul.f32 %v5553, %v5526
        %v5562 = vmul.f32 %v5553, %v5527
        %v5563 = vmul.f32 %v5553, %v5528
        %v5564 = vmul.f32 %v5553, %v5529
        %v5565 = vmul.f32 %v5553, %v5530
        %v5566 = vmul.f32 %v5553, %v5531
        %v5567 = vmul.f32 %v5553, %v5532
        %v5568 = vmul.f32 %v5553, %v5533
        %v5569 = vmul.f32 %v5553, %v5534
        %v5570 = vadd.f32 %v5554, %v5536
        %v5571 = vadd.f32 %v5555, %v5537
        %v5572 = vadd.f32 %v5556, %v5538
        %v5573 = vadd.f32 %v5557, %v5539
        %v5574 = vadd.f32 %v5558, %v5540
        %v5575 = vadd.f32 %v5559, %v5541
        %v5576 = vadd.f32 %v5560, %v5542
        %v5577 = vadd.f32 %v5561, %v5543
        %v5578 = vadd.f32 %v5562, %v5544
        %v5579 = vadd.f32 %v5563, %v5545
        %v5580 = vadd.f32 %v5564, %v5546
        %v5581 = vadd.f32 %v5565, %v5547
        %v5582 = vadd.f32 %v5566, %v5548
        %v5583 = vadd.f32 %v5567, %v5549
        %v5584 = vadd.f32 %v5568, %v5550
        %v5585 = vadd.f32 %v5569, %v5551
        %5586 = vst.msk [vmem:[%s394] sm:$0xff] %vm748, %v5570
        %5587 = vst.msk [vmem:[%s394 + $0x8] sm:$0xff] %vm748, %v5571
        %5588 = vst.msk [vmem:[%s394 + $0x10] sm:$0xff] %vm748, %v5572
        %5589 = vst.msk [vmem:[%s394 + $0x18] sm:$0xff] %vm748, %v5573
        %5590 = vst.msk [vmem:[%s394 + $0x20] sm:$0xff] %vm748, %v5574
        %5591 = vst.msk [vmem:[%s394 + $0x28] sm:$0xff] %vm748, %v5575
        %5592 = vst.msk [vmem:[%s394 + $0x30] sm:$0xff] %vm748, %v5576
        %5593 = vst.msk [vmem:[%s394 + $0x38] sm:$0xff] %vm748, %v5577
        %5594 = vst.msk [vmem:[%s394 + $0x40] sm:$0xff] %vm748, %v5578
        %5595 = vst.msk [vmem:[%s394 + $0x48] sm:$0xff] %vm748, %v5579
        %5596 = vst.msk [vmem:[%s394 + $0x50] sm:$0xff] %vm748, %v5580
        %5597 = vst.msk [vmem:[%s394 + $0x58] sm:$0xff] %vm748, %v5581
        %5598 = vst.msk [vmem:[%s394 + $0x60] sm:$0xff] %vm748, %v5582
        %5599 = vst.msk [vmem:[%s394 + $0x68] sm:$0xff] %vm748, %v5583
        %5600 = vst.msk [vmem:[%s394 + $0x70] sm:$0xff] %vm748, %v5584
        %5601 = vst.msk [vmem:[%s394 + $0x78] sm:$0xff] %vm748, %v5585
        %s5602 = sand.u32 %s231, 1
        %s5603 = scalar_lea.sflag [#allocation7], %s5602
        %s5604 = sand.u32 %s231, 1
        %s5605 = smul.addr %s5604, 128
        %s5606 = scalar_lea.vmem [#allocation11], %s5605
        // Predicated region
        $region69: #{tpu_custom_call.1} parent=51 // pred_check
          %p5607 = pneg %p241
        $region70: #{tpu_custom_call.1} parent=51 // pred_check_branch
          %5609 = sbr.rel (%p5607) target = $region72
        $region71: #{tpu_custom_call.1} parent=51 // pred_region
          %s5610 = smul.u32 2, %s34
          %s5612 = ssub.s32 2048, 2048
          %5613 = vsyncadd %s5603, %s5612
          %s5614 = smul.addr %s33, 16
          %s5615 = sadd.s32 %s5610, %s5614
          %s5616 = smul.addr %s5615, 128
          %s5617 = scalar_lea.hbm %s8, %s5616
          %s5618 = sshll.u32 %s5606, 4
          %s5619 = int_to_ptr.vmem [resolvable:$true] %s5618
          %5624 = dma.vmem_to_hbm [thread:$0]  %s5619, 2048, %s5617, %s5603, 128, 128, 8
        $region72: #{tpu_custom_call.1} parent=51 // pred_fallthru
          _
      $region52: #{tpu_custom_call.1} parent=5 // pred_fallthru
        _
      %p5625 = scmp.le.s32.totalorder 2, %s24
      // Predicated region
      $region73: #{tpu_custom_call.1} parent=5 // pred_check
        %p5626 = pneg %p5625
      $region74: #{tpu_custom_call.1} parent=5 // pred_check_branch
        %5628 = sbr.rel (%p5626) target = $region76
      $region75: #{tpu_custom_call.1} parent=5 // pred_region
        %s5629 = ssub.s32 %s24, 2
        // Predicated region
        $region77: #{tpu_custom_call.1} parent=75 // pred_check
          %p5630 = pneg %p247
        $region78: #{tpu_custom_call.1} parent=75 // pred_check_branch
          %5632 = sbr.rel (%p5630) target = $region80
        $region79: #{tpu_custom_call.1} parent=75 // pred_region
          %s5633 = sand.u32 %s232, 1
          %s5634 = scalar_lea.sflag [#allocation7], %s5633
          %s5635 = sand.u32 %s232, 1
          %s5636 = smul.addr %s5635, 128
          %s5637 = scalar_lea.vmem [#allocation11], %s5636
          %5638 = dma.done %s5634, 2048
        $region80: #{tpu_custom_call.1} parent=75 // pred_fallthru
          _
      $region76: #{tpu_custom_call.1} parent=5 // pred_fallthru
        _
    $region6: #{tpu_custom_call.1} parent=1 // loop_footer
      %s28 = sadd.s32 1, %s24
    $region7: #{tpu_custom_call.1} parent=1 // loop_footer_branch
      %23 = sbr.rel target = $region3
    $region8: #{tpu_custom_call.1} parent=1 // loop_exit
      _
    %5639 = vsyncpa [#allocation6], 1
    %s5640 = scalar_lea.sflag [#allocation6], 1
    %5641 = vsyncpa %s5640, 1
    %5642 = vsyncpa [#allocation9], 1
    %s5643 = scalar_lea.sflag [#allocation9], 1
    %5644 = vsyncpa %s5643, 1
    %5645 = vsyncpa [#allocation7], 1
    %s5646 = scalar_lea.sflag [#allocation7], 1
    %5647 = vsyncpa %s5646, 1

</llo_original>
